<compile_context>
chip_gen: v6e
topology: v6e:2x2x1
jax: 0.10.0
libtpu: 0.0.40
codegen_flags: <defaults>
</compile_context>

<pallas_src>
import jax
import jax.numpy as jnp
from jax.experimental import pallas as pl
from jax.experimental.pallas import tpu as pltpu

EPS = 1e-5


def _make_kernel(N, H, W, C):
    NHW = N * H * W
    inv_n = 1.0 / float(NHW)

    def kernel(x_ref, w1_ref, g1_ref, be1_ref, a_ref,
               w2_ref, g2_ref, be2_ref, out_ref, pad_ref, col_ref):
        f32 = jnp.float32

        # ---- zero ONLY the 1-pixel halo of the padded scratch (reused by
        # both convs), then place the input in the interior ------------------
        zrow = jnp.zeros((N, 1, W + 2, C), f32)
        zcol = jnp.zeros((N, H + 2, 1, C), f32)
        pad_ref[:, 0:1, :, :] = zrow
        pad_ref[:, H + 1:H + 2, :, :] = zrow
        pad_ref[:, :, 0:1, :] = zcol
        pad_ref[:, :, W + 1:W + 2, :] = zcol
        pad_ref[:, 1:H + 1, 1:W + 1, :] = x_ref[...]

        def im2col():
            # Gather the 9 shifted views into one (NHW, 9C) patch matrix.
            for dy in range(3):
                for dx in range(3):
                    k0 = (dy * 3 + dx) * C
                    col_ref[:, k0:k0 + C] = (
                        pad_ref[:, dy:dy + H, dx:dx + W, :].reshape(NHW, C))

        def batchnorm(acc, g_ref, be_ref):
            # One-pass stats (biased variance, training-mode BN).
            s = jnp.sum(acc, axis=0, keepdims=True)
            sq = jnp.sum(acc * acc, axis=0, keepdims=True)
            mean = s * inv_n
            var = sq * inv_n - mean * mean
            scale = g_ref[...] * jax.lax.rsqrt(var + EPS)   # (1, C)
            shift = be_ref[...] - mean * scale              # (1, C)
            return acc * scale + shift

        # ---- conv1 (bias cancelled by bn1) + bn1 + PReLU --------------------
        im2col()
        acc1 = jnp.dot(col_ref[...], w1_ref[...],
                       preferred_element_type=f32)           # (NHW, C)
        h = batchnorm(acc1, g1_ref, be1_ref)
        alpha = a_ref[0]                                     # shared PReLU slope
        h = jnp.where(h >= 0.0, h, alpha * h)

        # ---- conv2 (bias cancelled by bn2) + bn2 ----------------------------
        pad_ref[:, 1:H + 1, 1:W + 1, :] = h.reshape(N, H, W, C)  # halo stays 0
        im2col()
        acc2 = jnp.dot(col_ref[...], w2_ref[...],
                       preferred_element_type=f32)           # (NHW, C)
        resid = batchnorm(acc2, g2_ref, be2_ref)

        # ---- residual add: read x directly, no re-slicing -------------------
        out_ref[...] = x_ref[...] + resid.reshape(N, H, W, C)

    return kernel


@jax.jit
def residual_block(x_nchw, params):
    """Forward pass matching the PyTorch ResidualBlock (training-mode BN)."""
    x = jnp.transpose(x_nchw, (0, 2, 3, 1)).astype(jnp.float32)  # NCHW -> NHWC
    N, H, W, C = x.shape
    NHW = N * H * W

    # HWIO (3,3,Cin,Cout) -> (9*Cin, Cout); K ordering matches im2col columns.
    w1 = params["w1"].reshape(9 * C, C)
    w2 = params["w2"].reshape(9 * C, C)

    vmem = pl.BlockSpec(memory_space=pltpu.MemorySpace.VMEM)
    smem = pl.BlockSpec(memory_space=pltpu.MemorySpace.SMEM)

    out = pl.pallas_call(
        _make_kernel(N, H, W, C),
        out_shape=jax.ShapeDtypeStruct((N, H, W, C), jnp.float32),
        in_specs=[vmem,               # x (unpadded)
                  vmem, vmem, vmem,   # w1, gamma1, beta1
                  smem,               # PReLU slope (scalar)
                  vmem, vmem, vmem],  # w2, gamma2, beta2
        out_specs=vmem,
        scratch_shapes=[
            pltpu.VMEM((N, H + 2, W + 2, C), jnp.float32),  # shared padded act
            pltpu.VMEM((NHW, 9 * C), jnp.float32),          # im2col patches
        ],
        compiler_params=pltpu.CompilerParams(
            vmem_limit_bytes=32 * 1024 * 1024),
    )(
        x,
        w1, params["g1"].reshape(1, C), params["be1"].reshape(1, C),
        params["a"],
        w2, params["g2"].reshape(1, C), params["be2"].reshape(1, C),
    )
    return jnp.transpose(out, (0, 3, 1, 2))  # NHWC -> NCHW


def _ref_forward(x_nchw, params):
    """Pure-JAX reference of the PyTorch forward (with conv biases)."""
    x = jnp.transpose(x_nchw, (0, 2, 3, 1)).astype(jnp.float32)

    def conv(h, w, b):
        return jax.lax.conv_general_dilated(
            h, w, (1, 1), "SAME",
            dimension_numbers=("NHWC", "HWIO", "NHWC")) + b

    def bn(h, g, be):
        m = h.mean((0, 1, 2), keepdims=True)
        v = ((h - m) ** 2).mean((0, 1, 2), keepdims=True)
        return (h - m) / jnp.sqrt(v + EPS) * g + be

    r = conv(x, params["w1"], params["b1"])
    r = bn(r, params["g1"], params["be1"])
    r = jnp.where(r >= 0.0, r, params["a"][0] * r)
    r = conv(r, params["w2"], params["b2"])
    r = bn(r, params["g2"], params["be2"])
    y = x + r
    return jnp.transpose(y, (0, 3, 1, 2))


def init_params(key, channels):
    """Deterministic init mirroring nn.Conv2d / nn.BatchNorm2d / nn.PReLU."""
    k1, k2, k3, k4 = jax.random.split(key, 4)
    fan_in = channels * 3 * 3
    bound = 1.0 / jnp.sqrt(fan_in)
    return {
        "w1": jax.random.uniform(k1, (3, 3, channels, channels),
                                 jnp.float32, -bound, bound),
        "b1": jax.random.uniform(k2, (channels,), jnp.float32, -bound, bound),
        "g1": jnp.ones((channels,), jnp.float32),
        "be1": jnp.zeros((channels,), jnp.float32),
        "a": jnp.full((1,), 0.25, jnp.float32),
        "w2": jax.random.uniform(k3, (3, 3, channels, channels),
                                 jnp.float32, -bound, bound),
        "b2": jax.random.uniform(k4, (channels,), jnp.float32, -bound, bound),
        "g2": jnp.ones((channels,), jnp.float32),
        "be2": jnp.zeros((channels,), jnp.float32),
    }


if __name__ == "__main__":
    key = jax.random.PRNGKey(0)
    kx, kp = jax.random.split(key)

    N, C, H, W = 2, 4, 16, 16
    x = jax.random.normal(kx, (N, C, H, W), jnp.float32)
    params = init_params(kp, C)

    y = jax.block_until_ready(residual_block(x, params))

    y_ref = _ref_forward(x, params)
    assert y.shape == (N, C, H, W)
    assert jnp.allclose(y, y_ref, atol=1e-4, rtol=1e-4), float(
        jnp.max(jnp.abs(y - y_ref)))

    print("KERNEL_OK")
</pallas_src>

<mosaic_0001>
module attributes {stable_mosaic.version = 11 : i64} {
  func.func @kernel(%arg0: memref<2x16x16x4xf32, #tpu.memory_space<vmem>>, %arg1: memref<36x4xf32, #tpu.memory_space<vmem>>, %arg2: memref<1x4xf32, #tpu.memory_space<vmem>>, %arg3: memref<1x4xf32, #tpu.memory_space<vmem>>, %arg4: memref<1xf32, #tpu.memory_space<smem>>, %arg5: memref<36x4xf32, #tpu.memory_space<vmem>>, %arg6: memref<1x4xf32, #tpu.memory_space<vmem>>, %arg7: memref<1x4xf32, #tpu.memory_space<vmem>>, %arg8: memref<2x16x16x4xf32, #tpu.memory_space<vmem>>, %arg9: memref<2x18x18x4xf32, #tpu.memory_space<vmem>>, %arg10: memref<512x36xf32, #tpu.memory_space<vmem>>) attributes {dimension_semantics = [], scalar_prefetch = 0 : i64, scratch_operands = 2 : i64, tpu.core_type = #tpu.core_type<tc>} {
    %cst = arith.constant 0.000000e+00 : f32
    %0 = vector.broadcast %cst : f32 to vector<2x1x18x4xf32>
    %cst_0 = arith.constant 0.000000e+00 : f32
    %1 = vector.broadcast %cst_0 : f32 to vector<2x18x1x4xf32>
    %c0 = arith.constant 0 : index
    %c0_1 = arith.constant 0 : index
    %c0_2 = arith.constant 0 : index
    %c0_3 = arith.constant 0 : index
    %2 = vector.load %arg9[%c0, %c0_1, %c0_2, %c0_3] : memref<2x18x18x4xf32, #tpu.memory_space<vmem>>, vector<2x1x18x4xf32>
    tpu.vector_store %arg9[%c0, %c0_1, %c0_2, %c0_3], %0 {strides = array<i32>} : memref<2x18x18x4xf32, #tpu.memory_space<vmem>>, vector<2x1x18x4xf32>,
    %c0_4 = arith.constant 0 : index
    %c17 = arith.constant 17 : index
    %c0_5 = arith.constant 0 : index
    %c0_6 = arith.constant 0 : index
    %3 = vector.load %arg9[%c0_4, %c17, %c0_5, %c0_6] : memref<2x18x18x4xf32, #tpu.memory_space<vmem>>, vector<2x1x18x4xf32>
    tpu.vector_store %arg9[%c0_4, %c17, %c0_5, %c0_6], %0 {strides = array<i32>} : memref<2x18x18x4xf32, #tpu.memory_space<vmem>>, vector<2x1x18x4xf32>,
    %c0_7 = arith.constant 0 : index
    %c0_8 = arith.constant 0 : index
    %c0_9 = arith.constant 0 : index
    %c0_10 = arith.constant 0 : index
    %4 = vector.load %arg9[%c0_7, %c0_8, %c0_9, %c0_10] : memref<2x18x18x4xf32, #tpu.memory_space<vmem>>, vector<2x18x1x4xf32>
    tpu.vector_store %arg9[%c0_7, %c0_8, %c0_9, %c0_10], %1 {strides = array<i32>} : memref<2x18x18x4xf32, #tpu.memory_space<vmem>>, vector<2x18x1x4xf32>,
    %c0_11 = arith.constant 0 : index
    %c0_12 = arith.constant 0 : index
    %c17_13 = arith.constant 17 : index
    %c0_14 = arith.constant 0 : index
    %5 = vector.load %arg9[%c0_11, %c0_12, %c17_13, %c0_14] : memref<2x18x18x4xf32, #tpu.memory_space<vmem>>, vector<2x18x1x4xf32>
    tpu.vector_store %arg9[%c0_11, %c0_12, %c17_13, %c0_14], %1 {strides = array<i32>} : memref<2x18x18x4xf32, #tpu.memory_space<vmem>>, vector<2x18x1x4xf32>,
    %c0_15 = arith.constant 0 : index
    %c0_16 = arith.constant 0 : index
    %c0_17 = arith.constant 0 : index
    %c0_18 = arith.constant 0 : index
    %6 = vector.load %arg0[%c0_15, %c0_16, %c0_17, %c0_18] : memref<2x16x16x4xf32, #tpu.memory_space<vmem>>, vector<2x16x16x4xf32>
    %c0_19 = arith.constant 0 : index
    %c1 = arith.constant 1 : index
    %c1_20 = arith.constant 1 : index
    %c0_21 = arith.constant 0 : index
    %7 = vector.load %arg9[%c0_19, %c1, %c1_20, %c0_21] : memref<2x18x18x4xf32, #tpu.memory_space<vmem>>, vector<2x16x16x4xf32>
    tpu.vector_store %arg9[%c0_19, %c1, %c1_20, %c0_21], %6 {strides = array<i32>} : memref<2x18x18x4xf32, #tpu.memory_space<vmem>>, vector<2x16x16x4xf32>,
    %c0_22 = arith.constant 0 : index
    %c0_23 = arith.constant 0 : index
    %c0_24 = arith.constant 0 : index
    %c0_25 = arith.constant 0 : index
    %8 = vector.load %arg9[%c0_22, %c0_23, %c0_24, %c0_25] : memref<2x18x18x4xf32, #tpu.memory_space<vmem>>, vector<2x16x16x4xf32>
    %9 = vector.shape_cast %8 : vector<2x16x16x4xf32> to vector<512x4xf32>
    %c0_26 = arith.constant 0 : index
    %c0_27 = arith.constant 0 : index
    %10 = vector.load %arg10[%c0_26, %c0_27] : memref<512x36xf32, #tpu.memory_space<vmem>>, vector<512x4xf32>
    tpu.vector_store %arg10[%c0_26, %c0_27], %9 {strides = array<i32>} : memref<512x36xf32, #tpu.memory_space<vmem>>, vector<512x4xf32>,
    %c0_28 = arith.constant 0 : index
    %c0_29 = arith.constant 0 : index
    %c1_30 = arith.constant 1 : index
    %c0_31 = arith.constant 0 : index
    %11 = vector.load %arg9[%c0_28, %c0_29, %c1_30, %c0_31] : memref<2x18x18x4xf32, #tpu.memory_space<vmem>>, vector<2x16x16x4xf32>
    %12 = vector.shape_cast %11 : vector<2x16x16x4xf32> to vector<512x4xf32>
    %c0_32 = arith.constant 0 : index
    %c4 = arith.constant 4 : index
    %13 = vector.load %arg10[%c0_32, %c4] : memref<512x36xf32, #tpu.memory_space<vmem>>, vector<512x4xf32>
    tpu.vector_store %arg10[%c0_32, %c4], %12 {strides = array<i32>} : memref<512x36xf32, #tpu.memory_space<vmem>>, vector<512x4xf32>,
    %c0_33 = arith.constant 0 : index
    %c0_34 = arith.constant 0 : index
    %c2 = arith.constant 2 : index
    %c0_35 = arith.constant 0 : index
    %14 = vector.load %arg9[%c0_33, %c0_34, %c2, %c0_35] : memref<2x18x18x4xf32, #tpu.memory_space<vmem>>, vector<2x16x16x4xf32>
    %15 = vector.shape_cast %14 : vector<2x16x16x4xf32> to vector<512x4xf32>
    %c0_36 = arith.constant 0 : index
    %c8 = arith.constant 8 : index
    %16 = vector.load %arg10[%c0_36, %c8] : memref<512x36xf32, #tpu.memory_space<vmem>>, vector<512x4xf32>
    tpu.vector_store %arg10[%c0_36, %c8], %15 {strides = array<i32>} : memref<512x36xf32, #tpu.memory_space<vmem>>, vector<512x4xf32>,
    %c0_37 = arith.constant 0 : index
    %c1_38 = arith.constant 1 : index
    %c0_39 = arith.constant 0 : index
    %c0_40 = arith.constant 0 : index
    %17 = vector.load %arg9[%c0_37, %c1_38, %c0_39, %c0_40] : memref<2x18x18x4xf32, #tpu.memory_space<vmem>>, vector<2x16x16x4xf32>
    %18 = vector.shape_cast %17 : vector<2x16x16x4xf32> to vector<512x4xf32>
    %c0_41 = arith.constant 0 : index
    %c12 = arith.constant 12 : index
    %19 = vector.load %arg10[%c0_41, %c12] : memref<512x36xf32, #tpu.memory_space<vmem>>, vector<512x4xf32>
    tpu.vector_store %arg10[%c0_41, %c12], %18 {strides = array<i32>} : memref<512x36xf32, #tpu.memory_space<vmem>>, vector<512x4xf32>,
    %c0_42 = arith.constant 0 : index
    %c1_43 = arith.constant 1 : index
    %c1_44 = arith.constant 1 : index
    %c0_45 = arith.constant 0 : index
    %20 = vector.load %arg9[%c0_42, %c1_43, %c1_44, %c0_45] : memref<2x18x18x4xf32, #tpu.memory_space<vmem>>, vector<2x16x16x4xf32>
    %21 = vector.shape_cast %20 : vector<2x16x16x4xf32> to vector<512x4xf32>
    %c0_46 = arith.constant 0 : index
    %c16 = arith.constant 16 : index
    %22 = vector.load %arg10[%c0_46, %c16] : memref<512x36xf32, #tpu.memory_space<vmem>>, vector<512x4xf32>
    tpu.vector_store %arg10[%c0_46, %c16], %21 {strides = array<i32>} : memref<512x36xf32, #tpu.memory_space<vmem>>, vector<512x4xf32>,
    %c0_47 = arith.constant 0 : index
    %c1_48 = arith.constant 1 : index
    %c2_49 = arith.constant 2 : index
    %c0_50 = arith.constant 0 : index
    %23 = vector.load %arg9[%c0_47, %c1_48, %c2_49, %c0_50] : memref<2x18x18x4xf32, #tpu.memory_space<vmem>>, vector<2x16x16x4xf32>
    %24 = vector.shape_cast %23 : vector<2x16x16x4xf32> to vector<512x4xf32>
    %c0_51 = arith.constant 0 : index
    %c20 = arith.constant 20 : index
    %25 = vector.load %arg10[%c0_51, %c20] : memref<512x36xf32, #tpu.memory_space<vmem>>, vector<512x4xf32>
    tpu.vector_store %arg10[%c0_51, %c20], %24 {strides = array<i32>} : memref<512x36xf32, #tpu.memory_space<vmem>>, vector<512x4xf32>,
    %c0_52 = arith.constant 0 : index
    %c2_53 = arith.constant 2 : index
    %c0_54 = arith.constant 0 : index
    %c0_55 = arith.constant 0 : index
    %26 = vector.load %arg9[%c0_52, %c2_53, %c0_54, %c0_55] : memref<2x18x18x4xf32, #tpu.memory_space<vmem>>, vector<2x16x16x4xf32>
    %27 = vector.shape_cast %26 : vector<2x16x16x4xf32> to vector<512x4xf32>
    %c0_56 = arith.constant 0 : index
    %c24 = arith.constant 24 : index
    %28 = vector.load %arg10[%c0_56, %c24] : memref<512x36xf32, #tpu.memory_space<vmem>>, vector<512x4xf32>
    tpu.vector_store %arg10[%c0_56, %c24], %27 {strides = array<i32>} : memref<512x36xf32, #tpu.memory_space<vmem>>, vector<512x4xf32>,
    %c0_57 = arith.constant 0 : index
    %c2_58 = arith.constant 2 : index
    %c1_59 = arith.constant 1 : index
    %c0_60 = arith.constant 0 : index
    %29 = vector.load %arg9[%c0_57, %c2_58, %c1_59, %c0_60] : memref<2x18x18x4xf32, #tpu.memory_space<vmem>>, vector<2x16x16x4xf32>
    %30 = vector.shape_cast %29 : vector<2x16x16x4xf32> to vector<512x4xf32>
    %c0_61 = arith.constant 0 : index
    %c28 = arith.constant 28 : index
    %31 = vector.load %arg10[%c0_61, %c28] : memref<512x36xf32, #tpu.memory_space<vmem>>, vector<512x4xf32>
    tpu.vector_store %arg10[%c0_61, %c28], %30 {strides = array<i32>} : memref<512x36xf32, #tpu.memory_space<vmem>>, vector<512x4xf32>,
    %c0_62 = arith.constant 0 : index
    %c2_63 = arith.constant 2 : index
    %c2_64 = arith.constant 2 : index
    %c0_65 = arith.constant 0 : index
    %32 = vector.load %arg9[%c0_62, %c2_63, %c2_64, %c0_65] : memref<2x18x18x4xf32, #tpu.memory_space<vmem>>, vector<2x16x16x4xf32>
    %33 = vector.shape_cast %32 : vector<2x16x16x4xf32> to vector<512x4xf32>
    %c0_66 = arith.constant 0 : index
    %c32 = arith.constant 32 : index
    %34 = vector.load %arg10[%c0_66, %c32] : memref<512x36xf32, #tpu.memory_space<vmem>>, vector<512x4xf32>
    tpu.vector_store %arg10[%c0_66, %c32], %33 {strides = array<i32>} : memref<512x36xf32, #tpu.memory_space<vmem>>, vector<512x4xf32>,
    %c0_67 = arith.constant 0 : index
    %c0_68 = arith.constant 0 : index
    %35 = vector.load %arg10[%c0_67, %c0_68] : memref<512x36xf32, #tpu.memory_space<vmem>>, vector<512x36xf32>
    %c0_69 = arith.constant 0 : index
    %c0_70 = arith.constant 0 : index
    %36 = vector.load %arg1[%c0_69, %c0_70] : memref<36x4xf32, #tpu.memory_space<vmem>>, vector<36x4xf32>
    %cst_71 = arith.constant dense<0.000000e+00> : vector<512x4xf32>
    %37 = tpu.matmul %35, %36, %cst_71 {dimension_numbers = #tpu.dot_dimension_numbers<[1], [0], [0], [1], [0, 0, 1, 1], [], []>} : vector<512x36xf32>, vector<36x4xf32>, vector<512x4xf32> -> vector<512x4xf32>
    %cst_72 = arith.constant dense<0.000000e+00> : vector<4xf32>
    %38 = vector.multi_reduction <add>, %37, %cst_72 [0] : vector<512x4xf32> to vector<4xf32>
    %39 = vector.shape_cast %38 : vector<4xf32> to vector<1x4xf32>
    %40 = arith.mulf %37, %37 : vector<512x4xf32>
    %cst_73 = arith.constant dense<0.000000e+00> : vector<4xf32>
    %41 = vector.multi_reduction <add>, %40, %cst_73 [0] : vector<512x4xf32> to vector<4xf32>
    %42 = vector.shape_cast %41 : vector<4xf32> to vector<1x4xf32>
    %cst_74 = arith.constant 0.001953125 : f32
    %43 = vector.broadcast %cst_74 : f32 to vector<1x4xf32>
    %44 = arith.mulf %39, %43 : vector<1x4xf32>
    %cst_75 = arith.constant 0.001953125 : f32
    %45 = vector.broadcast %cst_75 : f32 to vector<1x4xf32>
    %46 = arith.mulf %42, %45 : vector<1x4xf32>
    %47 = arith.mulf %44, %44 : vector<1x4xf32>
    %48 = arith.subf %46, %47 : vector<1x4xf32>
    %c0_76 = arith.constant 0 : index
    %c0_77 = arith.constant 0 : index
    %49 = vector.load %arg2[%c0_76, %c0_77] : memref<1x4xf32, #tpu.memory_space<vmem>>, vector<1x4xf32>
    %cst_78 = arith.constant 9.99999974E-6 : f32
    %50 = vector.broadcast %cst_78 : f32 to vector<1x4xf32>
    %51 = arith.addf %48, %50 : vector<1x4xf32>
    %52 = math.rsqrt %51 : vector<1x4xf32>
    %53 = arith.mulf %49, %52 : vector<1x4xf32>
    %c0_79 = arith.constant 0 : index
    %c0_80 = arith.constant 0 : index
    %54 = vector.load %arg3[%c0_79, %c0_80] : memref<1x4xf32, #tpu.memory_space<vmem>>, vector<1x4xf32>
    %55 = arith.mulf %44, %53 : vector<1x4xf32>
    %56 = arith.subf %54, %55 : vector<1x4xf32>
    %57 = vector.broadcast %53 : vector<1x4xf32> to vector<512x4xf32>
    %58 = arith.mulf %37, %57 : vector<512x4xf32>
    %59 = vector.broadcast %56 : vector<1x4xf32> to vector<512x4xf32>
    %60 = arith.addf %58, %59 : vector<512x4xf32>
    %c0_81 = arith.constant 0 : index
    %61 = memref.load %arg4[%c0_81] : memref<1xf32, #tpu.memory_space<smem>>
    %cst_82 = arith.constant 0.000000e+00 : f32
    %62 = vector.broadcast %cst_82 : f32 to vector<512x4xf32>
    %63 = arith.cmpf oge, %60, %62 : vector<512x4xf32>
    %64 = vector.broadcast %61 : f32 to vector<512x4xf32>
    %65 = arith.mulf %64, %60 : vector<512x4xf32>
    %66 = arith.select %63, %60, %65 : vector<512x4xi1>, vector<512x4xf32>
    %67 = vector.shape_cast %66 : vector<512x4xf32> to vector<2x16x16x4xf32>
    %c0_83 = arith.constant 0 : index
    %c1_84 = arith.constant 1 : index
    %c1_85 = arith.constant 1 : index
    %c0_86 = arith.constant 0 : index
    %68 = vector.load %arg9[%c0_83, %c1_84, %c1_85, %c0_86] : memref<2x18x18x4xf32, #tpu.memory_space<vmem>>, vector<2x16x16x4xf32>
    tpu.vector_store %arg9[%c0_83, %c1_84, %c1_85, %c0_86], %67 {strides = array<i32>} : memref<2x18x18x4xf32, #tpu.memory_space<vmem>>, vector<2x16x16x4xf32>,
    %c0_87 = arith.constant 0 : index
    %c0_88 = arith.constant 0 : index
    %c0_89 = arith.constant 0 : index
    %c0_90 = arith.constant 0 : index
    %69 = vector.load %arg9[%c0_87, %c0_88, %c0_89, %c0_90] : memref<2x18x18x4xf32, #tpu.memory_space<vmem>>, vector<2x16x16x4xf32>
    %70 = vector.shape_cast %69 : vector<2x16x16x4xf32> to vector<512x4xf32>
    %c0_91 = arith.constant 0 : index
    %c0_92 = arith.constant 0 : index
    %71 = vector.load %arg10[%c0_91, %c0_92] : memref<512x36xf32, #tpu.memory_space<vmem>>, vector<512x4xf32>
    tpu.vector_store %arg10[%c0_91, %c0_92], %70 {strides = array<i32>} : memref<512x36xf32, #tpu.memory_space<vmem>>, vector<512x4xf32>,
    %c0_93 = arith.constant 0 : index
    %c0_94 = arith.constant 0 : index
    %c1_95 = arith.constant 1 : index
    %c0_96 = arith.constant 0 : index
    %72 = vector.load %arg9[%c0_93, %c0_94, %c1_95, %c0_96] : memref<2x18x18x4xf32, #tpu.memory_space<vmem>>, vector<2x16x16x4xf32>
    %73 = vector.shape_cast %72 : vector<2x16x16x4xf32> to vector<512x4xf32>
    %c0_97 = arith.constant 0 : index
    %c4_98 = arith.constant 4 : index
    %74 = vector.load %arg10[%c0_97, %c4_98] : memref<512x36xf32, #tpu.memory_space<vmem>>, vector<512x4xf32>
    tpu.vector_store %arg10[%c0_97, %c4_98], %73 {strides = array<i32>} : memref<512x36xf32, #tpu.memory_space<vmem>>, vector<512x4xf32>,
    %c0_99 = arith.constant 0 : index
    %c0_100 = arith.constant 0 : index
    %c2_101 = arith.constant 2 : index
    %c0_102 = arith.constant 0 : index
    %75 = vector.load %arg9[%c0_99, %c0_100, %c2_101, %c0_102] : memref<2x18x18x4xf32, #tpu.memory_space<vmem>>, vector<2x16x16x4xf32>
    %76 = vector.shape_cast %75 : vector<2x16x16x4xf32> to vector<512x4xf32>
    %c0_103 = arith.constant 0 : index
    %c8_104 = arith.constant 8 : index
    %77 = vector.load %arg10[%c0_103, %c8_104] : memref<512x36xf32, #tpu.memory_space<vmem>>, vector<512x4xf32>
    tpu.vector_store %arg10[%c0_103, %c8_104], %76 {strides = array<i32>} : memref<512x36xf32, #tpu.memory_space<vmem>>, vector<512x4xf32>,
    %c0_105 = arith.constant 0 : index
    %c1_106 = arith.constant 1 : index
    %c0_107 = arith.constant 0 : index
    %c0_108 = arith.constant 0 : index
    %78 = vector.load %arg9[%c0_105, %c1_106, %c0_107, %c0_108] : memref<2x18x18x4xf32, #tpu.memory_space<vmem>>, vector<2x16x16x4xf32>
    %79 = vector.shape_cast %78 : vector<2x16x16x4xf32> to vector<512x4xf32>
    %c0_109 = arith.constant 0 : index
    %c12_110 = arith.constant 12 : index
    %80 = vector.load %arg10[%c0_109, %c12_110] : memref<512x36xf32, #tpu.memory_space<vmem>>, vector<512x4xf32>
    tpu.vector_store %arg10[%c0_109, %c12_110], %79 {strides = array<i32>} : memref<512x36xf32, #tpu.memory_space<vmem>>, vector<512x4xf32>,
    %c0_111 = arith.constant 0 : index
    %c1_112 = arith.constant 1 : index
    %c1_113 = arith.constant 1 : index
    %c0_114 = arith.constant 0 : index
    %81 = vector.load %arg9[%c0_111, %c1_112, %c1_113, %c0_114] : memref<2x18x18x4xf32, #tpu.memory_space<vmem>>, vector<2x16x16x4xf32>
    %82 = vector.shape_cast %81 : vector<2x16x16x4xf32> to vector<512x4xf32>
    %c0_115 = arith.constant 0 : index
    %c16_116 = arith.constant 16 : index
    %83 = vector.load %arg10[%c0_115, %c16_116] : memref<512x36xf32, #tpu.memory_space<vmem>>, vector<512x4xf32>
    tpu.vector_store %arg10[%c0_115, %c16_116], %82 {strides = array<i32>} : memref<512x36xf32, #tpu.memory_space<vmem>>, vector<512x4xf32>,
    %c0_117 = arith.constant 0 : index
    %c1_118 = arith.constant 1 : index
    %c2_119 = arith.constant 2 : index
    %c0_120 = arith.constant 0 : index
    %84 = vector.load %arg9[%c0_117, %c1_118, %c2_119, %c0_120] : memref<2x18x18x4xf32, #tpu.memory_space<vmem>>, vector<2x16x16x4xf32>
    %85 = vector.shape_cast %84 : vector<2x16x16x4xf32> to vector<512x4xf32>
    %c0_121 = arith.constant 0 : index
    %c20_122 = arith.constant 20 : index
    %86 = vector.load %arg10[%c0_121, %c20_122] : memref<512x36xf32, #tpu.memory_space<vmem>>, vector<512x4xf32>
    tpu.vector_store %arg10[%c0_121, %c20_122], %85 {strides = array<i32>} : memref<512x36xf32, #tpu.memory_space<vmem>>, vector<512x4xf32>,
    %c0_123 = arith.constant 0 : index
    %c2_124 = arith.constant 2 : index
    %c0_125 = arith.constant 0 : index
    %c0_126 = arith.constant 0 : index
    %87 = vector.load %arg9[%c0_123, %c2_124, %c0_125, %c0_126] : memref<2x18x18x4xf32, #tpu.memory_space<vmem>>, vector<2x16x16x4xf32>
    %88 = vector.shape_cast %87 : vector<2x16x16x4xf32> to vector<512x4xf32>
    %c0_127 = arith.constant 0 : index
    %c24_128 = arith.constant 24 : index
    %89 = vector.load %arg10[%c0_127, %c24_128] : memref<512x36xf32, #tpu.memory_space<vmem>>, vector<512x4xf32>
    tpu.vector_store %arg10[%c0_127, %c24_128], %88 {strides = array<i32>} : memref<512x36xf32, #tpu.memory_space<vmem>>, vector<512x4xf32>,
    %c0_129 = arith.constant 0 : index
    %c2_130 = arith.constant 2 : index
    %c1_131 = arith.constant 1 : index
    %c0_132 = arith.constant 0 : index
    %90 = vector.load %arg9[%c0_129, %c2_130, %c1_131, %c0_132] : memref<2x18x18x4xf32, #tpu.memory_space<vmem>>, vector<2x16x16x4xf32>
    %91 = vector.shape_cast %90 : vector<2x16x16x4xf32> to vector<512x4xf32>
    %c0_133 = arith.constant 0 : index
    %c28_134 = arith.constant 28 : index
    %92 = vector.load %arg10[%c0_133, %c28_134] : memref<512x36xf32, #tpu.memory_space<vmem>>, vector<512x4xf32>
    tpu.vector_store %arg10[%c0_133, %c28_134], %91 {strides = array<i32>} : memref<512x36xf32, #tpu.memory_space<vmem>>, vector<512x4xf32>,
    %c0_135 = arith.constant 0 : index
    %c2_136 = arith.constant 2 : index
    %c2_137 = arith.constant 2 : index
    %c0_138 = arith.constant 0 : index
    %93 = vector.load %arg9[%c0_135, %c2_136, %c2_137, %c0_138] : memref<2x18x18x4xf32, #tpu.memory_space<vmem>>, vector<2x16x16x4xf32>
    %94 = vector.shape_cast %93 : vector<2x16x16x4xf32> to vector<512x4xf32>
    %c0_139 = arith.constant 0 : index
    %c32_140 = arith.constant 32 : index
    %95 = vector.load %arg10[%c0_139, %c32_140] : memref<512x36xf32, #tpu.memory_space<vmem>>, vector<512x4xf32>
    tpu.vector_store %arg10[%c0_139, %c32_140], %94 {strides = array<i32>} : memref<512x36xf32, #tpu.memory_space<vmem>>, vector<512x4xf32>,
    %c0_141 = arith.constant 0 : index
    %c0_142 = arith.constant 0 : index
    %96 = vector.load %arg10[%c0_141, %c0_142] : memref<512x36xf32, #tpu.memory_space<vmem>>, vector<512x36xf32>
    %c0_143 = arith.constant 0 : index
    %c0_144 = arith.constant 0 : index
    %97 = vector.load %arg5[%c0_143, %c0_144] : memref<36x4xf32, #tpu.memory_space<vmem>>, vector<36x4xf32>
    %cst_145 = arith.constant dense<0.000000e+00> : vector<512x4xf32>
    %98 = tpu.matmul %96, %97, %cst_145 {dimension_numbers = #tpu.dot_dimension_numbers<[1], [0], [0], [1], [0, 0, 1, 1], [], []>} : vector<512x36xf32>, vector<36x4xf32>, vector<512x4xf32> -> vector<512x4xf32>
    %cst_146 = arith.constant dense<0.000000e+00> : vector<4xf32>
    %99 = vector.multi_reduction <add>, %98, %cst_146 [0] : vector<512x4xf32> to vector<4xf32>
    %100 = vector.shape_cast %99 : vector<4xf32> to vector<1x4xf32>
    %101 = arith.mulf %98, %98 : vector<512x4xf32>
    %cst_147 = arith.constant dense<0.000000e+00> : vector<4xf32>
    %102 = vector.multi_reduction <add>, %101, %cst_147 [0] : vector<512x4xf32> to vector<4xf32>
    %103 = vector.shape_cast %102 : vector<4xf32> to vector<1x4xf32>
    %cst_148 = arith.constant 0.001953125 : f32
    %104 = vector.broadcast %cst_148 : f32 to vector<1x4xf32>
    %105 = arith.mulf %100, %104 : vector<1x4xf32>
    %cst_149 = arith.constant 0.001953125 : f32
    %106 = vector.broadcast %cst_149 : f32 to vector<1x4xf32>
    %107 = arith.mulf %103, %106 : vector<1x4xf32>
    %108 = arith.mulf %105, %105 : vector<1x4xf32>
    %109 = arith.subf %107, %108 : vector<1x4xf32>
    %c0_150 = arith.constant 0 : index
    %c0_151 = arith.constant 0 : index
    %110 = vector.load %arg6[%c0_150, %c0_151] : memref<1x4xf32, #tpu.memory_space<vmem>>, vector<1x4xf32>
    %cst_152 = arith.constant 9.99999974E-6 : f32
    %111 = vector.broadcast %cst_152 : f32 to vector<1x4xf32>
    %112 = arith.addf %109, %111 : vector<1x4xf32>
    %113 = math.rsqrt %112 : vector<1x4xf32>
    %114 = arith.mulf %110, %113 : vector<1x4xf32>
    %c0_153 = arith.constant 0 : index
    %c0_154 = arith.constant 0 : index
    %115 = vector.load %arg7[%c0_153, %c0_154] : memref<1x4xf32, #tpu.memory_space<vmem>>, vector<1x4xf32>
    %116 = arith.mulf %105, %114 : vector<1x4xf32>
    %117 = arith.subf %115, %116 : vector<1x4xf32>
    %118 = vector.broadcast %114 : vector<1x4xf32> to vector<512x4xf32>
    %119 = arith.mulf %98, %118 : vector<512x4xf32>
    %120 = vector.broadcast %117 : vector<1x4xf32> to vector<512x4xf32>
    %121 = arith.addf %119, %120 : vector<512x4xf32>
    %c0_155 = arith.constant 0 : index
    %c0_156 = arith.constant 0 : index
    %c0_157 = arith.constant 0 : index
    %c0_158 = arith.constant 0 : index
    %122 = vector.load %arg0[%c0_155, %c0_156, %c0_157, %c0_158] : memref<2x16x16x4xf32, #tpu.memory_space<vmem>>, vector<2x16x16x4xf32>
    %123 = vector.shape_cast %121 : vector<512x4xf32> to vector<2x16x16x4xf32>
    %124 = arith.addf %122, %123 : vector<2x16x16x4xf32>
    %c0_159 = arith.constant 0 : index
    %c0_160 = arith.constant 0 : index
    %c0_161 = arith.constant 0 : index
    %c0_162 = arith.constant 0 : index
    %125 = vector.load %arg8[%c0_159, %c0_160, %c0_161, %c0_162] : memref<2x16x16x4xf32, #tpu.memory_space<vmem>>, vector<2x16x16x4xf32>
    tpu.vector_store %arg8[%c0_159, %c0_160, %c0_161, %c0_162], %124 {strides = array<i32>} : memref<2x16x16x4xf32, #tpu.memory_space<vmem>>, vector<2x16x16x4xf32>,
    return
  }
}

</mosaic_0001>

<llo_original>
// kernel: residual_block.1
$region0: #{residual_block.1}
  #allocation0 [shape = 'u32[]', space=smem, size = 0x4, offset = 0x4, fixed_abs, tag = 'smem constant byte address 0x4 - core index']
  #allocation1 [shape = 'u32[144,128]{1,0:T(1,128)}', space=vmem, size = 0x12000, scoped, tag = 'internal scratch']
  #allocation2 [shape = 'f32[2,18,18,4]{3,2,1,0:T(8,128)}', space=vmem, size = 0x6c000, scoped, tag = 'scratch operand']
  #allocation3 [shape = 'f32[512,36]{1,0:T(8,128)}', space=vmem, size = 0x40000, scoped, tag = 'scratch operand']
  #allocation4 [shape = 'f32[1]{0:T(128)S(6)}', space=smem, size = 0x200, scoped, tag = 'scoped memory for residual_block.1']
  %s0 = inlined_call_operand.vmem [shape: f32[2,16,16,4], index: 0, kind: input, shape index: {}]
  %s1 = inlined_call_operand.vmem [shape: f32[36,4], index: 1, kind: input, shape index: {}]
  %s2 = inlined_call_operand.vmem [shape: f32[1,4], index: 2, kind: input, shape index: {}]
  %s3 = inlined_call_operand.vmem [shape: f32[1,4], index: 3, kind: input, shape index: {}]
  %s4 = inlined_call_operand.<no memory space> [shape: f32[1], index: 4, kind: input, shape index: {}]
  %s5 = inlined_call_operand.vmem [shape: f32[36,4], index: 5, kind: input, shape index: {}]
  %s6 = inlined_call_operand.vmem [shape: f32[1,4], index: 6, kind: input, shape index: {}]
  %s7 = inlined_call_operand.vmem [shape: f32[1,4], index: 7, kind: input, shape index: {}]
  %s8 = inlined_call_operand.vmem [shape: f32[2,16,16,4], index: 8, kind: output, shape index: {}]
  %s9 = sld [smem:[#allocation0]]
  $region42: #{residual_block.1} parent=0
    _
  %s11 = ssub.s32 1, %s9
  %s12 = scalar_select 0, %s11, %s9
  %13 = sst [smem:[#allocation4]] %s4
  // Predicated region
  $region2: #{residual_block.1} parent=0 // pred_check
    _
  $region3: #{residual_block.1} parent=0 // pred_check_branch
    %15 = sbr.rel (0) target = $region5
  $region4: #{residual_block.1} parent=0 // pred_region
    _
  $region5: #{residual_block.1} parent=0 // pred_fallthru
    _
  // Predicated region
  $region6: #{residual_block.1} parent=0 // pred_check
    _
  $region7: #{residual_block.1} parent=0 // pred_check_branch
    %17 = sbr.rel (0) target = $region9
  $region8: #{residual_block.1} parent=0 // pred_region
    _
  $region9: #{residual_block.1} parent=0 // pred_fallthru
    _
  // Predicated region
  $region10: #{residual_block.1} parent=0 // pred_check
    _
  $region11: #{residual_block.1} parent=0 // pred_check_branch
    %19 = sbr.rel (0) target = $region13
  $region12: #{residual_block.1} parent=0 // pred_region
    _
  $region13: #{residual_block.1} parent=0 // pred_fallthru
    _
  // Predicated region
  $region14: #{residual_block.1} parent=0 // pred_check
    _
  $region15: #{residual_block.1} parent=0 // pred_check_branch
    %21 = sbr.rel (0) target = $region17
  $region16: #{residual_block.1} parent=0 // pred_region
    _
  $region17: #{residual_block.1} parent=0 // pred_fallthru
    _
  // Predicated region
  $region18: #{residual_block.1} parent=0 // pred_check
    _
  $region19: #{residual_block.1} parent=0 // pred_check_branch
    %23 = sbr.rel (0) target = $region21
  $region20: #{residual_block.1} parent=0 // pred_region
    _
  $region21: #{residual_block.1} parent=0 // pred_fallthru
    _
  // Predicated region
  $region22: #{residual_block.1} parent=0 // pred_check
    _
  $region23: #{residual_block.1} parent=0 // pred_check_branch
    %25 = sbr.rel (0) target = $region25
  $region24: #{residual_block.1} parent=0 // pred_region
    _
  $region25: #{residual_block.1} parent=0 // pred_fallthru
    _
  // Predicated region
  $region26: #{residual_block.1} parent=0 // pred_check
    _
  $region27: #{residual_block.1} parent=0 // pred_check_branch
    %27 = sbr.rel (0) target = $region29
  $region28: #{residual_block.1} parent=0 // pred_region
    _
  $region29: #{residual_block.1} parent=0 // pred_fallthru
    _
  // Predicated region
  $region30: #{residual_block.1} parent=0 // pred_check
    _
  $region31: #{residual_block.1} parent=0 // pred_check_branch
    %29 = sbr.rel (0) target = $region33
  $region32: #{residual_block.1} parent=0 // pred_region
    _
  $region33: #{residual_block.1} parent=0 // pred_fallthru
    _
  %vm30 = vcmask 31744
  %31 = vst.msk [vmem:[#allocation2] sm:$0xff] %vm30, 0.0
  %32 = vst.msk [vmem:[#allocation2 + $0x8] sm:$0xff] %vm30, 0.0
  %vm33 = vcmask 25600
  %34 = vst.msk [vmem:[#allocation2 + $0x10] sm:$0x3] %vm33, 0.0
  %35 = vst.msk [vmem:[#allocation2 + $0x1b0] sm:$0xff] %vm30, 0.0
  %36 = vst.msk [vmem:[#allocation2 + $0x1b8] sm:$0xff] %vm30, 0.0
  %37 = vst.msk [vmem:[#allocation2 + $0x1c0] sm:$0x3] %vm33, 0.0
  %s38 = scalar_lea.vmem [#allocation2], 408
  %39 = vst.msk [vmem:[%s38] sm:$0xff] %vm30, 0.0
  %40 = vst.msk [vmem:[%s38 + $0x8] sm:$0xff] %vm30, 0.0
  %41 = vst.msk [vmem:[%s38 + $0x10] sm:$0x3] %vm33, 0.0
  %42 = vst.msk [vmem:[%s38 + $0x1b0] sm:$0xff] %vm30, 0.0
  %43 = vst.msk [vmem:[%s38 + $0x1b8] sm:$0xff] %vm30, 0.0
  %44 = vst.msk [vmem:[%s38 + $0x1c0] sm:$0x3] %vm33, 0.0
  %vm45 = vcmask 24576
  %46 = vst.msk [vmem:[#allocation2] sm:$0x1] %vm45, 0.0
  %47 = vst.msk [vmem:[#allocation2 + $0x18] sm:$0x1] %vm45, 0.0
  %48 = vst.msk [vmem:[#allocation2 + $0x30] sm:$0x1] %vm45, 0.0
  %49 = vst.msk [vmem:[#allocation2 + $0x48] sm:$0x1] %vm45, 0.0
  %50 = vst.msk [vmem:[#allocation2 + $0x60] sm:$0x1] %vm45, 0.0
  %51 = vst.msk [vmem:[#allocation2 + $0x78] sm:$0x1] %vm45, 0.0
  %52 = vst.msk [vmem:[#allocation2 + $0x90] sm:$0x1] %vm45, 0.0
  %53 = vst.msk [vmem:[#allocation2 + $0xa8] sm:$0x1] %vm45, 0.0
  %54 = vst.msk [vmem:[#allocation2 + $0xc0] sm:$0x1] %vm45, 0.0
  %55 = vst.msk [vmem:[#allocation2 + $0xd8] sm:$0x1] %vm45, 0.0
  %56 = vst.msk [vmem:[#allocation2 + $0xf0] sm:$0x1] %vm45, 0.0
  %57 = vst.msk [vmem:[#allocation2 + $0x108] sm:$0x1] %vm45, 0.0
  %58 = vst.msk [vmem:[#allocation2 + $0x120] sm:$0x1] %vm45, 0.0
  %59 = vst.msk [vmem:[#allocation2 + $0x138] sm:$0x1] %vm45, 0.0
  %60 = vst.msk [vmem:[#allocation2 + $0x150] sm:$0x1] %vm45, 0.0
  %61 = vst.msk [vmem:[#allocation2 + $0x168] sm:$0x1] %vm45, 0.0
  %62 = vst.msk [vmem:[#allocation2 + $0x180] sm:$0x1] %vm45, 0.0
  %63 = vst.msk [vmem:[#allocation2 + $0x198] sm:$0x1] %vm45, 0.0
  %64 = vst.msk [vmem:[#allocation2 + $0x1b0] sm:$0x1] %vm45, 0.0
  %65 = vst.msk [vmem:[#allocation2 + $0x1c8] sm:$0x1] %vm45, 0.0
  %66 = vst.msk [vmem:[#allocation2 + $0x1e0] sm:$0x1] %vm45, 0.0
  %67 = vst.msk [vmem:[#allocation2 + $0x1f8] sm:$0x1] %vm45, 0.0
  %68 = vst.msk [vmem:[#allocation2 + $0x210] sm:$0x1] %vm45, 0.0
  %69 = vst.msk [vmem:[#allocation2 + $0x228] sm:$0x1] %vm45, 0.0
  %70 = vst.msk [vmem:[#allocation2 + $0x240] sm:$0x1] %vm45, 0.0
  %71 = vst.msk [vmem:[#allocation2 + $0x258] sm:$0x1] %vm45, 0.0
  %72 = vst.msk [vmem:[#allocation2 + $0x270] sm:$0x1] %vm45, 0.0
  %73 = vst.msk [vmem:[#allocation2 + $0x288] sm:$0x1] %vm45, 0.0
  %74 = vst.msk [vmem:[#allocation2 + $0x2a0] sm:$0x1] %vm45, 0.0
  %75 = vst.msk [vmem:[#allocation2 + $0x2b8] sm:$0x1] %vm45, 0.0
  %76 = vst.msk [vmem:[#allocation2 + $0x2d0] sm:$0x1] %vm45, 0.0
  %77 = vst.msk [vmem:[#allocation2 + $0x2e8] sm:$0x1] %vm45, 0.0
  %78 = vst.msk [vmem:[#allocation2 + $0x300] sm:$0x1] %vm45, 0.0
  %79 = vst.msk [vmem:[#allocation2 + $0x318] sm:$0x1] %vm45, 0.0
  %80 = vst.msk [vmem:[#allocation2 + $0x330] sm:$0x1] %vm45, 0.0
  %81 = vst.msk [vmem:[#allocation2 + $0x348] sm:$0x1] %vm45, 0.0
  %82 = vst.msk [vmem:[#allocation2 + $0x11] sm:$0x1] %vm45, 0.0
  %83 = vst.msk [vmem:[#allocation2 + $0x29] sm:$0x1] %vm45, 0.0
  %84 = vst.msk [vmem:[#allocation2 + $0x41] sm:$0x1] %vm45, 0.0
  %85 = vst.msk [vmem:[#allocation2 + $0x59] sm:$0x1] %vm45, 0.0
  %86 = vst.msk [vmem:[#allocation2 + $0x71] sm:$0x1] %vm45, 0.0
  %87 = vst.msk [vmem:[#allocation2 + $0x89] sm:$0x1] %vm45, 0.0
  %88 = vst.msk [vmem:[#allocation2 + $0xa1] sm:$0x1] %vm45, 0.0
  %89 = vst.msk [vmem:[#allocation2 + $0xb9] sm:$0x1] %vm45, 0.0
  %90 = vst.msk [vmem:[#allocation2 + $0xd1] sm:$0x1] %vm45, 0.0
  %91 = vst.msk [vmem:[#allocation2 + $0xe9] sm:$0x1] %vm45, 0.0
  %92 = vst.msk [vmem:[#allocation2 + $0x101] sm:$0x1] %vm45, 0.0
  %93 = vst.msk [vmem:[#allocation2 + $0x119] sm:$0x1] %vm45, 0.0
  %94 = vst.msk [vmem:[#allocation2 + $0x131] sm:$0x1] %vm45, 0.0
  %95 = vst.msk [vmem:[#allocation2 + $0x149] sm:$0x1] %vm45, 0.0
  %96 = vst.msk [vmem:[#allocation2 + $0x161] sm:$0x1] %vm45, 0.0
  %97 = vst.msk [vmem:[#allocation2 + $0x179] sm:$0x1] %vm45, 0.0
  %98 = vst.msk [vmem:[#allocation2 + $0x191] sm:$0x1] %vm45, 0.0
  %99 = vst.msk [vmem:[#allocation2 + $0x1a9] sm:$0x1] %vm45, 0.0
  %100 = vst.msk [vmem:[#allocation2 + $0x1c1] sm:$0x1] %vm45, 0.0
  %101 = vst.msk [vmem:[#allocation2 + $0x1d9] sm:$0x1] %vm45, 0.0
  %102 = vst.msk [vmem:[#allocation2 + $0x1f1] sm:$0x1] %vm45, 0.0
  %103 = vst.msk [vmem:[#allocation2 + $0x209] sm:$0x1] %vm45, 0.0
  %104 = vst.msk [vmem:[#allocation2 + $0x221] sm:$0x1] %vm45, 0.0
  %105 = vst.msk [vmem:[#allocation2 + $0x239] sm:$0x1] %vm45, 0.0
  %106 = vst.msk [vmem:[#allocation2 + $0x251] sm:$0x1] %vm45, 0.0
  %107 = vst.msk [vmem:[#allocation2 + $0x269] sm:$0x1] %vm45, 0.0
  %108 = vst.msk [vmem:[#allocation2 + $0x281] sm:$0x1] %vm45, 0.0
  %109 = vst.msk [vmem:[#allocation2 + $0x299] sm:$0x1] %vm45, 0.0
  %110 = vst.msk [vmem:[#allocation2 + $0x2b1] sm:$0x1] %vm45, 0.0
  %111 = vst.msk [vmem:[#allocation2 + $0x2c9] sm:$0x1] %vm45, 0.0
  %112 = vst.msk [vmem:[#allocation2 + $0x2e1] sm:$0x1] %vm45, 0.0
  %113 = vst.msk [vmem:[#allocation2 + $0x2f9] sm:$0x1] %vm45, 0.0
  %114 = vst.msk [vmem:[#allocation2 + $0x311] sm:$0x1] %vm45, 0.0
  %115 = vst.msk [vmem:[#allocation2 + $0x329] sm:$0x1] %vm45, 0.0
  %116 = vst.msk [vmem:[#allocation2 + $0x341] sm:$0x1] %vm45, 0.0
  %117 = vst.msk [vmem:[#allocation2 + $0x359] sm:$0x1] %vm45, 0.0
  %v118 = vld [vmem:[%s0] sm:$0xff]
  %v119 = vld [vmem:[%s0 + $0x8] sm:$0xff]
  %v120 = vld [vmem:[%s0 + $0x10] sm:$0xff]
  %v121 = vld [vmem:[%s0 + $0x18] sm:$0xff]
  %v122 = vld [vmem:[%s0 + $0x20] sm:$0xff]
  %v123 = vld [vmem:[%s0 + $0x28] sm:$0xff]
  %v124 = vld [vmem:[%s0 + $0x30] sm:$0xff]
  %v125 = vld [vmem:[%s0 + $0x38] sm:$0xff]
  %v126 = vld [vmem:[%s0 + $0x40] sm:$0xff]
  %v127 = vld [vmem:[%s0 + $0x48] sm:$0xff]
  %v128 = vld [vmem:[%s0 + $0x50] sm:$0xff]
  %v129 = vld [vmem:[%s0 + $0x58] sm:$0xff]
  %v130 = vld [vmem:[%s0 + $0x60] sm:$0xff]
  %v131 = vld [vmem:[%s0 + $0x68] sm:$0xff]
  %v132 = vld [vmem:[%s0 + $0x70] sm:$0xff]
  %v133 = vld [vmem:[%s0 + $0x78] sm:$0xff]
  %v134 = vld [vmem:[%s0 + $0x80] sm:$0xff]
  %v135 = vld [vmem:[%s0 + $0x88] sm:$0xff]
  %v136 = vld [vmem:[%s0 + $0x90] sm:$0xff]
  %v137 = vld [vmem:[%s0 + $0x98] sm:$0xff]
  %v138 = vld [vmem:[%s0 + $0xa0] sm:$0xff]
  %v139 = vld [vmem:[%s0 + $0xa8] sm:$0xff]
  %v140 = vld [vmem:[%s0 + $0xb0] sm:$0xff]
  %v141 = vld [vmem:[%s0 + $0xb8] sm:$0xff]
  %v142 = vld [vmem:[%s0 + $0xc0] sm:$0xff]
  %v143 = vld [vmem:[%s0 + $0xc8] sm:$0xff]
  %v144 = vld [vmem:[%s0 + $0xd0] sm:$0xff]
  %v145 = vld [vmem:[%s0 + $0xd8] sm:$0xff]
  %v146 = vld [vmem:[%s0 + $0xe0] sm:$0xff]
  %v147 = vld [vmem:[%s0 + $0xe8] sm:$0xff]
  %v148 = vld [vmem:[%s0 + $0xf0] sm:$0xff]
  %v149 = vld [vmem:[%s0 + $0xf8] sm:$0xff]
  %v150 = vld [vmem:[%s0 + $0x100] sm:$0xff]
  %v151 = vld [vmem:[%s0 + $0x108] sm:$0xff]
  %v152 = vld [vmem:[%s0 + $0x110] sm:$0xff]
  %v153 = vld [vmem:[%s0 + $0x118] sm:$0xff]
  %v154 = vld [vmem:[%s0 + $0x120] sm:$0xff]
  %v155 = vld [vmem:[%s0 + $0x128] sm:$0xff]
  %v156 = vld [vmem:[%s0 + $0x130] sm:$0xff]
  %v157 = vld [vmem:[%s0 + $0x138] sm:$0xff]
  %v158 = vld [vmem:[%s0 + $0x140] sm:$0xff]
  %v159 = vld [vmem:[%s0 + $0x148] sm:$0xff]
  %v160 = vld [vmem:[%s0 + $0x150] sm:$0xff]
  %v161 = vld [vmem:[%s0 + $0x158] sm:$0xff]
  %v162 = vld [vmem:[%s0 + $0x160] sm:$0xff]
  %v163 = vld [vmem:[%s0 + $0x168] sm:$0xff]
  %v164 = vld [vmem:[%s0 + $0x170] sm:$0xff]
  %v165 = vld [vmem:[%s0 + $0x178] sm:$0xff]
  %v166 = vld [vmem:[%s0 + $0x180] sm:$0xff]
  %v167 = vld [vmem:[%s0 + $0x188] sm:$0xff]
  %v168 = vld [vmem:[%s0 + $0x190] sm:$0xff]
  %v169 = vld [vmem:[%s0 + $0x198] sm:$0xff]
  %v170 = vld [vmem:[%s0 + $0x1a0] sm:$0xff]
  %v171 = vld [vmem:[%s0 + $0x1a8] sm:$0xff]
  %v172 = vld [vmem:[%s0 + $0x1b0] sm:$0xff]
  %v173 = vld [vmem:[%s0 + $0x1b8] sm:$0xff]
  %v174 = vld [vmem:[%s0 + $0x1c0] sm:$0xff]
  %v175 = vld [vmem:[%s0 + $0x1c8] sm:$0xff]
  %v176 = vld [vmem:[%s0 + $0x1d0] sm:$0xff]
  %v177 = vld [vmem:[%s0 + $0x1d8] sm:$0xff]
  %v178 = vld [vmem:[%s0 + $0x1e0] sm:$0xff]
  %v179 = vld [vmem:[%s0 + $0x1e8] sm:$0xff]
  %v180 = vld [vmem:[%s0 + $0x1f0] sm:$0xff]
  %v181 = vld [vmem:[%s0 + $0x1f8] sm:$0xff]
  %s182 = scalar_lea.vmem [#allocation2], 24
  %183 = vst.msk [vmem:[%s182 + $0x1] sm:$0xff] %vm30, %v118
  %184 = vst.msk [vmem:[%s182 + $0x9] sm:$0xff] %vm30, %v119
  %185 = vst.msk [vmem:[%s182 + $0x19] sm:$0xff] %vm30, %v120
  %186 = vst.msk [vmem:[%s182 + $0x21] sm:$0xff] %vm30, %v121
  %187 = vst.msk [vmem:[%s182 + $0x31] sm:$0xff] %vm30, %v122
  %188 = vst.msk [vmem:[%s182 + $0x39] sm:$0xff] %vm30, %v123
  %189 = vst.msk [vmem:[%s182 + $0x49] sm:$0xff] %vm30, %v124
  %190 = vst.msk [vmem:[%s182 + $0x51] sm:$0xff] %vm30, %v125
  %191 = vst.msk [vmem:[%s182 + $0x61] sm:$0xff] %vm30, %v126
  %192 = vst.msk [vmem:[%s182 + $0x69] sm:$0xff] %vm30, %v127
  %193 = vst.msk [vmem:[%s182 + $0x79] sm:$0xff] %vm30, %v128
  %194 = vst.msk [vmem:[%s182 + $0x81] sm:$0xff] %vm30, %v129
  %195 = vst.msk [vmem:[%s182 + $0x91] sm:$0xff] %vm30, %v130
  %196 = vst.msk [vmem:[%s182 + $0x99] sm:$0xff] %vm30, %v131
  %197 = vst.msk [vmem:[%s182 + $0xa9] sm:$0xff] %vm30, %v132
  %198 = vst.msk [vmem:[%s182 + $0xb1] sm:$0xff] %vm30, %v133
  %199 = vst.msk [vmem:[%s182 + $0xc1] sm:$0xff] %vm30, %v134
  %200 = vst.msk [vmem:[%s182 + $0xc9] sm:$0xff] %vm30, %v135
  %201 = vst.msk [vmem:[%s182 + $0xd9] sm:$0xff] %vm30, %v136
  %202 = vst.msk [vmem:[%s182 + $0xe1] sm:$0xff] %vm30, %v137
  %203 = vst.msk [vmem:[%s182 + $0xf1] sm:$0xff] %vm30, %v138
  %204 = vst.msk [vmem:[%s182 + $0xf9] sm:$0xff] %vm30, %v139
  %205 = vst.msk [vmem:[%s182 + $0x109] sm:$0xff] %vm30, %v140
  %206 = vst.msk [vmem:[%s182 + $0x111] sm:$0xff] %vm30, %v141
  %207 = vst.msk [vmem:[%s182 + $0x121] sm:$0xff] %vm30, %v142
  %208 = vst.msk [vmem:[%s182 + $0x129] sm:$0xff] %vm30, %v143
  %209 = vst.msk [vmem:[%s182 + $0x139] sm:$0xff] %vm30, %v144
  %210 = vst.msk [vmem:[%s182 + $0x141] sm:$0xff] %vm30, %v145
  %211 = vst.msk [vmem:[%s182 + $0x151] sm:$0xff] %vm30, %v146
  %212 = vst.msk [vmem:[%s182 + $0x159] sm:$0xff] %vm30, %v147
  %213 = vst.msk [vmem:[%s182 + $0x169] sm:$0xff] %vm30, %v148
  %214 = vst.msk [vmem:[%s182 + $0x171] sm:$0xff] %vm30, %v149
  %215 = vst.msk [vmem:[%s182 + $0x1b1] sm:$0xff] %vm30, %v150
  %216 = vst.msk [vmem:[%s182 + $0x1b9] sm:$0xff] %vm30, %v151
  %217 = vst.msk [vmem:[%s182 + $0x1c9] sm:$0xff] %vm30, %v152
  %218 = vst.msk [vmem:[%s182 + $0x1d1] sm:$0xff] %vm30, %v153
  %219 = vst.msk [vmem:[%s182 + $0x1e1] sm:$0xff] %vm30, %v154
  %220 = vst.msk [vmem:[%s182 + $0x1e9] sm:$0xff] %vm30, %v155
  %221 = vst.msk [vmem:[%s182 + $0x1f9] sm:$0xff] %vm30, %v156
  %222 = vst.msk [vmem:[%s182 + $0x201] sm:$0xff] %vm30, %v157
  %223 = vst.msk [vmem:[%s182 + $0x211] sm:$0xff] %vm30, %v158
  %224 = vst.msk [vmem:[%s182 + $0x219] sm:$0xff] %vm30, %v159
  %225 = vst.msk [vmem:[%s182 + $0x229] sm:$0xff] %vm30, %v160
  %226 = vst.msk [vmem:[%s182 + $0x231] sm:$0xff] %vm30, %v161
  %227 = vst.msk [vmem:[%s182 + $0x241] sm:$0xff] %vm30, %v162
  %228 = vst.msk [vmem:[%s182 + $0x249] sm:$0xff] %vm30, %v163
  %229 = vst.msk [vmem:[%s182 + $0x259] sm:$0xff] %vm30, %v164
  %230 = vst.msk [vmem:[%s182 + $0x261] sm:$0xff] %vm30, %v165
  %231 = vst.msk [vmem:[%s182 + $0x271] sm:$0xff] %vm30, %v166
  %232 = vst.msk [vmem:[%s182 + $0x279] sm:$0xff] %vm30, %v167
  %233 = vst.msk [vmem:[%s182 + $0x289] sm:$0xff] %vm30, %v168
  %234 = vst.msk [vmem:[%s182 + $0x291] sm:$0xff] %vm30, %v169
  %235 = vst.msk [vmem:[%s182 + $0x2a1] sm:$0xff] %vm30, %v170
  %236 = vst.msk [vmem:[%s182 + $0x2a9] sm:$0xff] %vm30, %v171
  %237 = vst.msk [vmem:[%s182 + $0x2b9] sm:$0xff] %vm30, %v172
  %238 = vst.msk [vmem:[%s182 + $0x2c1] sm:$0xff] %vm30, %v173
  %239 = vst.msk [vmem:[%s182 + $0x2d1] sm:$0xff] %vm30, %v174
  %240 = vst.msk [vmem:[%s182 + $0x2d9] sm:$0xff] %vm30, %v175
  %241 = vst.msk [vmem:[%s182 + $0x2e9] sm:$0xff] %vm30, %v176
  %242 = vst.msk [vmem:[%s182 + $0x2f1] sm:$0xff] %vm30, %v177
  %243 = vst.msk [vmem:[%s182 + $0x301] sm:$0xff] %vm30, %v178
  %244 = vst.msk [vmem:[%s182 + $0x309] sm:$0xff] %vm30, %v179
  %245 = vst.msk [vmem:[%s182 + $0x319] sm:$0xff] %vm30, %v180
  %246 = vst.msk [vmem:[%s182 + $0x321] sm:$0xff] %vm30, %v181
  %v247 = vld [vmem:[#allocation2] sm:$0xff]
  %v248 = vld [vmem:[#allocation2 + $0x8] sm:$0xff]
  %v249 = vld [vmem:[#allocation2 + $0x18] sm:$0xff]
  %v250 = vld [vmem:[#allocation2 + $0x20] sm:$0xff]
  %v251 = vld [vmem:[#allocation2 + $0x30] sm:$0xff]
  %v252 = vld [vmem:[#allocation2 + $0x38] sm:$0xff]
  %v253 = vld [vmem:[#allocation2 + $0x48] sm:$0xff]
  %v254 = vld [vmem:[#allocation2 + $0x50] sm:$0xff]
  %v255 = vld [vmem:[#allocation2 + $0x60] sm:$0xff]
  %v256 = vld [vmem:[#allocation2 + $0x68] sm:$0xff]
  %v257 = vld [vmem:[#allocation2 + $0x78] sm:$0xff]
  %v258 = vld [vmem:[#allocation2 + $0x80] sm:$0xff]
  %v259 = vld [vmem:[#allocation2 + $0x90] sm:$0xff]
  %v260 = vld [vmem:[#allocation2 + $0x98] sm:$0xff]
  %v261 = vld [vmem:[#allocation2 + $0xa8] sm:$0xff]
  %v262 = vld [vmem:[#allocation2 + $0xb0] sm:$0xff]
  %v263 = vld [vmem:[#allocation2 + $0xc0] sm:$0xff]
  %v264 = vld [vmem:[#allocation2 + $0xc8] sm:$0xff]
  %v265 = vld [vmem:[#allocation2 + $0xd8] sm:$0xff]
  %v266 = vld [vmem:[#allocation2 + $0xe0] sm:$0xff]
  %v267 = vld [vmem:[#allocation2 + $0xf0] sm:$0xff]
  %v268 = vld [vmem:[#allocation2 + $0xf8] sm:$0xff]
  %v269 = vld [vmem:[#allocation2 + $0x108] sm:$0xff]
  %v270 = vld [vmem:[#allocation2 + $0x110] sm:$0xff]
  %v271 = vld [vmem:[#allocation2 + $0x120] sm:$0xff]
  %v272 = vld [vmem:[#allocation2 + $0x128] sm:$0xff]
  %v273 = vld [vmem:[#allocation2 + $0x138] sm:$0xff]
  %v274 = vld [vmem:[#allocation2 + $0x140] sm:$0xff]
  %v275 = vld [vmem:[#allocation2 + $0x150] sm:$0xff]
  %v276 = vld [vmem:[#allocation2 + $0x158] sm:$0xff]
  %v277 = vld [vmem:[#allocation2 + $0x168] sm:$0xff]
  %v278 = vld [vmem:[#allocation2 + $0x170] sm:$0xff]
  %v279 = vld [vmem:[#allocation2 + $0x1b0] sm:$0xff]
  %v280 = vld [vmem:[#allocation2 + $0x1b8] sm:$0xff]
  %v281 = vld [vmem:[#allocation2 + $0x1c8] sm:$0xff]
  %v282 = vld [vmem:[#allocation2 + $0x1d0] sm:$0xff]
  %v283 = vld [vmem:[#allocation2 + $0x1e0] sm:$0xff]
  %v284 = vld [vmem:[#allocation2 + $0x1e8] sm:$0xff]
  %v285 = vld [vmem:[#allocation2 + $0x1f8] sm:$0xff]
  %v286 = vld [vmem:[#allocation2 + $0x200] sm:$0xff]
  %v287 = vld [vmem:[#allocation2 + $0x210] sm:$0xff]
  %v288 = vld [vmem:[#allocation2 + $0x218] sm:$0xff]
  %v289 = vld [vmem:[#allocation2 + $0x228] sm:$0xff]
  %v290 = vld [vmem:[#allocation2 + $0x230] sm:$0xff]
  %v291 = vld [vmem:[#allocation2 + $0x240] sm:$0xff]
  %v292 = vld [vmem:[#allocation2 + $0x248] sm:$0xff]
  %v293 = vld [vmem:[#allocation2 + $0x258] sm:$0xff]
  %v294 = vld [vmem:[#allocation2 + $0x260] sm:$0xff]
  %v295 = vld [vmem:[#allocation2 + $0x270] sm:$0xff]
  %v296 = vld [vmem:[#allocation2 + $0x278] sm:$0xff]
  %v297 = vld [vmem:[#allocation2 + $0x288] sm:$0xff]
  %v298 = vld [vmem:[#allocation2 + $0x290] sm:$0xff]
  %v299 = vld [vmem:[#allocation2 + $0x2a0] sm:$0xff]
  %v300 = vld [vmem:[#allocation2 + $0x2a8] sm:$0xff]
  %v301 = vld [vmem:[#allocation2 + $0x2b8] sm:$0xff]
  %v302 = vld [vmem:[#allocation2 + $0x2c0] sm:$0xff]
  %v303 = vld [vmem:[#allocation2 + $0x2d0] sm:$0xff]
  %v304 = vld [vmem:[#allocation2 + $0x2d8] sm:$0xff]
  %v305 = vld [vmem:[#allocation2 + $0x2e8] sm:$0xff]
  %v306 = vld [vmem:[#allocation2 + $0x2f0] sm:$0xff]
  %v307 = vld [vmem:[#allocation2 + $0x300] sm:$0xff]
  %v308 = vld [vmem:[#allocation2 + $0x308] sm:$0xff]
  %v309 = vld [vmem:[#allocation2 + $0x318] sm:$0xff]
  %v310 = vld [vmem:[#allocation2 + $0x320] sm:$0xff]
  %311 = vst.msk [vmem:[#allocation3] sm:$0xff] %vm30, %v247
  %312 = vst.msk [vmem:[#allocation3 + $0x8] sm:$0xff] %vm30, %v248
  %313 = vst.msk [vmem:[#allocation3 + $0x10] sm:$0xff] %vm30, %v249
  %314 = vst.msk [vmem:[#allocation3 + $0x18] sm:$0xff] %vm30, %v250
  %315 = vst.msk [vmem:[#allocation3 + $0x20] sm:$0xff] %vm30, %v251
  %316 = vst.msk [vmem:[#allocation3 + $0x28] sm:$0xff] %vm30, %v252
  %317 = vst.msk [vmem:[#allocation3 + $0x30] sm:$0xff] %vm30, %v253
  %318 = vst.msk [vmem:[#allocation3 + $0x38] sm:$0xff] %vm30, %v254
  %319 = vst.msk [vmem:[#allocation3 + $0x40] sm:$0xff] %vm30, %v255
  %320 = vst.msk [vmem:[#allocation3 + $0x48] sm:$0xff] %vm30, %v256
  %321 = vst.msk [vmem:[#allocation3 + $0x50] sm:$0xff] %vm30, %v257
  %322 = vst.msk [vmem:[#allocation3 + $0x58] sm:$0xff] %vm30, %v258
  %323 = vst.msk [vmem:[#allocation3 + $0x60] sm:$0xff] %vm30, %v259
  %324 = vst.msk [vmem:[#allocation3 + $0x68] sm:$0xff] %vm30, %v260
  %325 = vst.msk [vmem:[#allocation3 + $0x70] sm:$0xff] %vm30, %v261
  %326 = vst.msk [vmem:[#allocation3 + $0x78] sm:$0xff] %vm30, %v262
  %327 = vst.msk [vmem:[#allocation3 + $0x80] sm:$0xff] %vm30, %v263
  %328 = vst.msk [vmem:[#allocation3 + $0x88] sm:$0xff] %vm30, %v264
  %329 = vst.msk [vmem:[#allocation3 + $0x90] sm:$0xff] %vm30, %v265
  %330 = vst.msk [vmem:[#allocation3 + $0x98] sm:$0xff] %vm30, %v266
  %331 = vst.msk [vmem:[#allocation3 + $0xa0] sm:$0xff] %vm30, %v267
  %332 = vst.msk [vmem:[#allocation3 + $0xa8] sm:$0xff] %vm30, %v268
  %333 = vst.msk [vmem:[#allocation3 + $0xb0] sm:$0xff] %vm30, %v269
  %334 = vst.msk [vmem:[#allocation3 + $0xb8] sm:$0xff] %vm30, %v270
  %335 = vst.msk [vmem:[#allocation3 + $0xc0] sm:$0xff] %vm30, %v271
  %336 = vst.msk [vmem:[#allocation3 + $0xc8] sm:$0xff] %vm30, %v272
  %337 = vst.msk [vmem:[#allocation3 + $0xd0] sm:$0xff] %vm30, %v273
  %338 = vst.msk [vmem:[#allocation3 + $0xd8] sm:$0xff] %vm30, %v274
  %339 = vst.msk [vmem:[#allocation3 + $0xe0] sm:$0xff] %vm30, %v275
  %340 = vst.msk [vmem:[#allocation3 + $0xe8] sm:$0xff] %vm30, %v276
  %341 = vst.msk [vmem:[#allocation3 + $0xf0] sm:$0xff] %vm30, %v277
  %342 = vst.msk [vmem:[#allocation3 + $0xf8] sm:$0xff] %vm30, %v278
  %343 = vst.msk [vmem:[#allocation3 + $0x100] sm:$0xff] %vm30, %v279
  %344 = vst.msk [vmem:[#allocation3 + $0x108] sm:$0xff] %vm30, %v280
  %345 = vst.msk [vmem:[#allocation3 + $0x110] sm:$0xff] %vm30, %v281
  %346 = vst.msk [vmem:[#allocation3 + $0x118] sm:$0xff] %vm30, %v282
  %347 = vst.msk [vmem:[#allocation3 + $0x120] sm:$0xff] %vm30, %v283
  %348 = vst.msk [vmem:[#allocation3 + $0x128] sm:$0xff] %vm30, %v284
  %349 = vst.msk [vmem:[#allocation3 + $0x130] sm:$0xff] %vm30, %v285
  %350 = vst.msk [vmem:[#allocation3 + $0x138] sm:$0xff] %vm30, %v286
  %351 = vst.msk [vmem:[#allocation3 + $0x140] sm:$0xff] %vm30, %v287
  %352 = vst.msk [vmem:[#allocation3 + $0x148] sm:$0xff] %vm30, %v288
  %353 = vst.msk [vmem:[#allocation3 + $0x150] sm:$0xff] %vm30, %v289
  %354 = vst.msk [vmem:[#allocation3 + $0x158] sm:$0xff] %vm30, %v290
  %355 = vst.msk [vmem:[#allocation3 + $0x160] sm:$0xff] %vm30, %v291
  %356 = vst.msk [vmem:[#allocation3 + $0x168] sm:$0xff] %vm30, %v292
  %357 = vst.msk [vmem:[#allocation3 + $0x170] sm:$0xff] %vm30, %v293
  %358 = vst.msk [vmem:[#allocation3 + $0x178] sm:$0xff] %vm30, %v294
  %359 = vst.msk [vmem:[#allocation3 + $0x180] sm:$0xff] %vm30, %v295
  %360 = vst.msk [vmem:[#allocation3 + $0x188] sm:$0xff] %vm30, %v296
  %361 = vst.msk [vmem:[#allocation3 + $0x190] sm:$0xff] %vm30, %v297
  %362 = vst.msk [vmem:[#allocation3 + $0x198] sm:$0xff] %vm30, %v298
  %363 = vst.msk [vmem:[#allocation3 + $0x1a0] sm:$0xff] %vm30, %v299
  %364 = vst.msk [vmem:[#allocation3 + $0x1a8] sm:$0xff] %vm30, %v300
  %365 = vst.msk [vmem:[#allocation3 + $0x1b0] sm:$0xff] %vm30, %v301
  %366 = vst.msk [vmem:[#allocation3 + $0x1b8] sm:$0xff] %vm30, %v302
  %367 = vst.msk [vmem:[#allocation3 + $0x1c0] sm:$0xff] %vm30, %v303
  %368 = vst.msk [vmem:[#allocation3 + $0x1c8] sm:$0xff] %vm30, %v304
  %369 = vst.msk [vmem:[#allocation3 + $0x1d0] sm:$0xff] %vm30, %v305
  %370 = vst.msk [vmem:[#allocation3 + $0x1d8] sm:$0xff] %vm30, %v306
  %371 = vst.msk [vmem:[#allocation3 + $0x1e0] sm:$0xff] %vm30, %v307
  %372 = vst.msk [vmem:[#allocation3 + $0x1e8] sm:$0xff] %vm30, %v308
  %373 = vst.msk [vmem:[#allocation3 + $0x1f0] sm:$0xff] %vm30, %v309
  %374 = vst.msk [vmem:[#allocation3 + $0x1f8] sm:$0xff] %vm30, %v310
  %v375 = vld [vmem:[#allocation2 + $0x1] sm:$0xff]
  %v376 = vld [vmem:[#allocation2 + $0x9] sm:$0xff]
  %v377 = vld [vmem:[#allocation2 + $0x19] sm:$0xff]
  %v378 = vld [vmem:[#allocation2 + $0x21] sm:$0xff]
  %v379 = vld [vmem:[#allocation2 + $0x31] sm:$0xff]
  %v380 = vld [vmem:[#allocation2 + $0x39] sm:$0xff]
  %v381 = vld [vmem:[#allocation2 + $0x49] sm:$0xff]
  %v382 = vld [vmem:[#allocation2 + $0x51] sm:$0xff]
  %v383 = vld [vmem:[#allocation2 + $0x61] sm:$0xff]
  %v384 = vld [vmem:[#allocation2 + $0x69] sm:$0xff]
  %v385 = vld [vmem:[#allocation2 + $0x79] sm:$0xff]
  %v386 = vld [vmem:[#allocation2 + $0x81] sm:$0xff]
  %v387 = vld [vmem:[#allocation2 + $0x91] sm:$0xff]
  %v388 = vld [vmem:[#allocation2 + $0x99] sm:$0xff]
  %v389 = vld [vmem:[#allocation2 + $0xa9] sm:$0xff]
  %v390 = vld [vmem:[#allocation2 + $0xb1] sm:$0xff]
  %v391 = vld [vmem:[#allocation2 + $0xc1] sm:$0xff]
  %v392 = vld [vmem:[#allocation2 + $0xc9] sm:$0xff]
  %v393 = vld [vmem:[#allocation2 + $0xd9] sm:$0xff]
  %v394 = vld [vmem:[#allocation2 + $0xe1] sm:$0xff]
  %v395 = vld [vmem:[#allocation2 + $0xf1] sm:$0xff]
  %v396 = vld [vmem:[#allocation2 + $0xf9] sm:$0xff]
  %v397 = vld [vmem:[#allocation2 + $0x109] sm:$0xff]
  %v398 = vld [vmem:[#allocation2 + $0x111] sm:$0xff]
  %v399 = vld [vmem:[#allocation2 + $0x121] sm:$0xff]
  %v400 = vld [vmem:[#allocation2 + $0x129] sm:$0xff]
  %v401 = vld [vmem:[#allocation2 + $0x139] sm:$0xff]
  %v402 = vld [vmem:[#allocation2 + $0x141] sm:$0xff]
  %v403 = vld [vmem:[#allocation2 + $0x151] sm:$0xff]
  %v404 = vld [vmem:[#allocation2 + $0x159] sm:$0xff]
  %v405 = vld [vmem:[#allocation2 + $0x169] sm:$0xff]
  %v406 = vld [vmem:[#allocation2 + $0x171] sm:$0xff]
  %v407 = vld [vmem:[#allocation2 + $0x1b1] sm:$0xff]
  %v408 = vld [vmem:[#allocation2 + $0x1b9] sm:$0xff]
  %v409 = vld [vmem:[#allocation2 + $0x1c9] sm:$0xff]
  %v410 = vld [vmem:[#allocation2 + $0x1d1] sm:$0xff]
  %v411 = vld [vmem:[#allocation2 + $0x1e1] sm:$0xff]
  %v412 = vld [vmem:[#allocation2 + $0x1e9] sm:$0xff]
  %v413 = vld [vmem:[#allocation2 + $0x1f9] sm:$0xff]
  %v414 = vld [vmem:[#allocation2 + $0x201] sm:$0xff]
  %v415 = vld [vmem:[#allocation2 + $0x211] sm:$0xff]
  %v416 = vld [vmem:[#allocation2 + $0x219] sm:$0xff]
  %v417 = vld [vmem:[#allocation2 + $0x229] sm:$0xff]
  %v418 = vld [vmem:[#allocation2 + $0x231] sm:$0xff]
  %v419 = vld [vmem:[#allocation2 + $0x241] sm:$0xff]
  %v420 = vld [vmem:[#allocation2 + $0x249] sm:$0xff]
  %v421 = vld [vmem:[#allocation2 + $0x259] sm:$0xff]
  %v422 = vld [vmem:[#allocation2 + $0x261] sm:$0xff]
  %v423 = vld [vmem:[#allocation2 + $0x271] sm:$0xff]
  %v424 = vld [vmem:[#allocation2 + $0x279] sm:$0xff]
  %v425 = vld [vmem:[#allocation2 + $0x289] sm:$0xff]
  %v426 = vld [vmem:[#allocation2 + $0x291] sm:$0xff]
  %v427 = vld [vmem:[#allocation2 + $0x2a1] sm:$0xff]
  %v428 = vld [vmem:[#allocation2 + $0x2a9] sm:$0xff]
  %v429 = vld [vmem:[#allocation2 + $0x2b9] sm:$0xff]
  %v430 = vld [vmem:[#allocation2 + $0x2c1] sm:$0xff]
  %v431 = vld [vmem:[#allocation2 + $0x2d1] sm:$0xff]
  %v432 = vld [vmem:[#allocation2 + $0x2d9] sm:$0xff]
  %v433 = vld [vmem:[#allocation2 + $0x2e9] sm:$0xff]
  %v434 = vld [vmem:[#allocation2 + $0x2f1] sm:$0xff]
  %v435 = vld [vmem:[#allocation2 + $0x301] sm:$0xff]
  %v436 = vld [vmem:[#allocation2 + $0x309] sm:$0xff]
  %v437 = vld [vmem:[#allocation2 + $0x319] sm:$0xff]
  %v438 = vld [vmem:[#allocation2 + $0x321] sm:$0xff]
  %503 = vrot.lane.b32.xlu0 %v375, 4
  %v504 = vpop.permute.xlu0 %503
  %505 = vrot.lane.b32.xlu0 %v376, 4
  %v506 = vpop.permute.xlu0 %505
  %507 = vrot.lane.b32.xlu0 %v377, 4
  %v508 = vpop.permute.xlu0 %507
  %509 = vrot.lane.b32.xlu0 %v378, 4
  %v510 = vpop.permute.xlu0 %509
  %511 = vrot.lane.b32.xlu0 %v379, 4
  %v512 = vpop.permute.xlu0 %511
  %513 = vrot.lane.b32.xlu0 %v380, 4
  %v514 = vpop.permute.xlu0 %513
  %515 = vrot.lane.b32.xlu0 %v381, 4
  %v516 = vpop.permute.xlu0 %515
  %517 = vrot.lane.b32.xlu0 %v382, 4
  %v518 = vpop.permute.xlu0 %517
  %519 = vrot.lane.b32.xlu0 %v383, 4
  %v520 = vpop.permute.xlu0 %519
  %521 = vrot.lane.b32.xlu0 %v384, 4
  %v522 = vpop.permute.xlu0 %521
  %523 = vrot.lane.b32.xlu0 %v385, 4
  %v524 = vpop.permute.xlu0 %523
  %525 = vrot.lane.b32.xlu0 %v386, 4
  %v526 = vpop.permute.xlu0 %525
  %527 = vrot.lane.b32.xlu0 %v387, 4
  %v528 = vpop.permute.xlu0 %527
  %529 = vrot.lane.b32.xlu0 %v388, 4
  %v530 = vpop.permute.xlu0 %529
  %531 = vrot.lane.b32.xlu0 %v389, 4
  %v532 = vpop.permute.xlu0 %531
  %533 = vrot.lane.b32.xlu0 %v390, 4
  %v534 = vpop.permute.xlu0 %533
  %535 = vrot.lane.b32.xlu0 %v391, 4
  %v536 = vpop.permute.xlu0 %535
  %537 = vrot.lane.b32.xlu0 %v392, 4
  %v538 = vpop.permute.xlu0 %537
  %539 = vrot.lane.b32.xlu0 %v393, 4
  %v540 = vpop.permute.xlu0 %539
  %541 = vrot.lane.b32.xlu0 %v394, 4
  %v542 = vpop.permute.xlu0 %541
  %543 = vrot.lane.b32.xlu0 %v395, 4
  %v544 = vpop.permute.xlu0 %543
  %545 = vrot.lane.b32.xlu0 %v396, 4
  %v546 = vpop.permute.xlu0 %545
  %547 = vrot.lane.b32.xlu0 %v397, 4
  %v548 = vpop.permute.xlu0 %547
  %549 = vrot.lane.b32.xlu0 %v398, 4
  %v550 = vpop.permute.xlu0 %549
  %551 = vrot.lane.b32.xlu0 %v399, 4
  %v552 = vpop.permute.xlu0 %551
  %553 = vrot.lane.b32.xlu0 %v400, 4
  %v554 = vpop.permute.xlu0 %553
  %555 = vrot.lane.b32.xlu0 %v401, 4
  %v556 = vpop.permute.xlu0 %555
  %557 = vrot.lane.b32.xlu0 %v402, 4
  %v558 = vpop.permute.xlu0 %557
  %559 = vrot.lane.b32.xlu0 %v403, 4
  %v560 = vpop.permute.xlu0 %559
  %561 = vrot.lane.b32.xlu0 %v404, 4
  %v562 = vpop.permute.xlu0 %561
  %563 = vrot.lane.b32.xlu0 %v405, 4
  %v564 = vpop.permute.xlu0 %563
  %565 = vrot.lane.b32.xlu0 %v406, 4
  %v566 = vpop.permute.xlu0 %565
  %567 = vrot.lane.b32.xlu0 %v407, 4
  %v568 = vpop.permute.xlu0 %567
  %569 = vrot.lane.b32.xlu0 %v408, 4
  %v570 = vpop.permute.xlu0 %569
  %571 = vrot.lane.b32.xlu0 %v409, 4
  %v572 = vpop.permute.xlu0 %571
  %573 = vrot.lane.b32.xlu0 %v410, 4
  %v574 = vpop.permute.xlu0 %573
  %575 = vrot.lane.b32.xlu0 %v411, 4
  %v576 = vpop.permute.xlu0 %575
  %577 = vrot.lane.b32.xlu0 %v412, 4
  %v578 = vpop.permute.xlu0 %577
  %579 = vrot.lane.b32.xlu0 %v413, 4
  %v580 = vpop.permute.xlu0 %579
  %581 = vrot.lane.b32.xlu0 %v414, 4
  %v582 = vpop.permute.xlu0 %581
  %583 = vrot.lane.b32.xlu0 %v415, 4
  %v584 = vpop.permute.xlu0 %583
  %585 = vrot.lane.b32.xlu0 %v416, 4
  %v586 = vpop.permute.xlu0 %585
  %587 = vrot.lane.b32.xlu0 %v417, 4
  %v588 = vpop.permute.xlu0 %587
  %589 = vrot.lane.b32.xlu0 %v418, 4
  %v590 = vpop.permute.xlu0 %589
  %591 = vrot.lane.b32.xlu0 %v419, 4
  %v592 = vpop.permute.xlu0 %591
  %593 = vrot.lane.b32.xlu0 %v420, 4
  %v594 = vpop.permute.xlu0 %593
  %595 = vrot.lane.b32.xlu0 %v421, 4
  %v596 = vpop.permute.xlu0 %595
  %597 = vrot.lane.b32.xlu0 %v422, 4
  %v598 = vpop.permute.xlu0 %597
  %599 = vrot.lane.b32.xlu0 %v423, 4
  %v600 = vpop.permute.xlu0 %599
  %601 = vrot.lane.b32.xlu0 %v424, 4
  %v602 = vpop.permute.xlu0 %601
  %603 = vrot.lane.b32.xlu0 %v425, 4
  %v604 = vpop.permute.xlu0 %603
  %605 = vrot.lane.b32.xlu0 %v426, 4
  %v606 = vpop.permute.xlu0 %605
  %607 = vrot.lane.b32.xlu0 %v427, 4
  %v608 = vpop.permute.xlu0 %607
  %609 = vrot.lane.b32.xlu0 %v428, 4
  %v610 = vpop.permute.xlu0 %609
  %611 = vrot.lane.b32.xlu0 %v429, 4
  %v612 = vpop.permute.xlu0 %611
  %613 = vrot.lane.b32.xlu0 %v430, 4
  %v614 = vpop.permute.xlu0 %613
  %615 = vrot.lane.b32.xlu0 %v431, 4
  %v616 = vpop.permute.xlu0 %615
  %617 = vrot.lane.b32.xlu0 %v432, 4
  %v618 = vpop.permute.xlu0 %617
  %619 = vrot.lane.b32.xlu0 %v433, 4
  %v620 = vpop.permute.xlu0 %619
  %621 = vrot.lane.b32.xlu0 %v434, 4
  %v622 = vpop.permute.xlu0 %621
  %623 = vrot.lane.b32.xlu0 %v435, 4
  %v624 = vpop.permute.xlu0 %623
  %625 = vrot.lane.b32.xlu0 %v436, 4
  %v626 = vpop.permute.xlu0 %625
  %627 = vrot.lane.b32.xlu0 %v437, 4
  %v628 = vpop.permute.xlu0 %627
  %629 = vrot.lane.b32.xlu0 %v438, 4
  %v630 = vpop.permute.xlu0 %629
  %vm695 = vcmask 64544
  %696 = vst.msk [vmem:[#allocation3] sm:$0xff] %vm695, %v504
  %697 = vst.msk [vmem:[#allocation3 + $0x8] sm:$0xff] %vm695, %v506
  %698 = vst.msk [vmem:[#allocation3 + $0x10] sm:$0xff] %vm695, %v508
  %699 = vst.msk [vmem:[#allocation3 + $0x18] sm:$0xff] %vm695, %v510
  %700 = vst.msk [vmem:[#allocation3 + $0x20] sm:$0xff] %vm695, %v512
  %701 = vst.msk [vmem:[#allocation3 + $0x28] sm:$0xff] %vm695, %v514
  %702 = vst.msk [vmem:[#allocation3 + $0x30] sm:$0xff] %vm695, %v516
  %703 = vst.msk [vmem:[#allocation3 + $0x38] sm:$0xff] %vm695, %v518
  %704 = vst.msk [vmem:[#allocation3 + $0x40] sm:$0xff] %vm695, %v520
  %705 = vst.msk [vmem:[#allocation3 + $0x48] sm:$0xff] %vm695, %v522
  %706 = vst.msk [vmem:[#allocation3 + $0x50] sm:$0xff] %vm695, %v524
  %707 = vst.msk [vmem:[#allocation3 + $0x58] sm:$0xff] %vm695, %v526
  %708 = vst.msk [vmem:[#allocation3 + $0x60] sm:$0xff] %vm695, %v528
  %709 = vst.msk [vmem:[#allocation3 + $0x68] sm:$0xff] %vm695, %v530
  %710 = vst.msk [vmem:[#allocation3 + $0x70] sm:$0xff] %vm695, %v532
  %711 = vst.msk [vmem:[#allocation3 + $0x78] sm:$0xff] %vm695, %v534
  %712 = vst.msk [vmem:[#allocation3 + $0x80] sm:$0xff] %vm695, %v536
  %713 = vst.msk [vmem:[#allocation3 + $0x88] sm:$0xff] %vm695, %v538
  %714 = vst.msk [vmem:[#allocation3 + $0x90] sm:$0xff] %vm695, %v540
  %715 = vst.msk [vmem:[#allocation3 + $0x98] sm:$0xff] %vm695, %v542
  %716 = vst.msk [vmem:[#allocation3 + $0xa0] sm:$0xff] %vm695, %v544
  %717 = vst.msk [vmem:[#allocation3 + $0xa8] sm:$0xff] %vm695, %v546
  %718 = vst.msk [vmem:[#allocation3 + $0xb0] sm:$0xff] %vm695, %v548
  %719 = vst.msk [vmem:[#allocation3 + $0xb8] sm:$0xff] %vm695, %v550
  %720 = vst.msk [vmem:[#allocation3 + $0xc0] sm:$0xff] %vm695, %v552
  %721 = vst.msk [vmem:[#allocation3 + $0xc8] sm:$0xff] %vm695, %v554
  %722 = vst.msk [vmem:[#allocation3 + $0xd0] sm:$0xff] %vm695, %v556
  %723 = vst.msk [vmem:[#allocation3 + $0xd8] sm:$0xff] %vm695, %v558
  %724 = vst.msk [vmem:[#allocation3 + $0xe0] sm:$0xff] %vm695, %v560
  %725 = vst.msk [vmem:[#allocation3 + $0xe8] sm:$0xff] %vm695, %v562
  %726 = vst.msk [vmem:[#allocation3 + $0xf0] sm:$0xff] %vm695, %v564
  %727 = vst.msk [vmem:[#allocation3 + $0xf8] sm:$0xff] %vm695, %v566
  %728 = vst.msk [vmem:[#allocation3 + $0x100] sm:$0xff] %vm695, %v568
  %729 = vst.msk [vmem:[#allocation3 + $0x108] sm:$0xff] %vm695, %v570
  %730 = vst.msk [vmem:[#allocation3 + $0x110] sm:$0xff] %vm695, %v572
  %731 = vst.msk [vmem:[#allocation3 + $0x118] sm:$0xff] %vm695, %v574
  %732 = vst.msk [vmem:[#allocation3 + $0x120] sm:$0xff] %vm695, %v576
  %733 = vst.msk [vmem:[#allocation3 + $0x128] sm:$0xff] %vm695, %v578
  %734 = vst.msk [vmem:[#allocation3 + $0x130] sm:$0xff] %vm695, %v580
  %735 = vst.msk [vmem:[#allocation3 + $0x138] sm:$0xff] %vm695, %v582
  %736 = vst.msk [vmem:[#allocation3 + $0x140] sm:$0xff] %vm695, %v584
  %737 = vst.msk [vmem:[#allocation3 + $0x148] sm:$0xff] %vm695, %v586
  %738 = vst.msk [vmem:[#allocation3 + $0x150] sm:$0xff] %vm695, %v588
  %739 = vst.msk [vmem:[#allocation3 + $0x158] sm:$0xff] %vm695, %v590
  %740 = vst.msk [vmem:[#allocation3 + $0x160] sm:$0xff] %vm695, %v592
  %741 = vst.msk [vmem:[#allocation3 + $0x168] sm:$0xff] %vm695, %v594
  %742 = vst.msk [vmem:[#allocation3 + $0x170] sm:$0xff] %vm695, %v596
  %743 = vst.msk [vmem:[#allocation3 + $0x178] sm:$0xff] %vm695, %v598
  %744 = vst.msk [vmem:[#allocation3 + $0x180] sm:$0xff] %vm695, %v600
  %745 = vst.msk [vmem:[#allocation3 + $0x188] sm:$0xff] %vm695, %v602
  %746 = vst.msk [vmem:[#allocation3 + $0x190] sm:$0xff] %vm695, %v604
  %747 = vst.msk [vmem:[#allocation3 + $0x198] sm:$0xff] %vm695, %v606
  %748 = vst.msk [vmem:[#allocation3 + $0x1a0] sm:$0xff] %vm695, %v608
  %749 = vst.msk [vmem:[#allocation3 + $0x1a8] sm:$0xff] %vm695, %v610
  %750 = vst.msk [vmem:[#allocation3 + $0x1b0] sm:$0xff] %vm695, %v612
  %751 = vst.msk [vmem:[#allocation3 + $0x1b8] sm:$0xff] %vm695, %v614
  %752 = vst.msk [vmem:[#allocation3 + $0x1c0] sm:$0xff] %vm695, %v616
  %753 = vst.msk [vmem:[#allocation3 + $0x1c8] sm:$0xff] %vm695, %v618
  %754 = vst.msk [vmem:[#allocation3 + $0x1d0] sm:$0xff] %vm695, %v620
  %755 = vst.msk [vmem:[#allocation3 + $0x1d8] sm:$0xff] %vm695, %v622
  %756 = vst.msk [vmem:[#allocation3 + $0x1e0] sm:$0xff] %vm695, %v624
  %757 = vst.msk [vmem:[#allocation3 + $0x1e8] sm:$0xff] %vm695, %v626
  %758 = vst.msk [vmem:[#allocation3 + $0x1f0] sm:$0xff] %vm695, %v628
  %759 = vst.msk [vmem:[#allocation3 + $0x1f8] sm:$0xff] %vm695, %v630
  %v760 = vld [vmem:[#allocation2 + $0x2] sm:$0xff]
  %v761 = vld [vmem:[#allocation2 + $0xa] sm:$0xff]
  %v762 = vld [vmem:[#allocation2 + $0x1a] sm:$0xff]
  %v763 = vld [vmem:[#allocation2 + $0x22] sm:$0xff]
  %v764 = vld [vmem:[#allocation2 + $0x32] sm:$0xff]
  %v765 = vld [vmem:[#allocation2 + $0x3a] sm:$0xff]
  %v766 = vld [vmem:[#allocation2 + $0x4a] sm:$0xff]
  %v767 = vld [vmem:[#allocation2 + $0x52] sm:$0xff]
  %v768 = vld [vmem:[#allocation2 + $0x62] sm:$0xff]
  %v769 = vld [vmem:[#allocation2 + $0x6a] sm:$0xff]
  %v770 = vld [vmem:[#allocation2 + $0x7a] sm:$0xff]
  %v771 = vld [vmem:[#allocation2 + $0x82] sm:$0xff]
  %v772 = vld [vmem:[#allocation2 + $0x92] sm:$0xff]
  %v773 = vld [vmem:[#allocation2 + $0x9a] sm:$0xff]
  %v774 = vld [vmem:[#allocation2 + $0xaa] sm:$0xff]
  %v775 = vld [vmem:[#allocation2 + $0xb2] sm:$0xff]
  %v776 = vld [vmem:[#allocation2 + $0xc2] sm:$0xff]
  %v777 = vld [vmem:[#allocation2 + $0xca] sm:$0xff]
  %v778 = vld [vmem:[#allocation2 + $0xda] sm:$0xff]
  %v779 = vld [vmem:[#allocation2 + $0xe2] sm:$0xff]
  %v780 = vld [vmem:[#allocation2 + $0xf2] sm:$0xff]
  %v781 = vld [vmem:[#allocation2 + $0xfa] sm:$0xff]
  %v782 = vld [vmem:[#allocation2 + $0x10a] sm:$0xff]
  %v783 = vld [vmem:[#allocation2 + $0x112] sm:$0xff]
  %v784 = vld [vmem:[#allocation2 + $0x122] sm:$0xff]
  %v785 = vld [vmem:[#allocation2 + $0x12a] sm:$0xff]
  %v786 = vld [vmem:[#allocation2 + $0x13a] sm:$0xff]
  %v787 = vld [vmem:[#allocation2 + $0x142] sm:$0xff]
  %v788 = vld [vmem:[#allocation2 + $0x152] sm:$0xff]
  %v789 = vld [vmem:[#allocation2 + $0x15a] sm:$0xff]
  %v790 = vld [vmem:[#allocation2 + $0x16a] sm:$0xff]
  %v791 = vld [vmem:[#allocation2 + $0x172] sm:$0xff]
  %v792 = vld [vmem:[#allocation2 + $0x1b2] sm:$0xff]
  %v793 = vld [vmem:[#allocation2 + $0x1ba] sm:$0xff]
  %v794 = vld [vmem:[#allocation2 + $0x1ca] sm:$0xff]
  %v795 = vld [vmem:[#allocation2 + $0x1d2] sm:$0xff]
  %v796 = vld [vmem:[#allocation2 + $0x1e2] sm:$0xff]
  %v797 = vld [vmem:[#allocation2 + $0x1ea] sm:$0xff]
  %v798 = vld [vmem:[#allocation2 + $0x1fa] sm:$0xff]
  %v799 = vld [vmem:[#allocation2 + $0x202] sm:$0xff]
  %v800 = vld [vmem:[#allocation2 + $0x212] sm:$0xff]
  %v801 = vld [vmem:[#allocation2 + $0x21a] sm:$0xff]
  %v802 = vld [vmem:[#allocation2 + $0x22a] sm:$0xff]
  %v803 = vld [vmem:[#allocation2 + $0x232] sm:$0xff]
  %v804 = vld [vmem:[#allocation2 + $0x242] sm:$0xff]
  %v805 = vld [vmem:[#allocation2 + $0x24a] sm:$0xff]
  %v806 = vld [vmem:[#allocation2 + $0x25a] sm:$0xff]
  %v807 = vld [vmem:[#allocation2 + $0x262] sm:$0xff]
  %v808 = vld [vmem:[#allocation2 + $0x272] sm:$0xff]
  %v809 = vld [vmem:[#allocation2 + $0x27a] sm:$0xff]
  %v810 = vld [vmem:[#allocation2 + $0x28a] sm:$0xff]
  %v811 = vld [vmem:[#allocation2 + $0x292] sm:$0xff]
  %v812 = vld [vmem:[#allocation2 + $0x2a2] sm:$0xff]
  %v813 = vld [vmem:[#allocation2 + $0x2aa] sm:$0xff]
  %v814 = vld [vmem:[#allocation2 + $0x2ba] sm:$0xff]
  %v815 = vld [vmem:[#allocation2 + $0x2c2] sm:$0xff]
  %v816 = vld [vmem:[#allocation2 + $0x2d2] sm:$0xff]
  %v817 = vld [vmem:[#allocation2 + $0x2da] sm:$0xff]
  %v818 = vld [vmem:[#allocation2 + $0x2ea] sm:$0xff]
  %v819 = vld [vmem:[#allocation2 + $0x2f2] sm:$0xff]
  %v820 = vld [vmem:[#allocation2 + $0x302] sm:$0xff]
  %v821 = vld [vmem:[#allocation2 + $0x30a] sm:$0xff]
  %v822 = vld [vmem:[#allocation2 + $0x31a] sm:$0xff]
  %v823 = vld [vmem:[#allocation2 + $0x322] sm:$0xff]
  %888 = vrot.lane.b32.xlu0 %v760, 8
  %v889 = vpop.permute.xlu0 %888
  %890 = vrot.lane.b32.xlu0 %v761, 8
  %v891 = vpop.permute.xlu0 %890
  %892 = vrot.lane.b32.xlu0 %v762, 8
  %v893 = vpop.permute.xlu0 %892
  %894 = vrot.lane.b32.xlu0 %v763, 8
  %v895 = vpop.permute.xlu0 %894
  %896 = vrot.lane.b32.xlu0 %v764, 8
  %v897 = vpop.permute.xlu0 %896
  %898 = vrot.lane.b32.xlu0 %v765, 8
  %v899 = vpop.permute.xlu0 %898
  %900 = vrot.lane.b32.xlu0 %v766, 8
  %v901 = vpop.permute.xlu0 %900
  %902 = vrot.lane.b32.xlu0 %v767, 8
  %v903 = vpop.permute.xlu0 %902
  %904 = vrot.lane.b32.xlu0 %v768, 8
  %v905 = vpop.permute.xlu0 %904
  %906 = vrot.lane.b32.xlu0 %v769, 8
  %v907 = vpop.permute.xlu0 %906
  %908 = vrot.lane.b32.xlu0 %v770, 8
  %v909 = vpop.permute.xlu0 %908
  %910 = vrot.lane.b32.xlu0 %v771, 8
  %v911 = vpop.permute.xlu0 %910
  %912 = vrot.lane.b32.xlu0 %v772, 8
  %v913 = vpop.permute.xlu0 %912
  %914 = vrot.lane.b32.xlu0 %v773, 8
  %v915 = vpop.permute.xlu0 %914
  %916 = vrot.lane.b32.xlu0 %v774, 8
  %v917 = vpop.permute.xlu0 %916
  %918 = vrot.lane.b32.xlu0 %v775, 8
  %v919 = vpop.permute.xlu0 %918
  %920 = vrot.lane.b32.xlu0 %v776, 8
  %v921 = vpop.permute.xlu0 %920
  %922 = vrot.lane.b32.xlu0 %v777, 8
  %v923 = vpop.permute.xlu0 %922
  %924 = vrot.lane.b32.xlu0 %v778, 8
  %v925 = vpop.permute.xlu0 %924
  %926 = vrot.lane.b32.xlu0 %v779, 8
  %v927 = vpop.permute.xlu0 %926
  %928 = vrot.lane.b32.xlu0 %v780, 8
  %v929 = vpop.permute.xlu0 %928
  %930 = vrot.lane.b32.xlu0 %v781, 8
  %v931 = vpop.permute.xlu0 %930
  %932 = vrot.lane.b32.xlu0 %v782, 8
  %v933 = vpop.permute.xlu0 %932
  %934 = vrot.lane.b32.xlu0 %v783, 8
  %v935 = vpop.permute.xlu0 %934
  %936 = vrot.lane.b32.xlu0 %v784, 8
  %v937 = vpop.permute.xlu0 %936
  %938 = vrot.lane.b32.xlu0 %v785, 8
  %v939 = vpop.permute.xlu0 %938
  %940 = vrot.lane.b32.xlu0 %v786, 8
  %v941 = vpop.permute.xlu0 %940
  %942 = vrot.lane.b32.xlu0 %v787, 8
  %v943 = vpop.permute.xlu0 %942
  %944 = vrot.lane.b32.xlu0 %v788, 8
  %v945 = vpop.permute.xlu0 %944
  %946 = vrot.lane.b32.xlu0 %v789, 8
  %v947 = vpop.permute.xlu0 %946
  %948 = vrot.lane.b32.xlu0 %v790, 8
  %v949 = vpop.permute.xlu0 %948
  %950 = vrot.lane.b32.xlu0 %v791, 8
  %v951 = vpop.permute.xlu0 %950
  %952 = vrot.lane.b32.xlu0 %v792, 8
  %v953 = vpop.permute.xlu0 %952
  %954 = vrot.lane.b32.xlu0 %v793, 8
  %v955 = vpop.permute.xlu0 %954
  %956 = vrot.lane.b32.xlu0 %v794, 8
  %v957 = vpop.permute.xlu0 %956
  %958 = vrot.lane.b32.xlu0 %v795, 8
  %v959 = vpop.permute.xlu0 %958
  %960 = vrot.lane.b32.xlu0 %v796, 8
  %v961 = vpop.permute.xlu0 %960
  %962 = vrot.lane.b32.xlu0 %v797, 8
  %v963 = vpop.permute.xlu0 %962
  %964 = vrot.lane.b32.xlu0 %v798, 8
  %v965 = vpop.permute.xlu0 %964
  %966 = vrot.lane.b32.xlu0 %v799, 8
  %v967 = vpop.permute.xlu0 %966
  %968 = vrot.lane.b32.xlu0 %v800, 8
  %v969 = vpop.permute.xlu0 %968
  %970 = vrot.lane.b32.xlu0 %v801, 8
  %v971 = vpop.permute.xlu0 %970
  %972 = vrot.lane.b32.xlu0 %v802, 8
  %v973 = vpop.permute.xlu0 %972
  %974 = vrot.lane.b32.xlu0 %v803, 8
  %v975 = vpop.permute.xlu0 %974
  %976 = vrot.lane.b32.xlu0 %v804, 8
  %v977 = vpop.permute.xlu0 %976
  %978 = vrot.lane.b32.xlu0 %v805, 8
  %v979 = vpop.permute.xlu0 %978
  %980 = vrot.lane.b32.xlu0 %v806, 8
  %v981 = vpop.permute.xlu0 %980
  %982 = vrot.lane.b32.xlu0 %v807, 8
  %v983 = vpop.permute.xlu0 %982
  %984 = vrot.lane.b32.xlu0 %v808, 8
  %v985 = vpop.permute.xlu0 %984
  %986 = vrot.lane.b32.xlu0 %v809, 8
  %v987 = vpop.permute.xlu0 %986
  %988 = vrot.lane.b32.xlu0 %v810, 8
  %v989 = vpop.permute.xlu0 %988
  %990 = vrot.lane.b32.xlu0 %v811, 8
  %v991 = vpop.permute.xlu0 %990
  %992 = vrot.lane.b32.xlu0 %v812, 8
  %v993 = vpop.permute.xlu0 %992
  %994 = vrot.lane.b32.xlu0 %v813, 8
  %v995 = vpop.permute.xlu0 %994
  %996 = vrot.lane.b32.xlu0 %v814, 8
  %v997 = vpop.permute.xlu0 %996
  %998 = vrot.lane.b32.xlu0 %v815, 8
  %v999 = vpop.permute.xlu0 %998
  %1000 = vrot.lane.b32.xlu0 %v816, 8
  %v1001 = vpop.permute.xlu0 %1000
  %1002 = vrot.lane.b32.xlu0 %v817, 8
  %v1003 = vpop.permute.xlu0 %1002
  %1004 = vrot.lane.b32.xlu0 %v818, 8
  %v1005 = vpop.permute.xlu0 %1004
  %1006 = vrot.lane.b32.xlu0 %v819, 8
  %v1007 = vpop.permute.xlu0 %1006
  %1008 = vrot.lane.b32.xlu0 %v820, 8
  %v1009 = vpop.permute.xlu0 %1008
  %1010 = vrot.lane.b32.xlu0 %v821, 8
  %v1011 = vpop.permute.xlu0 %1010
  %1012 = vrot.lane.b32.xlu0 %v822, 8
  %v1013 = vpop.permute.xlu0 %1012
  %1014 = vrot.lane.b32.xlu0 %v823, 8
  %v1015 = vpop.permute.xlu0 %1014
  %vm1080 = vcmask 97344
  %1081 = vst.msk [vmem:[#allocation3] sm:$0xff] %vm1080, %v889
  %1082 = vst.msk [vmem:[#allocation3 + $0x8] sm:$0xff] %vm1080, %v891
  %1083 = vst.msk [vmem:[#allocation3 + $0x10] sm:$0xff] %vm1080, %v893
  %1084 = vst.msk [vmem:[#allocation3 + $0x18] sm:$0xff] %vm1080, %v895
  %1085 = vst.msk [vmem:[#allocation3 + $0x20] sm:$0xff] %vm1080, %v897
  %1086 = vst.msk [vmem:[#allocation3 + $0x28] sm:$0xff] %vm1080, %v899
  %1087 = vst.msk [vmem:[#allocation3 + $0x30] sm:$0xff] %vm1080, %v901
  %1088 = vst.msk [vmem:[#allocation3 + $0x38] sm:$0xff] %vm1080, %v903
  %1089 = vst.msk [vmem:[#allocation3 + $0x40] sm:$0xff] %vm1080, %v905
  %1090 = vst.msk [vmem:[#allocation3 + $0x48] sm:$0xff] %vm1080, %v907
  %1091 = vst.msk [vmem:[#allocation3 + $0x50] sm:$0xff] %vm1080, %v909
  %1092 = vst.msk [vmem:[#allocation3 + $0x58] sm:$0xff] %vm1080, %v911
  %1093 = vst.msk [vmem:[#allocation3 + $0x60] sm:$0xff] %vm1080, %v913
  %1094 = vst.msk [vmem:[#allocation3 + $0x68] sm:$0xff] %vm1080, %v915
  %1095 = vst.msk [vmem:[#allocation3 + $0x70] sm:$0xff] %vm1080, %v917
  %1096 = vst.msk [vmem:[#allocation3 + $0x78] sm:$0xff] %vm1080, %v919
  %1097 = vst.msk [vmem:[#allocation3 + $0x80] sm:$0xff] %vm1080, %v921
  %1098 = vst.msk [vmem:[#allocation3 + $0x88] sm:$0xff] %vm1080, %v923
  %1099 = vst.msk [vmem:[#allocation3 + $0x90] sm:$0xff] %vm1080, %v925
  %1100 = vst.msk [vmem:[#allocation3 + $0x98] sm:$0xff] %vm1080, %v927
  %1101 = vst.msk [vmem:[#allocation3 + $0xa0] sm:$0xff] %vm1080, %v929
  %1102 = vst.msk [vmem:[#allocation3 + $0xa8] sm:$0xff] %vm1080, %v931
  %1103 = vst.msk [vmem:[#allocation3 + $0xb0] sm:$0xff] %vm1080, %v933
  %1104 = vst.msk [vmem:[#allocation3 + $0xb8] sm:$0xff] %vm1080, %v935
  %1105 = vst.msk [vmem:[#allocation3 + $0xc0] sm:$0xff] %vm1080, %v937
  %1106 = vst.msk [vmem:[#allocation3 + $0xc8] sm:$0xff] %vm1080, %v939
  %1107 = vst.msk [vmem:[#allocation3 + $0xd0] sm:$0xff] %vm1080, %v941
  %1108 = vst.msk [vmem:[#allocation3 + $0xd8] sm:$0xff] %vm1080, %v943
  %1109 = vst.msk [vmem:[#allocation3 + $0xe0] sm:$0xff] %vm1080, %v945
  %1110 = vst.msk [vmem:[#allocation3 + $0xe8] sm:$0xff] %vm1080, %v947
  %1111 = vst.msk [vmem:[#allocation3 + $0xf0] sm:$0xff] %vm1080, %v949
  %1112 = vst.msk [vmem:[#allocation3 + $0xf8] sm:$0xff] %vm1080, %v951
  %1113 = vst.msk [vmem:[#allocation3 + $0x100] sm:$0xff] %vm1080, %v953
  %1114 = vst.msk [vmem:[#allocation3 + $0x108] sm:$0xff] %vm1080, %v955
  %1115 = vst.msk [vmem:[#allocation3 + $0x110] sm:$0xff] %vm1080, %v957
  %1116 = vst.msk [vmem:[#allocation3 + $0x118] sm:$0xff] %vm1080, %v959
  %1117 = vst.msk [vmem:[#allocation3 + $0x120] sm:$0xff] %vm1080, %v961
  %1118 = vst.msk [vmem:[#allocation3 + $0x128] sm:$0xff] %vm1080, %v963
  %1119 = vst.msk [vmem:[#allocation3 + $0x130] sm:$0xff] %vm1080, %v965
  %1120 = vst.msk [vmem:[#allocation3 + $0x138] sm:$0xff] %vm1080, %v967
  %1121 = vst.msk [vmem:[#allocation3 + $0x140] sm:$0xff] %vm1080, %v969
  %1122 = vst.msk [vmem:[#allocation3 + $0x148] sm:$0xff] %vm1080, %v971
  %1123 = vst.msk [vmem:[#allocation3 + $0x150] sm:$0xff] %vm1080, %v973
  %1124 = vst.msk [vmem:[#allocation3 + $0x158] sm:$0xff] %vm1080, %v975
  %1125 = vst.msk [vmem:[#allocation3 + $0x160] sm:$0xff] %vm1080, %v977
  %1126 = vst.msk [vmem:[#allocation3 + $0x168] sm:$0xff] %vm1080, %v979
  %1127 = vst.msk [vmem:[#allocation3 + $0x170] sm:$0xff] %vm1080, %v981
  %1128 = vst.msk [vmem:[#allocation3 + $0x178] sm:$0xff] %vm1080, %v983
  %1129 = vst.msk [vmem:[#allocation3 + $0x180] sm:$0xff] %vm1080, %v985
  %1130 = vst.msk [vmem:[#allocation3 + $0x188] sm:$0xff] %vm1080, %v987
  %1131 = vst.msk [vmem:[#allocation3 + $0x190] sm:$0xff] %vm1080, %v989
  %1132 = vst.msk [vmem:[#allocation3 + $0x198] sm:$0xff] %vm1080, %v991
  %1133 = vst.msk [vmem:[#allocation3 + $0x1a0] sm:$0xff] %vm1080, %v993
  %1134 = vst.msk [vmem:[#allocation3 + $0x1a8] sm:$0xff] %vm1080, %v995
  %1135 = vst.msk [vmem:[#allocation3 + $0x1b0] sm:$0xff] %vm1080, %v997
  %1136 = vst.msk [vmem:[#allocation3 + $0x1b8] sm:$0xff] %vm1080, %v999
  %1137 = vst.msk [vmem:[#allocation3 + $0x1c0] sm:$0xff] %vm1080, %v1001
  %1138 = vst.msk [vmem:[#allocation3 + $0x1c8] sm:$0xff] %vm1080, %v1003
  %1139 = vst.msk [vmem:[#allocation3 + $0x1d0] sm:$0xff] %vm1080, %v1005
  %1140 = vst.msk [vmem:[#allocation3 + $0x1d8] sm:$0xff] %vm1080, %v1007
  %1141 = vst.msk [vmem:[#allocation3 + $0x1e0] sm:$0xff] %vm1080, %v1009
  %1142 = vst.msk [vmem:[#allocation3 + $0x1e8] sm:$0xff] %vm1080, %v1011
  %1143 = vst.msk [vmem:[#allocation3 + $0x1f0] sm:$0xff] %vm1080, %v1013
  %1144 = vst.msk [vmem:[#allocation3 + $0x1f8] sm:$0xff] %vm1080, %v1015
  %v1145 = vld [vmem:[%s182] sm:$0xff]
  %v1146 = vld [vmem:[%s182 + $0x8] sm:$0xff]
  %v1147 = vld [vmem:[%s182 + $0x18] sm:$0xff]
  %v1148 = vld [vmem:[%s182 + $0x20] sm:$0xff]
  %v1149 = vld [vmem:[%s182 + $0x30] sm:$0xff]
  %v1150 = vld [vmem:[%s182 + $0x38] sm:$0xff]
  %v1151 = vld [vmem:[%s182 + $0x48] sm:$0xff]
  %v1152 = vld [vmem:[%s182 + $0x50] sm:$0xff]
  %v1153 = vld [vmem:[%s182 + $0x60] sm:$0xff]
  %v1154 = vld [vmem:[%s182 + $0x68] sm:$0xff]
  %v1155 = vld [vmem:[%s182 + $0x78] sm:$0xff]
  %v1156 = vld [vmem:[%s182 + $0x80] sm:$0xff]
  %v1157 = vld [vmem:[%s182 + $0x90] sm:$0xff]
  %v1158 = vld [vmem:[%s182 + $0x98] sm:$0xff]
  %v1159 = vld [vmem:[%s182 + $0xa8] sm:$0xff]
  %v1160 = vld [vmem:[%s182 + $0xb0] sm:$0xff]
  %v1161 = vld [vmem:[%s182 + $0xc0] sm:$0xff]
  %v1162 = vld [vmem:[%s182 + $0xc8] sm:$0xff]
  %v1163 = vld [vmem:[%s182 + $0xd8] sm:$0xff]
  %v1164 = vld [vmem:[%s182 + $0xe0] sm:$0xff]
  %v1165 = vld [vmem:[%s182 + $0xf0] sm:$0xff]
  %v1166 = vld [vmem:[%s182 + $0xf8] sm:$0xff]
  %v1167 = vld [vmem:[%s182 + $0x108] sm:$0xff]
  %v1168 = vld [vmem:[%s182 + $0x110] sm:$0xff]
  %v1169 = vld [vmem:[%s182 + $0x120] sm:$0xff]
  %v1170 = vld [vmem:[%s182 + $0x128] sm:$0xff]
  %v1171 = vld [vmem:[%s182 + $0x138] sm:$0xff]
  %v1172 = vld [vmem:[%s182 + $0x140] sm:$0xff]
  %v1173 = vld [vmem:[%s182 + $0x150] sm:$0xff]
  %v1174 = vld [vmem:[%s182 + $0x158] sm:$0xff]
  %v1175 = vld [vmem:[%s182 + $0x168] sm:$0xff]
  %v1176 = vld [vmem:[%s182 + $0x170] sm:$0xff]
  %v1177 = vld [vmem:[%s182 + $0x1b0] sm:$0xff]
  %v1178 = vld [vmem:[%s182 + $0x1b8] sm:$0xff]
  %v1179 = vld [vmem:[%s182 + $0x1c8] sm:$0xff]
  %v1180 = vld [vmem:[%s182 + $0x1d0] sm:$0xff]
  %v1181 = vld [vmem:[%s182 + $0x1e0] sm:$0xff]
  %v1182 = vld [vmem:[%s182 + $0x1e8] sm:$0xff]
  %v1183 = vld [vmem:[%s182 + $0x1f8] sm:$0xff]
  %v1184 = vld [vmem:[%s182 + $0x200] sm:$0xff]
  %v1185 = vld [vmem:[%s182 + $0x210] sm:$0xff]
  %v1186 = vld [vmem:[%s182 + $0x218] sm:$0xff]
  %v1187 = vld [vmem:[%s182 + $0x228] sm:$0xff]
  %v1188 = vld [vmem:[%s182 + $0x230] sm:$0xff]
  %v1189 = vld [vmem:[%s182 + $0x240] sm:$0xff]
  %v1190 = vld [vmem:[%s182 + $0x248] sm:$0xff]
  %v1191 = vld [vmem:[%s182 + $0x258] sm:$0xff]
  %v1192 = vld [vmem:[%s182 + $0x260] sm:$0xff]
  %v1193 = vld [vmem:[%s182 + $0x270] sm:$0xff]
  %v1194 = vld [vmem:[%s182 + $0x278] sm:$0xff]
  %v1195 = vld [vmem:[%s182 + $0x288] sm:$0xff]
  %v1196 = vld [vmem:[%s182 + $0x290] sm:$0xff]
  %v1197 = vld [vmem:[%s182 + $0x2a0] sm:$0xff]
  %v1198 = vld [vmem:[%s182 + $0x2a8] sm:$0xff]
  %v1199 = vld [vmem:[%s182 + $0x2b8] sm:$0xff]
  %v1200 = vld [vmem:[%s182 + $0x2c0] sm:$0xff]
  %v1201 = vld [vmem:[%s182 + $0x2d0] sm:$0xff]
  %v1202 = vld [vmem:[%s182 + $0x2d8] sm:$0xff]
  %v1203 = vld [vmem:[%s182 + $0x2e8] sm:$0xff]
  %v1204 = vld [vmem:[%s182 + $0x2f0] sm:$0xff]
  %v1205 = vld [vmem:[%s182 + $0x300] sm:$0xff]
  %v1206 = vld [vmem:[%s182 + $0x308] sm:$0xff]
  %v1207 = vld [vmem:[%s182 + $0x318] sm:$0xff]
  %v1208 = vld [vmem:[%s182 + $0x320] sm:$0xff]
  %1273 = vrot.lane.b32.xlu0 %v1145, 12
  %v1274 = vpop.permute.xlu0 %1273
  %1275 = vrot.lane.b32.xlu0 %v1146, 12
  %v1276 = vpop.permute.xlu0 %1275
  %1277 = vrot.lane.b32.xlu0 %v1147, 12
  %v1278 = vpop.permute.xlu0 %1277
  %1279 = vrot.lane.b32.xlu0 %v1148, 12
  %v1280 = vpop.permute.xlu0 %1279
  %1281 = vrot.lane.b32.xlu0 %v1149, 12
  %v1282 = vpop.permute.xlu0 %1281
  %1283 = vrot.lane.b32.xlu0 %v1150, 12
  %v1284 = vpop.permute.xlu0 %1283
  %1285 = vrot.lane.b32.xlu0 %v1151, 12
  %v1286 = vpop.permute.xlu0 %1285
  %1287 = vrot.lane.b32.xlu0 %v1152, 12
  %v1288 = vpop.permute.xlu0 %1287
  %1289 = vrot.lane.b32.xlu0 %v1153, 12
  %v1290 = vpop.permute.xlu0 %1289
  %1291 = vrot.lane.b32.xlu0 %v1154, 12
  %v1292 = vpop.permute.xlu0 %1291
  %1293 = vrot.lane.b32.xlu0 %v1155, 12
  %v1294 = vpop.permute.xlu0 %1293
  %1295 = vrot.lane.b32.xlu0 %v1156, 12
  %v1296 = vpop.permute.xlu0 %1295
  %1297 = vrot.lane.b32.xlu0 %v1157, 12
  %v1298 = vpop.permute.xlu0 %1297
  %1299 = vrot.lane.b32.xlu0 %v1158, 12
  %v1300 = vpop.permute.xlu0 %1299
  %1301 = vrot.lane.b32.xlu0 %v1159, 12
  %v1302 = vpop.permute.xlu0 %1301
  %1303 = vrot.lane.b32.xlu0 %v1160, 12
  %v1304 = vpop.permute.xlu0 %1303
  %1305 = vrot.lane.b32.xlu0 %v1161, 12
  %v1306 = vpop.permute.xlu0 %1305
  %1307 = vrot.lane.b32.xlu0 %v1162, 12
  %v1308 = vpop.permute.xlu0 %1307
  %1309 = vrot.lane.b32.xlu0 %v1163, 12
  %v1310 = vpop.permute.xlu0 %1309
  %1311 = vrot.lane.b32.xlu0 %v1164, 12
  %v1312 = vpop.permute.xlu0 %1311
  %1313 = vrot.lane.b32.xlu0 %v1165, 12
  %v1314 = vpop.permute.xlu0 %1313
  %1315 = vrot.lane.b32.xlu0 %v1166, 12
  %v1316 = vpop.permute.xlu0 %1315
  %1317 = vrot.lane.b32.xlu0 %v1167, 12
  %v1318 = vpop.permute.xlu0 %1317
  %1319 = vrot.lane.b32.xlu0 %v1168, 12
  %v1320 = vpop.permute.xlu0 %1319
  %1321 = vrot.lane.b32.xlu0 %v1169, 12
  %v1322 = vpop.permute.xlu0 %1321
  %1323 = vrot.lane.b32.xlu0 %v1170, 12
  %v1324 = vpop.permute.xlu0 %1323
  %1325 = vrot.lane.b32.xlu0 %v1171, 12
  %v1326 = vpop.permute.xlu0 %1325
  %1327 = vrot.lane.b32.xlu0 %v1172, 12
  %v1328 = vpop.permute.xlu0 %1327
  %1329 = vrot.lane.b32.xlu0 %v1173, 12
  %v1330 = vpop.permute.xlu0 %1329
  %1331 = vrot.lane.b32.xlu0 %v1174, 12
  %v1332 = vpop.permute.xlu0 %1331
  %1333 = vrot.lane.b32.xlu0 %v1175, 12
  %v1334 = vpop.permute.xlu0 %1333
  %1335 = vrot.lane.b32.xlu0 %v1176, 12
  %v1336 = vpop.permute.xlu0 %1335
  %1337 = vrot.lane.b32.xlu0 %v1177, 12
  %v1338 = vpop.permute.xlu0 %1337
  %1339 = vrot.lane.b32.xlu0 %v1178, 12
  %v1340 = vpop.permute.xlu0 %1339
  %1341 = vrot.lane.b32.xlu0 %v1179, 12
  %v1342 = vpop.permute.xlu0 %1341
  %1343 = vrot.lane.b32.xlu0 %v1180, 12
  %v1344 = vpop.permute.xlu0 %1343
  %1345 = vrot.lane.b32.xlu0 %v1181, 12
  %v1346 = vpop.permute.xlu0 %1345
  %1347 = vrot.lane.b32.xlu0 %v1182, 12
  %v1348 = vpop.permute.xlu0 %1347
  %1349 = vrot.lane.b32.xlu0 %v1183, 12
  %v1350 = vpop.permute.xlu0 %1349
  %1351 = vrot.lane.b32.xlu0 %v1184, 12
  %v1352 = vpop.permute.xlu0 %1351
  %1353 = vrot.lane.b32.xlu0 %v1185, 12
  %v1354 = vpop.permute.xlu0 %1353
  %1355 = vrot.lane.b32.xlu0 %v1186, 12
  %v1356 = vpop.permute.xlu0 %1355
  %1357 = vrot.lane.b32.xlu0 %v1187, 12
  %v1358 = vpop.permute.xlu0 %1357
  %1359 = vrot.lane.b32.xlu0 %v1188, 12
  %v1360 = vpop.permute.xlu0 %1359
  %1361 = vrot.lane.b32.xlu0 %v1189, 12
  %v1362 = vpop.permute.xlu0 %1361
  %1363 = vrot.lane.b32.xlu0 %v1190, 12
  %v1364 = vpop.permute.xlu0 %1363
  %1365 = vrot.lane.b32.xlu0 %v1191, 12
  %v1366 = vpop.permute.xlu0 %1365
  %1367 = vrot.lane.b32.xlu0 %v1192, 12
  %v1368 = vpop.permute.xlu0 %1367
  %1369 = vrot.lane.b32.xlu0 %v1193, 12
  %v1370 = vpop.permute.xlu0 %1369
  %1371 = vrot.lane.b32.xlu0 %v1194, 12
  %v1372 = vpop.permute.xlu0 %1371
  %1373 = vrot.lane.b32.xlu0 %v1195, 12
  %v1374 = vpop.permute.xlu0 %1373
  %1375 = vrot.lane.b32.xlu0 %v1196, 12
  %v1376 = vpop.permute.xlu0 %1375
  %1377 = vrot.lane.b32.xlu0 %v1197, 12
  %v1378 = vpop.permute.xlu0 %1377
  %1379 = vrot.lane.b32.xlu0 %v1198, 12
  %v1380 = vpop.permute.xlu0 %1379
  %1381 = vrot.lane.b32.xlu0 %v1199, 12
  %v1382 = vpop.permute.xlu0 %1381
  %1383 = vrot.lane.b32.xlu0 %v1200, 12
  %v1384 = vpop.permute.xlu0 %1383
  %1385 = vrot.lane.b32.xlu0 %v1201, 12
  %v1386 = vpop.permute.xlu0 %1385
  %1387 = vrot.lane.b32.xlu0 %v1202, 12
  %v1388 = vpop.permute.xlu0 %1387
  %1389 = vrot.lane.b32.xlu0 %v1203, 12
  %v1390 = vpop.permute.xlu0 %1389
  %1391 = vrot.lane.b32.xlu0 %v1204, 12
  %v1392 = vpop.permute.xlu0 %1391
  %1393 = vrot.lane.b32.xlu0 %v1205, 12
  %v1394 = vpop.permute.xlu0 %1393
  %1395 = vrot.lane.b32.xlu0 %v1206, 12
  %v1396 = vpop.permute.xlu0 %1395
  %1397 = vrot.lane.b32.xlu0 %v1207, 12
  %v1398 = vpop.permute.xlu0 %1397
  %1399 = vrot.lane.b32.xlu0 %v1208, 12
  %v1400 = vpop.permute.xlu0 %1399
  %vm1465 = vcmask 130144
  %1466 = vst.msk [vmem:[#allocation3] sm:$0xff] %vm1465, %v1274
  %1467 = vst.msk [vmem:[#allocation3 + $0x8] sm:$0xff] %vm1465, %v1276
  %1468 = vst.msk [vmem:[#allocation3 + $0x10] sm:$0xff] %vm1465, %v1278
  %1469 = vst.msk [vmem:[#allocation3 + $0x18] sm:$0xff] %vm1465, %v1280
  %1470 = vst.msk [vmem:[#allocation3 + $0x20] sm:$0xff] %vm1465, %v1282
  %1471 = vst.msk [vmem:[#allocation3 + $0x28] sm:$0xff] %vm1465, %v1284
  %1472 = vst.msk [vmem:[#allocation3 + $0x30] sm:$0xff] %vm1465, %v1286
  %1473 = vst.msk [vmem:[#allocation3 + $0x38] sm:$0xff] %vm1465, %v1288
  %1474 = vst.msk [vmem:[#allocation3 + $0x40] sm:$0xff] %vm1465, %v1290
  %1475 = vst.msk [vmem:[#allocation3 + $0x48] sm:$0xff] %vm1465, %v1292
  %1476 = vst.msk [vmem:[#allocation3 + $0x50] sm:$0xff] %vm1465, %v1294
  %1477 = vst.msk [vmem:[#allocation3 + $0x58] sm:$0xff] %vm1465, %v1296
  %1478 = vst.msk [vmem:[#allocation3 + $0x60] sm:$0xff] %vm1465, %v1298
  %1479 = vst.msk [vmem:[#allocation3 + $0x68] sm:$0xff] %vm1465, %v1300
  %1480 = vst.msk [vmem:[#allocation3 + $0x70] sm:$0xff] %vm1465, %v1302
  %1481 = vst.msk [vmem:[#allocation3 + $0x78] sm:$0xff] %vm1465, %v1304
  %1482 = vst.msk [vmem:[#allocation3 + $0x80] sm:$0xff] %vm1465, %v1306
  %1483 = vst.msk [vmem:[#allocation3 + $0x88] sm:$0xff] %vm1465, %v1308
  %1484 = vst.msk [vmem:[#allocation3 + $0x90] sm:$0xff] %vm1465, %v1310
  %1485 = vst.msk [vmem:[#allocation3 + $0x98] sm:$0xff] %vm1465, %v1312
  %1486 = vst.msk [vmem:[#allocation3 + $0xa0] sm:$0xff] %vm1465, %v1314
  %1487 = vst.msk [vmem:[#allocation3 + $0xa8] sm:$0xff] %vm1465, %v1316
  %1488 = vst.msk [vmem:[#allocation3 + $0xb0] sm:$0xff] %vm1465, %v1318
  %1489 = vst.msk [vmem:[#allocation3 + $0xb8] sm:$0xff] %vm1465, %v1320
  %1490 = vst.msk [vmem:[#allocation3 + $0xc0] sm:$0xff] %vm1465, %v1322
  %1491 = vst.msk [vmem:[#allocation3 + $0xc8] sm:$0xff] %vm1465, %v1324
  %1492 = vst.msk [vmem:[#allocation3 + $0xd0] sm:$0xff] %vm1465, %v1326
  %1493 = vst.msk [vmem:[#allocation3 + $0xd8] sm:$0xff] %vm1465, %v1328
  %1494 = vst.msk [vmem:[#allocation3 + $0xe0] sm:$0xff] %vm1465, %v1330
  %1495 = vst.msk [vmem:[#allocation3 + $0xe8] sm:$0xff] %vm1465, %v1332
  %1496 = vst.msk [vmem:[#allocation3 + $0xf0] sm:$0xff] %vm1465, %v1334
  %1497 = vst.msk [vmem:[#allocation3 + $0xf8] sm:$0xff] %vm1465, %v1336
  %1498 = vst.msk [vmem:[#allocation3 + $0x100] sm:$0xff] %vm1465, %v1338
  %1499 = vst.msk [vmem:[#allocation3 + $0x108] sm:$0xff] %vm1465, %v1340
  %1500 = vst.msk [vmem:[#allocation3 + $0x110] sm:$0xff] %vm1465, %v1342
  %1501 = vst.msk [vmem:[#allocation3 + $0x118] sm:$0xff] %vm1465, %v1344
  %1502 = vst.msk [vmem:[#allocation3 + $0x120] sm:$0xff] %vm1465, %v1346
  %1503 = vst.msk [vmem:[#allocation3 + $0x128] sm:$0xff] %vm1465, %v1348
  %1504 = vst.msk [vmem:[#allocation3 + $0x130] sm:$0xff] %vm1465, %v1350
  %1505 = vst.msk [vmem:[#allocation3 + $0x138] sm:$0xff] %vm1465, %v1352
  %1506 = vst.msk [vmem:[#allocation3 + $0x140] sm:$0xff] %vm1465, %v1354
  %1507 = vst.msk [vmem:[#allocation3 + $0x148] sm:$0xff] %vm1465, %v1356
  %1508 = vst.msk [vmem:[#allocation3 + $0x150] sm:$0xff] %vm1465, %v1358
  %1509 = vst.msk [vmem:[#allocation3 + $0x158] sm:$0xff] %vm1465, %v1360
  %1510 = vst.msk [vmem:[#allocation3 + $0x160] sm:$0xff] %vm1465, %v1362
  %1511 = vst.msk [vmem:[#allocation3 + $0x168] sm:$0xff] %vm1465, %v1364
  %1512 = vst.msk [vmem:[#allocation3 + $0x170] sm:$0xff] %vm1465, %v1366
  %1513 = vst.msk [vmem:[#allocation3 + $0x178] sm:$0xff] %vm1465, %v1368
  %1514 = vst.msk [vmem:[#allocation3 + $0x180] sm:$0xff] %vm1465, %v1370
  %1515 = vst.msk [vmem:[#allocation3 + $0x188] sm:$0xff] %vm1465, %v1372
  %1516 = vst.msk [vmem:[#allocation3 + $0x190] sm:$0xff] %vm1465, %v1374
  %1517 = vst.msk [vmem:[#allocation3 + $0x198] sm:$0xff] %vm1465, %v1376
  %1518 = vst.msk [vmem:[#allocation3 + $0x1a0] sm:$0xff] %vm1465, %v1378
  %1519 = vst.msk [vmem:[#allocation3 + $0x1a8] sm:$0xff] %vm1465, %v1380
  %1520 = vst.msk [vmem:[#allocation3 + $0x1b0] sm:$0xff] %vm1465, %v1382
  %1521 = vst.msk [vmem:[#allocation3 + $0x1b8] sm:$0xff] %vm1465, %v1384
  %1522 = vst.msk [vmem:[#allocation3 + $0x1c0] sm:$0xff] %vm1465, %v1386
  %1523 = vst.msk [vmem:[#allocation3 + $0x1c8] sm:$0xff] %vm1465, %v1388
  %1524 = vst.msk [vmem:[#allocation3 + $0x1d0] sm:$0xff] %vm1465, %v1390
  %1525 = vst.msk [vmem:[#allocation3 + $0x1d8] sm:$0xff] %vm1465, %v1392
  %1526 = vst.msk [vmem:[#allocation3 + $0x1e0] sm:$0xff] %vm1465, %v1394
  %1527 = vst.msk [vmem:[#allocation3 + $0x1e8] sm:$0xff] %vm1465, %v1396
  %1528 = vst.msk [vmem:[#allocation3 + $0x1f0] sm:$0xff] %vm1465, %v1398
  %1529 = vst.msk [vmem:[#allocation3 + $0x1f8] sm:$0xff] %vm1465, %v1400
  %v1530 = vld [vmem:[%s182 + $0x1] sm:$0xff]
  %v1531 = vld [vmem:[%s182 + $0x9] sm:$0xff]
  %v1532 = vld [vmem:[%s182 + $0x19] sm:$0xff]
  %v1533 = vld [vmem:[%s182 + $0x21] sm:$0xff]
  %v1534 = vld [vmem:[%s182 + $0x31] sm:$0xff]
  %v1535 = vld [vmem:[%s182 + $0x39] sm:$0xff]
  %v1536 = vld [vmem:[%s182 + $0x49] sm:$0xff]
  %v1537 = vld [vmem:[%s182 + $0x51] sm:$0xff]
  %v1538 = vld [vmem:[%s182 + $0x61] sm:$0xff]
  %v1539 = vld [vmem:[%s182 + $0x69] sm:$0xff]
  %v1540 = vld [vmem:[%s182 + $0x79] sm:$0xff]
  %v1541 = vld [vmem:[%s182 + $0x81] sm:$0xff]
  %v1542 = vld [vmem:[%s182 + $0x91] sm:$0xff]
  %v1543 = vld [vmem:[%s182 + $0x99] sm:$0xff]
  %v1544 = vld [vmem:[%s182 + $0xa9] sm:$0xff]
  %v1545 = vld [vmem:[%s182 + $0xb1] sm:$0xff]
  %v1546 = vld [vmem:[%s182 + $0xc1] sm:$0xff]
  %v1547 = vld [vmem:[%s182 + $0xc9] sm:$0xff]
  %v1548 = vld [vmem:[%s182 + $0xd9] sm:$0xff]
  %v1549 = vld [vmem:[%s182 + $0xe1] sm:$0xff]
  %v1550 = vld [vmem:[%s182 + $0xf1] sm:$0xff]
  %v1551 = vld [vmem:[%s182 + $0xf9] sm:$0xff]
  %v1552 = vld [vmem:[%s182 + $0x109] sm:$0xff]
  %v1553 = vld [vmem:[%s182 + $0x111] sm:$0xff]
  %v1554 = vld [vmem:[%s182 + $0x121] sm:$0xff]
  %v1555 = vld [vmem:[%s182 + $0x129] sm:$0xff]
  %v1556 = vld [vmem:[%s182 + $0x139] sm:$0xff]
  %v1557 = vld [vmem:[%s182 + $0x141] sm:$0xff]
  %v1558 = vld [vmem:[%s182 + $0x151] sm:$0xff]
  %v1559 = vld [vmem:[%s182 + $0x159] sm:$0xff]
  %v1560 = vld [vmem:[%s182 + $0x169] sm:$0xff]
  %v1561 = vld [vmem:[%s182 + $0x171] sm:$0xff]
  %v1562 = vld [vmem:[%s182 + $0x1b1] sm:$0xff]
  %v1563 = vld [vmem:[%s182 + $0x1b9] sm:$0xff]
  %v1564 = vld [vmem:[%s182 + $0x1c9] sm:$0xff]
  %v1565 = vld [vmem:[%s182 + $0x1d1] sm:$0xff]
  %v1566 = vld [vmem:[%s182 + $0x1e1] sm:$0xff]
  %v1567 = vld [vmem:[%s182 + $0x1e9] sm:$0xff]
  %v1568 = vld [vmem:[%s182 + $0x1f9] sm:$0xff]
  %v1569 = vld [vmem:[%s182 + $0x201] sm:$0xff]
  %v1570 = vld [vmem:[%s182 + $0x211] sm:$0xff]
  %v1571 = vld [vmem:[%s182 + $0x219] sm:$0xff]
  %v1572 = vld [vmem:[%s182 + $0x229] sm:$0xff]
  %v1573 = vld [vmem:[%s182 + $0x231] sm:$0xff]
  %v1574 = vld [vmem:[%s182 + $0x241] sm:$0xff]
  %v1575 = vld [vmem:[%s182 + $0x249] sm:$0xff]
  %v1576 = vld [vmem:[%s182 + $0x259] sm:$0xff]
  %v1577 = vld [vmem:[%s182 + $0x261] sm:$0xff]
  %v1578 = vld [vmem:[%s182 + $0x271] sm:$0xff]
  %v1579 = vld [vmem:[%s182 + $0x279] sm:$0xff]
  %v1580 = vld [vmem:[%s182 + $0x289] sm:$0xff]
  %v1581 = vld [vmem:[%s182 + $0x291] sm:$0xff]
  %v1582 = vld [vmem:[%s182 + $0x2a1] sm:$0xff]
  %v1583 = vld [vmem:[%s182 + $0x2a9] sm:$0xff]
  %v1584 = vld [vmem:[%s182 + $0x2b9] sm:$0xff]
  %v1585 = vld [vmem:[%s182 + $0x2c1] sm:$0xff]
  %v1586 = vld [vmem:[%s182 + $0x2d1] sm:$0xff]
  %v1587 = vld [vmem:[%s182 + $0x2d9] sm:$0xff]
  %v1588 = vld [vmem:[%s182 + $0x2e9] sm:$0xff]
  %v1589 = vld [vmem:[%s182 + $0x2f1] sm:$0xff]
  %v1590 = vld [vmem:[%s182 + $0x301] sm:$0xff]
  %v1591 = vld [vmem:[%s182 + $0x309] sm:$0xff]
  %v1592 = vld [vmem:[%s182 + $0x319] sm:$0xff]
  %v1593 = vld [vmem:[%s182 + $0x321] sm:$0xff]
  %1658 = vrot.lane.b32.xlu0 %v1530, 16
  %v1659 = vpop.permute.xlu0 %1658
  %1660 = vrot.lane.b32.xlu0 %v1531, 16
  %v1661 = vpop.permute.xlu0 %1660
  %1662 = vrot.lane.b32.xlu0 %v1532, 16
  %v1663 = vpop.permute.xlu0 %1662
  %1664 = vrot.lane.b32.xlu0 %v1533, 16
  %v1665 = vpop.permute.xlu0 %1664
  %1666 = vrot.lane.b32.xlu0 %v1534, 16
  %v1667 = vpop.permute.xlu0 %1666
  %1668 = vrot.lane.b32.xlu0 %v1535, 16
  %v1669 = vpop.permute.xlu0 %1668
  %1670 = vrot.lane.b32.xlu0 %v1536, 16
  %v1671 = vpop.permute.xlu0 %1670
  %1672 = vrot.lane.b32.xlu0 %v1537, 16
  %v1673 = vpop.permute.xlu0 %1672
  %1674 = vrot.lane.b32.xlu0 %v1538, 16
  %v1675 = vpop.permute.xlu0 %1674
  %1676 = vrot.lane.b32.xlu0 %v1539, 16
  %v1677 = vpop.permute.xlu0 %1676
  %1678 = vrot.lane.b32.xlu0 %v1540, 16
  %v1679 = vpop.permute.xlu0 %1678
  %1680 = vrot.lane.b32.xlu0 %v1541, 16
  %v1681 = vpop.permute.xlu0 %1680
  %1682 = vrot.lane.b32.xlu0 %v1542, 16
  %v1683 = vpop.permute.xlu0 %1682
  %1684 = vrot.lane.b32.xlu0 %v1543, 16
  %v1685 = vpop.permute.xlu0 %1684
  %1686 = vrot.lane.b32.xlu0 %v1544, 16
  %v1687 = vpop.permute.xlu0 %1686
  %1688 = vrot.lane.b32.xlu0 %v1545, 16
  %v1689 = vpop.permute.xlu0 %1688
  %1690 = vrot.lane.b32.xlu0 %v1546, 16
  %v1691 = vpop.permute.xlu0 %1690
  %1692 = vrot.lane.b32.xlu0 %v1547, 16
  %v1693 = vpop.permute.xlu0 %1692
  %1694 = vrot.lane.b32.xlu0 %v1548, 16
  %v1695 = vpop.permute.xlu0 %1694
  %1696 = vrot.lane.b32.xlu0 %v1549, 16
  %v1697 = vpop.permute.xlu0 %1696
  %1698 = vrot.lane.b32.xlu0 %v1550, 16
  %v1699 = vpop.permute.xlu0 %1698
  %1700 = vrot.lane.b32.xlu0 %v1551, 16
  %v1701 = vpop.permute.xlu0 %1700
  %1702 = vrot.lane.b32.xlu0 %v1552, 16
  %v1703 = vpop.permute.xlu0 %1702
  %1704 = vrot.lane.b32.xlu0 %v1553, 16
  %v1705 = vpop.permute.xlu0 %1704
  %1706 = vrot.lane.b32.xlu0 %v1554, 16
  %v1707 = vpop.permute.xlu0 %1706
  %1708 = vrot.lane.b32.xlu0 %v1555, 16
  %v1709 = vpop.permute.xlu0 %1708
  %1710 = vrot.lane.b32.xlu0 %v1556, 16
  %v1711 = vpop.permute.xlu0 %1710
  %1712 = vrot.lane.b32.xlu0 %v1557, 16
  %v1713 = vpop.permute.xlu0 %1712
  %1714 = vrot.lane.b32.xlu0 %v1558, 16
  %v1715 = vpop.permute.xlu0 %1714
  %1716 = vrot.lane.b32.xlu0 %v1559, 16
  %v1717 = vpop.permute.xlu0 %1716
  %1718 = vrot.lane.b32.xlu0 %v1560, 16
  %v1719 = vpop.permute.xlu0 %1718
  %1720 = vrot.lane.b32.xlu0 %v1561, 16
  %v1721 = vpop.permute.xlu0 %1720
  %1722 = vrot.lane.b32.xlu0 %v1562, 16
  %v1723 = vpop.permute.xlu0 %1722
  %1724 = vrot.lane.b32.xlu0 %v1563, 16
  %v1725 = vpop.permute.xlu0 %1724
  %1726 = vrot.lane.b32.xlu0 %v1564, 16
  %v1727 = vpop.permute.xlu0 %1726
  %1728 = vrot.lane.b32.xlu0 %v1565, 16
  %v1729 = vpop.permute.xlu0 %1728
  %1730 = vrot.lane.b32.xlu0 %v1566, 16
  %v1731 = vpop.permute.xlu0 %1730
  %1732 = vrot.lane.b32.xlu0 %v1567, 16
  %v1733 = vpop.permute.xlu0 %1732
  %1734 = vrot.lane.b32.xlu0 %v1568, 16
  %v1735 = vpop.permute.xlu0 %1734
  %1736 = vrot.lane.b32.xlu0 %v1569, 16
  %v1737 = vpop.permute.xlu0 %1736
  %1738 = vrot.lane.b32.xlu0 %v1570, 16
  %v1739 = vpop.permute.xlu0 %1738
  %1740 = vrot.lane.b32.xlu0 %v1571, 16
  %v1741 = vpop.permute.xlu0 %1740
  %1742 = vrot.lane.b32.xlu0 %v1572, 16
  %v1743 = vpop.permute.xlu0 %1742
  %1744 = vrot.lane.b32.xlu0 %v1573, 16
  %v1745 = vpop.permute.xlu0 %1744
  %1746 = vrot.lane.b32.xlu0 %v1574, 16
  %v1747 = vpop.permute.xlu0 %1746
  %1748 = vrot.lane.b32.xlu0 %v1575, 16
  %v1749 = vpop.permute.xlu0 %1748
  %1750 = vrot.lane.b32.xlu0 %v1576, 16
  %v1751 = vpop.permute.xlu0 %1750
  %1752 = vrot.lane.b32.xlu0 %v1577, 16
  %v1753 = vpop.permute.xlu0 %1752
  %1754 = vrot.lane.b32.xlu0 %v1578, 16
  %v1755 = vpop.permute.xlu0 %1754
  %1756 = vrot.lane.b32.xlu0 %v1579, 16
  %v1757 = vpop.permute.xlu0 %1756
  %1758 = vrot.lane.b32.xlu0 %v1580, 16
  %v1759 = vpop.permute.xlu0 %1758
  %1760 = vrot.lane.b32.xlu0 %v1581, 16
  %v1761 = vpop.permute.xlu0 %1760
  %1762 = vrot.lane.b32.xlu0 %v1582, 16
  %v1763 = vpop.permute.xlu0 %1762
  %1764 = vrot.lane.b32.xlu0 %v1583, 16
  %v1765 = vpop.permute.xlu0 %1764
  %1766 = vrot.lane.b32.xlu0 %v1584, 16
  %v1767 = vpop.permute.xlu0 %1766
  %1768 = vrot.lane.b32.xlu0 %v1585, 16
  %v1769 = vpop.permute.xlu0 %1768
  %1770 = vrot.lane.b32.xlu0 %v1586, 16
  %v1771 = vpop.permute.xlu0 %1770
  %1772 = vrot.lane.b32.xlu0 %v1587, 16
  %v1773 = vpop.permute.xlu0 %1772
  %1774 = vrot.lane.b32.xlu0 %v1588, 16
  %v1775 = vpop.permute.xlu0 %1774
  %1776 = vrot.lane.b32.xlu0 %v1589, 16
  %v1777 = vpop.permute.xlu0 %1776
  %1778 = vrot.lane.b32.xlu0 %v1590, 16
  %v1779 = vpop.permute.xlu0 %1778
  %1780 = vrot.lane.b32.xlu0 %v1591, 16
  %v1781 = vpop.permute.xlu0 %1780
  %1782 = vrot.lane.b32.xlu0 %v1592, 16
  %v1783 = vpop.permute.xlu0 %1782
  %1784 = vrot.lane.b32.xlu0 %v1593, 16
  %v1785 = vpop.permute.xlu0 %1784
  %vm1850 = vcmask 162944
  %1851 = vst.msk [vmem:[#allocation3] sm:$0xff] %vm1850, %v1659
  %1852 = vst.msk [vmem:[#allocation3 + $0x8] sm:$0xff] %vm1850, %v1661
  %1853 = vst.msk [vmem:[#allocation3 + $0x10] sm:$0xff] %vm1850, %v1663
  %1854 = vst.msk [vmem:[#allocation3 + $0x18] sm:$0xff] %vm1850, %v1665
  %1855 = vst.msk [vmem:[#allocation3 + $0x20] sm:$0xff] %vm1850, %v1667
  %1856 = vst.msk [vmem:[#allocation3 + $0x28] sm:$0xff] %vm1850, %v1669
  %1857 = vst.msk [vmem:[#allocation3 + $0x30] sm:$0xff] %vm1850, %v1671
  %1858 = vst.msk [vmem:[#allocation3 + $0x38] sm:$0xff] %vm1850, %v1673
  %1859 = vst.msk [vmem:[#allocation3 + $0x40] sm:$0xff] %vm1850, %v1675
  %1860 = vst.msk [vmem:[#allocation3 + $0x48] sm:$0xff] %vm1850, %v1677
  %1861 = vst.msk [vmem:[#allocation3 + $0x50] sm:$0xff] %vm1850, %v1679
  %1862 = vst.msk [vmem:[#allocation3 + $0x58] sm:$0xff] %vm1850, %v1681
  %1863 = vst.msk [vmem:[#allocation3 + $0x60] sm:$0xff] %vm1850, %v1683
  %1864 = vst.msk [vmem:[#allocation3 + $0x68] sm:$0xff] %vm1850, %v1685
  %1865 = vst.msk [vmem:[#allocation3 + $0x70] sm:$0xff] %vm1850, %v1687
  %1866 = vst.msk [vmem:[#allocation3 + $0x78] sm:$0xff] %vm1850, %v1689
  %1867 = vst.msk [vmem:[#allocation3 + $0x80] sm:$0xff] %vm1850, %v1691
  %1868 = vst.msk [vmem:[#allocation3 + $0x88] sm:$0xff] %vm1850, %v1693
  %1869 = vst.msk [vmem:[#allocation3 + $0x90] sm:$0xff] %vm1850, %v1695
  %1870 = vst.msk [vmem:[#allocation3 + $0x98] sm:$0xff] %vm1850, %v1697
  %1871 = vst.msk [vmem:[#allocation3 + $0xa0] sm:$0xff] %vm1850, %v1699
  %1872 = vst.msk [vmem:[#allocation3 + $0xa8] sm:$0xff] %vm1850, %v1701
  %1873 = vst.msk [vmem:[#allocation3 + $0xb0] sm:$0xff] %vm1850, %v1703
  %1874 = vst.msk [vmem:[#allocation3 + $0xb8] sm:$0xff] %vm1850, %v1705
  %1875 = vst.msk [vmem:[#allocation3 + $0xc0] sm:$0xff] %vm1850, %v1707
  %1876 = vst.msk [vmem:[#allocation3 + $0xc8] sm:$0xff] %vm1850, %v1709
  %1877 = vst.msk [vmem:[#allocation3 + $0xd0] sm:$0xff] %vm1850, %v1711
  %1878 = vst.msk [vmem:[#allocation3 + $0xd8] sm:$0xff] %vm1850, %v1713
  %1879 = vst.msk [vmem:[#allocation3 + $0xe0] sm:$0xff] %vm1850, %v1715
  %1880 = vst.msk [vmem:[#allocation3 + $0xe8] sm:$0xff] %vm1850, %v1717
  %1881 = vst.msk [vmem:[#allocation3 + $0xf0] sm:$0xff] %vm1850, %v1719
  %1882 = vst.msk [vmem:[#allocation3 + $0xf8] sm:$0xff] %vm1850, %v1721
  %1883 = vst.msk [vmem:[#allocation3 + $0x100] sm:$0xff] %vm1850, %v1723
  %1884 = vst.msk [vmem:[#allocation3 + $0x108] sm:$0xff] %vm1850, %v1725
  %1885 = vst.msk [vmem:[#allocation3 + $0x110] sm:$0xff] %vm1850, %v1727
  %1886 = vst.msk [vmem:[#allocation3 + $0x118] sm:$0xff] %vm1850, %v1729
  %1887 = vst.msk [vmem:[#allocation3 + $0x120] sm:$0xff] %vm1850, %v1731
  %1888 = vst.msk [vmem:[#allocation3 + $0x128] sm:$0xff] %vm1850, %v1733
  %1889 = vst.msk [vmem:[#allocation3 + $0x130] sm:$0xff] %vm1850, %v1735
  %1890 = vst.msk [vmem:[#allocation3 + $0x138] sm:$0xff] %vm1850, %v1737
  %1891 = vst.msk [vmem:[#allocation3 + $0x140] sm:$0xff] %vm1850, %v1739
  %1892 = vst.msk [vmem:[#allocation3 + $0x148] sm:$0xff] %vm1850, %v1741
  %1893 = vst.msk [vmem:[#allocation3 + $0x150] sm:$0xff] %vm1850, %v1743
  %1894 = vst.msk [vmem:[#allocation3 + $0x158] sm:$0xff] %vm1850, %v1745
  %1895 = vst.msk [vmem:[#allocation3 + $0x160] sm:$0xff] %vm1850, %v1747
  %1896 = vst.msk [vmem:[#allocation3 + $0x168] sm:$0xff] %vm1850, %v1749
  %1897 = vst.msk [vmem:[#allocation3 + $0x170] sm:$0xff] %vm1850, %v1751
  %1898 = vst.msk [vmem:[#allocation3 + $0x178] sm:$0xff] %vm1850, %v1753
  %1899 = vst.msk [vmem:[#allocation3 + $0x180] sm:$0xff] %vm1850, %v1755
  %1900 = vst.msk [vmem:[#allocation3 + $0x188] sm:$0xff] %vm1850, %v1757
  %1901 = vst.msk [vmem:[#allocation3 + $0x190] sm:$0xff] %vm1850, %v1759
  %1902 = vst.msk [vmem:[#allocation3 + $0x198] sm:$0xff] %vm1850, %v1761
  %1903 = vst.msk [vmem:[#allocation3 + $0x1a0] sm:$0xff] %vm1850, %v1763
  %1904 = vst.msk [vmem:[#allocation3 + $0x1a8] sm:$0xff] %vm1850, %v1765
  %1905 = vst.msk [vmem:[#allocation3 + $0x1b0] sm:$0xff] %vm1850, %v1767
  %1906 = vst.msk [vmem:[#allocation3 + $0x1b8] sm:$0xff] %vm1850, %v1769
  %1907 = vst.msk [vmem:[#allocation3 + $0x1c0] sm:$0xff] %vm1850, %v1771
  %1908 = vst.msk [vmem:[#allocation3 + $0x1c8] sm:$0xff] %vm1850, %v1773
  %1909 = vst.msk [vmem:[#allocation3 + $0x1d0] sm:$0xff] %vm1850, %v1775
  %1910 = vst.msk [vmem:[#allocation3 + $0x1d8] sm:$0xff] %vm1850, %v1777
  %1911 = vst.msk [vmem:[#allocation3 + $0x1e0] sm:$0xff] %vm1850, %v1779
  %1912 = vst.msk [vmem:[#allocation3 + $0x1e8] sm:$0xff] %vm1850, %v1781
  %1913 = vst.msk [vmem:[#allocation3 + $0x1f0] sm:$0xff] %vm1850, %v1783
  %1914 = vst.msk [vmem:[#allocation3 + $0x1f8] sm:$0xff] %vm1850, %v1785
  %v1915 = vld [vmem:[%s182 + $0x2] sm:$0xff]
  %v1916 = vld [vmem:[%s182 + $0xa] sm:$0xff]
  %v1917 = vld [vmem:[%s182 + $0x1a] sm:$0xff]
  %v1918 = vld [vmem:[%s182 + $0x22] sm:$0xff]
  %v1919 = vld [vmem:[%s182 + $0x32] sm:$0xff]
  %v1920 = vld [vmem:[%s182 + $0x3a] sm:$0xff]
  %v1921 = vld [vmem:[%s182 + $0x4a] sm:$0xff]
  %v1922 = vld [vmem:[%s182 + $0x52] sm:$0xff]
  %v1923 = vld [vmem:[%s182 + $0x62] sm:$0xff]
  %v1924 = vld [vmem:[%s182 + $0x6a] sm:$0xff]
  %v1925 = vld [vmem:[%s182 + $0x7a] sm:$0xff]
  %v1926 = vld [vmem:[%s182 + $0x82] sm:$0xff]
  %v1927 = vld [vmem:[%s182 + $0x92] sm:$0xff]
  %v1928 = vld [vmem:[%s182 + $0x9a] sm:$0xff]
  %v1929 = vld [vmem:[%s182 + $0xaa] sm:$0xff]
  %v1930 = vld [vmem:[%s182 + $0xb2] sm:$0xff]
  %v1931 = vld [vmem:[%s182 + $0xc2] sm:$0xff]
  %v1932 = vld [vmem:[%s182 + $0xca] sm:$0xff]
  %v1933 = vld [vmem:[%s182 + $0xda] sm:$0xff]
  %v1934 = vld [vmem:[%s182 + $0xe2] sm:$0xff]
  %v1935 = vld [vmem:[%s182 + $0xf2] sm:$0xff]
  %v1936 = vld [vmem:[%s182 + $0xfa] sm:$0xff]
  %v1937 = vld [vmem:[%s182 + $0x10a] sm:$0xff]
  %v1938 = vld [vmem:[%s182 + $0x112] sm:$0xff]
  %v1939 = vld [vmem:[%s182 + $0x122] sm:$0xff]
  %v1940 = vld [vmem:[%s182 + $0x12a] sm:$0xff]
  %v1941 = vld [vmem:[%s182 + $0x13a] sm:$0xff]
  %v1942 = vld [vmem:[%s182 + $0x142] sm:$0xff]
  %v1943 = vld [vmem:[%s182 + $0x152] sm:$0xff]
  %v1944 = vld [vmem:[%s182 + $0x15a] sm:$0xff]
  %v1945 = vld [vmem:[%s182 + $0x16a] sm:$0xff]
  %v1946 = vld [vmem:[%s182 + $0x172] sm:$0xff]
  %v1947 = vld [vmem:[%s182 + $0x1b2] sm:$0xff]
  %v1948 = vld [vmem:[%s182 + $0x1ba] sm:$0xff]
  %v1949 = vld [vmem:[%s182 + $0x1ca] sm:$0xff]
  %v1950 = vld [vmem:[%s182 + $0x1d2] sm:$0xff]
  %v1951 = vld [vmem:[%s182 + $0x1e2] sm:$0xff]
  %v1952 = vld [vmem:[%s182 + $0x1ea] sm:$0xff]
  %v1953 = vld [vmem:[%s182 + $0x1fa] sm:$0xff]
  %v1954 = vld [vmem:[%s182 + $0x202] sm:$0xff]
  %v1955 = vld [vmem:[%s182 + $0x212] sm:$0xff]
  %v1956 = vld [vmem:[%s182 + $0x21a] sm:$0xff]
  %v1957 = vld [vmem:[%s182 + $0x22a] sm:$0xff]
  %v1958 = vld [vmem:[%s182 + $0x232] sm:$0xff]
  %v1959 = vld [vmem:[%s182 + $0x242] sm:$0xff]
  %v1960 = vld [vmem:[%s182 + $0x24a] sm:$0xff]
  %v1961 = vld [vmem:[%s182 + $0x25a] sm:$0xff]
  %v1962 = vld [vmem:[%s182 + $0x262] sm:$0xff]
  %v1963 = vld [vmem:[%s182 + $0x272] sm:$0xff]
  %v1964 = vld [vmem:[%s182 + $0x27a] sm:$0xff]
  %v1965 = vld [vmem:[%s182 + $0x28a] sm:$0xff]
  %v1966 = vld [vmem:[%s182 + $0x292] sm:$0xff]
  %v1967 = vld [vmem:[%s182 + $0x2a2] sm:$0xff]
  %v1968 = vld [vmem:[%s182 + $0x2aa] sm:$0xff]
  %v1969 = vld [vmem:[%s182 + $0x2ba] sm:$0xff]
  %v1970 = vld [vmem:[%s182 + $0x2c2] sm:$0xff]
  %v1971 = vld [vmem:[%s182 + $0x2d2] sm:$0xff]
  %v1972 = vld [vmem:[%s182 + $0x2da] sm:$0xff]
  %v1973 = vld [vmem:[%s182 + $0x2ea] sm:$0xff]
  %v1974 = vld [vmem:[%s182 + $0x2f2] sm:$0xff]
  %v1975 = vld [vmem:[%s182 + $0x302] sm:$0xff]
  %v1976 = vld [vmem:[%s182 + $0x30a] sm:$0xff]
  %v1977 = vld [vmem:[%s182 + $0x31a] sm:$0xff]
  %v1978 = vld [vmem:[%s182 + $0x322] sm:$0xff]
  %2043 = vrot.lane.b32.xlu0 %v1915, 20
  %v2044 = vpop.permute.xlu0 %2043
  %2045 = vrot.lane.b32.xlu0 %v1916, 20
  %v2046 = vpop.permute.xlu0 %2045
  %2047 = vrot.lane.b32.xlu0 %v1917, 20
  %v2048 = vpop.permute.xlu0 %2047
  %2049 = vrot.lane.b32.xlu0 %v1918, 20
  %v2050 = vpop.permute.xlu0 %2049
  %2051 = vrot.lane.b32.xlu0 %v1919, 20
  %v2052 = vpop.permute.xlu0 %2051
  %2053 = vrot.lane.b32.xlu0 %v1920, 20
  %v2054 = vpop.permute.xlu0 %2053
  %2055 = vrot.lane.b32.xlu0 %v1921, 20
  %v2056 = vpop.permute.xlu0 %2055
  %2057 = vrot.lane.b32.xlu0 %v1922, 20
  %v2058 = vpop.permute.xlu0 %2057
  %2059 = vrot.lane.b32.xlu0 %v1923, 20
  %v2060 = vpop.permute.xlu0 %2059
  %2061 = vrot.lane.b32.xlu0 %v1924, 20
  %v2062 = vpop.permute.xlu0 %2061
  %2063 = vrot.lane.b32.xlu0 %v1925, 20
  %v2064 = vpop.permute.xlu0 %2063
  %2065 = vrot.lane.b32.xlu0 %v1926, 20
  %v2066 = vpop.permute.xlu0 %2065
  %2067 = vrot.lane.b32.xlu0 %v1927, 20
  %v2068 = vpop.permute.xlu0 %2067
  %2069 = vrot.lane.b32.xlu0 %v1928, 20
  %v2070 = vpop.permute.xlu0 %2069
  %2071 = vrot.lane.b32.xlu0 %v1929, 20
  %v2072 = vpop.permute.xlu0 %2071
  %2073 = vrot.lane.b32.xlu0 %v1930, 20
  %v2074 = vpop.permute.xlu0 %2073
  %2075 = vrot.lane.b32.xlu0 %v1931, 20
  %v2076 = vpop.permute.xlu0 %2075
  %2077 = vrot.lane.b32.xlu0 %v1932, 20
  %v2078 = vpop.permute.xlu0 %2077
  %2079 = vrot.lane.b32.xlu0 %v1933, 20
  %v2080 = vpop.permute.xlu0 %2079
  %2081 = vrot.lane.b32.xlu0 %v1934, 20
  %v2082 = vpop.permute.xlu0 %2081
  %2083 = vrot.lane.b32.xlu0 %v1935, 20
  %v2084 = vpop.permute.xlu0 %2083
  %2085 = vrot.lane.b32.xlu0 %v1936, 20
  %v2086 = vpop.permute.xlu0 %2085
  %2087 = vrot.lane.b32.xlu0 %v1937, 20
  %v2088 = vpop.permute.xlu0 %2087
  %2089 = vrot.lane.b32.xlu0 %v1938, 20
  %v2090 = vpop.permute.xlu0 %2089
  %2091 = vrot.lane.b32.xlu0 %v1939, 20
  %v2092 = vpop.permute.xlu0 %2091
  %2093 = vrot.lane.b32.xlu0 %v1940, 20
  %v2094 = vpop.permute.xlu0 %2093
  %2095 = vrot.lane.b32.xlu0 %v1941, 20
  %v2096 = vpop.permute.xlu0 %2095
  %2097 = vrot.lane.b32.xlu0 %v1942, 20
  %v2098 = vpop.permute.xlu0 %2097
  %2099 = vrot.lane.b32.xlu0 %v1943, 20
  %v2100 = vpop.permute.xlu0 %2099
  %2101 = vrot.lane.b32.xlu0 %v1944, 20
  %v2102 = vpop.permute.xlu0 %2101
  %2103 = vrot.lane.b32.xlu0 %v1945, 20
  %v2104 = vpop.permute.xlu0 %2103
  %2105 = vrot.lane.b32.xlu0 %v1946, 20
  %v2106 = vpop.permute.xlu0 %2105
  %2107 = vrot.lane.b32.xlu0 %v1947, 20
  %v2108 = vpop.permute.xlu0 %2107
  %2109 = vrot.lane.b32.xlu0 %v1948, 20
  %v2110 = vpop.permute.xlu0 %2109
  %2111 = vrot.lane.b32.xlu0 %v1949, 20
  %v2112 = vpop.permute.xlu0 %2111
  %2113 = vrot.lane.b32.xlu0 %v1950, 20
  %v2114 = vpop.permute.xlu0 %2113
  %2115 = vrot.lane.b32.xlu0 %v1951, 20
  %v2116 = vpop.permute.xlu0 %2115
  %2117 = vrot.lane.b32.xlu0 %v1952, 20
  %v2118 = vpop.permute.xlu0 %2117
  %2119 = vrot.lane.b32.xlu0 %v1953, 20
  %v2120 = vpop.permute.xlu0 %2119
  %2121 = vrot.lane.b32.xlu0 %v1954, 20
  %v2122 = vpop.permute.xlu0 %2121
  %2123 = vrot.lane.b32.xlu0 %v1955, 20
  %v2124 = vpop.permute.xlu0 %2123
  %2125 = vrot.lane.b32.xlu0 %v1956, 20
  %v2126 = vpop.permute.xlu0 %2125
  %2127 = vrot.lane.b32.xlu0 %v1957, 20
  %v2128 = vpop.permute.xlu0 %2127
  %2129 = vrot.lane.b32.xlu0 %v1958, 20
  %v2130 = vpop.permute.xlu0 %2129
  %2131 = vrot.lane.b32.xlu0 %v1959, 20
  %v2132 = vpop.permute.xlu0 %2131
  %2133 = vrot.lane.b32.xlu0 %v1960, 20
  %v2134 = vpop.permute.xlu0 %2133
  %2135 = vrot.lane.b32.xlu0 %v1961, 20
  %v2136 = vpop.permute.xlu0 %2135
  %2137 = vrot.lane.b32.xlu0 %v1962, 20
  %v2138 = vpop.permute.xlu0 %2137
  %2139 = vrot.lane.b32.xlu0 %v1963, 20
  %v2140 = vpop.permute.xlu0 %2139
  %2141 = vrot.lane.b32.xlu0 %v1964, 20
  %v2142 = vpop.permute.xlu0 %2141
  %2143 = vrot.lane.b32.xlu0 %v1965, 20
  %v2144 = vpop.permute.xlu0 %2143
  %2145 = vrot.lane.b32.xlu0 %v1966, 20
  %v2146 = vpop.permute.xlu0 %2145
  %2147 = vrot.lane.b32.xlu0 %v1967, 20
  %v2148 = vpop.permute.xlu0 %2147
  %2149 = vrot.lane.b32.xlu0 %v1968, 20
  %v2150 = vpop.permute.xlu0 %2149
  %2151 = vrot.lane.b32.xlu0 %v1969, 20
  %v2152 = vpop.permute.xlu0 %2151
  %2153 = vrot.lane.b32.xlu0 %v1970, 20
  %v2154 = vpop.permute.xlu0 %2153
  %2155 = vrot.lane.b32.xlu0 %v1971, 20
  %v2156 = vpop.permute.xlu0 %2155
  %2157 = vrot.lane.b32.xlu0 %v1972, 20
  %v2158 = vpop.permute.xlu0 %2157
  %2159 = vrot.lane.b32.xlu0 %v1973, 20
  %v2160 = vpop.permute.xlu0 %2159
  %2161 = vrot.lane.b32.xlu0 %v1974, 20
  %v2162 = vpop.permute.xlu0 %2161
  %2163 = vrot.lane.b32.xlu0 %v1975, 20
  %v2164 = vpop.permute.xlu0 %2163
  %2165 = vrot.lane.b32.xlu0 %v1976, 20
  %v2166 = vpop.permute.xlu0 %2165
  %2167 = vrot.lane.b32.xlu0 %v1977, 20
  %v2168 = vpop.permute.xlu0 %2167
  %2169 = vrot.lane.b32.xlu0 %v1978, 20
  %v2170 = vpop.permute.xlu0 %2169
  %vm2235 = vcmask 195744
  %2236 = vst.msk [vmem:[#allocation3] sm:$0xff] %vm2235, %v2044
  %2237 = vst.msk [vmem:[#allocation3 + $0x8] sm:$0xff] %vm2235, %v2046
  %2238 = vst.msk [vmem:[#allocation3 + $0x10] sm:$0xff] %vm2235, %v2048
  %2239 = vst.msk [vmem:[#allocation3 + $0x18] sm:$0xff] %vm2235, %v2050
  %2240 = vst.msk [vmem:[#allocation3 + $0x20] sm:$0xff] %vm2235, %v2052
  %2241 = vst.msk [vmem:[#allocation3 + $0x28] sm:$0xff] %vm2235, %v2054
  %2242 = vst.msk [vmem:[#allocation3 + $0x30] sm:$0xff] %vm2235, %v2056
  %2243 = vst.msk [vmem:[#allocation3 + $0x38] sm:$0xff] %vm2235, %v2058
  %2244 = vst.msk [vmem:[#allocation3 + $0x40] sm:$0xff] %vm2235, %v2060
  %2245 = vst.msk [vmem:[#allocation3 + $0x48] sm:$0xff] %vm2235, %v2062
  %2246 = vst.msk [vmem:[#allocation3 + $0x50] sm:$0xff] %vm2235, %v2064
  %2247 = vst.msk [vmem:[#allocation3 + $0x58] sm:$0xff] %vm2235, %v2066
  %2248 = vst.msk [vmem:[#allocation3 + $0x60] sm:$0xff] %vm2235, %v2068
  %2249 = vst.msk [vmem:[#allocation3 + $0x68] sm:$0xff] %vm2235, %v2070
  %2250 = vst.msk [vmem:[#allocation3 + $0x70] sm:$0xff] %vm2235, %v2072
  %2251 = vst.msk [vmem:[#allocation3 + $0x78] sm:$0xff] %vm2235, %v2074
  %2252 = vst.msk [vmem:[#allocation3 + $0x80] sm:$0xff] %vm2235, %v2076
  %2253 = vst.msk [vmem:[#allocation3 + $0x88] sm:$0xff] %vm2235, %v2078
  %2254 = vst.msk [vmem:[#allocation3 + $0x90] sm:$0xff] %vm2235, %v2080
  %2255 = vst.msk [vmem:[#allocation3 + $0x98] sm:$0xff] %vm2235, %v2082
  %2256 = vst.msk [vmem:[#allocation3 + $0xa0] sm:$0xff] %vm2235, %v2084
  %2257 = vst.msk [vmem:[#allocation3 + $0xa8] sm:$0xff] %vm2235, %v2086
  %2258 = vst.msk [vmem:[#allocation3 + $0xb0] sm:$0xff] %vm2235, %v2088
  %2259 = vst.msk [vmem:[#allocation3 + $0xb8] sm:$0xff] %vm2235, %v2090
  %2260 = vst.msk [vmem:[#allocation3 + $0xc0] sm:$0xff] %vm2235, %v2092
  %2261 = vst.msk [vmem:[#allocation3 + $0xc8] sm:$0xff] %vm2235, %v2094
  %2262 = vst.msk [vmem:[#allocation3 + $0xd0] sm:$0xff] %vm2235, %v2096
  %2263 = vst.msk [vmem:[#allocation3 + $0xd8] sm:$0xff] %vm2235, %v2098
  %2264 = vst.msk [vmem:[#allocation3 + $0xe0] sm:$0xff] %vm2235, %v2100
  %2265 = vst.msk [vmem:[#allocation3 + $0xe8] sm:$0xff] %vm2235, %v2102
  %2266 = vst.msk [vmem:[#allocation3 + $0xf0] sm:$0xff] %vm2235, %v2104
  %2267 = vst.msk [vmem:[#allocation3 + $0xf8] sm:$0xff] %vm2235, %v2106
  %2268 = vst.msk [vmem:[#allocation3 + $0x100] sm:$0xff] %vm2235, %v2108
  %2269 = vst.msk [vmem:[#allocation3 + $0x108] sm:$0xff] %vm2235, %v2110
  %2270 = vst.msk [vmem:[#allocation3 + $0x110] sm:$0xff] %vm2235, %v2112
  %2271 = vst.msk [vmem:[#allocation3 + $0x118] sm:$0xff] %vm2235, %v2114
  %2272 = vst.msk [vmem:[#allocation3 + $0x120] sm:$0xff] %vm2235, %v2116
  %2273 = vst.msk [vmem:[#allocation3 + $0x128] sm:$0xff] %vm2235, %v2118
  %2274 = vst.msk [vmem:[#allocation3 + $0x130] sm:$0xff] %vm2235, %v2120
  %2275 = vst.msk [vmem:[#allocation3 + $0x138] sm:$0xff] %vm2235, %v2122
  %2276 = vst.msk [vmem:[#allocation3 + $0x140] sm:$0xff] %vm2235, %v2124
  %2277 = vst.msk [vmem:[#allocation3 + $0x148] sm:$0xff] %vm2235, %v2126
  %2278 = vst.msk [vmem:[#allocation3 + $0x150] sm:$0xff] %vm2235, %v2128
  %2279 = vst.msk [vmem:[#allocation3 + $0x158] sm:$0xff] %vm2235, %v2130
  %2280 = vst.msk [vmem:[#allocation3 + $0x160] sm:$0xff] %vm2235, %v2132
  %2281 = vst.msk [vmem:[#allocation3 + $0x168] sm:$0xff] %vm2235, %v2134
  %2282 = vst.msk [vmem:[#allocation3 + $0x170] sm:$0xff] %vm2235, %v2136
  %2283 = vst.msk [vmem:[#allocation3 + $0x178] sm:$0xff] %vm2235, %v2138
  %2284 = vst.msk [vmem:[#allocation3 + $0x180] sm:$0xff] %vm2235, %v2140
  %2285 = vst.msk [vmem:[#allocation3 + $0x188] sm:$0xff] %vm2235, %v2142
  %2286 = vst.msk [vmem:[#allocation3 + $0x190] sm:$0xff] %vm2235, %v2144
  %2287 = vst.msk [vmem:[#allocation3 + $0x198] sm:$0xff] %vm2235, %v2146
  %2288 = vst.msk [vmem:[#allocation3 + $0x1a0] sm:$0xff] %vm2235, %v2148
  %2289 = vst.msk [vmem:[#allocation3 + $0x1a8] sm:$0xff] %vm2235, %v2150
  %2290 = vst.msk [vmem:[#allocation3 + $0x1b0] sm:$0xff] %vm2235, %v2152
  %2291 = vst.msk [vmem:[#allocation3 + $0x1b8] sm:$0xff] %vm2235, %v2154
  %2292 = vst.msk [vmem:[#allocation3 + $0x1c0] sm:$0xff] %vm2235, %v2156
  %2293 = vst.msk [vmem:[#allocation3 + $0x1c8] sm:$0xff] %vm2235, %v2158
  %2294 = vst.msk [vmem:[#allocation3 + $0x1d0] sm:$0xff] %vm2235, %v2160
  %2295 = vst.msk [vmem:[#allocation3 + $0x1d8] sm:$0xff] %vm2235, %v2162
  %2296 = vst.msk [vmem:[#allocation3 + $0x1e0] sm:$0xff] %vm2235, %v2164
  %2297 = vst.msk [vmem:[#allocation3 + $0x1e8] sm:$0xff] %vm2235, %v2166
  %2298 = vst.msk [vmem:[#allocation3 + $0x1f0] sm:$0xff] %vm2235, %v2168
  %2299 = vst.msk [vmem:[#allocation3 + $0x1f8] sm:$0xff] %vm2235, %v2170
  %s2300 = scalar_lea.vmem [#allocation2], 48
  %v2301 = vld [vmem:[%s2300] sm:$0xff]
  %v2302 = vld [vmem:[%s2300 + $0x8] sm:$0xff]
  %v2303 = vld [vmem:[%s2300 + $0x18] sm:$0xff]
  %v2304 = vld [vmem:[%s2300 + $0x20] sm:$0xff]
  %v2305 = vld [vmem:[%s2300 + $0x30] sm:$0xff]
  %v2306 = vld [vmem:[%s2300 + $0x38] sm:$0xff]
  %v2307 = vld [vmem:[%s2300 + $0x48] sm:$0xff]
  %v2308 = vld [vmem:[%s2300 + $0x50] sm:$0xff]
  %v2309 = vld [vmem:[%s2300 + $0x60] sm:$0xff]
  %v2310 = vld [vmem:[%s2300 + $0x68] sm:$0xff]
  %v2311 = vld [vmem:[%s2300 + $0x78] sm:$0xff]
  %v2312 = vld [vmem:[%s2300 + $0x80] sm:$0xff]
  %v2313 = vld [vmem:[%s2300 + $0x90] sm:$0xff]
  %v2314 = vld [vmem:[%s2300 + $0x98] sm:$0xff]
  %v2315 = vld [vmem:[%s2300 + $0xa8] sm:$0xff]
  %v2316 = vld [vmem:[%s2300 + $0xb0] sm:$0xff]
  %v2317 = vld [vmem:[%s2300 + $0xc0] sm:$0xff]
  %v2318 = vld [vmem:[%s2300 + $0xc8] sm:$0xff]
  %v2319 = vld [vmem:[%s2300 + $0xd8] sm:$0xff]
  %v2320 = vld [vmem:[%s2300 + $0xe0] sm:$0xff]
  %v2321 = vld [vmem:[%s2300 + $0xf0] sm:$0xff]
  %v2322 = vld [vmem:[%s2300 + $0xf8] sm:$0xff]
  %v2323 = vld [vmem:[%s2300 + $0x108] sm:$0xff]
  %v2324 = vld [vmem:[%s2300 + $0x110] sm:$0xff]
  %v2325 = vld [vmem:[%s2300 + $0x120] sm:$0xff]
  %v2326 = vld [vmem:[%s2300 + $0x128] sm:$0xff]
  %v2327 = vld [vmem:[%s2300 + $0x138] sm:$0xff]
  %v2328 = vld [vmem:[%s2300 + $0x140] sm:$0xff]
  %v2329 = vld [vmem:[%s2300 + $0x150] sm:$0xff]
  %v2330 = vld [vmem:[%s2300 + $0x158] sm:$0xff]
  %v2331 = vld [vmem:[%s2300 + $0x168] sm:$0xff]
  %v2332 = vld [vmem:[%s2300 + $0x170] sm:$0xff]
  %v2333 = vld [vmem:[%s2300 + $0x1b0] sm:$0xff]
  %v2334 = vld [vmem:[%s2300 + $0x1b8] sm:$0xff]
  %v2335 = vld [vmem:[%s2300 + $0x1c8] sm:$0xff]
  %v2336 = vld [vmem:[%s2300 + $0x1d0] sm:$0xff]
  %v2337 = vld [vmem:[%s2300 + $0x1e0] sm:$0xff]
  %v2338 = vld [vmem:[%s2300 + $0x1e8] sm:$0xff]
  %v2339 = vld [vmem:[%s2300 + $0x1f8] sm:$0xff]
  %v2340 = vld [vmem:[%s2300 + $0x200] sm:$0xff]
  %v2341 = vld [vmem:[%s2300 + $0x210] sm:$0xff]
  %v2342 = vld [vmem:[%s2300 + $0x218] sm:$0xff]
  %v2343 = vld [vmem:[%s2300 + $0x228] sm:$0xff]
  %v2344 = vld [vmem:[%s2300 + $0x230] sm:$0xff]
  %v2345 = vld [vmem:[%s2300 + $0x240] sm:$0xff]
  %v2346 = vld [vmem:[%s2300 + $0x248] sm:$0xff]
  %v2347 = vld [vmem:[%s2300 + $0x258] sm:$0xff]
  %v2348 = vld [vmem:[%s2300 + $0x260] sm:$0xff]
  %v2349 = vld [vmem:[%s2300 + $0x270] sm:$0xff]
  %v2350 = vld [vmem:[%s2300 + $0x278] sm:$0xff]
  %v2351 = vld [vmem:[%s2300 + $0x288] sm:$0xff]
  %v2352 = vld [vmem:[%s2300 + $0x290] sm:$0xff]
  %v2353 = vld [vmem:[%s2300 + $0x2a0] sm:$0xff]
  %v2354 = vld [vmem:[%s2300 + $0x2a8] sm:$0xff]
  %v2355 = vld [vmem:[%s2300 + $0x2b8] sm:$0xff]
  %v2356 = vld [vmem:[%s2300 + $0x2c0] sm:$0xff]
  %v2357 = vld [vmem:[%s2300 + $0x2d0] sm:$0xff]
  %v2358 = vld [vmem:[%s2300 + $0x2d8] sm:$0xff]
  %v2359 = vld [vmem:[%s2300 + $0x2e8] sm:$0xff]
  %v2360 = vld [vmem:[%s2300 + $0x2f0] sm:$0xff]
  %v2361 = vld [vmem:[%s2300 + $0x300] sm:$0xff]
  %v2362 = vld [vmem:[%s2300 + $0x308] sm:$0xff]
  %v2363 = vld [vmem:[%s2300 + $0x318] sm:$0xff]
  %v2364 = vld [vmem:[%s2300 + $0x320] sm:$0xff]
  %2429 = vrot.lane.b32.xlu0 %v2301, 24
  %v2430 = vpop.permute.xlu0 %2429
  %2431 = vrot.lane.b32.xlu0 %v2302, 24
  %v2432 = vpop.permute.xlu0 %2431
  %2433 = vrot.lane.b32.xlu0 %v2303, 24
  %v2434 = vpop.permute.xlu0 %2433
  %2435 = vrot.lane.b32.xlu0 %v2304, 24
  %v2436 = vpop.permute.xlu0 %2435
  %2437 = vrot.lane.b32.xlu0 %v2305, 24
  %v2438 = vpop.permute.xlu0 %2437
  %2439 = vrot.lane.b32.xlu0 %v2306, 24
  %v2440 = vpop.permute.xlu0 %2439
  %2441 = vrot.lane.b32.xlu0 %v2307, 24
  %v2442 = vpop.permute.xlu0 %2441
  %2443 = vrot.lane.b32.xlu0 %v2308, 24
  %v2444 = vpop.permute.xlu0 %2443
  %2445 = vrot.lane.b32.xlu0 %v2309, 24
  %v2446 = vpop.permute.xlu0 %2445
  %2447 = vrot.lane.b32.xlu0 %v2310, 24
  %v2448 = vpop.permute.xlu0 %2447
  %2449 = vrot.lane.b32.xlu0 %v2311, 24
  %v2450 = vpop.permute.xlu0 %2449
  %2451 = vrot.lane.b32.xlu0 %v2312, 24
  %v2452 = vpop.permute.xlu0 %2451
  %2453 = vrot.lane.b32.xlu0 %v2313, 24
  %v2454 = vpop.permute.xlu0 %2453
  %2455 = vrot.lane.b32.xlu0 %v2314, 24
  %v2456 = vpop.permute.xlu0 %2455
  %2457 = vrot.lane.b32.xlu0 %v2315, 24
  %v2458 = vpop.permute.xlu0 %2457
  %2459 = vrot.lane.b32.xlu0 %v2316, 24
  %v2460 = vpop.permute.xlu0 %2459
  %2461 = vrot.lane.b32.xlu0 %v2317, 24
  %v2462 = vpop.permute.xlu0 %2461
  %2463 = vrot.lane.b32.xlu0 %v2318, 24
  %v2464 = vpop.permute.xlu0 %2463
  %2465 = vrot.lane.b32.xlu0 %v2319, 24
  %v2466 = vpop.permute.xlu0 %2465
  %2467 = vrot.lane.b32.xlu0 %v2320, 24
  %v2468 = vpop.permute.xlu0 %2467
  %2469 = vrot.lane.b32.xlu0 %v2321, 24
  %v2470 = vpop.permute.xlu0 %2469
  %2471 = vrot.lane.b32.xlu0 %v2322, 24
  %v2472 = vpop.permute.xlu0 %2471
  %2473 = vrot.lane.b32.xlu0 %v2323, 24
  %v2474 = vpop.permute.xlu0 %2473
  %2475 = vrot.lane.b32.xlu0 %v2324, 24
  %v2476 = vpop.permute.xlu0 %2475
  %2477 = vrot.lane.b32.xlu0 %v2325, 24
  %v2478 = vpop.permute.xlu0 %2477
  %2479 = vrot.lane.b32.xlu0 %v2326, 24
  %v2480 = vpop.permute.xlu0 %2479
  %2481 = vrot.lane.b32.xlu0 %v2327, 24
  %v2482 = vpop.permute.xlu0 %2481
  %2483 = vrot.lane.b32.xlu0 %v2328, 24
  %v2484 = vpop.permute.xlu0 %2483
  %2485 = vrot.lane.b32.xlu0 %v2329, 24
  %v2486 = vpop.permute.xlu0 %2485
  %2487 = vrot.lane.b32.xlu0 %v2330, 24
  %v2488 = vpop.permute.xlu0 %2487
  %2489 = vrot.lane.b32.xlu0 %v2331, 24
  %v2490 = vpop.permute.xlu0 %2489
  %2491 = vrot.lane.b32.xlu0 %v2332, 24
  %v2492 = vpop.permute.xlu0 %2491
  %2493 = vrot.lane.b32.xlu0 %v2333, 24
  %v2494 = vpop.permute.xlu0 %2493
  %2495 = vrot.lane.b32.xlu0 %v2334, 24
  %v2496 = vpop.permute.xlu0 %2495
  %2497 = vrot.lane.b32.xlu0 %v2335, 24
  %v2498 = vpop.permute.xlu0 %2497
  %2499 = vrot.lane.b32.xlu0 %v2336, 24
  %v2500 = vpop.permute.xlu0 %2499
  %2501 = vrot.lane.b32.xlu0 %v2337, 24
  %v2502 = vpop.permute.xlu0 %2501
  %2503 = vrot.lane.b32.xlu0 %v2338, 24
  %v2504 = vpop.permute.xlu0 %2503
  %2505 = vrot.lane.b32.xlu0 %v2339, 24
  %v2506 = vpop.permute.xlu0 %2505
  %2507 = vrot.lane.b32.xlu0 %v2340, 24
  %v2508 = vpop.permute.xlu0 %2507
  %2509 = vrot.lane.b32.xlu0 %v2341, 24
  %v2510 = vpop.permute.xlu0 %2509
  %2511 = vrot.lane.b32.xlu0 %v2342, 24
  %v2512 = vpop.permute.xlu0 %2511
  %2513 = vrot.lane.b32.xlu0 %v2343, 24
  %v2514 = vpop.permute.xlu0 %2513
  %2515 = vrot.lane.b32.xlu0 %v2344, 24
  %v2516 = vpop.permute.xlu0 %2515
  %2517 = vrot.lane.b32.xlu0 %v2345, 24
  %v2518 = vpop.permute.xlu0 %2517
  %2519 = vrot.lane.b32.xlu0 %v2346, 24
  %v2520 = vpop.permute.xlu0 %2519
  %2521 = vrot.lane.b32.xlu0 %v2347, 24
  %v2522 = vpop.permute.xlu0 %2521
  %2523 = vrot.lane.b32.xlu0 %v2348, 24
  %v2524 = vpop.permute.xlu0 %2523
  %2525 = vrot.lane.b32.xlu0 %v2349, 24
  %v2526 = vpop.permute.xlu0 %2525
  %2527 = vrot.lane.b32.xlu0 %v2350, 24
  %v2528 = vpop.permute.xlu0 %2527
  %2529 = vrot.lane.b32.xlu0 %v2351, 24
  %v2530 = vpop.permute.xlu0 %2529
  %2531 = vrot.lane.b32.xlu0 %v2352, 24
  %v2532 = vpop.permute.xlu0 %2531
  %2533 = vrot.lane.b32.xlu0 %v2353, 24
  %v2534 = vpop.permute.xlu0 %2533
  %2535 = vrot.lane.b32.xlu0 %v2354, 24
  %v2536 = vpop.permute.xlu0 %2535
  %2537 = vrot.lane.b32.xlu0 %v2355, 24
  %v2538 = vpop.permute.xlu0 %2537
  %2539 = vrot.lane.b32.xlu0 %v2356, 24
  %v2540 = vpop.permute.xlu0 %2539
  %2541 = vrot.lane.b32.xlu0 %v2357, 24
  %v2542 = vpop.permute.xlu0 %2541
  %2543 = vrot.lane.b32.xlu0 %v2358, 24
  %v2544 = vpop.permute.xlu0 %2543
  %2545 = vrot.lane.b32.xlu0 %v2359, 24
  %v2546 = vpop.permute.xlu0 %2545
  %2547 = vrot.lane.b32.xlu0 %v2360, 24
  %v2548 = vpop.permute.xlu0 %2547
  %2549 = vrot.lane.b32.xlu0 %v2361, 24
  %v2550 = vpop.permute.xlu0 %2549
  %2551 = vrot.lane.b32.xlu0 %v2362, 24
  %v2552 = vpop.permute.xlu0 %2551
  %2553 = vrot.lane.b32.xlu0 %v2363, 24
  %v2554 = vpop.permute.xlu0 %2553
  %2555 = vrot.lane.b32.xlu0 %v2364, 24
  %v2556 = vpop.permute.xlu0 %2555
  %vm2621 = vcmask 228544
  %2622 = vst.msk [vmem:[#allocation3] sm:$0xff] %vm2621, %v2430
  %2623 = vst.msk [vmem:[#allocation3 + $0x8] sm:$0xff] %vm2621, %v2432
  %2624 = vst.msk [vmem:[#allocation3 + $0x10] sm:$0xff] %vm2621, %v2434
  %2625 = vst.msk [vmem:[#allocation3 + $0x18] sm:$0xff] %vm2621, %v2436
  %2626 = vst.msk [vmem:[#allocation3 + $0x20] sm:$0xff] %vm2621, %v2438
  %2627 = vst.msk [vmem:[#allocation3 + $0x28] sm:$0xff] %vm2621, %v2440
  %2628 = vst.msk [vmem:[#allocation3 + $0x30] sm:$0xff] %vm2621, %v2442
  %2629 = vst.msk [vmem:[#allocation3 + $0x38] sm:$0xff] %vm2621, %v2444
  %2630 = vst.msk [vmem:[#allocation3 + $0x40] sm:$0xff] %vm2621, %v2446
  %2631 = vst.msk [vmem:[#allocation3 + $0x48] sm:$0xff] %vm2621, %v2448
  %2632 = vst.msk [vmem:[#allocation3 + $0x50] sm:$0xff] %vm2621, %v2450
  %2633 = vst.msk [vmem:[#allocation3 + $0x58] sm:$0xff] %vm2621, %v2452
  %2634 = vst.msk [vmem:[#allocation3 + $0x60] sm:$0xff] %vm2621, %v2454
  %2635 = vst.msk [vmem:[#allocation3 + $0x68] sm:$0xff] %vm2621, %v2456
  %2636 = vst.msk [vmem:[#allocation3 + $0x70] sm:$0xff] %vm2621, %v2458
  %2637 = vst.msk [vmem:[#allocation3 + $0x78] sm:$0xff] %vm2621, %v2460
  %2638 = vst.msk [vmem:[#allocation3 + $0x80] sm:$0xff] %vm2621, %v2462
  %2639 = vst.msk [vmem:[#allocation3 + $0x88] sm:$0xff] %vm2621, %v2464
  %2640 = vst.msk [vmem:[#allocation3 + $0x90] sm:$0xff] %vm2621, %v2466
  %2641 = vst.msk [vmem:[#allocation3 + $0x98] sm:$0xff] %vm2621, %v2468
  %2642 = vst.msk [vmem:[#allocation3 + $0xa0] sm:$0xff] %vm2621, %v2470
  %2643 = vst.msk [vmem:[#allocation3 + $0xa8] sm:$0xff] %vm2621, %v2472
  %2644 = vst.msk [vmem:[#allocation3 + $0xb0] sm:$0xff] %vm2621, %v2474
  %2645 = vst.msk [vmem:[#allocation3 + $0xb8] sm:$0xff] %vm2621, %v2476
  %2646 = vst.msk [vmem:[#allocation3 + $0xc0] sm:$0xff] %vm2621, %v2478
  %2647 = vst.msk [vmem:[#allocation3 + $0xc8] sm:$0xff] %vm2621, %v2480
  %2648 = vst.msk [vmem:[#allocation3 + $0xd0] sm:$0xff] %vm2621, %v2482
  %2649 = vst.msk [vmem:[#allocation3 + $0xd8] sm:$0xff] %vm2621, %v2484
  %2650 = vst.msk [vmem:[#allocation3 + $0xe0] sm:$0xff] %vm2621, %v2486
  %2651 = vst.msk [vmem:[#allocation3 + $0xe8] sm:$0xff] %vm2621, %v2488
  %2652 = vst.msk [vmem:[#allocation3 + $0xf0] sm:$0xff] %vm2621, %v2490
  %2653 = vst.msk [vmem:[#allocation3 + $0xf8] sm:$0xff] %vm2621, %v2492
  %2654 = vst.msk [vmem:[#allocation3 + $0x100] sm:$0xff] %vm2621, %v2494
  %2655 = vst.msk [vmem:[#allocation3 + $0x108] sm:$0xff] %vm2621, %v2496
  %2656 = vst.msk [vmem:[#allocation3 + $0x110] sm:$0xff] %vm2621, %v2498
  %2657 = vst.msk [vmem:[#allocation3 + $0x118] sm:$0xff] %vm2621, %v2500
  %2658 = vst.msk [vmem:[#allocation3 + $0x120] sm:$0xff] %vm2621, %v2502
  %2659 = vst.msk [vmem:[#allocation3 + $0x128] sm:$0xff] %vm2621, %v2504
  %2660 = vst.msk [vmem:[#allocation3 + $0x130] sm:$0xff] %vm2621, %v2506
  %2661 = vst.msk [vmem:[#allocation3 + $0x138] sm:$0xff] %vm2621, %v2508
  %2662 = vst.msk [vmem:[#allocation3 + $0x140] sm:$0xff] %vm2621, %v2510
  %2663 = vst.msk [vmem:[#allocation3 + $0x148] sm:$0xff] %vm2621, %v2512
  %2664 = vst.msk [vmem:[#allocation3 + $0x150] sm:$0xff] %vm2621, %v2514
  %2665 = vst.msk [vmem:[#allocation3 + $0x158] sm:$0xff] %vm2621, %v2516
  %2666 = vst.msk [vmem:[#allocation3 + $0x160] sm:$0xff] %vm2621, %v2518
  %2667 = vst.msk [vmem:[#allocation3 + $0x168] sm:$0xff] %vm2621, %v2520
  %2668 = vst.msk [vmem:[#allocation3 + $0x170] sm:$0xff] %vm2621, %v2522
  %2669 = vst.msk [vmem:[#allocation3 + $0x178] sm:$0xff] %vm2621, %v2524
  %2670 = vst.msk [vmem:[#allocation3 + $0x180] sm:$0xff] %vm2621, %v2526
  %2671 = vst.msk [vmem:[#allocation3 + $0x188] sm:$0xff] %vm2621, %v2528
  %2672 = vst.msk [vmem:[#allocation3 + $0x190] sm:$0xff] %vm2621, %v2530
  %2673 = vst.msk [vmem:[#allocation3 + $0x198] sm:$0xff] %vm2621, %v2532
  %2674 = vst.msk [vmem:[#allocation3 + $0x1a0] sm:$0xff] %vm2621, %v2534
  %2675 = vst.msk [vmem:[#allocation3 + $0x1a8] sm:$0xff] %vm2621, %v2536
  %2676 = vst.msk [vmem:[#allocation3 + $0x1b0] sm:$0xff] %vm2621, %v2538
  %2677 = vst.msk [vmem:[#allocation3 + $0x1b8] sm:$0xff] %vm2621, %v2540
  %2678 = vst.msk [vmem:[#allocation3 + $0x1c0] sm:$0xff] %vm2621, %v2542
  %2679 = vst.msk [vmem:[#allocation3 + $0x1c8] sm:$0xff] %vm2621, %v2544
  %2680 = vst.msk [vmem:[#allocation3 + $0x1d0] sm:$0xff] %vm2621, %v2546
  %2681 = vst.msk [vmem:[#allocation3 + $0x1d8] sm:$0xff] %vm2621, %v2548
  %2682 = vst.msk [vmem:[#allocation3 + $0x1e0] sm:$0xff] %vm2621, %v2550
  %2683 = vst.msk [vmem:[#allocation3 + $0x1e8] sm:$0xff] %vm2621, %v2552
  %2684 = vst.msk [vmem:[#allocation3 + $0x1f0] sm:$0xff] %vm2621, %v2554
  %2685 = vst.msk [vmem:[#allocation3 + $0x1f8] sm:$0xff] %vm2621, %v2556
  %v2686 = vld [vmem:[%s2300 + $0x1] sm:$0xff]
  %v2687 = vld [vmem:[%s2300 + $0x9] sm:$0xff]
  %v2688 = vld [vmem:[%s2300 + $0x19] sm:$0xff]
  %v2689 = vld [vmem:[%s2300 + $0x21] sm:$0xff]
  %v2690 = vld [vmem:[%s2300 + $0x31] sm:$0xff]
  %v2691 = vld [vmem:[%s2300 + $0x39] sm:$0xff]
  %v2692 = vld [vmem:[%s2300 + $0x49] sm:$0xff]
  %v2693 = vld [vmem:[%s2300 + $0x51] sm:$0xff]
  %v2694 = vld [vmem:[%s2300 + $0x61] sm:$0xff]
  %v2695 = vld [vmem:[%s2300 + $0x69] sm:$0xff]
  %v2696 = vld [vmem:[%s2300 + $0x79] sm:$0xff]
  %v2697 = vld [vmem:[%s2300 + $0x81] sm:$0xff]
  %v2698 = vld [vmem:[%s2300 + $0x91] sm:$0xff]
  %v2699 = vld [vmem:[%s2300 + $0x99] sm:$0xff]
  %v2700 = vld [vmem:[%s2300 + $0xa9] sm:$0xff]
  %v2701 = vld [vmem:[%s2300 + $0xb1] sm:$0xff]
  %v2702 = vld [vmem:[%s2300 + $0xc1] sm:$0xff]
  %v2703 = vld [vmem:[%s2300 + $0xc9] sm:$0xff]
  %v2704 = vld [vmem:[%s2300 + $0xd9] sm:$0xff]
  %v2705 = vld [vmem:[%s2300 + $0xe1] sm:$0xff]
  %v2706 = vld [vmem:[%s2300 + $0xf1] sm:$0xff]
  %v2707 = vld [vmem:[%s2300 + $0xf9] sm:$0xff]
  %v2708 = vld [vmem:[%s2300 + $0x109] sm:$0xff]
  %v2709 = vld [vmem:[%s2300 + $0x111] sm:$0xff]
  %v2710 = vld [vmem:[%s2300 + $0x121] sm:$0xff]
  %v2711 = vld [vmem:[%s2300 + $0x129] sm:$0xff]
  %v2712 = vld [vmem:[%s2300 + $0x139] sm:$0xff]
  %v2713 = vld [vmem:[%s2300 + $0x141] sm:$0xff]
  %v2714 = vld [vmem:[%s2300 + $0x151] sm:$0xff]
  %v2715 = vld [vmem:[%s2300 + $0x159] sm:$0xff]
  %v2716 = vld [vmem:[%s2300 + $0x169] sm:$0xff]
  %v2717 = vld [vmem:[%s2300 + $0x171] sm:$0xff]
  %v2718 = vld [vmem:[%s2300 + $0x1b1] sm:$0xff]
  %v2719 = vld [vmem:[%s2300 + $0x1b9] sm:$0xff]
  %v2720 = vld [vmem:[%s2300 + $0x1c9] sm:$0xff]
  %v2721 = vld [vmem:[%s2300 + $0x1d1] sm:$0xff]
  %v2722 = vld [vmem:[%s2300 + $0x1e1] sm:$0xff]
  %v2723 = vld [vmem:[%s2300 + $0x1e9] sm:$0xff]
  %v2724 = vld [vmem:[%s2300 + $0x1f9] sm:$0xff]
  %v2725 = vld [vmem:[%s2300 + $0x201] sm:$0xff]
  %v2726 = vld [vmem:[%s2300 + $0x211] sm:$0xff]
  %v2727 = vld [vmem:[%s2300 + $0x219] sm:$0xff]
  %v2728 = vld [vmem:[%s2300 + $0x229] sm:$0xff]
  %v2729 = vld [vmem:[%s2300 + $0x231] sm:$0xff]
  %v2730 = vld [vmem:[%s2300 + $0x241] sm:$0xff]
  %v2731 = vld [vmem:[%s2300 + $0x249] sm:$0xff]
  %v2732 = vld [vmem:[%s2300 + $0x259] sm:$0xff]
  %v2733 = vld [vmem:[%s2300 + $0x261] sm:$0xff]
  %v2734 = vld [vmem:[%s2300 + $0x271] sm:$0xff]
  %v2735 = vld [vmem:[%s2300 + $0x279] sm:$0xff]
  %v2736 = vld [vmem:[%s2300 + $0x289] sm:$0xff]
  %v2737 = vld [vmem:[%s2300 + $0x291] sm:$0xff]
  %v2738 = vld [vmem:[%s2300 + $0x2a1] sm:$0xff]
  %v2739 = vld [vmem:[%s2300 + $0x2a9] sm:$0xff]
  %v2740 = vld [vmem:[%s2300 + $0x2b9] sm:$0xff]
  %v2741 = vld [vmem:[%s2300 + $0x2c1] sm:$0xff]
  %v2742 = vld [vmem:[%s2300 + $0x2d1] sm:$0xff]
  %v2743 = vld [vmem:[%s2300 + $0x2d9] sm:$0xff]
  %v2744 = vld [vmem:[%s2300 + $0x2e9] sm:$0xff]
  %v2745 = vld [vmem:[%s2300 + $0x2f1] sm:$0xff]
  %v2746 = vld [vmem:[%s2300 + $0x301] sm:$0xff]
  %v2747 = vld [vmem:[%s2300 + $0x309] sm:$0xff]
  %v2748 = vld [vmem:[%s2300 + $0x319] sm:$0xff]
  %v2749 = vld [vmem:[%s2300 + $0x321] sm:$0xff]
  %2814 = vrot.lane.b32.xlu0 %v2686, 28
  %v2815 = vpop.permute.xlu0 %2814
  %2816 = vrot.lane.b32.xlu0 %v2687, 28
  %v2817 = vpop.permute.xlu0 %2816
  %2818 = vrot.lane.b32.xlu0 %v2688, 28
  %v2819 = vpop.permute.xlu0 %2818
  %2820 = vrot.lane.b32.xlu0 %v2689, 28
  %v2821 = vpop.permute.xlu0 %2820
  %2822 = vrot.lane.b32.xlu0 %v2690, 28
  %v2823 = vpop.permute.xlu0 %2822
  %2824 = vrot.lane.b32.xlu0 %v2691, 28
  %v2825 = vpop.permute.xlu0 %2824
  %2826 = vrot.lane.b32.xlu0 %v2692, 28
  %v2827 = vpop.permute.xlu0 %2826
  %2828 = vrot.lane.b32.xlu0 %v2693, 28
  %v2829 = vpop.permute.xlu0 %2828
  %2830 = vrot.lane.b32.xlu0 %v2694, 28
  %v2831 = vpop.permute.xlu0 %2830
  %2832 = vrot.lane.b32.xlu0 %v2695, 28
  %v2833 = vpop.permute.xlu0 %2832
  %2834 = vrot.lane.b32.xlu0 %v2696, 28
  %v2835 = vpop.permute.xlu0 %2834
  %2836 = vrot.lane.b32.xlu0 %v2697, 28
  %v2837 = vpop.permute.xlu0 %2836
  %2838 = vrot.lane.b32.xlu0 %v2698, 28
  %v2839 = vpop.permute.xlu0 %2838
  %2840 = vrot.lane.b32.xlu0 %v2699, 28
  %v2841 = vpop.permute.xlu0 %2840
  %2842 = vrot.lane.b32.xlu0 %v2700, 28
  %v2843 = vpop.permute.xlu0 %2842
  %2844 = vrot.lane.b32.xlu0 %v2701, 28
  %v2845 = vpop.permute.xlu0 %2844
  %2846 = vrot.lane.b32.xlu0 %v2702, 28
  %v2847 = vpop.permute.xlu0 %2846
  %2848 = vrot.lane.b32.xlu0 %v2703, 28
  %v2849 = vpop.permute.xlu0 %2848
  %2850 = vrot.lane.b32.xlu0 %v2704, 28
  %v2851 = vpop.permute.xlu0 %2850
  %2852 = vrot.lane.b32.xlu0 %v2705, 28
  %v2853 = vpop.permute.xlu0 %2852
  %2854 = vrot.lane.b32.xlu0 %v2706, 28
  %v2855 = vpop.permute.xlu0 %2854
  %2856 = vrot.lane.b32.xlu0 %v2707, 28
  %v2857 = vpop.permute.xlu0 %2856
  %2858 = vrot.lane.b32.xlu0 %v2708, 28
  %v2859 = vpop.permute.xlu0 %2858
  %2860 = vrot.lane.b32.xlu0 %v2709, 28
  %v2861 = vpop.permute.xlu0 %2860
  %2862 = vrot.lane.b32.xlu0 %v2710, 28
  %v2863 = vpop.permute.xlu0 %2862
  %2864 = vrot.lane.b32.xlu0 %v2711, 28
  %v2865 = vpop.permute.xlu0 %2864
  %2866 = vrot.lane.b32.xlu0 %v2712, 28
  %v2867 = vpop.permute.xlu0 %2866
  %2868 = vrot.lane.b32.xlu0 %v2713, 28
  %v2869 = vpop.permute.xlu0 %2868
  %2870 = vrot.lane.b32.xlu0 %v2714, 28
  %v2871 = vpop.permute.xlu0 %2870
  %2872 = vrot.lane.b32.xlu0 %v2715, 28
  %v2873 = vpop.permute.xlu0 %2872
  %2874 = vrot.lane.b32.xlu0 %v2716, 28
  %v2875 = vpop.permute.xlu0 %2874
  %2876 = vrot.lane.b32.xlu0 %v2717, 28
  %v2877 = vpop.permute.xlu0 %2876
  %2878 = vrot.lane.b32.xlu0 %v2718, 28
  %v2879 = vpop.permute.xlu0 %2878
  %2880 = vrot.lane.b32.xlu0 %v2719, 28
  %v2881 = vpop.permute.xlu0 %2880
  %2882 = vrot.lane.b32.xlu0 %v2720, 28
  %v2883 = vpop.permute.xlu0 %2882
  %2884 = vrot.lane.b32.xlu0 %v2721, 28
  %v2885 = vpop.permute.xlu0 %2884
  %2886 = vrot.lane.b32.xlu0 %v2722, 28
  %v2887 = vpop.permute.xlu0 %2886
  %2888 = vrot.lane.b32.xlu0 %v2723, 28
  %v2889 = vpop.permute.xlu0 %2888
  %2890 = vrot.lane.b32.xlu0 %v2724, 28
  %v2891 = vpop.permute.xlu0 %2890
  %2892 = vrot.lane.b32.xlu0 %v2725, 28
  %v2893 = vpop.permute.xlu0 %2892
  %2894 = vrot.lane.b32.xlu0 %v2726, 28
  %v2895 = vpop.permute.xlu0 %2894
  %2896 = vrot.lane.b32.xlu0 %v2727, 28
  %v2897 = vpop.permute.xlu0 %2896
  %2898 = vrot.lane.b32.xlu0 %v2728, 28
  %v2899 = vpop.permute.xlu0 %2898
  %2900 = vrot.lane.b32.xlu0 %v2729, 28
  %v2901 = vpop.permute.xlu0 %2900
  %2902 = vrot.lane.b32.xlu0 %v2730, 28
  %v2903 = vpop.permute.xlu0 %2902
  %2904 = vrot.lane.b32.xlu0 %v2731, 28
  %v2905 = vpop.permute.xlu0 %2904
  %2906 = vrot.lane.b32.xlu0 %v2732, 28
  %v2907 = vpop.permute.xlu0 %2906
  %2908 = vrot.lane.b32.xlu0 %v2733, 28
  %v2909 = vpop.permute.xlu0 %2908
  %2910 = vrot.lane.b32.xlu0 %v2734, 28
  %v2911 = vpop.permute.xlu0 %2910
  %2912 = vrot.lane.b32.xlu0 %v2735, 28
  %v2913 = vpop.permute.xlu0 %2912
  %2914 = vrot.lane.b32.xlu0 %v2736, 28
  %v2915 = vpop.permute.xlu0 %2914
  %2916 = vrot.lane.b32.xlu0 %v2737, 28
  %v2917 = vpop.permute.xlu0 %2916
  %2918 = vrot.lane.b32.xlu0 %v2738, 28
  %v2919 = vpop.permute.xlu0 %2918
  %2920 = vrot.lane.b32.xlu0 %v2739, 28
  %v2921 = vpop.permute.xlu0 %2920
  %2922 = vrot.lane.b32.xlu0 %v2740, 28
  %v2923 = vpop.permute.xlu0 %2922
  %2924 = vrot.lane.b32.xlu0 %v2741, 28
  %v2925 = vpop.permute.xlu0 %2924
  %2926 = vrot.lane.b32.xlu0 %v2742, 28
  %v2927 = vpop.permute.xlu0 %2926
  %2928 = vrot.lane.b32.xlu0 %v2743, 28
  %v2929 = vpop.permute.xlu0 %2928
  %2930 = vrot.lane.b32.xlu0 %v2744, 28
  %v2931 = vpop.permute.xlu0 %2930
  %2932 = vrot.lane.b32.xlu0 %v2745, 28
  %v2933 = vpop.permute.xlu0 %2932
  %2934 = vrot.lane.b32.xlu0 %v2746, 28
  %v2935 = vpop.permute.xlu0 %2934
  %2936 = vrot.lane.b32.xlu0 %v2747, 28
  %v2937 = vpop.permute.xlu0 %2936
  %2938 = vrot.lane.b32.xlu0 %v2748, 28
  %v2939 = vpop.permute.xlu0 %2938
  %2940 = vrot.lane.b32.xlu0 %v2749, 28
  %v2941 = vpop.permute.xlu0 %2940
  %vm3006 = vcmask 261344
  %3007 = vst.msk [vmem:[#allocation3] sm:$0xff] %vm3006, %v2815
  %3008 = vst.msk [vmem:[#allocation3 + $0x8] sm:$0xff] %vm3006, %v2817
  %3009 = vst.msk [vmem:[#allocation3 + $0x10] sm:$0xff] %vm3006, %v2819
  %3010 = vst.msk [vmem:[#allocation3 + $0x18] sm:$0xff] %vm3006, %v2821
  %3011 = vst.msk [vmem:[#allocation3 + $0x20] sm:$0xff] %vm3006, %v2823
  %3012 = vst.msk [vmem:[#allocation3 + $0x28] sm:$0xff] %vm3006, %v2825
  %3013 = vst.msk [vmem:[#allocation3 + $0x30] sm:$0xff] %vm3006, %v2827
  %3014 = vst.msk [vmem:[#allocation3 + $0x38] sm:$0xff] %vm3006, %v2829
  %3015 = vst.msk [vmem:[#allocation3 + $0x40] sm:$0xff] %vm3006, %v2831
  %3016 = vst.msk [vmem:[#allocation3 + $0x48] sm:$0xff] %vm3006, %v2833
  %3017 = vst.msk [vmem:[#allocation3 + $0x50] sm:$0xff] %vm3006, %v2835
  %3018 = vst.msk [vmem:[#allocation3 + $0x58] sm:$0xff] %vm3006, %v2837
  %3019 = vst.msk [vmem:[#allocation3 + $0x60] sm:$0xff] %vm3006, %v2839
  %3020 = vst.msk [vmem:[#allocation3 + $0x68] sm:$0xff] %vm3006, %v2841
  %3021 = vst.msk [vmem:[#allocation3 + $0x70] sm:$0xff] %vm3006, %v2843
  %3022 = vst.msk [vmem:[#allocation3 + $0x78] sm:$0xff] %vm3006, %v2845
  %3023 = vst.msk [vmem:[#allocation3 + $0x80] sm:$0xff] %vm3006, %v2847
  %3024 = vst.msk [vmem:[#allocation3 + $0x88] sm:$0xff] %vm3006, %v2849
  %3025 = vst.msk [vmem:[#allocation3 + $0x90] sm:$0xff] %vm3006, %v2851
  %3026 = vst.msk [vmem:[#allocation3 + $0x98] sm:$0xff] %vm3006, %v2853
  %3027 = vst.msk [vmem:[#allocation3 + $0xa0] sm:$0xff] %vm3006, %v2855
  %3028 = vst.msk [vmem:[#allocation3 + $0xa8] sm:$0xff] %vm3006, %v2857
  %3029 = vst.msk [vmem:[#allocation3 + $0xb0] sm:$0xff] %vm3006, %v2859
  %3030 = vst.msk [vmem:[#allocation3 + $0xb8] sm:$0xff] %vm3006, %v2861
  %3031 = vst.msk [vmem:[#allocation3 + $0xc0] sm:$0xff] %vm3006, %v2863
  %3032 = vst.msk [vmem:[#allocation3 + $0xc8] sm:$0xff] %vm3006, %v2865
  %3033 = vst.msk [vmem:[#allocation3 + $0xd0] sm:$0xff] %vm3006, %v2867
  %3034 = vst.msk [vmem:[#allocation3 + $0xd8] sm:$0xff] %vm3006, %v2869
  %3035 = vst.msk [vmem:[#allocation3 + $0xe0] sm:$0xff] %vm3006, %v2871
  %3036 = vst.msk [vmem:[#allocation3 + $0xe8] sm:$0xff] %vm3006, %v2873
  %3037 = vst.msk [vmem:[#allocation3 + $0xf0] sm:$0xff] %vm3006, %v2875
  %3038 = vst.msk [vmem:[#allocation3 + $0xf8] sm:$0xff] %vm3006, %v2877
  %3039 = vst.msk [vmem:[#allocation3 + $0x100] sm:$0xff] %vm3006, %v2879
  %3040 = vst.msk [vmem:[#allocation3 + $0x108] sm:$0xff] %vm3006, %v2881
  %3041 = vst.msk [vmem:[#allocation3 + $0x110] sm:$0xff] %vm3006, %v2883
  %3042 = vst.msk [vmem:[#allocation3 + $0x118] sm:$0xff] %vm3006, %v2885
  %3043 = vst.msk [vmem:[#allocation3 + $0x120] sm:$0xff] %vm3006, %v2887
  %3044 = vst.msk [vmem:[#allocation3 + $0x128] sm:$0xff] %vm3006, %v2889
  %3045 = vst.msk [vmem:[#allocation3 + $0x130] sm:$0xff] %vm3006, %v2891
  %3046 = vst.msk [vmem:[#allocation3 + $0x138] sm:$0xff] %vm3006, %v2893
  %3047 = vst.msk [vmem:[#allocation3 + $0x140] sm:$0xff] %vm3006, %v2895
  %3048 = vst.msk [vmem:[#allocation3 + $0x148] sm:$0xff] %vm3006, %v2897
  %3049 = vst.msk [vmem:[#allocation3 + $0x150] sm:$0xff] %vm3006, %v2899
  %3050 = vst.msk [vmem:[#allocation3 + $0x158] sm:$0xff] %vm3006, %v2901
  %3051 = vst.msk [vmem:[#allocation3 + $0x160] sm:$0xff] %vm3006, %v2903
  %3052 = vst.msk [vmem:[#allocation3 + $0x168] sm:$0xff] %vm3006, %v2905
  %3053 = vst.msk [vmem:[#allocation3 + $0x170] sm:$0xff] %vm3006, %v2907
  %3054 = vst.msk [vmem:[#allocation3 + $0x178] sm:$0xff] %vm3006, %v2909
  %3055 = vst.msk [vmem:[#allocation3 + $0x180] sm:$0xff] %vm3006, %v2911
  %3056 = vst.msk [vmem:[#allocation3 + $0x188] sm:$0xff] %vm3006, %v2913
  %3057 = vst.msk [vmem:[#allocation3 + $0x190] sm:$0xff] %vm3006, %v2915
  %3058 = vst.msk [vmem:[#allocation3 + $0x198] sm:$0xff] %vm3006, %v2917
  %3059 = vst.msk [vmem:[#allocation3 + $0x1a0] sm:$0xff] %vm3006, %v2919
  %3060 = vst.msk [vmem:[#allocation3 + $0x1a8] sm:$0xff] %vm3006, %v2921
  %3061 = vst.msk [vmem:[#allocation3 + $0x1b0] sm:$0xff] %vm3006, %v2923
  %3062 = vst.msk [vmem:[#allocation3 + $0x1b8] sm:$0xff] %vm3006, %v2925
  %3063 = vst.msk [vmem:[#allocation3 + $0x1c0] sm:$0xff] %vm3006, %v2927
  %3064 = vst.msk [vmem:[#allocation3 + $0x1c8] sm:$0xff] %vm3006, %v2929
  %3065 = vst.msk [vmem:[#allocation3 + $0x1d0] sm:$0xff] %vm3006, %v2931
  %3066 = vst.msk [vmem:[#allocation3 + $0x1d8] sm:$0xff] %vm3006, %v2933
  %3067 = vst.msk [vmem:[#allocation3 + $0x1e0] sm:$0xff] %vm3006, %v2935
  %3068 = vst.msk [vmem:[#allocation3 + $0x1e8] sm:$0xff] %vm3006, %v2937
  %3069 = vst.msk [vmem:[#allocation3 + $0x1f0] sm:$0xff] %vm3006, %v2939
  %3070 = vst.msk [vmem:[#allocation3 + $0x1f8] sm:$0xff] %vm3006, %v2941
  %v3071 = vld [vmem:[%s2300 + $0x2] sm:$0xff]
  %v3072 = vld [vmem:[%s2300 + $0xa] sm:$0xff]
  %v3073 = vld [vmem:[%s2300 + $0x1a] sm:$0xff]
  %v3074 = vld [vmem:[%s2300 + $0x22] sm:$0xff]
  %v3075 = vld [vmem:[%s2300 + $0x32] sm:$0xff]
  %v3076 = vld [vmem:[%s2300 + $0x3a] sm:$0xff]
  %v3077 = vld [vmem:[%s2300 + $0x4a] sm:$0xff]
  %v3078 = vld [vmem:[%s2300 + $0x52] sm:$0xff]
  %v3079 = vld [vmem:[%s2300 + $0x62] sm:$0xff]
  %v3080 = vld [vmem:[%s2300 + $0x6a] sm:$0xff]
  %v3081 = vld [vmem:[%s2300 + $0x7a] sm:$0xff]
  %v3082 = vld [vmem:[%s2300 + $0x82] sm:$0xff]
  %v3083 = vld [vmem:[%s2300 + $0x92] sm:$0xff]
  %v3084 = vld [vmem:[%s2300 + $0x9a] sm:$0xff]
  %v3085 = vld [vmem:[%s2300 + $0xaa] sm:$0xff]
  %v3086 = vld [vmem:[%s2300 + $0xb2] sm:$0xff]
  %v3087 = vld [vmem:[%s2300 + $0xc2] sm:$0xff]
  %v3088 = vld [vmem:[%s2300 + $0xca] sm:$0xff]
  %v3089 = vld [vmem:[%s2300 + $0xda] sm:$0xff]
  %v3090 = vld [vmem:[%s2300 + $0xe2] sm:$0xff]
  %v3091 = vld [vmem:[%s2300 + $0xf2] sm:$0xff]
  %v3092 = vld [vmem:[%s2300 + $0xfa] sm:$0xff]
  %v3093 = vld [vmem:[%s2300 + $0x10a] sm:$0xff]
  %v3094 = vld [vmem:[%s2300 + $0x112] sm:$0xff]
  %v3095 = vld [vmem:[%s2300 + $0x122] sm:$0xff]
  %v3096 = vld [vmem:[%s2300 + $0x12a] sm:$0xff]
  %v3097 = vld [vmem:[%s2300 + $0x13a] sm:$0xff]
  %v3098 = vld [vmem:[%s2300 + $0x142] sm:$0xff]
  %v3099 = vld [vmem:[%s2300 + $0x152] sm:$0xff]
  %v3100 = vld [vmem:[%s2300 + $0x15a] sm:$0xff]
  %v3101 = vld [vmem:[%s2300 + $0x16a] sm:$0xff]
  %v3102 = vld [vmem:[%s2300 + $0x172] sm:$0xff]
  %v3103 = vld [vmem:[%s2300 + $0x1b2] sm:$0xff]
  %v3104 = vld [vmem:[%s2300 + $0x1ba] sm:$0xff]
  %v3105 = vld [vmem:[%s2300 + $0x1ca] sm:$0xff]
  %v3106 = vld [vmem:[%s2300 + $0x1d2] sm:$0xff]
  %v3107 = vld [vmem:[%s2300 + $0x1e2] sm:$0xff]
  %v3108 = vld [vmem:[%s2300 + $0x1ea] sm:$0xff]
  %v3109 = vld [vmem:[%s2300 + $0x1fa] sm:$0xff]
  %v3110 = vld [vmem:[%s2300 + $0x202] sm:$0xff]
  %v3111 = vld [vmem:[%s2300 + $0x212] sm:$0xff]
  %v3112 = vld [vmem:[%s2300 + $0x21a] sm:$0xff]
  %v3113 = vld [vmem:[%s2300 + $0x22a] sm:$0xff]
  %v3114 = vld [vmem:[%s2300 + $0x232] sm:$0xff]
  %v3115 = vld [vmem:[%s2300 + $0x242] sm:$0xff]
  %v3116 = vld [vmem:[%s2300 + $0x24a] sm:$0xff]
  %v3117 = vld [vmem:[%s2300 + $0x25a] sm:$0xff]
  %v3118 = vld [vmem:[%s2300 + $0x262] sm:$0xff]
  %v3119 = vld [vmem:[%s2300 + $0x272] sm:$0xff]
  %v3120 = vld [vmem:[%s2300 + $0x27a] sm:$0xff]
  %v3121 = vld [vmem:[%s2300 + $0x28a] sm:$0xff]
  %v3122 = vld [vmem:[%s2300 + $0x292] sm:$0xff]
  %v3123 = vld [vmem:[%s2300 + $0x2a2] sm:$0xff]
  %v3124 = vld [vmem:[%s2300 + $0x2aa] sm:$0xff]
  %v3125 = vld [vmem:[%s2300 + $0x2ba] sm:$0xff]
  %v3126 = vld [vmem:[%s2300 + $0x2c2] sm:$0xff]
  %v3127 = vld [vmem:[%s2300 + $0x2d2] sm:$0xff]
  %v3128 = vld [vmem:[%s2300 + $0x2da] sm:$0xff]
  %v3129 = vld [vmem:[%s2300 + $0x2ea] sm:$0xff]
  %v3130 = vld [vmem:[%s2300 + $0x2f2] sm:$0xff]
  %v3131 = vld [vmem:[%s2300 + $0x302] sm:$0xff]
  %v3132 = vld [vmem:[%s2300 + $0x30a] sm:$0xff]
  %v3133 = vld [vmem:[%s2300 + $0x31a] sm:$0xff]
  %v3134 = vld [vmem:[%s2300 + $0x322] sm:$0xff]
  %3199 = vrot.lane.b32.xlu0 %v3071, 32
  %v3200 = vpop.permute.xlu0 %3199
  %3201 = vrot.lane.b32.xlu0 %v3072, 32
  %v3202 = vpop.permute.xlu0 %3201
  %3203 = vrot.lane.b32.xlu0 %v3073, 32
  %v3204 = vpop.permute.xlu0 %3203
  %3205 = vrot.lane.b32.xlu0 %v3074, 32
  %v3206 = vpop.permute.xlu0 %3205
  %3207 = vrot.lane.b32.xlu0 %v3075, 32
  %v3208 = vpop.permute.xlu0 %3207
  %3209 = vrot.lane.b32.xlu0 %v3076, 32
  %v3210 = vpop.permute.xlu0 %3209
  %3211 = vrot.lane.b32.xlu0 %v3077, 32
  %v3212 = vpop.permute.xlu0 %3211
  %3213 = vrot.lane.b32.xlu0 %v3078, 32
  %v3214 = vpop.permute.xlu0 %3213
  %3215 = vrot.lane.b32.xlu0 %v3079, 32
  %v3216 = vpop.permute.xlu0 %3215
  %3217 = vrot.lane.b32.xlu0 %v3080, 32
  %v3218 = vpop.permute.xlu0 %3217
  %3219 = vrot.lane.b32.xlu0 %v3081, 32
  %v3220 = vpop.permute.xlu0 %3219
  %3221 = vrot.lane.b32.xlu0 %v3082, 32
  %v3222 = vpop.permute.xlu0 %3221
  %3223 = vrot.lane.b32.xlu0 %v3083, 32
  %v3224 = vpop.permute.xlu0 %3223
  %3225 = vrot.lane.b32.xlu0 %v3084, 32
  %v3226 = vpop.permute.xlu0 %3225
  %3227 = vrot.lane.b32.xlu0 %v3085, 32
  %v3228 = vpop.permute.xlu0 %3227
  %3229 = vrot.lane.b32.xlu0 %v3086, 32
  %v3230 = vpop.permute.xlu0 %3229
  %3231 = vrot.lane.b32.xlu0 %v3087, 32
  %v3232 = vpop.permute.xlu0 %3231
  %3233 = vrot.lane.b32.xlu0 %v3088, 32
  %v3234 = vpop.permute.xlu0 %3233
  %3235 = vrot.lane.b32.xlu0 %v3089, 32
  %v3236 = vpop.permute.xlu0 %3235
  %3237 = vrot.lane.b32.xlu0 %v3090, 32
  %v3238 = vpop.permute.xlu0 %3237
  %3239 = vrot.lane.b32.xlu0 %v3091, 32
  %v3240 = vpop.permute.xlu0 %3239
  %3241 = vrot.lane.b32.xlu0 %v3092, 32
  %v3242 = vpop.permute.xlu0 %3241
  %3243 = vrot.lane.b32.xlu0 %v3093, 32
  %v3244 = vpop.permute.xlu0 %3243
  %3245 = vrot.lane.b32.xlu0 %v3094, 32
  %v3246 = vpop.permute.xlu0 %3245
  %3247 = vrot.lane.b32.xlu0 %v3095, 32
  %v3248 = vpop.permute.xlu0 %3247
  %3249 = vrot.lane.b32.xlu0 %v3096, 32
  %v3250 = vpop.permute.xlu0 %3249
  %3251 = vrot.lane.b32.xlu0 %v3097, 32
  %v3252 = vpop.permute.xlu0 %3251
  %3253 = vrot.lane.b32.xlu0 %v3098, 32
  %v3254 = vpop.permute.xlu0 %3253
  %3255 = vrot.lane.b32.xlu0 %v3099, 32
  %v3256 = vpop.permute.xlu0 %3255
  %3257 = vrot.lane.b32.xlu0 %v3100, 32
  %v3258 = vpop.permute.xlu0 %3257
  %3259 = vrot.lane.b32.xlu0 %v3101, 32
  %v3260 = vpop.permute.xlu0 %3259
  %3261 = vrot.lane.b32.xlu0 %v3102, 32
  %v3262 = vpop.permute.xlu0 %3261
  %3263 = vrot.lane.b32.xlu0 %v3103, 32
  %v3264 = vpop.permute.xlu0 %3263
  %3265 = vrot.lane.b32.xlu0 %v3104, 32
  %v3266 = vpop.permute.xlu0 %3265
  %3267 = vrot.lane.b32.xlu0 %v3105, 32
  %v3268 = vpop.permute.xlu0 %3267
  %3269 = vrot.lane.b32.xlu0 %v3106, 32
  %v3270 = vpop.permute.xlu0 %3269
  %3271 = vrot.lane.b32.xlu0 %v3107, 32
  %v3272 = vpop.permute.xlu0 %3271
  %3273 = vrot.lane.b32.xlu0 %v3108, 32
  %v3274 = vpop.permute.xlu0 %3273
  %3275 = vrot.lane.b32.xlu0 %v3109, 32
  %v3276 = vpop.permute.xlu0 %3275
  %3277 = vrot.lane.b32.xlu0 %v3110, 32
  %v3278 = vpop.permute.xlu0 %3277
  %3279 = vrot.lane.b32.xlu0 %v3111, 32
  %v3280 = vpop.permute.xlu0 %3279
  %3281 = vrot.lane.b32.xlu0 %v3112, 32
  %v3282 = vpop.permute.xlu0 %3281
  %3283 = vrot.lane.b32.xlu0 %v3113, 32
  %v3284 = vpop.permute.xlu0 %3283
  %3285 = vrot.lane.b32.xlu0 %v3114, 32
  %v3286 = vpop.permute.xlu0 %3285
  %3287 = vrot.lane.b32.xlu0 %v3115, 32
  %v3288 = vpop.permute.xlu0 %3287
  %3289 = vrot.lane.b32.xlu0 %v3116, 32
  %v3290 = vpop.permute.xlu0 %3289
  %3291 = vrot.lane.b32.xlu0 %v3117, 32
  %v3292 = vpop.permute.xlu0 %3291
  %3293 = vrot.lane.b32.xlu0 %v3118, 32
  %v3294 = vpop.permute.xlu0 %3293
  %3295 = vrot.lane.b32.xlu0 %v3119, 32
  %v3296 = vpop.permute.xlu0 %3295
  %3297 = vrot.lane.b32.xlu0 %v3120, 32
  %v3298 = vpop.permute.xlu0 %3297
  %3299 = vrot.lane.b32.xlu0 %v3121, 32
  %v3300 = vpop.permute.xlu0 %3299
  %3301 = vrot.lane.b32.xlu0 %v3122, 32
  %v3302 = vpop.permute.xlu0 %3301
  %3303 = vrot.lane.b32.xlu0 %v3123, 32
  %v3304 = vpop.permute.xlu0 %3303
  %3305 = vrot.lane.b32.xlu0 %v3124, 32
  %v3306 = vpop.permute.xlu0 %3305
  %3307 = vrot.lane.b32.xlu0 %v3125, 32
  %v3308 = vpop.permute.xlu0 %3307
  %3309 = vrot.lane.b32.xlu0 %v3126, 32
  %v3310 = vpop.permute.xlu0 %3309
  %3311 = vrot.lane.b32.xlu0 %v3127, 32
  %v3312 = vpop.permute.xlu0 %3311
  %3313 = vrot.lane.b32.xlu0 %v3128, 32
  %v3314 = vpop.permute.xlu0 %3313
  %3315 = vrot.lane.b32.xlu0 %v3129, 32
  %v3316 = vpop.permute.xlu0 %3315
  %3317 = vrot.lane.b32.xlu0 %v3130, 32
  %v3318 = vpop.permute.xlu0 %3317
  %3319 = vrot.lane.b32.xlu0 %v3131, 32
  %v3320 = vpop.permute.xlu0 %3319
  %3321 = vrot.lane.b32.xlu0 %v3132, 32
  %v3322 = vpop.permute.xlu0 %3321
  %3323 = vrot.lane.b32.xlu0 %v3133, 32
  %v3324 = vpop.permute.xlu0 %3323
  %3325 = vrot.lane.b32.xlu0 %v3134, 32
  %v3326 = vpop.permute.xlu0 %3325
  %vm3391 = vcmask 294144
  %3392 = vst.msk [vmem:[#allocation3] sm:$0xff] %vm3391, %v3200
  %3393 = vst.msk [vmem:[#allocation3 + $0x8] sm:$0xff] %vm3391, %v3202
  %3394 = vst.msk [vmem:[#allocation3 + $0x10] sm:$0xff] %vm3391, %v3204
  %3395 = vst.msk [vmem:[#allocation3 + $0x18] sm:$0xff] %vm3391, %v3206
  %3396 = vst.msk [vmem:[#allocation3 + $0x20] sm:$0xff] %vm3391, %v3208
  %3397 = vst.msk [vmem:[#allocation3 + $0x28] sm:$0xff] %vm3391, %v3210
  %3398 = vst.msk [vmem:[#allocation3 + $0x30] sm:$0xff] %vm3391, %v3212
  %3399 = vst.msk [vmem:[#allocation3 + $0x38] sm:$0xff] %vm3391, %v3214
  %3400 = vst.msk [vmem:[#allocation3 + $0x40] sm:$0xff] %vm3391, %v3216
  %3401 = vst.msk [vmem:[#allocation3 + $0x48] sm:$0xff] %vm3391, %v3218
  %3402 = vst.msk [vmem:[#allocation3 + $0x50] sm:$0xff] %vm3391, %v3220
  %3403 = vst.msk [vmem:[#allocation3 + $0x58] sm:$0xff] %vm3391, %v3222
  %3404 = vst.msk [vmem:[#allocation3 + $0x60] sm:$0xff] %vm3391, %v3224
  %3405 = vst.msk [vmem:[#allocation3 + $0x68] sm:$0xff] %vm3391, %v3226
  %3406 = vst.msk [vmem:[#allocation3 + $0x70] sm:$0xff] %vm3391, %v3228
  %3407 = vst.msk [vmem:[#allocation3 + $0x78] sm:$0xff] %vm3391, %v3230
  %3408 = vst.msk [vmem:[#allocation3 + $0x80] sm:$0xff] %vm3391, %v3232
  %3409 = vst.msk [vmem:[#allocation3 + $0x88] sm:$0xff] %vm3391, %v3234
  %3410 = vst.msk [vmem:[#allocation3 + $0x90] sm:$0xff] %vm3391, %v3236
  %3411 = vst.msk [vmem:[#allocation3 + $0x98] sm:$0xff] %vm3391, %v3238
  %3412 = vst.msk [vmem:[#allocation3 + $0xa0] sm:$0xff] %vm3391, %v3240
  %3413 = vst.msk [vmem:[#allocation3 + $0xa8] sm:$0xff] %vm3391, %v3242
  %3414 = vst.msk [vmem:[#allocation3 + $0xb0] sm:$0xff] %vm3391, %v3244
  %3415 = vst.msk [vmem:[#allocation3 + $0xb8] sm:$0xff] %vm3391, %v3246
  %3416 = vst.msk [vmem:[#allocation3 + $0xc0] sm:$0xff] %vm3391, %v3248
  %3417 = vst.msk [vmem:[#allocation3 + $0xc8] sm:$0xff] %vm3391, %v3250
  %3418 = vst.msk [vmem:[#allocation3 + $0xd0] sm:$0xff] %vm3391, %v3252
  %3419 = vst.msk [vmem:[#allocation3 + $0xd8] sm:$0xff] %vm3391, %v3254
  %3420 = vst.msk [vmem:[#allocation3 + $0xe0] sm:$0xff] %vm3391, %v3256
  %3421 = vst.msk [vmem:[#allocation3 + $0xe8] sm:$0xff] %vm3391, %v3258
  %3422 = vst.msk [vmem:[#allocation3 + $0xf0] sm:$0xff] %vm3391, %v3260
  %3423 = vst.msk [vmem:[#allocation3 + $0xf8] sm:$0xff] %vm3391, %v3262
  %3424 = vst.msk [vmem:[#allocation3 + $0x100] sm:$0xff] %vm3391, %v3264
  %3425 = vst.msk [vmem:[#allocation3 + $0x108] sm:$0xff] %vm3391, %v3266
  %3426 = vst.msk [vmem:[#allocation3 + $0x110] sm:$0xff] %vm3391, %v3268
  %3427 = vst.msk [vmem:[#allocation3 + $0x118] sm:$0xff] %vm3391, %v3270
  %3428 = vst.msk [vmem:[#allocation3 + $0x120] sm:$0xff] %vm3391, %v3272
  %3429 = vst.msk [vmem:[#allocation3 + $0x128] sm:$0xff] %vm3391, %v3274
  %3430 = vst.msk [vmem:[#allocation3 + $0x130] sm:$0xff] %vm3391, %v3276
  %3431 = vst.msk [vmem:[#allocation3 + $0x138] sm:$0xff] %vm3391, %v3278
  %3432 = vst.msk [vmem:[#allocation3 + $0x140] sm:$0xff] %vm3391, %v3280
  %3433 = vst.msk [vmem:[#allocation3 + $0x148] sm:$0xff] %vm3391, %v3282
  %3434 = vst.msk [vmem:[#allocation3 + $0x150] sm:$0xff] %vm3391, %v3284
  %3435 = vst.msk [vmem:[#allocation3 + $0x158] sm:$0xff] %vm3391, %v3286
  %3436 = vst.msk [vmem:[#allocation3 + $0x160] sm:$0xff] %vm3391, %v3288
  %3437 = vst.msk [vmem:[#allocation3 + $0x168] sm:$0xff] %vm3391, %v3290
  %3438 = vst.msk [vmem:[#allocation3 + $0x170] sm:$0xff] %vm3391, %v3292
  %3439 = vst.msk [vmem:[#allocation3 + $0x178] sm:$0xff] %vm3391, %v3294
  %3440 = vst.msk [vmem:[#allocation3 + $0x180] sm:$0xff] %vm3391, %v3296
  %3441 = vst.msk [vmem:[#allocation3 + $0x188] sm:$0xff] %vm3391, %v3298
  %3442 = vst.msk [vmem:[#allocation3 + $0x190] sm:$0xff] %vm3391, %v3300
  %3443 = vst.msk [vmem:[#allocation3 + $0x198] sm:$0xff] %vm3391, %v3302
  %3444 = vst.msk [vmem:[#allocation3 + $0x1a0] sm:$0xff] %vm3391, %v3304
  %3445 = vst.msk [vmem:[#allocation3 + $0x1a8] sm:$0xff] %vm3391, %v3306
  %3446 = vst.msk [vmem:[#allocation3 + $0x1b0] sm:$0xff] %vm3391, %v3308
  %3447 = vst.msk [vmem:[#allocation3 + $0x1b8] sm:$0xff] %vm3391, %v3310
  %3448 = vst.msk [vmem:[#allocation3 + $0x1c0] sm:$0xff] %vm3391, %v3312
  %3449 = vst.msk [vmem:[#allocation3 + $0x1c8] sm:$0xff] %vm3391, %v3314
  %3450 = vst.msk [vmem:[#allocation3 + $0x1d0] sm:$0xff] %vm3391, %v3316
  %3451 = vst.msk [vmem:[#allocation3 + $0x1d8] sm:$0xff] %vm3391, %v3318
  %3452 = vst.msk [vmem:[#allocation3 + $0x1e0] sm:$0xff] %vm3391, %v3320
  %3453 = vst.msk [vmem:[#allocation3 + $0x1e8] sm:$0xff] %vm3391, %v3322
  %3454 = vst.msk [vmem:[#allocation3 + $0x1f0] sm:$0xff] %vm3391, %v3324
  %3455 = vst.msk [vmem:[#allocation3 + $0x1f8] sm:$0xff] %vm3391, %v3326
  %v3456 = vld [vmem:[#allocation3] sm:$0xff]
  %v3457 = vld [vmem:[#allocation3 + $0x8] sm:$0xff]
  %v3458 = vld [vmem:[#allocation3 + $0x10] sm:$0xff]
  %v3459 = vld [vmem:[#allocation3 + $0x18] sm:$0xff]
  %v3460 = vld [vmem:[#allocation3 + $0x20] sm:$0xff]
  %v3461 = vld [vmem:[#allocation3 + $0x28] sm:$0xff]
  %v3462 = vld [vmem:[#allocation3 + $0x30] sm:$0xff]
  %v3463 = vld [vmem:[#allocation3 + $0x38] sm:$0xff]
  %v3464 = vld [vmem:[#allocation3 + $0x40] sm:$0xff]
  %v3465 = vld [vmem:[#allocation3 + $0x48] sm:$0xff]
  %v3466 = vld [vmem:[#allocation3 + $0x50] sm:$0xff]
  %v3467 = vld [vmem:[#allocation3 + $0x58] sm:$0xff]
  %v3468 = vld [vmem:[#allocation3 + $0x60] sm:$0xff]
  %v3469 = vld [vmem:[#allocation3 + $0x68] sm:$0xff]
  %v3470 = vld [vmem:[#allocation3 + $0x70] sm:$0xff]
  %v3471 = vld [vmem:[#allocation3 + $0x78] sm:$0xff]
  %v3472 = vld [vmem:[#allocation3 + $0x80] sm:$0xff]
  %v3473 = vld [vmem:[#allocation3 + $0x88] sm:$0xff]
  %v3474 = vld [vmem:[#allocation3 + $0x90] sm:$0xff]
  %v3475 = vld [vmem:[#allocation3 + $0x98] sm:$0xff]
  %v3476 = vld [vmem:[#allocation3 + $0xa0] sm:$0xff]
  %v3477 = vld [vmem:[#allocation3 + $0xa8] sm:$0xff]
  %v3478 = vld [vmem:[#allocation3 + $0xb0] sm:$0xff]
  %v3479 = vld [vmem:[#allocation3 + $0xb8] sm:$0xff]
  %v3480 = vld [vmem:[#allocation3 + $0xc0] sm:$0xff]
  %v3481 = vld [vmem:[#allocation3 + $0xc8] sm:$0xff]
  %v3482 = vld [vmem:[#allocation3 + $0xd0] sm:$0xff]
  %v3483 = vld [vmem:[#allocation3 + $0xd8] sm:$0xff]
  %v3484 = vld [vmem:[#allocation3 + $0xe0] sm:$0xff]
  %v3485 = vld [vmem:[#allocation3 + $0xe8] sm:$0xff]
  %v3486 = vld [vmem:[#allocation3 + $0xf0] sm:$0xff]
  %v3487 = vld [vmem:[#allocation3 + $0xf8] sm:$0xff]
  %v3488 = vld [vmem:[#allocation3 + $0x100] sm:$0xff]
  %v3489 = vld [vmem:[#allocation3 + $0x108] sm:$0xff]
  %v3490 = vld [vmem:[#allocation3 + $0x110] sm:$0xff]
  %v3491 = vld [vmem:[#allocation3 + $0x118] sm:$0xff]
  %v3492 = vld [vmem:[#allocation3 + $0x120] sm:$0xff]
  %v3493 = vld [vmem:[#allocation3 + $0x128] sm:$0xff]
  %v3494 = vld [vmem:[#allocation3 + $0x130] sm:$0xff]
  %v3495 = vld [vmem:[#allocation3 + $0x138] sm:$0xff]
  %v3496 = vld [vmem:[#allocation3 + $0x140] sm:$0xff]
  %v3497 = vld [vmem:[#allocation3 + $0x148] sm:$0xff]
  %v3498 = vld [vmem:[#allocation3 + $0x150] sm:$0xff]
  %v3499 = vld [vmem:[#allocation3 + $0x158] sm:$0xff]
  %v3500 = vld [vmem:[#allocation3 + $0x160] sm:$0xff]
  %v3501 = vld [vmem:[#allocation3 + $0x168] sm:$0xff]
  %v3502 = vld [vmem:[#allocation3 + $0x170] sm:$0xff]
  %v3503 = vld [vmem:[#allocation3 + $0x178] sm:$0xff]
  %v3504 = vld [vmem:[#allocation3 + $0x180] sm:$0xff]
  %v3505 = vld [vmem:[#allocation3 + $0x188] sm:$0xff]
  %v3506 = vld [vmem:[#allocation3 + $0x190] sm:$0xff]
  %v3507 = vld [vmem:[#allocation3 + $0x198] sm:$0xff]
  %v3508 = vld [vmem:[#allocation3 + $0x1a0] sm:$0xff]
  %v3509 = vld [vmem:[#allocation3 + $0x1a8] sm:$0xff]
  %v3510 = vld [vmem:[#allocation3 + $0x1b0] sm:$0xff]
  %v3511 = vld [vmem:[#allocation3 + $0x1b8] sm:$0xff]
  %v3512 = vld [vmem:[#allocation3 + $0x1c0] sm:$0xff]
  %v3513 = vld [vmem:[#allocation3 + $0x1c8] sm:$0xff]
  %v3514 = vld [vmem:[#allocation3 + $0x1d0] sm:$0xff]
  %v3515 = vld [vmem:[#allocation3 + $0x1d8] sm:$0xff]
  %v3516 = vld [vmem:[#allocation3 + $0x1e0] sm:$0xff]
  %v3517 = vld [vmem:[#allocation3 + $0x1e8] sm:$0xff]
  %v3518 = vld [vmem:[#allocation3 + $0x1f0] sm:$0xff]
  %v3519 = vld [vmem:[#allocation3 + $0x1f8] sm:$0xff]
  %v3520 = vld [vmem:[%s1] sm:$0xff]
  %v3521 = vld [vmem:[%s1 + $0x8] sm:$0xff]
  %v3522 = vld [vmem:[%s1 + $0x10] sm:$0xff]
  %v3523 = vld [vmem:[%s1 + $0x18] sm:$0xff]
  %v3524 = vld [vmem:[%s1 + $0x20] sm:$0xf]
  %vm3525 = vcmask 293888
  %v3527 = vsel %vm3525, %v3456, 0
  %v3530 = vsel %vm3525, %v3457, 0
  %v3533 = vsel %vm3525, %v3458, 0
  %v3536 = vsel %vm3525, %v3459, 0
  %v3539 = vsel %vm3525, %v3460, 0
  %v3542 = vsel %vm3525, %v3461, 0
  %v3545 = vsel %vm3525, %v3462, 0
  %v3548 = vsel %vm3525, %v3463, 0
  %v3551 = vsel %vm3525, %v3464, 0
  %v3554 = vsel %vm3525, %v3465, 0
  %v3557 = vsel %vm3525, %v3466, 0
  %v3560 = vsel %vm3525, %v3467, 0
  %v3563 = vsel %vm3525, %v3468, 0
  %v3566 = vsel %vm3525, %v3469, 0
  %v3569 = vsel %vm3525, %v3470, 0
  %v3572 = vsel %vm3525, %v3471, 0
  %v3575 = vsel %vm3525, %v3472, 0
  %v3578 = vsel %vm3525, %v3473, 0
  %v3581 = vsel %vm3525, %v3474, 0
  %v3584 = vsel %vm3525, %v3475, 0
  %v3587 = vsel %vm3525, %v3476, 0
  %v3590 = vsel %vm3525, %v3477, 0
  %v3593 = vsel %vm3525, %v3478, 0
  %v3596 = vsel %vm3525, %v3479, 0
  %v3599 = vsel %vm3525, %v3480, 0
  %v3602 = vsel %vm3525, %v3481, 0
  %v3605 = vsel %vm3525, %v3482, 0
  %v3608 = vsel %vm3525, %v3483, 0
  %v3611 = vsel %vm3525, %v3484, 0
  %v3614 = vsel %vm3525, %v3485, 0
  %v3617 = vsel %vm3525, %v3486, 0
  %v3620 = vsel %vm3525, %v3487, 0
  %v3623 = vsel %vm3525, %v3488, 0
  %v3626 = vsel %vm3525, %v3489, 0
  %v3629 = vsel %vm3525, %v3490, 0
  %v3632 = vsel %vm3525, %v3491, 0
  %v3635 = vsel %vm3525, %v3492, 0
  %v3638 = vsel %vm3525, %v3493, 0
  %v3641 = vsel %vm3525, %v3494, 0
  %v3644 = vsel %vm3525, %v3495, 0
  %v3647 = vsel %vm3525, %v3496, 0
  %v3650 = vsel %vm3525, %v3497, 0
  %v3653 = vsel %vm3525, %v3498, 0
  %v3656 = vsel %vm3525, %v3499, 0
  %v3659 = vsel %vm3525, %v3500, 0
  %v3662 = vsel %vm3525, %v3501, 0
  %v3665 = vsel %vm3525, %v3502, 0
  %v3668 = vsel %vm3525, %v3503, 0
  %v3671 = vsel %vm3525, %v3504, 0
  %v3674 = vsel %vm3525, %v3505, 0
  %v3677 = vsel %vm3525, %v3506, 0
  %v3680 = vsel %vm3525, %v3507, 0
  %v3683 = vsel %vm3525, %v3508, 0
  %v3686 = vsel %vm3525, %v3509, 0
  %v3689 = vsel %vm3525, %v3510, 0
  %v3692 = vsel %vm3525, %v3511, 0
  %v3695 = vsel %vm3525, %v3512, 0
  %v3698 = vsel %vm3525, %v3513, 0
  %v3701 = vsel %vm3525, %v3514, 0
  %v3704 = vsel %vm3525, %v3515, 0
  %v3707 = vsel %vm3525, %v3516, 0
  %v3710 = vsel %vm3525, %v3517, 0
  %v3713 = vsel %vm3525, %v3518, 0
  %v3716 = vsel %vm3525, %v3519, 0
  %vm3718 = vcmask 1043456
  %v3720 = vsel %vm3718, %v3524, 0
  %3722 = vmatprep.subr.mxu0 0.0
  %3723 = vmatpush1.msra.mxu0 0.0
  %3724 = vmatprep.subr.mxu0 0.0
  %3725 = vmatpush1.msra.mxu0 0.0
  %3726 = vmatprep.subr.mxu0 0.0
  %3727 = vmatpush1.msra.mxu0 0.0
  %3728 = vmatprep.subr.mxu0 0.0
  %3729 = vmatpush1.msra.mxu0 0.0
  %3730 = vmatprep.subr.mxu0 0.0
  %3731 = vmatpush1.msra.mxu0 0.0
  %3732 = vmatprep.subr.mxu0 0.0
  %3733 = vmatpush1.msra.mxu0 0.0
  %3734 = vmatprep.subr.mxu0 0.0
  %3735 = vmatpush1.msra.mxu0 0.0
  %3736 = vmatprep.subr.mxu0 0.0
  %3737 = vmatpush1.msra.mxu0 0.0
  %3738 = vmatprep.subr.mxu0 0.0
  %3739 = vmatpush1.msra.mxu0 0.0
  %3740 = vmatprep.subr.mxu0 0.0
  %3741 = vmatpush1.msra.mxu0 0.0
  %3742 = vmatprep.subr.mxu0 0.0
  %3743 = vmatpush1.msra.mxu0 0.0
  %3744 = vmatprep.subr.mxu0 0.0
  %3745 = vmatpush1.msra.mxu0 %v3720
  %3746 = vmatprep.subr.mxu0 0.0
  %3747 = vmatpush1.msra.mxu0 %v3523
  %3748 = vmatprep.subr.mxu0 0.0
  %3749 = vmatpush1.msra.mxu0 %v3522
  %3750 = vmatprep.subr.mxu0 0.0
  %3751 = vmatpush1.msra.mxu0 %v3521
  %3752 = vmatprep.subr.mxu0 0.0
  %3753 = vmatpush1.msra.mxu0 %v3520
  %3754 = vmatprep.subr.mxu0 0.0
  %3755 = vmatpush2.msra.mxu0 0.0
  %3756 = vmatprep.subr.mxu0 0.0
  %3757 = vmatpush2.msra.mxu0 0.0
  %3758 = vmatprep.subr.mxu0 0.0
  %3759 = vmatpush2.msra.mxu0 0.0
  %3760 = vmatprep.subr.mxu0 0.0
  %3761 = vmatpush2.msra.mxu0 0.0
  %3762 = vmatprep.subr.mxu0 0.0
  %3763 = vmatpush2.msra.mxu0 0.0
  %3764 = vmatprep.subr.mxu0 0.0
  %3765 = vmatpush2.msra.mxu0 0.0
  %3766 = vmatprep.subr.mxu0 0.0
  %3767 = vmatpush2.msra.mxu0 0.0
  %3768 = vmatprep.subr.mxu0 0.0
  %3769 = vmatpush2.msra.mxu0 0.0
  %3770 = vmatprep.subr.mxu0 0.0
  %3771 = vmatpush2.msra.mxu0 0.0
  %3772 = vmatprep.subr.mxu0 0.0
  %3773 = vmatpush2.msra.mxu0 0.0
  %3774 = vmatprep.subr.mxu0 0.0
  %3775 = vmatpush2.msra.mxu0 0.0
  %3776 = vmatprep.subr.mxu0 0.0
  %3777 = vmatpush2.msra.mxu0 0.0
  %3778 = vmatprep.subr.mxu0 0.0
  %3779 = vmatpush2.msra.mxu0 0.0
  %3780 = vmatprep.subr.mxu0 0.0
  %3781 = vmatpush2.msra.mxu0 0.0
  %3782 = vmatprep.subr.mxu0 0.0
  %3783 = vmatpush2.msra.mxu0 0.0
  %3784 = vmatprep.subr.mxu0 0.0
  %3785 = vmatpush2.msra.mxu0 0.0
  %3786 = vmatprep.mubr.f32.mxu0 0.0
  %3787 = vmatmul.mubr.f32.gmra.mxu0 %v3527
  %v3788 = vpop.f32.mrf.mxu0
  %v3789 = vadd.f32 0.0, %v3788
  %v3790 = vpop.f32.mrf.mxu0
  %3791 = vmatprep.mubr.f32.mxu0 0.0
  %3792 = vmatmul.mubr.f32.gmra.mxu0 %v3530
  %v3793 = vpop.f32.mrf.mxu0
  %v3794 = vadd.f32 0.0, %v3793
  %v3795 = vpop.f32.mrf.mxu0
  %3796 = vmatprep.mubr.f32.mxu0 0.0
  %3797 = vmatmul.mubr.f32.gmra.mxu0 %v3533
  %v3798 = vpop.f32.mrf.mxu0
  %v3799 = vadd.f32 0.0, %v3798
  %v3800 = vpop.f32.mrf.mxu0
  %3801 = vmatprep.mubr.f32.mxu0 0.0
  %3802 = vmatmul.mubr.f32.gmra.mxu0 %v3536
  %v3803 = vpop.f32.mrf.mxu0
  %v3804 = vadd.f32 0.0, %v3803
  %v3805 = vpop.f32.mrf.mxu0
  %3806 = vmatprep.mubr.f32.mxu0 0.0
  %3807 = vmatmul.mubr.f32.gmra.mxu0 %v3539
  %v3808 = vpop.f32.mrf.mxu0
  %v3809 = vadd.f32 0.0, %v3808
  %v3810 = vpop.f32.mrf.mxu0
  %3811 = vmatprep.mubr.f32.mxu0 0.0
  %3812 = vmatmul.mubr.f32.gmra.mxu0 %v3542
  %v3813 = vpop.f32.mrf.mxu0
  %v3814 = vadd.f32 0.0, %v3813
  %v3815 = vpop.f32.mrf.mxu0
  %3816 = vmatprep.mubr.f32.mxu0 0.0
  %3817 = vmatmul.mubr.f32.gmra.mxu0 %v3545
  %v3818 = vpop.f32.mrf.mxu0
  %v3819 = vadd.f32 0.0, %v3818
  %v3820 = vpop.f32.mrf.mxu0
  %3821 = vmatprep.mubr.f32.mxu0 0.0
  %3822 = vmatmul.mubr.f32.gmra.mxu0 %v3548
  %v3823 = vpop.f32.mrf.mxu0
  %v3824 = vadd.f32 0.0, %v3823
  %v3825 = vpop.f32.mrf.mxu0
  %3826 = vmatprep.mubr.f32.mxu0 0.0
  %3827 = vmatmul.mubr.f32.gmra.mxu0 %v3551
  %v3828 = vpop.f32.mrf.mxu0
  %v3829 = vadd.f32 0.0, %v3828
  %v3830 = vpop.f32.mrf.mxu0
  %3831 = vmatprep.mubr.f32.mxu0 0.0
  %3832 = vmatmul.mubr.f32.gmra.mxu0 %v3554
  %v3833 = vpop.f32.mrf.mxu0
  %v3834 = vadd.f32 0.0, %v3833
  %v3835 = vpop.f32.mrf.mxu0
  %3836 = vmatprep.mubr.f32.mxu0 0.0
  %3837 = vmatmul.mubr.f32.gmra.mxu0 %v3557
  %v3838 = vpop.f32.mrf.mxu0
  %v3839 = vadd.f32 0.0, %v3838
  %v3840 = vpop.f32.mrf.mxu0
  %3841 = vmatprep.mubr.f32.mxu0 0.0
  %3842 = vmatmul.mubr.f32.gmra.mxu0 %v3560
  %v3843 = vpop.f32.mrf.mxu0
  %v3844 = vadd.f32 0.0, %v3843
  %v3845 = vpop.f32.mrf.mxu0
  %3846 = vmatprep.mubr.f32.mxu0 0.0
  %3847 = vmatmul.mubr.f32.gmra.mxu0 %v3563
  %v3848 = vpop.f32.mrf.mxu0
  %v3849 = vadd.f32 0.0, %v3848
  %v3850 = vpop.f32.mrf.mxu0
  %3851 = vmatprep.mubr.f32.mxu0 0.0
  %3852 = vmatmul.mubr.f32.gmra.mxu0 %v3566
  %v3853 = vpop.f32.mrf.mxu0
  %v3854 = vadd.f32 0.0, %v3853
  %v3855 = vpop.f32.mrf.mxu0
  %3856 = vmatprep.mubr.f32.mxu0 0.0
  %3857 = vmatmul.mubr.f32.gmra.mxu0 %v3569
  %v3858 = vpop.f32.mrf.mxu0
  %v3859 = vadd.f32 0.0, %v3858
  %v3860 = vpop.f32.mrf.mxu0
  %3861 = vmatprep.mubr.f32.mxu0 0.0
  %3862 = vmatmul.mubr.f32.gmra.mxu0 %v3572
  %v3863 = vpop.f32.mrf.mxu0
  %v3864 = vadd.f32 0.0, %v3863
  %v3865 = vpop.f32.mrf.mxu0
  %3866 = vmatprep.mubr.f32.mxu0 0.0
  %3867 = vmatmul.mubr.f32.gmra.mxu0 %v3575
  %v3868 = vpop.f32.mrf.mxu0
  %v3869 = vadd.f32 0.0, %v3868
  %v3870 = vpop.f32.mrf.mxu0
  %3871 = vmatprep.mubr.f32.mxu0 0.0
  %3872 = vmatmul.mubr.f32.gmra.mxu0 %v3578
  %v3873 = vpop.f32.mrf.mxu0
  %v3874 = vadd.f32 0.0, %v3873
  %v3875 = vpop.f32.mrf.mxu0
  %3876 = vmatprep.mubr.f32.mxu0 0.0
  %3877 = vmatmul.mubr.f32.gmra.mxu0 %v3581
  %v3878 = vpop.f32.mrf.mxu0
  %v3879 = vadd.f32 0.0, %v3878
  %v3880 = vpop.f32.mrf.mxu0
  %3881 = vmatprep.mubr.f32.mxu0 0.0
  %3882 = vmatmul.mubr.f32.gmra.mxu0 %v3584
  %v3883 = vpop.f32.mrf.mxu0
  %v3884 = vadd.f32 0.0, %v3883
  %v3885 = vpop.f32.mrf.mxu0
  %3886 = vmatprep.mubr.f32.mxu0 0.0
  %3887 = vmatmul.mubr.f32.gmra.mxu0 %v3587
  %v3888 = vpop.f32.mrf.mxu0
  %v3889 = vadd.f32 0.0, %v3888
  %v3890 = vpop.f32.mrf.mxu0
  %3891 = vmatprep.mubr.f32.mxu0 0.0
  %3892 = vmatmul.mubr.f32.gmra.mxu0 %v3590
  %v3893 = vpop.f32.mrf.mxu0
  %v3894 = vadd.f32 0.0, %v3893
  %v3895 = vpop.f32.mrf.mxu0
  %3896 = vmatprep.mubr.f32.mxu0 0.0
  %3897 = vmatmul.mubr.f32.gmra.mxu0 %v3593
  %v3898 = vpop.f32.mrf.mxu0
  %v3899 = vadd.f32 0.0, %v3898
  %v3900 = vpop.f32.mrf.mxu0
  %3901 = vmatprep.mubr.f32.mxu0 0.0
  %3902 = vmatmul.mubr.f32.gmra.mxu0 %v3596
  %v3903 = vpop.f32.mrf.mxu0
  %v3904 = vadd.f32 0.0, %v3903
  %v3905 = vpop.f32.mrf.mxu0
  %3906 = vmatprep.mubr.f32.mxu0 0.0
  %3907 = vmatmul.mubr.f32.gmra.mxu0 %v3599
  %v3908 = vpop.f32.mrf.mxu0
  %v3909 = vadd.f32 0.0, %v3908
  %v3910 = vpop.f32.mrf.mxu0
  %3911 = vmatprep.mubr.f32.mxu0 0.0
  %3912 = vmatmul.mubr.f32.gmra.mxu0 %v3602
  %v3913 = vpop.f32.mrf.mxu0
  %v3914 = vadd.f32 0.0, %v3913
  %v3915 = vpop.f32.mrf.mxu0
  %3916 = vmatprep.mubr.f32.mxu0 0.0
  %3917 = vmatmul.mubr.f32.gmra.mxu0 %v3605
  %v3918 = vpop.f32.mrf.mxu0
  %v3919 = vadd.f32 0.0, %v3918
  %v3920 = vpop.f32.mrf.mxu0
  %3921 = vmatprep.mubr.f32.mxu0 0.0
  %3922 = vmatmul.mubr.f32.gmra.mxu0 %v3608
  %v3923 = vpop.f32.mrf.mxu0
  %v3924 = vadd.f32 0.0, %v3923
  %v3925 = vpop.f32.mrf.mxu0
  %3926 = vmatprep.mubr.f32.mxu0 0.0
  %3927 = vmatmul.mubr.f32.gmra.mxu0 %v3611
  %v3928 = vpop.f32.mrf.mxu0
  %v3929 = vadd.f32 0.0, %v3928
  %v3930 = vpop.f32.mrf.mxu0
  %3931 = vmatprep.mubr.f32.mxu0 0.0
  %3932 = vmatmul.mubr.f32.gmra.mxu0 %v3614
  %v3933 = vpop.f32.mrf.mxu0
  %v3934 = vadd.f32 0.0, %v3933
  %v3935 = vpop.f32.mrf.mxu0
  %3936 = vmatprep.mubr.f32.mxu0 0.0
  %3937 = vmatmul.mubr.f32.gmra.mxu0 %v3617
  %v3938 = vpop.f32.mrf.mxu0
  %v3939 = vadd.f32 0.0, %v3938
  %v3940 = vpop.f32.mrf.mxu0
  %3941 = vmatprep.mubr.f32.mxu0 0.0
  %3942 = vmatmul.mubr.f32.gmra.mxu0 %v3620
  %v3943 = vpop.f32.mrf.mxu0
  %v3944 = vadd.f32 0.0, %v3943
  %v3945 = vpop.f32.mrf.mxu0
  %3946 = vmatprep.mubr.f32.mxu0 0.0
  %3947 = vmatmul.mubr.f32.gmra.mxu0 %v3623
  %v3948 = vpop.f32.mrf.mxu0
  %v3949 = vadd.f32 0.0, %v3948
  %v3950 = vpop.f32.mrf.mxu0
  %3951 = vmatprep.mubr.f32.mxu0 0.0
  %3952 = vmatmul.mubr.f32.gmra.mxu0 %v3626
  %v3953 = vpop.f32.mrf.mxu0
  %v3954 = vadd.f32 0.0, %v3953
  %v3955 = vpop.f32.mrf.mxu0
  %3956 = vmatprep.mubr.f32.mxu0 0.0
  %3957 = vmatmul.mubr.f32.gmra.mxu0 %v3629
  %v3958 = vpop.f32.mrf.mxu0
  %v3959 = vadd.f32 0.0, %v3958
  %v3960 = vpop.f32.mrf.mxu0
  %3961 = vmatprep.mubr.f32.mxu0 0.0
  %3962 = vmatmul.mubr.f32.gmra.mxu0 %v3632
  %v3963 = vpop.f32.mrf.mxu0
  %v3964 = vadd.f32 0.0, %v3963
  %v3965 = vpop.f32.mrf.mxu0
  %3966 = vmatprep.mubr.f32.mxu0 0.0
  %3967 = vmatmul.mubr.f32.gmra.mxu0 %v3635
  %v3968 = vpop.f32.mrf.mxu0
  %v3969 = vadd.f32 0.0, %v3968
  %v3970 = vpop.f32.mrf.mxu0
  %3971 = vmatprep.mubr.f32.mxu0 0.0
  %3972 = vmatmul.mubr.f32.gmra.mxu0 %v3638
  %v3973 = vpop.f32.mrf.mxu0
  %v3974 = vadd.f32 0.0, %v3973
  %v3975 = vpop.f32.mrf.mxu0
  %3976 = vmatprep.mubr.f32.mxu0 0.0
  %3977 = vmatmul.mubr.f32.gmra.mxu0 %v3641
  %v3978 = vpop.f32.mrf.mxu0
  %v3979 = vadd.f32 0.0, %v3978
  %v3980 = vpop.f32.mrf.mxu0
  %3981 = vmatprep.mubr.f32.mxu0 0.0
  %3982 = vmatmul.mubr.f32.gmra.mxu0 %v3644
  %v3983 = vpop.f32.mrf.mxu0
  %v3984 = vadd.f32 0.0, %v3983
  %v3985 = vpop.f32.mrf.mxu0
  %3986 = vmatprep.mubr.f32.mxu0 0.0
  %3987 = vmatmul.mubr.f32.gmra.mxu0 %v3647
  %v3988 = vpop.f32.mrf.mxu0
  %v3989 = vadd.f32 0.0, %v3988
  %v3990 = vpop.f32.mrf.mxu0
  %3991 = vmatprep.mubr.f32.mxu0 0.0
  %3992 = vmatmul.mubr.f32.gmra.mxu0 %v3650
  %v3993 = vpop.f32.mrf.mxu0
  %v3994 = vadd.f32 0.0, %v3993
  %v3995 = vpop.f32.mrf.mxu0
  %3996 = vmatprep.mubr.f32.mxu0 0.0
  %3997 = vmatmul.mubr.f32.gmra.mxu0 %v3653
  %v3998 = vpop.f32.mrf.mxu0
  %v3999 = vadd.f32 0.0, %v3998
  %v4000 = vpop.f32.mrf.mxu0
  %4001 = vmatprep.mubr.f32.mxu0 0.0
  %4002 = vmatmul.mubr.f32.gmra.mxu0 %v3656
  %v4003 = vpop.f32.mrf.mxu0
  %v4004 = vadd.f32 0.0, %v4003
  %v4005 = vpop.f32.mrf.mxu0
  %4006 = vmatprep.mubr.f32.mxu0 0.0
  %4007 = vmatmul.mubr.f32.gmra.mxu0 %v3659
  %v4008 = vpop.f32.mrf.mxu0
  %v4009 = vadd.f32 0.0, %v4008
  %v4010 = vpop.f32.mrf.mxu0
  %4011 = vmatprep.mubr.f32.mxu0 0.0
  %4012 = vmatmul.mubr.f32.gmra.mxu0 %v3662
  %v4013 = vpop.f32.mrf.mxu0
  %v4014 = vadd.f32 0.0, %v4013
  %v4015 = vpop.f32.mrf.mxu0
  %4016 = vmatprep.mubr.f32.mxu0 0.0
  %4017 = vmatmul.mubr.f32.gmra.mxu0 %v3665
  %v4018 = vpop.f32.mrf.mxu0
  %v4019 = vadd.f32 0.0, %v4018
  %v4020 = vpop.f32.mrf.mxu0
  %4021 = vmatprep.mubr.f32.mxu0 0.0
  %4022 = vmatmul.mubr.f32.gmra.mxu0 %v3668
  %v4023 = vpop.f32.mrf.mxu0
  %v4024 = vadd.f32 0.0, %v4023
  %v4025 = vpop.f32.mrf.mxu0
  %4026 = vmatprep.mubr.f32.mxu0 0.0
  %4027 = vmatmul.mubr.f32.gmra.mxu0 %v3671
  %v4028 = vpop.f32.mrf.mxu0
  %v4029 = vadd.f32 0.0, %v4028
  %v4030 = vpop.f32.mrf.mxu0
  %4031 = vmatprep.mubr.f32.mxu0 0.0
  %4032 = vmatmul.mubr.f32.gmra.mxu0 %v3674
  %v4033 = vpop.f32.mrf.mxu0
  %v4034 = vadd.f32 0.0, %v4033
  %v4035 = vpop.f32.mrf.mxu0
  %4036 = vmatprep.mubr.f32.mxu0 0.0
  %4037 = vmatmul.mubr.f32.gmra.mxu0 %v3677
  %v4038 = vpop.f32.mrf.mxu0
  %v4039 = vadd.f32 0.0, %v4038
  %v4040 = vpop.f32.mrf.mxu0
  %4041 = vmatprep.mubr.f32.mxu0 0.0
  %4042 = vmatmul.mubr.f32.gmra.mxu0 %v3680
  %v4043 = vpop.f32.mrf.mxu0
  %v4044 = vadd.f32 0.0, %v4043
  %v4045 = vpop.f32.mrf.mxu0
  %4046 = vmatprep.mubr.f32.mxu0 0.0
  %4047 = vmatmul.mubr.f32.gmra.mxu0 %v3683
  %v4048 = vpop.f32.mrf.mxu0
  %v4049 = vadd.f32 0.0, %v4048
  %v4050 = vpop.f32.mrf.mxu0
  %4051 = vmatprep.mubr.f32.mxu0 0.0
  %4052 = vmatmul.mubr.f32.gmra.mxu0 %v3686
  %v4053 = vpop.f32.mrf.mxu0
  %v4054 = vadd.f32 0.0, %v4053
  %v4055 = vpop.f32.mrf.mxu0
  %4056 = vmatprep.mubr.f32.mxu0 0.0
  %4057 = vmatmul.mubr.f32.gmra.mxu0 %v3689
  %v4058 = vpop.f32.mrf.mxu0
  %v4059 = vadd.f32 0.0, %v4058
  %v4060 = vpop.f32.mrf.mxu0
  %4061 = vmatprep.mubr.f32.mxu0 0.0
  %4062 = vmatmul.mubr.f32.gmra.mxu0 %v3692
  %v4063 = vpop.f32.mrf.mxu0
  %v4064 = vadd.f32 0.0, %v4063
  %v4065 = vpop.f32.mrf.mxu0
  %4066 = vmatprep.mubr.f32.mxu0 0.0
  %4067 = vmatmul.mubr.f32.gmra.mxu0 %v3695
  %v4068 = vpop.f32.mrf.mxu0
  %v4069 = vadd.f32 0.0, %v4068
  %v4070 = vpop.f32.mrf.mxu0
  %4071 = vmatprep.mubr.f32.mxu0 0.0
  %4072 = vmatmul.mubr.f32.gmra.mxu0 %v3698
  %v4073 = vpop.f32.mrf.mxu0
  %v4074 = vadd.f32 0.0, %v4073
  %v4075 = vpop.f32.mrf.mxu0
  %4076 = vmatprep.mubr.f32.mxu0 0.0
  %4077 = vmatmul.mubr.f32.gmra.mxu0 %v3701
  %v4078 = vpop.f32.mrf.mxu0
  %v4079 = vadd.f32 0.0, %v4078
  %v4080 = vpop.f32.mrf.mxu0
  %4081 = vmatprep.mubr.f32.mxu0 0.0
  %4082 = vmatmul.mubr.f32.gmra.mxu0 %v3704
  %v4083 = vpop.f32.mrf.mxu0
  %v4084 = vadd.f32 0.0, %v4083
  %v4085 = vpop.f32.mrf.mxu0
  %4086 = vmatprep.mubr.f32.mxu0 0.0
  %4087 = vmatmul.mubr.f32.gmra.mxu0 %v3707
  %v4088 = vpop.f32.mrf.mxu0
  %v4089 = vadd.f32 0.0, %v4088
  %v4090 = vpop.f32.mrf.mxu0
  %4091 = vmatprep.mubr.f32.mxu0 0.0
  %4092 = vmatmul.mubr.f32.gmra.mxu0 %v3710
  %v4093 = vpop.f32.mrf.mxu0
  %v4094 = vadd.f32 0.0, %v4093
  %v4095 = vpop.f32.mrf.mxu0
  %4096 = vmatprep.mubr.f32.mxu0 0.0
  %4097 = vmatmul.mubr.f32.gmra.mxu0 %v3713
  %v4098 = vpop.f32.mrf.mxu0
  %v4099 = vadd.f32 0.0, %v4098
  %v4100 = vpop.f32.mrf.mxu0
  %4101 = vmatprep.mubr.f32.mxu0 0.0
  %4102 = vmatmul.mubr.f32.gmra.mxu0 %v3716
  %v4103 = vpop.f32.mrf.mxu0
  %v4104 = vadd.f32 0.0, %v4103
  %v4105 = vpop.f32.mrf.mxu0
  %4106 = vdwg.mxu0
  %v4107 = vsel %vm30, %v3789, 0.0
  %v4108 = vsel %vm30, %v3794, 0.0
  %v4109 = vadd.f32 %v4107, %v4108
  %v4110 = vsel %vm30, %v3799, 0.0
  %v4111 = vadd.f32 %v4109, %v4110
  %v4112 = vsel %vm30, %v3804, 0.0
  %v4113 = vadd.f32 %v4111, %v4112
  %v4114 = vsel %vm30, %v3809, 0.0
  %v4115 = vadd.f32 %v4113, %v4114
  %v4116 = vsel %vm30, %v3814, 0.0
  %v4117 = vadd.f32 %v4115, %v4116
  %v4118 = vsel %vm30, %v3819, 0.0
  %v4119 = vadd.f32 %v4117, %v4118
  %v4120 = vsel %vm30, %v3824, 0.0
  %v4121 = vadd.f32 %v4119, %v4120
  %v4122 = vsel %vm30, %v3829, 0.0
  %v4123 = vadd.f32 %v4121, %v4122
  %v4124 = vsel %vm30, %v3834, 0.0
  %v4125 = vadd.f32 %v4123, %v4124
  %v4126 = vsel %vm30, %v3839, 0.0
  %v4127 = vadd.f32 %v4125, %v4126
  %v4128 = vsel %vm30, %v3844, 0.0
  %v4129 = vadd.f32 %v4127, %v4128
  %v4130 = vsel %vm30, %v3849, 0.0
  %v4131 = vadd.f32 %v4129, %v4130
  %v4132 = vsel %vm30, %v3854, 0.0
  %v4133 = vadd.f32 %v4131, %v4132
  %v4134 = vsel %vm30, %v3859, 0.0
  %v4135 = vadd.f32 %v4133, %v4134
  %v4136 = vsel %vm30, %v3864, 0.0
  %v4137 = vadd.f32 %v4135, %v4136
  %v4138 = vsel %vm30, %v3869, 0.0
  %v4139 = vadd.f32 %v4137, %v4138
  %v4140 = vsel %vm30, %v3874, 0.0
  %v4141 = vadd.f32 %v4139, %v4140
  %v4142 = vsel %vm30, %v3879, 0.0
  %v4143 = vadd.f32 %v4141, %v4142
  %v4144 = vsel %vm30, %v3884, 0.0
  %v4145 = vadd.f32 %v4143, %v4144
  %v4146 = vsel %vm30, %v3889, 0.0
  %v4147 = vadd.f32 %v4145, %v4146
  %v4148 = vsel %vm30, %v3894, 0.0
  %v4149 = vadd.f32 %v4147, %v4148
  %v4150 = vsel %vm30, %v3899, 0.0
  %v4151 = vadd.f32 %v4149, %v4150
  %v4152 = vsel %vm30, %v3904, 0.0
  %v4153 = vadd.f32 %v4151, %v4152
  %v4154 = vsel %vm30, %v3909, 0.0
  %v4155 = vadd.f32 %v4153, %v4154
  %v4156 = vsel %vm30, %v3914, 0.0
  %v4157 = vadd.f32 %v4155, %v4156
  %v4158 = vsel %vm30, %v3919, 0.0
  %v4159 = vadd.f32 %v4157, %v4158
  %v4160 = vsel %vm30, %v3924, 0.0
  %v4161 = vadd.f32 %v4159, %v4160
  %v4162 = vsel %vm30, %v3929, 0.0
  %v4163 = vadd.f32 %v4161, %v4162
  %v4164 = vsel %vm30, %v3934, 0.0
  %v4165 = vadd.f32 %v4163, %v4164
  %v4166 = vsel %vm30, %v3939, 0.0
  %v4167 = vadd.f32 %v4165, %v4166
  %v4168 = vsel %vm30, %v3944, 0.0
  %v4169 = vadd.f32 %v4167, %v4168
  %v4170 = vsel %vm30, %v3949, 0.0
  %v4171 = vadd.f32 %v4169, %v4170
  %v4172 = vsel %vm30, %v3954, 0.0
  %v4173 = vadd.f32 %v4171, %v4172
  %v4174 = vsel %vm30, %v3959, 0.0
  %v4175 = vadd.f32 %v4173, %v4174
  %v4176 = vsel %vm30, %v3964, 0.0
  %v4177 = vadd.f32 %v4175, %v4176
  %v4178 = vsel %vm30, %v3969, 0.0
  %v4179 = vadd.f32 %v4177, %v4178
  %v4180 = vsel %vm30, %v3974, 0.0
  %v4181 = vadd.f32 %v4179, %v4180
  %v4182 = vsel %vm30, %v3979, 0.0
  %v4183 = vadd.f32 %v4181, %v4182
  %v4184 = vsel %vm30, %v3984, 0.0
  %v4185 = vadd.f32 %v4183, %v4184
  %v4186 = vsel %vm30, %v3989, 0.0
  %v4187 = vadd.f32 %v4185, %v4186
  %v4188 = vsel %vm30, %v3994, 0.0
  %v4189 = vadd.f32 %v4187, %v4188
  %v4190 = vsel %vm30, %v3999, 0.0
  %v4191 = vadd.f32 %v4189, %v4190
  %v4192 = vsel %vm30, %v4004, 0.0
  %v4193 = vadd.f32 %v4191, %v4192
  %v4194 = vsel %vm30, %v4009, 0.0
  %v4195 = vadd.f32 %v4193, %v4194
  %v4196 = vsel %vm30, %v4014, 0.0
  %v4197 = vadd.f32 %v4195, %v4196
  %v4198 = vsel %vm30, %v4019, 0.0
  %v4199 = vadd.f32 %v4197, %v4198
  %v4200 = vsel %vm30, %v4024, 0.0
  %v4201 = vadd.f32 %v4199, %v4200
  %v4202 = vsel %vm30, %v4029, 0.0
  %v4203 = vadd.f32 %v4201, %v4202
  %v4204 = vsel %vm30, %v4034, 0.0
  %v4205 = vadd.f32 %v4203, %v4204
  %v4206 = vsel %vm30, %v4039, 0.0
  %v4207 = vadd.f32 %v4205, %v4206
  %v4208 = vsel %vm30, %v4044, 0.0
  %v4209 = vadd.f32 %v4207, %v4208
  %v4210 = vsel %vm30, %v4049, 0.0
  %v4211 = vadd.f32 %v4209, %v4210
  %v4212 = vsel %vm30, %v4054, 0.0
  %v4213 = vadd.f32 %v4211, %v4212
  %v4214 = vsel %vm30, %v4059, 0.0
  %v4215 = vadd.f32 %v4213, %v4214
  %v4216 = vsel %vm30, %v4064, 0.0
  %v4217 = vadd.f32 %v4215, %v4216
  %v4218 = vsel %vm30, %v4069, 0.0
  %v4219 = vadd.f32 %v4217, %v4218
  %v4220 = vsel %vm30, %v4074, 0.0
  %v4221 = vadd.f32 %v4219, %v4220
  %v4222 = vsel %vm30, %v4079, 0.0
  %v4223 = vadd.f32 %v4221, %v4222
  %v4224 = vsel %vm30, %v4084, 0.0
  %v4225 = vadd.f32 %v4223, %v4224
  %v4226 = vsel %vm30, %v4089, 0.0
  %v4227 = vadd.f32 %v4225, %v4226
  %v4228 = vsel %vm30, %v4094, 0.0
  %v4229 = vadd.f32 %v4227, %v4228
  %v4230 = vsel %vm30, %v4099, 0.0
  %v4231 = vadd.f32 %v4229, %v4230
  %v4232 = vsel %vm30, %v4104, 0.0
  %v4233 = vadd.f32 %v4231, %v4232
  %v4234 = vrot.slane %v4233, 4
  %v4235 = vadd.f32 %v4233, %v4234
  %v4236 = vrot.slane %v4235, 2
  %v4237 = vadd.f32 %v4235, %v4236
  %v4238 = vrot.slane %v4237, 1
  %v4239 = vadd.f32 %v4237, %v4238
  %v4240 = vmul.f32 %v3789, %v3789
  %v4241 = vmul.f32 %v3794, %v3794
  %v4242 = vmul.f32 %v3799, %v3799
  %v4243 = vmul.f32 %v3804, %v3804
  %v4244 = vmul.f32 %v3809, %v3809
  %v4245 = vmul.f32 %v3814, %v3814
  %v4246 = vmul.f32 %v3819, %v3819
  %v4247 = vmul.f32 %v3824, %v3824
  %v4248 = vmul.f32 %v3829, %v3829
  %v4249 = vmul.f32 %v3834, %v3834
  %v4250 = vmul.f32 %v3839, %v3839
  %v4251 = vmul.f32 %v3844, %v3844
  %v4252 = vmul.f32 %v3849, %v3849
  %v4253 = vmul.f32 %v3854, %v3854
  %v4254 = vmul.f32 %v3859, %v3859
  %v4255 = vmul.f32 %v3864, %v3864
  %v4256 = vmul.f32 %v3869, %v3869
  %v4257 = vmul.f32 %v3874, %v3874
  %v4258 = vmul.f32 %v3879, %v3879
  %v4259 = vmul.f32 %v3884, %v3884
  %v4260 = vmul.f32 %v3889, %v3889
  %v4261 = vmul.f32 %v3894, %v3894
  %v4262 = vmul.f32 %v3899, %v3899
  %v4263 = vmul.f32 %v3904, %v3904
  %v4264 = vmul.f32 %v3909, %v3909
  %v4265 = vmul.f32 %v3914, %v3914
  %v4266 = vmul.f32 %v3919, %v3919
  %v4267 = vmul.f32 %v3924, %v3924
  %v4268 = vmul.f32 %v3929, %v3929
  %v4269 = vmul.f32 %v3934, %v3934
  %v4270 = vmul.f32 %v3939, %v3939
  %v4271 = vmul.f32 %v3944, %v3944
  %v4272 = vmul.f32 %v3949, %v3949
  %v4273 = vmul.f32 %v3954, %v3954
  %v4274 = vmul.f32 %v3959, %v3959
  %v4275 = vmul.f32 %v3964, %v3964
  %v4276 = vmul.f32 %v3969, %v3969
  %v4277 = vmul.f32 %v3974, %v3974
  %v4278 = vmul.f32 %v3979, %v3979
  %v4279 = vmul.f32 %v3984, %v3984
  %v4280 = vmul.f32 %v3989, %v3989
  %v4281 = vmul.f32 %v3994, %v3994
  %v4282 = vmul.f32 %v3999, %v3999
  %v4283 = vmul.f32 %v4004, %v4004
  %v4284 = vmul.f32 %v4009, %v4009
  %v4285 = vmul.f32 %v4014, %v4014
  %v4286 = vmul.f32 %v4019, %v4019
  %v4287 = vmul.f32 %v4024, %v4024
  %v4288 = vmul.f32 %v4029, %v4029
  %v4289 = vmul.f32 %v4034, %v4034
  %v4290 = vmul.f32 %v4039, %v4039
  %v4291 = vmul.f32 %v4044, %v4044
  %v4292 = vmul.f32 %v4049, %v4049
  %v4293 = vmul.f32 %v4054, %v4054
  %v4294 = vmul.f32 %v4059, %v4059
  %v4295 = vmul.f32 %v4064, %v4064
  %v4296 = vmul.f32 %v4069, %v4069
  %v4297 = vmul.f32 %v4074, %v4074
  %v4298 = vmul.f32 %v4079, %v4079
  %v4299 = vmul.f32 %v4084, %v4084
  %v4300 = vmul.f32 %v4089, %v4089
  %v4301 = vmul.f32 %v4094, %v4094
  %v4302 = vmul.f32 %v4099, %v4099
  %v4303 = vmul.f32 %v4104, %v4104
  %v4304 = vsel %vm30, %v4240, 0.0
  %v4305 = vsel %vm30, %v4241, 0.0
  %v4306 = vadd.f32 %v4304, %v4305
  %v4307 = vsel %vm30, %v4242, 0.0
  %v4308 = vadd.f32 %v4306, %v4307
  %v4309 = vsel %vm30, %v4243, 0.0
  %v4310 = vadd.f32 %v4308, %v4309
  %v4311 = vsel %vm30, %v4244, 0.0
  %v4312 = vadd.f32 %v4310, %v4311
  %v4313 = vsel %vm30, %v4245, 0.0
  %v4314 = vadd.f32 %v4312, %v4313
  %v4315 = vsel %vm30, %v4246, 0.0
  %v4316 = vadd.f32 %v4314, %v4315
  %v4317 = vsel %vm30, %v4247, 0.0
  %v4318 = vadd.f32 %v4316, %v4317
  %v4319 = vsel %vm30, %v4248, 0.0
  %v4320 = vadd.f32 %v4318, %v4319
  %v4321 = vsel %vm30, %v4249, 0.0
  %v4322 = vadd.f32 %v4320, %v4321
  %v4323 = vsel %vm30, %v4250, 0.0
  %v4324 = vadd.f32 %v4322, %v4323
  %v4325 = vsel %vm30, %v4251, 0.0
  %v4326 = vadd.f32 %v4324, %v4325
  %v4327 = vsel %vm30, %v4252, 0.0
  %v4328 = vadd.f32 %v4326, %v4327
  %v4329 = vsel %vm30, %v4253, 0.0
  %v4330 = vadd.f32 %v4328, %v4329
  %v4331 = vsel %vm30, %v4254, 0.0
  %v4332 = vadd.f32 %v4330, %v4331
  %v4333 = vsel %vm30, %v4255, 0.0
  %v4334 = vadd.f32 %v4332, %v4333
  %v4335 = vsel %vm30, %v4256, 0.0
  %v4336 = vadd.f32 %v4334, %v4335
  %v4337 = vsel %vm30, %v4257, 0.0
  %v4338 = vadd.f32 %v4336, %v4337
  %v4339 = vsel %vm30, %v4258, 0.0
  %v4340 = vadd.f32 %v4338, %v4339
  %v4341 = vsel %vm30, %v4259, 0.0
  %v4342 = vadd.f32 %v4340, %v4341
  %v4343 = vsel %vm30, %v4260, 0.0
  %v4344 = vadd.f32 %v4342, %v4343
  %v4345 = vsel %vm30, %v4261, 0.0
  %v4346 = vadd.f32 %v4344, %v4345
  %v4347 = vsel %vm30, %v4262, 0.0
  %v4348 = vadd.f32 %v4346, %v4347
  %v4349 = vsel %vm30, %v4263, 0.0
  %v4350 = vadd.f32 %v4348, %v4349
  %v4351 = vsel %vm30, %v4264, 0.0
  %v4352 = vadd.f32 %v4350, %v4351
  %v4353 = vsel %vm30, %v4265, 0.0
  %v4354 = vadd.f32 %v4352, %v4353
  %v4355 = vsel %vm30, %v4266, 0.0
  %v4356 = vadd.f32 %v4354, %v4355
  %v4357 = vsel %vm30, %v4267, 0.0
  %v4358 = vadd.f32 %v4356, %v4357
  %v4359 = vsel %vm30, %v4268, 0.0
  %v4360 = vadd.f32 %v4358, %v4359
  %v4361 = vsel %vm30, %v4269, 0.0
  %v4362 = vadd.f32 %v4360, %v4361
  %v4363 = vsel %vm30, %v4270, 0.0
  %v4364 = vadd.f32 %v4362, %v4363
  %v4365 = vsel %vm30, %v4271, 0.0
  %v4366 = vadd.f32 %v4364, %v4365
  %v4367 = vsel %vm30, %v4272, 0.0
  %v4368 = vadd.f32 %v4366, %v4367
  %v4369 = vsel %vm30, %v4273, 0.0
  %v4370 = vadd.f32 %v4368, %v4369
  %v4371 = vsel %vm30, %v4274, 0.0
  %v4372 = vadd.f32 %v4370, %v4371
  %v4373 = vsel %vm30, %v4275, 0.0
  %v4374 = vadd.f32 %v4372, %v4373
  %v4375 = vsel %vm30, %v4276, 0.0
  %v4376 = vadd.f32 %v4374, %v4375
  %v4377 = vsel %vm30, %v4277, 0.0
  %v4378 = vadd.f32 %v4376, %v4377
  %v4379 = vsel %vm30, %v4278, 0.0
  %v4380 = vadd.f32 %v4378, %v4379
  %v4381 = vsel %vm30, %v4279, 0.0
  %v4382 = vadd.f32 %v4380, %v4381
  %v4383 = vsel %vm30, %v4280, 0.0
  %v4384 = vadd.f32 %v4382, %v4383
  %v4385 = vsel %vm30, %v4281, 0.0
  %v4386 = vadd.f32 %v4384, %v4385
  %v4387 = vsel %vm30, %v4282, 0.0
  %v4388 = vadd.f32 %v4386, %v4387
  %v4389 = vsel %vm30, %v4283, 0.0
  %v4390 = vadd.f32 %v4388, %v4389
  %v4391 = vsel %vm30, %v4284, 0.0
  %v4392 = vadd.f32 %v4390, %v4391
  %v4393 = vsel %vm30, %v4285, 0.0
  %v4394 = vadd.f32 %v4392, %v4393
  %v4395 = vsel %vm30, %v4286, 0.0
  %v4396 = vadd.f32 %v4394, %v4395
  %v4397 = vsel %vm30, %v4287, 0.0
  %v4398 = vadd.f32 %v4396, %v4397
  %v4399 = vsel %vm30, %v4288, 0.0
  %v4400 = vadd.f32 %v4398, %v4399
  %v4401 = vsel %vm30, %v4289, 0.0
  %v4402 = vadd.f32 %v4400, %v4401
  %v4403 = vsel %vm30, %v4290, 0.0
  %v4404 = vadd.f32 %v4402, %v4403
  %v4405 = vsel %vm30, %v4291, 0.0
  %v4406 = vadd.f32 %v4404, %v4405
  %v4407 = vsel %vm30, %v4292, 0.0
  %v4408 = vadd.f32 %v4406, %v4407
  %v4409 = vsel %vm30, %v4293, 0.0
  %v4410 = vadd.f32 %v4408, %v4409
  %v4411 = vsel %vm30, %v4294, 0.0
  %v4412 = vadd.f32 %v4410, %v4411
  %v4413 = vsel %vm30, %v4295, 0.0
  %v4414 = vadd.f32 %v4412, %v4413
  %v4415 = vsel %vm30, %v4296, 0.0
  %v4416 = vadd.f32 %v4414, %v4415
  %v4417 = vsel %vm30, %v4297, 0.0
  %v4418 = vadd.f32 %v4416, %v4417
  %v4419 = vsel %vm30, %v4298, 0.0
  %v4420 = vadd.f32 %v4418, %v4419
  %v4421 = vsel %vm30, %v4299, 0.0
  %v4422 = vadd.f32 %v4420, %v4421
  %v4423 = vsel %vm30, %v4300, 0.0
  %v4424 = vadd.f32 %v4422, %v4423
  %v4425 = vsel %vm30, %v4301, 0.0
  %v4426 = vadd.f32 %v4424, %v4425
  %v4427 = vsel %vm30, %v4302, 0.0
  %v4428 = vadd.f32 %v4426, %v4427
  %v4429 = vsel %vm30, %v4303, 0.0
  %v4430 = vadd.f32 %v4428, %v4429
  %v4431 = vrot.slane %v4430, 4
  %v4432 = vadd.f32 %v4430, %v4431
  %v4433 = vrot.slane %v4432, 2
  %v4434 = vadd.f32 %v4432, %v4433
  %v4435 = vrot.slane %v4434, 1
  %v4436 = vadd.f32 %v4434, %v4435
  %v4437 = vmul.f32 %v4239, 0.001953125
  %v4438 = vmul.f32 %v4436, 0.001953125
  %v4439 = vmul.f32 %v4437, %v4437
  %v4440 = vsub.f32 %v4438, %v4439
  %v4441 = vld [vmem:[%s2] sm:$0x1]
  %v4442 = vadd.f32 %v4440, 1e-05
  %v4443 = vrsqrt.pop %v4442
  %v4444 = vmul.f32 %v4441, %v4443
  %v4445 = vld [vmem:[%s3] sm:$0x1]
  %v4446 = vmul.f32 %v4437, %v4444
  %v4447 = vsub.f32 %v4445, %v4446
  %v4449 = vlaneseq
  %v4450 = vshrl.u32 %v4449, 7
  %v4451 = vsub.s32 0, %v4450
  %v4452 = vrot.slane %v4444, %v4451
  %v4454 = vmul.f32 %v3789, %v4452
  %v4455 = vmul.f32 %v3794, %v4452
  %v4456 = vmul.f32 %v3799, %v4452
  %v4457 = vmul.f32 %v3804, %v4452
  %v4458 = vmul.f32 %v3809, %v4452
  %v4459 = vmul.f32 %v3814, %v4452
  %v4460 = vmul.f32 %v3819, %v4452
  %v4461 = vmul.f32 %v3824, %v4452
  %v4462 = vmul.f32 %v3829, %v4452
  %v4463 = vmul.f32 %v3834, %v4452
  %v4464 = vmul.f32 %v3839, %v4452
  %v4465 = vmul.f32 %v3844, %v4452
  %v4466 = vmul.f32 %v3849, %v4452
  %v4467 = vmul.f32 %v3854, %v4452
  %v4468 = vmul.f32 %v3859, %v4452
  %v4469 = vmul.f32 %v3864, %v4452
  %v4470 = vmul.f32 %v3869, %v4452
  %v4471 = vmul.f32 %v3874, %v4452
  %v4472 = vmul.f32 %v3879, %v4452
  %v4473 = vmul.f32 %v3884, %v4452
  %v4474 = vmul.f32 %v3889, %v4452
  %v4475 = vmul.f32 %v3894, %v4452
  %v4476 = vmul.f32 %v3899, %v4452
  %v4477 = vmul.f32 %v3904, %v4452
  %v4478 = vmul.f32 %v3909, %v4452
  %v4479 = vmul.f32 %v3914, %v4452
  %v4480 = vmul.f32 %v3919, %v4452
  %v4481 = vmul.f32 %v3924, %v4452
  %v4482 = vmul.f32 %v3929, %v4452
  %v4483 = vmul.f32 %v3934, %v4452
  %v4484 = vmul.f32 %v3939, %v4452
  %v4485 = vmul.f32 %v3944, %v4452
  %v4486 = vmul.f32 %v3949, %v4452
  %v4487 = vmul.f32 %v3954, %v4452
  %v4488 = vmul.f32 %v3959, %v4452
  %v4489 = vmul.f32 %v3964, %v4452
  %v4490 = vmul.f32 %v3969, %v4452
  %v4491 = vmul.f32 %v3974, %v4452
  %v4492 = vmul.f32 %v3979, %v4452
  %v4493 = vmul.f32 %v3984, %v4452
  %v4494 = vmul.f32 %v3989, %v4452
  %v4495 = vmul.f32 %v3994, %v4452
  %v4496 = vmul.f32 %v3999, %v4452
  %v4497 = vmul.f32 %v4004, %v4452
  %v4498 = vmul.f32 %v4009, %v4452
  %v4499 = vmul.f32 %v4014, %v4452
  %v4500 = vmul.f32 %v4019, %v4452
  %v4501 = vmul.f32 %v4024, %v4452
  %v4502 = vmul.f32 %v4029, %v4452
  %v4503 = vmul.f32 %v4034, %v4452
  %v4504 = vmul.f32 %v4039, %v4452
  %v4505 = vmul.f32 %v4044, %v4452
  %v4506 = vmul.f32 %v4049, %v4452
  %v4507 = vmul.f32 %v4054, %v4452
  %v4508 = vmul.f32 %v4059, %v4452
  %v4509 = vmul.f32 %v4064, %v4452
  %v4510 = vmul.f32 %v4069, %v4452
  %v4511 = vmul.f32 %v4074, %v4452
  %v4512 = vmul.f32 %v4079, %v4452
  %v4513 = vmul.f32 %v4084, %v4452
  %v4514 = vmul.f32 %v4089, %v4452
  %v4515 = vmul.f32 %v4094, %v4452
  %v4516 = vmul.f32 %v4099, %v4452
  %v4517 = vmul.f32 %v4104, %v4452
  %v4519 = vlaneseq
  %v4520 = vshrl.u32 %v4519, 7
  %v4521 = vsub.s32 0, %v4520
  %v4522 = vrot.slane %v4447, %v4521
  %v4524 = vadd.f32 %v4454, %v4522
  %v4525 = vadd.f32 %v4455, %v4522
  %v4526 = vadd.f32 %v4456, %v4522
  %v4527 = vadd.f32 %v4457, %v4522
  %v4528 = vadd.f32 %v4458, %v4522
  %v4529 = vadd.f32 %v4459, %v4522
  %v4530 = vadd.f32 %v4460, %v4522
  %v4531 = vadd.f32 %v4461, %v4522
  %v4532 = vadd.f32 %v4462, %v4522
  %v4533 = vadd.f32 %v4463, %v4522
  %v4534 = vadd.f32 %v4464, %v4522
  %v4535 = vadd.f32 %v4465, %v4522
  %v4536 = vadd.f32 %v4466, %v4522
  %v4537 = vadd.f32 %v4467, %v4522
  %v4538 = vadd.f32 %v4468, %v4522
  %v4539 = vadd.f32 %v4469, %v4522
  %v4540 = vadd.f32 %v4470, %v4522
  %v4541 = vadd.f32 %v4471, %v4522
  %v4542 = vadd.f32 %v4472, %v4522
  %v4543 = vadd.f32 %v4473, %v4522
  %v4544 = vadd.f32 %v4474, %v4522
  %v4545 = vadd.f32 %v4475, %v4522
  %v4546 = vadd.f32 %v4476, %v4522
  %v4547 = vadd.f32 %v4477, %v4522
  %v4548 = vadd.f32 %v4478, %v4522
  %v4549 = vadd.f32 %v4479, %v4522
  %v4550 = vadd.f32 %v4480, %v4522
  %v4551 = vadd.f32 %v4481, %v4522
  %v4552 = vadd.f32 %v4482, %v4522
  %v4553 = vadd.f32 %v4483, %v4522
  %v4554 = vadd.f32 %v4484, %v4522
  %v4555 = vadd.f32 %v4485, %v4522
  %v4556 = vadd.f32 %v4486, %v4522
  %v4557 = vadd.f32 %v4487, %v4522
  %v4558 = vadd.f32 %v4488, %v4522
  %v4559 = vadd.f32 %v4489, %v4522
  %v4560 = vadd.f32 %v4490, %v4522
  %v4561 = vadd.f32 %v4491, %v4522
  %v4562 = vadd.f32 %v4492, %v4522
  %v4563 = vadd.f32 %v4493, %v4522
  %v4564 = vadd.f32 %v4494, %v4522
  %v4565 = vadd.f32 %v4495, %v4522
  %v4566 = vadd.f32 %v4496, %v4522
  %v4567 = vadd.f32 %v4497, %v4522
  %v4568 = vadd.f32 %v4498, %v4522
  %v4569 = vadd.f32 %v4499, %v4522
  %v4570 = vadd.f32 %v4500, %v4522
  %v4571 = vadd.f32 %v4501, %v4522
  %v4572 = vadd.f32 %v4502, %v4522
  %v4573 = vadd.f32 %v4503, %v4522
  %v4574 = vadd.f32 %v4504, %v4522
  %v4575 = vadd.f32 %v4505, %v4522
  %v4576 = vadd.f32 %v4506, %v4522
  %v4577 = vadd.f32 %v4507, %v4522
  %v4578 = vadd.f32 %v4508, %v4522
  %v4579 = vadd.f32 %v4509, %v4522
  %v4580 = vadd.f32 %v4510, %v4522
  %v4581 = vadd.f32 %v4511, %v4522
  %v4582 = vadd.f32 %v4512, %v4522
  %v4583 = vadd.f32 %v4513, %v4522
  %v4584 = vadd.f32 %v4514, %v4522
  %v4585 = vadd.f32 %v4515, %v4522
  %v4586 = vadd.f32 %v4516, %v4522
  %v4587 = vadd.f32 %v4517, %v4522
  %s4588 = sld [smem:[#allocation4]]
  %vm4589 = vcmp.ge.f32.partialorder %v4524, 0.0
  %vm4590 = vcmp.ge.f32.partialorder %v4525, 0.0
  %vm4591 = vcmp.ge.f32.partialorder %v4526, 0.0
  %vm4592 = vcmp.ge.f32.partialorder %v4527, 0.0
  %vm4593 = vcmp.ge.f32.partialorder %v4528, 0.0
  %vm4594 = vcmp.ge.f32.partialorder %v4529, 0.0
  %vm4595 = vcmp.ge.f32.partialorder %v4530, 0.0
  %vm4596 = vcmp.ge.f32.partialorder %v4531, 0.0
  %vm4597 = vcmp.ge.f32.partialorder %v4532, 0.0
  %vm4598 = vcmp.ge.f32.partialorder %v4533, 0.0
  %vm4599 = vcmp.ge.f32.partialorder %v4534, 0.0
  %vm4600 = vcmp.ge.f32.partialorder %v4535, 0.0
  %vm4601 = vcmp.ge.f32.partialorder %v4536, 0.0
  %vm4602 = vcmp.ge.f32.partialorder %v4537, 0.0
  %vm4603 = vcmp.ge.f32.partialorder %v4538, 0.0
  %vm4604 = vcmp.ge.f32.partialorder %v4539, 0.0
  %vm4605 = vcmp.ge.f32.partialorder %v4540, 0.0
  %vm4606 = vcmp.ge.f32.partialorder %v4541, 0.0
  %vm4607 = vcmp.ge.f32.partialorder %v4542, 0.0
  %vm4608 = vcmp.ge.f32.partialorder %v4543, 0.0
  %vm4609 = vcmp.ge.f32.partialorder %v4544, 0.0
  %vm4610 = vcmp.ge.f32.partialorder %v4545, 0.0
  %vm4611 = vcmp.ge.f32.partialorder %v4546, 0.0
  %vm4612 = vcmp.ge.f32.partialorder %v4547, 0.0
  %vm4613 = vcmp.ge.f32.partialorder %v4548, 0.0
  %vm4614 = vcmp.ge.f32.partialorder %v4549, 0.0
  %vm4615 = vcmp.ge.f32.partialorder %v4550, 0.0
  %vm4616 = vcmp.ge.f32.partialorder %v4551, 0.0
  %vm4617 = vcmp.ge.f32.partialorder %v4552, 0.0
  %vm4618 = vcmp.ge.f32.partialorder %v4553, 0.0
  %vm4619 = vcmp.ge.f32.partialorder %v4554, 0.0
  %vm4620 = vcmp.ge.f32.partialorder %v4555, 0.0
  %vm4621 = vcmp.ge.f32.partialorder %v4556, 0.0
  %vm4622 = vcmp.ge.f32.partialorder %v4557, 0.0
  %vm4623 = vcmp.ge.f32.partialorder %v4558, 0.0
  %vm4624 = vcmp.ge.f32.partialorder %v4559, 0.0
  %vm4625 = vcmp.ge.f32.partialorder %v4560, 0.0
  %vm4626 = vcmp.ge.f32.partialorder %v4561, 0.0
  %vm4627 = vcmp.ge.f32.partialorder %v4562, 0.0
  %vm4628 = vcmp.ge.f32.partialorder %v4563, 0.0
  %vm4629 = vcmp.ge.f32.partialorder %v4564, 0.0
  %vm4630 = vcmp.ge.f32.partialorder %v4565, 0.0
  %vm4631 = vcmp.ge.f32.partialorder %v4566, 0.0
  %vm4632 = vcmp.ge.f32.partialorder %v4567, 0.0
  %vm4633 = vcmp.ge.f32.partialorder %v4568, 0.0
  %vm4634 = vcmp.ge.f32.partialorder %v4569, 0.0
  %vm4635 = vcmp.ge.f32.partialorder %v4570, 0.0
  %vm4636 = vcmp.ge.f32.partialorder %v4571, 0.0
  %vm4637 = vcmp.ge.f32.partialorder %v4572, 0.0
  %vm4638 = vcmp.ge.f32.partialorder %v4573, 0.0
  %vm4639 = vcmp.ge.f32.partialorder %v4574, 0.0
  %vm4640 = vcmp.ge.f32.partialorder %v4575, 0.0
  %vm4641 = vcmp.ge.f32.partialorder %v4576, 0.0
  %vm4642 = vcmp.ge.f32.partialorder %v4577, 0.0
  %vm4643 = vcmp.ge.f32.partialorder %v4578, 0.0
  %vm4644 = vcmp.ge.f32.partialorder %v4579, 0.0
  %vm4645 = vcmp.ge.f32.partialorder %v4580, 0.0
  %vm4646 = vcmp.ge.f32.partialorder %v4581, 0.0
  %vm4647 = vcmp.ge.f32.partialorder %v4582, 0.0
  %vm4648 = vcmp.ge.f32.partialorder %v4583, 0.0
  %vm4649 = vcmp.ge.f32.partialorder %v4584, 0.0
  %vm4650 = vcmp.ge.f32.partialorder %v4585, 0.0
  %vm4651 = vcmp.ge.f32.partialorder %v4586, 0.0
  %vm4652 = vcmp.ge.f32.partialorder %v4587, 0.0
  %v4653 = vstv %s4588
  %v4654 = vmul.f32 %v4653, %v4524
  %v4655 = vmul.f32 %v4653, %v4525
  %v4656 = vmul.f32 %v4653, %v4526
  %v4657 = vmul.f32 %v4653, %v4527
  %v4658 = vmul.f32 %v4653, %v4528
  %v4659 = vmul.f32 %v4653, %v4529
  %v4660 = vmul.f32 %v4653, %v4530
  %v4661 = vmul.f32 %v4653, %v4531
  %v4662 = vmul.f32 %v4653, %v4532
  %v4663 = vmul.f32 %v4653, %v4533
  %v4664 = vmul.f32 %v4653, %v4534
  %v4665 = vmul.f32 %v4653, %v4535
  %v4666 = vmul.f32 %v4653, %v4536
  %v4667 = vmul.f32 %v4653, %v4537
  %v4668 = vmul.f32 %v4653, %v4538
  %v4669 = vmul.f32 %v4653, %v4539
  %v4670 = vmul.f32 %v4653, %v4540
  %v4671 = vmul.f32 %v4653, %v4541
  %v4672 = vmul.f32 %v4653, %v4542
  %v4673 = vmul.f32 %v4653, %v4543
  %v4674 = vmul.f32 %v4653, %v4544
  %v4675 = vmul.f32 %v4653, %v4545
  %v4676 = vmul.f32 %v4653, %v4546
  %v4677 = vmul.f32 %v4653, %v4547
  %v4678 = vmul.f32 %v4653, %v4548
  %v4679 = vmul.f32 %v4653, %v4549
  %v4680 = vmul.f32 %v4653, %v4550
  %v4681 = vmul.f32 %v4653, %v4551
  %v4682 = vmul.f32 %v4653, %v4552
  %v4683 = vmul.f32 %v4653, %v4553
  %v4684 = vmul.f32 %v4653, %v4554
  %v4685 = vmul.f32 %v4653, %v4555
  %v4686 = vmul.f32 %v4653, %v4556
  %v4687 = vmul.f32 %v4653, %v4557
  %v4688 = vmul.f32 %v4653, %v4558
  %v4689 = vmul.f32 %v4653, %v4559
  %v4690 = vmul.f32 %v4653, %v4560
  %v4691 = vmul.f32 %v4653, %v4561
  %v4692 = vmul.f32 %v4653, %v4562
  %v4693 = vmul.f32 %v4653, %v4563
  %v4694 = vmul.f32 %v4653, %v4564
  %v4695 = vmul.f32 %v4653, %v4565
  %v4696 = vmul.f32 %v4653, %v4566
  %v4697 = vmul.f32 %v4653, %v4567
  %v4698 = vmul.f32 %v4653, %v4568
  %v4699 = vmul.f32 %v4653, %v4569
  %v4700 = vmul.f32 %v4653, %v4570
  %v4701 = vmul.f32 %v4653, %v4571
  %v4702 = vmul.f32 %v4653, %v4572
  %v4703 = vmul.f32 %v4653, %v4573
  %v4704 = vmul.f32 %v4653, %v4574
  %v4705 = vmul.f32 %v4653, %v4575
  %v4706 = vmul.f32 %v4653, %v4576
  %v4707 = vmul.f32 %v4653, %v4577
  %v4708 = vmul.f32 %v4653, %v4578
  %v4709 = vmul.f32 %v4653, %v4579
  %v4710 = vmul.f32 %v4653, %v4580
  %v4711 = vmul.f32 %v4653, %v4581
  %v4712 = vmul.f32 %v4653, %v4582
  %v4713 = vmul.f32 %v4653, %v4583
  %v4714 = vmul.f32 %v4653, %v4584
  %v4715 = vmul.f32 %v4653, %v4585
  %v4716 = vmul.f32 %v4653, %v4586
  %v4717 = vmul.f32 %v4653, %v4587
  %v4718 = vsel %vm4589, %v4524, %v4654
  %v4719 = vsel %vm4590, %v4525, %v4655
  %v4720 = vsel %vm4591, %v4526, %v4656
  %v4721 = vsel %vm4592, %v4527, %v4657
  %v4722 = vsel %vm4593, %v4528, %v4658
  %v4723 = vsel %vm4594, %v4529, %v4659
  %v4724 = vsel %vm4595, %v4530, %v4660
  %v4725 = vsel %vm4596, %v4531, %v4661
  %v4726 = vsel %vm4597, %v4532, %v4662
  %v4727 = vsel %vm4598, %v4533, %v4663
  %v4728 = vsel %vm4599, %v4534, %v4664
  %v4729 = vsel %vm4600, %v4535, %v4665
  %v4730 = vsel %vm4601, %v4536, %v4666
  %v4731 = vsel %vm4602, %v4537, %v4667
  %v4732 = vsel %vm4603, %v4538, %v4668
  %v4733 = vsel %vm4604, %v4539, %v4669
  %v4734 = vsel %vm4605, %v4540, %v4670
  %v4735 = vsel %vm4606, %v4541, %v4671
  %v4736 = vsel %vm4607, %v4542, %v4672
  %v4737 = vsel %vm4608, %v4543, %v4673
  %v4738 = vsel %vm4609, %v4544, %v4674
  %v4739 = vsel %vm4610, %v4545, %v4675
  %v4740 = vsel %vm4611, %v4546, %v4676
  %v4741 = vsel %vm4612, %v4547, %v4677
  %v4742 = vsel %vm4613, %v4548, %v4678
  %v4743 = vsel %vm4614, %v4549, %v4679
  %v4744 = vsel %vm4615, %v4550, %v4680
  %v4745 = vsel %vm4616, %v4551, %v4681
  %v4746 = vsel %vm4617, %v4552, %v4682
  %v4747 = vsel %vm4618, %v4553, %v4683
  %v4748 = vsel %vm4619, %v4554, %v4684
  %v4749 = vsel %vm4620, %v4555, %v4685
  %v4750 = vsel %vm4621, %v4556, %v4686
  %v4751 = vsel %vm4622, %v4557, %v4687
  %v4752 = vsel %vm4623, %v4558, %v4688
  %v4753 = vsel %vm4624, %v4559, %v4689
  %v4754 = vsel %vm4625, %v4560, %v4690
  %v4755 = vsel %vm4626, %v4561, %v4691
  %v4756 = vsel %vm4627, %v4562, %v4692
  %v4757 = vsel %vm4628, %v4563, %v4693
  %v4758 = vsel %vm4629, %v4564, %v4694
  %v4759 = vsel %vm4630, %v4565, %v4695
  %v4760 = vsel %vm4631, %v4566, %v4696
  %v4761 = vsel %vm4632, %v4567, %v4697
  %v4762 = vsel %vm4633, %v4568, %v4698
  %v4763 = vsel %vm4634, %v4569, %v4699
  %v4764 = vsel %vm4635, %v4570, %v4700
  %v4765 = vsel %vm4636, %v4571, %v4701
  %v4766 = vsel %vm4637, %v4572, %v4702
  %v4767 = vsel %vm4638, %v4573, %v4703
  %v4768 = vsel %vm4639, %v4574, %v4704
  %v4769 = vsel %vm4640, %v4575, %v4705
  %v4770 = vsel %vm4641, %v4576, %v4706
  %v4771 = vsel %vm4642, %v4577, %v4707
  %v4772 = vsel %vm4643, %v4578, %v4708
  %v4773 = vsel %vm4644, %v4579, %v4709
  %v4774 = vsel %vm4645, %v4580, %v4710
  %v4775 = vsel %vm4646, %v4581, %v4711
  %v4776 = vsel %vm4647, %v4582, %v4712
  %v4777 = vsel %vm4648, %v4583, %v4713
  %v4778 = vsel %vm4649, %v4584, %v4714
  %v4779 = vsel %vm4650, %v4585, %v4715
  %v4780 = vsel %vm4651, %v4586, %v4716
  %v4781 = vsel %vm4652, %v4587, %v4717
  %4782 = vst.msk [vmem:[%s182 + $0x1] sm:$0xff] %vm30, %v4718
  %4783 = vst.msk [vmem:[%s182 + $0x9] sm:$0xff] %vm30, %v4719
  %4784 = vst.msk [vmem:[%s182 + $0x19] sm:$0xff] %vm30, %v4720
  %4785 = vst.msk [vmem:[%s182 + $0x21] sm:$0xff] %vm30, %v4721
  %4786 = vst.msk [vmem:[%s182 + $0x31] sm:$0xff] %vm30, %v4722
  %4787 = vst.msk [vmem:[%s182 + $0x39] sm:$0xff] %vm30, %v4723
  %4788 = vst.msk [vmem:[%s182 + $0x49] sm:$0xff] %vm30, %v4724
  %4789 = vst.msk [vmem:[%s182 + $0x51] sm:$0xff] %vm30, %v4725
  %4790 = vst.msk [vmem:[%s182 + $0x61] sm:$0xff] %vm30, %v4726
  %4791 = vst.msk [vmem:[%s182 + $0x69] sm:$0xff] %vm30, %v4727
  %4792 = vst.msk [vmem:[%s182 + $0x79] sm:$0xff] %vm30, %v4728
  %4793 = vst.msk [vmem:[%s182 + $0x81] sm:$0xff] %vm30, %v4729
  %4794 = vst.msk [vmem:[%s182 + $0x91] sm:$0xff] %vm30, %v4730
  %4795 = vst.msk [vmem:[%s182 + $0x99] sm:$0xff] %vm30, %v4731
  %4796 = vst.msk [vmem:[%s182 + $0xa9] sm:$0xff] %vm30, %v4732
  %4797 = vst.msk [vmem:[%s182 + $0xb1] sm:$0xff] %vm30, %v4733
  %4798 = vst.msk [vmem:[%s182 + $0xc1] sm:$0xff] %vm30, %v4734
  %4799 = vst.msk [vmem:[%s182 + $0xc9] sm:$0xff] %vm30, %v4735
  %4800 = vst.msk [vmem:[%s182 + $0xd9] sm:$0xff] %vm30, %v4736
  %4801 = vst.msk [vmem:[%s182 + $0xe1] sm:$0xff] %vm30, %v4737
  %4802 = vst.msk [vmem:[%s182 + $0xf1] sm:$0xff] %vm30, %v4738
  %4803 = vst.msk [vmem:[%s182 + $0xf9] sm:$0xff] %vm30, %v4739
  %4804 = vst.msk [vmem:[%s182 + $0x109] sm:$0xff] %vm30, %v4740
  %4805 = vst.msk [vmem:[%s182 + $0x111] sm:$0xff] %vm30, %v4741
  %4806 = vst.msk [vmem:[%s182 + $0x121] sm:$0xff] %vm30, %v4742
  %4807 = vst.msk [vmem:[%s182 + $0x129] sm:$0xff] %vm30, %v4743
  %4808 = vst.msk [vmem:[%s182 + $0x139] sm:$0xff] %vm30, %v4744
  %4809 = vst.msk [vmem:[%s182 + $0x141] sm:$0xff] %vm30, %v4745
  %4810 = vst.msk [vmem:[%s182 + $0x151] sm:$0xff] %vm30, %v4746
  %4811 = vst.msk [vmem:[%s182 + $0x159] sm:$0xff] %vm30, %v4747
  %4812 = vst.msk [vmem:[%s182 + $0x169] sm:$0xff] %vm30, %v4748
  %4813 = vst.msk [vmem:[%s182 + $0x171] sm:$0xff] %vm30, %v4749
  %4814 = vst.msk [vmem:[%s182 + $0x1b1] sm:$0xff] %vm30, %v4750
  %4815 = vst.msk [vmem:[%s182 + $0x1b9] sm:$0xff] %vm30, %v4751
  %4816 = vst.msk [vmem:[%s182 + $0x1c9] sm:$0xff] %vm30, %v4752
  %4817 = vst.msk [vmem:[%s182 + $0x1d1] sm:$0xff] %vm30, %v4753
  %4818 = vst.msk [vmem:[%s182 + $0x1e1] sm:$0xff] %vm30, %v4754
  %4819 = vst.msk [vmem:[%s182 + $0x1e9] sm:$0xff] %vm30, %v4755
  %4820 = vst.msk [vmem:[%s182 + $0x1f9] sm:$0xff] %vm30, %v4756
  %4821 = vst.msk [vmem:[%s182 + $0x201] sm:$0xff] %vm30, %v4757
  %4822 = vst.msk [vmem:[%s182 + $0x211] sm:$0xff] %vm30, %v4758
  %4823 = vst.msk [vmem:[%s182 + $0x219] sm:$0xff] %vm30, %v4759
  %4824 = vst.msk [vmem:[%s182 + $0x229] sm:$0xff] %vm30, %v4760
  %4825 = vst.msk [vmem:[%s182 + $0x231] sm:$0xff] %vm30, %v4761
  %4826 = vst.msk [vmem:[%s182 + $0x241] sm:$0xff] %vm30, %v4762
  %4827 = vst.msk [vmem:[%s182 + $0x249] sm:$0xff] %vm30, %v4763
  %4828 = vst.msk [vmem:[%s182 + $0x259] sm:$0xff] %vm30, %v4764
  %4829 = vst.msk [vmem:[%s182 + $0x261] sm:$0xff] %vm30, %v4765
  %4830 = vst.msk [vmem:[%s182 + $0x271] sm:$0xff] %vm30, %v4766
  %4831 = vst.msk [vmem:[%s182 + $0x279] sm:$0xff] %vm30, %v4767
  %4832 = vst.msk [vmem:[%s182 + $0x289] sm:$0xff] %vm30, %v4768
  %4833 = vst.msk [vmem:[%s182 + $0x291] sm:$0xff] %vm30, %v4769
  %4834 = vst.msk [vmem:[%s182 + $0x2a1] sm:$0xff] %vm30, %v4770
  %4835 = vst.msk [vmem:[%s182 + $0x2a9] sm:$0xff] %vm30, %v4771
  %4836 = vst.msk [vmem:[%s182 + $0x2b9] sm:$0xff] %vm30, %v4772
  %4837 = vst.msk [vmem:[%s182 + $0x2c1] sm:$0xff] %vm30, %v4773
  %4838 = vst.msk [vmem:[%s182 + $0x2d1] sm:$0xff] %vm30, %v4774
  %4839 = vst.msk [vmem:[%s182 + $0x2d9] sm:$0xff] %vm30, %v4775
  %4840 = vst.msk [vmem:[%s182 + $0x2e9] sm:$0xff] %vm30, %v4776
  %4841 = vst.msk [vmem:[%s182 + $0x2f1] sm:$0xff] %vm30, %v4777
  %4842 = vst.msk [vmem:[%s182 + $0x301] sm:$0xff] %vm30, %v4778
  %4843 = vst.msk [vmem:[%s182 + $0x309] sm:$0xff] %vm30, %v4779
  %4844 = vst.msk [vmem:[%s182 + $0x319] sm:$0xff] %vm30, %v4780
  %4845 = vst.msk [vmem:[%s182 + $0x321] sm:$0xff] %vm30, %v4781
  %v4846 = vld [vmem:[#allocation2] sm:$0xff]
  %v4847 = vld [vmem:[#allocation2 + $0x8] sm:$0xff]
  %v4848 = vld [vmem:[#allocation2 + $0x18] sm:$0xff]
  %v4849 = vld [vmem:[#allocation2 + $0x20] sm:$0xff]
  %v4850 = vld [vmem:[#allocation2 + $0x30] sm:$0xff]
  %v4851 = vld [vmem:[#allocation2 + $0x38] sm:$0xff]
  %v4852 = vld [vmem:[#allocation2 + $0x48] sm:$0xff]
  %v4853 = vld [vmem:[#allocation2 + $0x50] sm:$0xff]
  %v4854 = vld [vmem:[#allocation2 + $0x60] sm:$0xff]
  %v4855 = vld [vmem:[#allocation2 + $0x68] sm:$0xff]
  %v4856 = vld [vmem:[#allocation2 + $0x78] sm:$0xff]
  %v4857 = vld [vmem:[#allocation2 + $0x80] sm:$0xff]
  %v4858 = vld [vmem:[#allocation2 + $0x90] sm:$0xff]
  %v4859 = vld [vmem:[#allocation2 + $0x98] sm:$0xff]
  %v4860 = vld [vmem:[#allocation2 + $0xa8] sm:$0xff]
  %v4861 = vld [vmem:[#allocation2 + $0xb0] sm:$0xff]
  %v4862 = vld [vmem:[#allocation2 + $0xc0] sm:$0xff]
  %v4863 = vld [vmem:[#allocation2 + $0xc8] sm:$0xff]
  %v4864 = vld [vmem:[#allocation2 + $0xd8] sm:$0xff]
  %v4865 = vld [vmem:[#allocation2 + $0xe0] sm:$0xff]
  %v4866 = vld [vmem:[#allocation2 + $0xf0] sm:$0xff]
  %v4867 = vld [vmem:[#allocation2 + $0xf8] sm:$0xff]
  %v4868 = vld [vmem:[#allocation2 + $0x108] sm:$0xff]
  %v4869 = vld [vmem:[#allocation2 + $0x110] sm:$0xff]
  %v4870 = vld [vmem:[#allocation2 + $0x120] sm:$0xff]
  %v4871 = vld [vmem:[#allocation2 + $0x128] sm:$0xff]
  %v4872 = vld [vmem:[#allocation2 + $0x138] sm:$0xff]
  %v4873 = vld [vmem:[#allocation2 + $0x140] sm:$0xff]
  %v4874 = vld [vmem:[#allocation2 + $0x150] sm:$0xff]
  %v4875 = vld [vmem:[#allocation2 + $0x158] sm:$0xff]
  %v4876 = vld [vmem:[#allocation2 + $0x168] sm:$0xff]
  %v4877 = vld [vmem:[#allocation2 + $0x170] sm:$0xff]
  %v4878 = vld [vmem:[#allocation2 + $0x1b0] sm:$0xff]
  %v4879 = vld [vmem:[#allocation2 + $0x1b8] sm:$0xff]
  %v4880 = vld [vmem:[#allocation2 + $0x1c8] sm:$0xff]
  %v4881 = vld [vmem:[#allocation2 + $0x1d0] sm:$0xff]
  %v4882 = vld [vmem:[#allocation2 + $0x1e0] sm:$0xff]
  %v4883 = vld [vmem:[#allocation2 + $0x1e8] sm:$0xff]
  %v4884 = vld [vmem:[#allocation2 + $0x1f8] sm:$0xff]
  %v4885 = vld [vmem:[#allocation2 + $0x200] sm:$0xff]
  %v4886 = vld [vmem:[#allocation2 + $0x210] sm:$0xff]
  %v4887 = vld [vmem:[#allocation2 + $0x218] sm:$0xff]
  %v4888 = vld [vmem:[#allocation2 + $0x228] sm:$0xff]
  %v4889 = vld [vmem:[#allocation2 + $0x230] sm:$0xff]
  %v4890 = vld [vmem:[#allocation2 + $0x240] sm:$0xff]
  %v4891 = vld [vmem:[#allocation2 + $0x248] sm:$0xff]
  %v4892 = vld [vmem:[#allocation2 + $0x258] sm:$0xff]
  %v4893 = vld [vmem:[#allocation2 + $0x260] sm:$0xff]
  %v4894 = vld [vmem:[#allocation2 + $0x270] sm:$0xff]
  %v4895 = vld [vmem:[#allocation2 + $0x278] sm:$0xff]
  %v4896 = vld [vmem:[#allocation2 + $0x288] sm:$0xff]
  %v4897 = vld [vmem:[#allocation2 + $0x290] sm:$0xff]
  %v4898 = vld [vmem:[#allocation2 + $0x2a0] sm:$0xff]
  %v4899 = vld [vmem:[#allocation2 + $0x2a8] sm:$0xff]
  %v4900 = vld [vmem:[#allocation2 + $0x2b8] sm:$0xff]
  %v4901 = vld [vmem:[#allocation2 + $0x2c0] sm:$0xff]
  %v4902 = vld [vmem:[#allocation2 + $0x2d0] sm:$0xff]
  %v4903 = vld [vmem:[#allocation2 + $0x2d8] sm:$0xff]
  %v4904 = vld [vmem:[#allocation2 + $0x2e8] sm:$0xff]
  %v4905 = vld [vmem:[#allocation2 + $0x2f0] sm:$0xff]
  %v4906 = vld [vmem:[#allocation2 + $0x300] sm:$0xff]
  %v4907 = vld [vmem:[#allocation2 + $0x308] sm:$0xff]
  %v4908 = vld [vmem:[#allocation2 + $0x318] sm:$0xff]
  %v4909 = vld [vmem:[#allocation2 + $0x320] sm:$0xff]
  %4910 = vst.msk [vmem:[#allocation3] sm:$0xff] %vm30, %v4846
  %4911 = vst.msk [vmem:[#allocation3 + $0x8] sm:$0xff] %vm30, %v4847
  %4912 = vst.msk [vmem:[#allocation3 + $0x10] sm:$0xff] %vm30, %v4848
  %4913 = vst.msk [vmem:[#allocation3 + $0x18] sm:$0xff] %vm30, %v4849
  %4914 = vst.msk [vmem:[#allocation3 + $0x20] sm:$0xff] %vm30, %v4850
  %4915 = vst.msk [vmem:[#allocation3 + $0x28] sm:$0xff] %vm30, %v4851
  %4916 = vst.msk [vmem:[#allocation3 + $0x30] sm:$0xff] %vm30, %v4852
  %4917 = vst.msk [vmem:[#allocation3 + $0x38] sm:$0xff] %vm30, %v4853
  %4918 = vst.msk [vmem:[#allocation3 + $0x40] sm:$0xff] %vm30, %v4854
  %4919 = vst.msk [vmem:[#allocation3 + $0x48] sm:$0xff] %vm30, %v4855
  %4920 = vst.msk [vmem:[#allocation3 + $0x50] sm:$0xff] %vm30, %v4856
  %4921 = vst.msk [vmem:[#allocation3 + $0x58] sm:$0xff] %vm30, %v4857
  %4922 = vst.msk [vmem:[#allocation3 + $0x60] sm:$0xff] %vm30, %v4858
  %4923 = vst.msk [vmem:[#allocation3 + $0x68] sm:$0xff] %vm30, %v4859
  %4924 = vst.msk [vmem:[#allocation3 + $0x70] sm:$0xff] %vm30, %v4860
  %4925 = vst.msk [vmem:[#allocation3 + $0x78] sm:$0xff] %vm30, %v4861
  %4926 = vst.msk [vmem:[#allocation3 + $0x80] sm:$0xff] %vm30, %v4862
  %4927 = vst.msk [vmem:[#allocation3 + $0x88] sm:$0xff] %vm30, %v4863
  %4928 = vst.msk [vmem:[#allocation3 + $0x90] sm:$0xff] %vm30, %v4864
  %4929 = vst.msk [vmem:[#allocation3 + $0x98] sm:$0xff] %vm30, %v4865
  %4930 = vst.msk [vmem:[#allocation3 + $0xa0] sm:$0xff] %vm30, %v4866
  %4931 = vst.msk [vmem:[#allocation3 + $0xa8] sm:$0xff] %vm30, %v4867
  %4932 = vst.msk [vmem:[#allocation3 + $0xb0] sm:$0xff] %vm30, %v4868
  %4933 = vst.msk [vmem:[#allocation3 + $0xb8] sm:$0xff] %vm30, %v4869
  %4934 = vst.msk [vmem:[#allocation3 + $0xc0] sm:$0xff] %vm30, %v4870
  %4935 = vst.msk [vmem:[#allocation3 + $0xc8] sm:$0xff] %vm30, %v4871
  %4936 = vst.msk [vmem:[#allocation3 + $0xd0] sm:$0xff] %vm30, %v4872
  %4937 = vst.msk [vmem:[#allocation3 + $0xd8] sm:$0xff] %vm30, %v4873
  %4938 = vst.msk [vmem:[#allocation3 + $0xe0] sm:$0xff] %vm30, %v4874
  %4939 = vst.msk [vmem:[#allocation3 + $0xe8] sm:$0xff] %vm30, %v4875
  %4940 = vst.msk [vmem:[#allocation3 + $0xf0] sm:$0xff] %vm30, %v4876
  %4941 = vst.msk [vmem:[#allocation3 + $0xf8] sm:$0xff] %vm30, %v4877
  %4942 = vst.msk [vmem:[#allocation3 + $0x100] sm:$0xff] %vm30, %v4878
  %4943 = vst.msk [vmem:[#allocation3 + $0x108] sm:$0xff] %vm30, %v4879
  %4944 = vst.msk [vmem:[#allocation3 + $0x110] sm:$0xff] %vm30, %v4880
  %4945 = vst.msk [vmem:[#allocation3 + $0x118] sm:$0xff] %vm30, %v4881
  %4946 = vst.msk [vmem:[#allocation3 + $0x120] sm:$0xff] %vm30, %v4882
  %4947 = vst.msk [vmem:[#allocation3 + $0x128] sm:$0xff] %vm30, %v4883
  %4948 = vst.msk [vmem:[#allocation3 + $0x130] sm:$0xff] %vm30, %v4884
  %4949 = vst.msk [vmem:[#allocation3 + $0x138] sm:$0xff] %vm30, %v4885
  %4950 = vst.msk [vmem:[#allocation3 + $0x140] sm:$0xff] %vm30, %v4886
  %4951 = vst.msk [vmem:[#allocation3 + $0x148] sm:$0xff] %vm30, %v4887
  %4952 = vst.msk [vmem:[#allocation3 + $0x150] sm:$0xff] %vm30, %v4888
  %4953 = vst.msk [vmem:[#allocation3 + $0x158] sm:$0xff] %vm30, %v4889
  %4954 = vst.msk [vmem:[#allocation3 + $0x160] sm:$0xff] %vm30, %v4890
  %4955 = vst.msk [vmem:[#allocation3 + $0x168] sm:$0xff] %vm30, %v4891
  %4956 = vst.msk [vmem:[#allocation3 + $0x170] sm:$0xff] %vm30, %v4892
  %4957 = vst.msk [vmem:[#allocation3 + $0x178] sm:$0xff] %vm30, %v4893
  %4958 = vst.msk [vmem:[#allocation3 + $0x180] sm:$0xff] %vm30, %v4894
  %4959 = vst.msk [vmem:[#allocation3 + $0x188] sm:$0xff] %vm30, %v4895
  %4960 = vst.msk [vmem:[#allocation3 + $0x190] sm:$0xff] %vm30, %v4896
  %4961 = vst.msk [vmem:[#allocation3 + $0x198] sm:$0xff] %vm30, %v4897
  %4962 = vst.msk [vmem:[#allocation3 + $0x1a0] sm:$0xff] %vm30, %v4898
  %4963 = vst.msk [vmem:[#allocation3 + $0x1a8] sm:$0xff] %vm30, %v4899
  %4964 = vst.msk [vmem:[#allocation3 + $0x1b0] sm:$0xff] %vm30, %v4900
  %4965 = vst.msk [vmem:[#allocation3 + $0x1b8] sm:$0xff] %vm30, %v4901
  %4966 = vst.msk [vmem:[#allocation3 + $0x1c0] sm:$0xff] %vm30, %v4902
  %4967 = vst.msk [vmem:[#allocation3 + $0x1c8] sm:$0xff] %vm30, %v4903
  %4968 = vst.msk [vmem:[#allocation3 + $0x1d0] sm:$0xff] %vm30, %v4904
  %4969 = vst.msk [vmem:[#allocation3 + $0x1d8] sm:$0xff] %vm30, %v4905
  %4970 = vst.msk [vmem:[#allocation3 + $0x1e0] sm:$0xff] %vm30, %v4906
  %4971 = vst.msk [vmem:[#allocation3 + $0x1e8] sm:$0xff] %vm30, %v4907
  %4972 = vst.msk [vmem:[#allocation3 + $0x1f0] sm:$0xff] %vm30, %v4908
  %4973 = vst.msk [vmem:[#allocation3 + $0x1f8] sm:$0xff] %vm30, %v4909
  %v4974 = vld [vmem:[#allocation2 + $0x1] sm:$0xff]
  %v4975 = vld [vmem:[#allocation2 + $0x9] sm:$0xff]
  %v4976 = vld [vmem:[#allocation2 + $0x19] sm:$0xff]
  %v4977 = vld [vmem:[#allocation2 + $0x21] sm:$0xff]
  %v4978 = vld [vmem:[#allocation2 + $0x31] sm:$0xff]
  %v4979 = vld [vmem:[#allocation2 + $0x39] sm:$0xff]
  %v4980 = vld [vmem:[#allocation2 + $0x49] sm:$0xff]
  %v4981 = vld [vmem:[#allocation2 + $0x51] sm:$0xff]
  %v4982 = vld [vmem:[#allocation2 + $0x61] sm:$0xff]
  %v4983 = vld [vmem:[#allocation2 + $0x69] sm:$0xff]
  %v4984 = vld [vmem:[#allocation2 + $0x79] sm:$0xff]
  %v4985 = vld [vmem:[#allocation2 + $0x81] sm:$0xff]
  %v4986 = vld [vmem:[#allocation2 + $0x91] sm:$0xff]
  %v4987 = vld [vmem:[#allocation2 + $0x99] sm:$0xff]
  %v4988 = vld [vmem:[#allocation2 + $0xa9] sm:$0xff]
  %v4989 = vld [vmem:[#allocation2 + $0xb1] sm:$0xff]
  %v4990 = vld [vmem:[#allocation2 + $0xc1] sm:$0xff]
  %v4991 = vld [vmem:[#allocation2 + $0xc9] sm:$0xff]
  %v4992 = vld [vmem:[#allocation2 + $0xd9] sm:$0xff]
  %v4993 = vld [vmem:[#allocation2 + $0xe1] sm:$0xff]
  %v4994 = vld [vmem:[#allocation2 + $0xf1] sm:$0xff]
  %v4995 = vld [vmem:[#allocation2 + $0xf9] sm:$0xff]
  %v4996 = vld [vmem:[#allocation2 + $0x109] sm:$0xff]
  %v4997 = vld [vmem:[#allocation2 + $0x111] sm:$0xff]
  %v4998 = vld [vmem:[#allocation2 + $0x121] sm:$0xff]
  %v4999 = vld [vmem:[#allocation2 + $0x129] sm:$0xff]
  %v5000 = vld [vmem:[#allocation2 + $0x139] sm:$0xff]
  %v5001 = vld [vmem:[#allocation2 + $0x141] sm:$0xff]
  %v5002 = vld [vmem:[#allocation2 + $0x151] sm:$0xff]
  %v5003 = vld [vmem:[#allocation2 + $0x159] sm:$0xff]
  %v5004 = vld [vmem:[#allocation2 + $0x169] sm:$0xff]
  %v5005 = vld [vmem:[#allocation2 + $0x171] sm:$0xff]
  %v5006 = vld [vmem:[#allocation2 + $0x1b1] sm:$0xff]
  %v5007 = vld [vmem:[#allocation2 + $0x1b9] sm:$0xff]
  %v5008 = vld [vmem:[#allocation2 + $0x1c9] sm:$0xff]
  %v5009 = vld [vmem:[#allocation2 + $0x1d1] sm:$0xff]
  %v5010 = vld [vmem:[#allocation2 + $0x1e1] sm:$0xff]
  %v5011 = vld [vmem:[#allocation2 + $0x1e9] sm:$0xff]
  %v5012 = vld [vmem:[#allocation2 + $0x1f9] sm:$0xff]
  %v5013 = vld [vmem:[#allocation2 + $0x201] sm:$0xff]
  %v5014 = vld [vmem:[#allocation2 + $0x211] sm:$0xff]
  %v5015 = vld [vmem:[#allocation2 + $0x219] sm:$0xff]
  %v5016 = vld [vmem:[#allocation2 + $0x229] sm:$0xff]
  %v5017 = vld [vmem:[#allocation2 + $0x231] sm:$0xff]
  %v5018 = vld [vmem:[#allocation2 + $0x241] sm:$0xff]
  %v5019 = vld [vmem:[#allocation2 + $0x249] sm:$0xff]
  %v5020 = vld [vmem:[#allocation2 + $0x259] sm:$0xff]
  %v5021 = vld [vmem:[#allocation2 + $0x261] sm:$0xff]
  %v5022 = vld [vmem:[#allocation2 + $0x271] sm:$0xff]
  %v5023 = vld [vmem:[#allocation2 + $0x279] sm:$0xff]
  %v5024 = vld [vmem:[#allocation2 + $0x289] sm:$0xff]
  %v5025 = vld [vmem:[#allocation2 + $0x291] sm:$0xff]
  %v5026 = vld [vmem:[#allocation2 + $0x2a1] sm:$0xff]
  %v5027 = vld [vmem:[#allocation2 + $0x2a9] sm:$0xff]
  %v5028 = vld [vmem:[#allocation2 + $0x2b9] sm:$0xff]
  %v5029 = vld [vmem:[#allocation2 + $0x2c1] sm:$0xff]
  %v5030 = vld [vmem:[#allocation2 + $0x2d1] sm:$0xff]
  %v5031 = vld [vmem:[#allocation2 + $0x2d9] sm:$0xff]
  %v5032 = vld [vmem:[#allocation2 + $0x2e9] sm:$0xff]
  %v5033 = vld [vmem:[#allocation2 + $0x2f1] sm:$0xff]
  %v5034 = vld [vmem:[#allocation2 + $0x301] sm:$0xff]
  %v5035 = vld [vmem:[#allocation2 + $0x309] sm:$0xff]
  %v5036 = vld [vmem:[#allocation2 + $0x319] sm:$0xff]
  %v5037 = vld [vmem:[#allocation2 + $0x321] sm:$0xff]
  %5102 = vrot.lane.b32.xlu0 %v4974, 4
  %v5103 = vpop.permute.xlu0 %5102
  %5104 = vrot.lane.b32.xlu0 %v4975, 4
  %v5105 = vpop.permute.xlu0 %5104
  %5106 = vrot.lane.b32.xlu0 %v4976, 4
  %v5107 = vpop.permute.xlu0 %5106
  %5108 = vrot.lane.b32.xlu0 %v4977, 4
  %v5109 = vpop.permute.xlu0 %5108
  %5110 = vrot.lane.b32.xlu0 %v4978, 4
  %v5111 = vpop.permute.xlu0 %5110
  %5112 = vrot.lane.b32.xlu0 %v4979, 4
  %v5113 = vpop.permute.xlu0 %5112
  %5114 = vrot.lane.b32.xlu0 %v4980, 4
  %v5115 = vpop.permute.xlu0 %5114
  %5116 = vrot.lane.b32.xlu0 %v4981, 4
  %v5117 = vpop.permute.xlu0 %5116
  %5118 = vrot.lane.b32.xlu0 %v4982, 4
  %v5119 = vpop.permute.xlu0 %5118
  %5120 = vrot.lane.b32.xlu0 %v4983, 4
  %v5121 = vpop.permute.xlu0 %5120
  %5122 = vrot.lane.b32.xlu0 %v4984, 4
  %v5123 = vpop.permute.xlu0 %5122
  %5124 = vrot.lane.b32.xlu0 %v4985, 4
  %v5125 = vpop.permute.xlu0 %5124
  %5126 = vrot.lane.b32.xlu0 %v4986, 4
  %v5127 = vpop.permute.xlu0 %5126
  %5128 = vrot.lane.b32.xlu0 %v4987, 4
  %v5129 = vpop.permute.xlu0 %5128
  %5130 = vrot.lane.b32.xlu0 %v4988, 4
  %v5131 = vpop.permute.xlu0 %5130
  %5132 = vrot.lane.b32.xlu0 %v4989, 4
  %v5133 = vpop.permute.xlu0 %5132
  %5134 = vrot.lane.b32.xlu0 %v4990, 4
  %v5135 = vpop.permute.xlu0 %5134
  %5136 = vrot.lane.b32.xlu0 %v4991, 4
  %v5137 = vpop.permute.xlu0 %5136
  %5138 = vrot.lane.b32.xlu0 %v4992, 4
  %v5139 = vpop.permute.xlu0 %5138
  %5140 = vrot.lane.b32.xlu0 %v4993, 4
  %v5141 = vpop.permute.xlu0 %5140
  %5142 = vrot.lane.b32.xlu0 %v4994, 4
  %v5143 = vpop.permute.xlu0 %5142
  %5144 = vrot.lane.b32.xlu0 %v4995, 4
  %v5145 = vpop.permute.xlu0 %5144
  %5146 = vrot.lane.b32.xlu0 %v4996, 4
  %v5147 = vpop.permute.xlu0 %5146
  %5148 = vrot.lane.b32.xlu0 %v4997, 4
  %v5149 = vpop.permute.xlu0 %5148
  %5150 = vrot.lane.b32.xlu0 %v4998, 4
  %v5151 = vpop.permute.xlu0 %5150
  %5152 = vrot.lane.b32.xlu0 %v4999, 4
  %v5153 = vpop.permute.xlu0 %5152
  %5154 = vrot.lane.b32.xlu0 %v5000, 4
  %v5155 = vpop.permute.xlu0 %5154
  %5156 = vrot.lane.b32.xlu0 %v5001, 4
  %v5157 = vpop.permute.xlu0 %5156
  %5158 = vrot.lane.b32.xlu0 %v5002, 4
  %v5159 = vpop.permute.xlu0 %5158
  %5160 = vrot.lane.b32.xlu0 %v5003, 4
  %v5161 = vpop.permute.xlu0 %5160
  %5162 = vrot.lane.b32.xlu0 %v5004, 4
  %v5163 = vpop.permute.xlu0 %5162
  %5164 = vrot.lane.b32.xlu0 %v5005, 4
  %v5165 = vpop.permute.xlu0 %5164
  %5166 = vrot.lane.b32.xlu0 %v5006, 4
  %v5167 = vpop.permute.xlu0 %5166
  %5168 = vrot.lane.b32.xlu0 %v5007, 4
  %v5169 = vpop.permute.xlu0 %5168
  %5170 = vrot.lane.b32.xlu0 %v5008, 4
  %v5171 = vpop.permute.xlu0 %5170
  %5172 = vrot.lane.b32.xlu0 %v5009, 4
  %v5173 = vpop.permute.xlu0 %5172
  %5174 = vrot.lane.b32.xlu0 %v5010, 4
  %v5175 = vpop.permute.xlu0 %5174
  %5176 = vrot.lane.b32.xlu0 %v5011, 4
  %v5177 = vpop.permute.xlu0 %5176
  %5178 = vrot.lane.b32.xlu0 %v5012, 4
  %v5179 = vpop.permute.xlu0 %5178
  %5180 = vrot.lane.b32.xlu0 %v5013, 4
  %v5181 = vpop.permute.xlu0 %5180
  %5182 = vrot.lane.b32.xlu0 %v5014, 4
  %v5183 = vpop.permute.xlu0 %5182
  %5184 = vrot.lane.b32.xlu0 %v5015, 4
  %v5185 = vpop.permute.xlu0 %5184
  %5186 = vrot.lane.b32.xlu0 %v5016, 4
  %v5187 = vpop.permute.xlu0 %5186
  %5188 = vrot.lane.b32.xlu0 %v5017, 4
  %v5189 = vpop.permute.xlu0 %5188
  %5190 = vrot.lane.b32.xlu0 %v5018, 4
  %v5191 = vpop.permute.xlu0 %5190
  %5192 = vrot.lane.b32.xlu0 %v5019, 4
  %v5193 = vpop.permute.xlu0 %5192
  %5194 = vrot.lane.b32.xlu0 %v5020, 4
  %v5195 = vpop.permute.xlu0 %5194
  %5196 = vrot.lane.b32.xlu0 %v5021, 4
  %v5197 = vpop.permute.xlu0 %5196
  %5198 = vrot.lane.b32.xlu0 %v5022, 4
  %v5199 = vpop.permute.xlu0 %5198
  %5200 = vrot.lane.b32.xlu0 %v5023, 4
  %v5201 = vpop.permute.xlu0 %5200
  %5202 = vrot.lane.b32.xlu0 %v5024, 4
  %v5203 = vpop.permute.xlu0 %5202
  %5204 = vrot.lane.b32.xlu0 %v5025, 4
  %v5205 = vpop.permute.xlu0 %5204
  %5206 = vrot.lane.b32.xlu0 %v5026, 4
  %v5207 = vpop.permute.xlu0 %5206
  %5208 = vrot.lane.b32.xlu0 %v5027, 4
  %v5209 = vpop.permute.xlu0 %5208
  %5210 = vrot.lane.b32.xlu0 %v5028, 4
  %v5211 = vpop.permute.xlu0 %5210
  %5212 = vrot.lane.b32.xlu0 %v5029, 4
  %v5213 = vpop.permute.xlu0 %5212
  %5214 = vrot.lane.b32.xlu0 %v5030, 4
  %v5215 = vpop.permute.xlu0 %5214
  %5216 = vrot.lane.b32.xlu0 %v5031, 4
  %v5217 = vpop.permute.xlu0 %5216
  %5218 = vrot.lane.b32.xlu0 %v5032, 4
  %v5219 = vpop.permute.xlu0 %5218
  %5220 = vrot.lane.b32.xlu0 %v5033, 4
  %v5221 = vpop.permute.xlu0 %5220
  %5222 = vrot.lane.b32.xlu0 %v5034, 4
  %v5223 = vpop.permute.xlu0 %5222
  %5224 = vrot.lane.b32.xlu0 %v5035, 4
  %v5225 = vpop.permute.xlu0 %5224
  %5226 = vrot.lane.b32.xlu0 %v5036, 4
  %v5227 = vpop.permute.xlu0 %5226
  %5228 = vrot.lane.b32.xlu0 %v5037, 4
  %v5229 = vpop.permute.xlu0 %5228
  %5294 = vst.msk [vmem:[#allocation3] sm:$0xff] %vm695, %v5103
  %5295 = vst.msk [vmem:[#allocation3 + $0x8] sm:$0xff] %vm695, %v5105
  %5296 = vst.msk [vmem:[#allocation3 + $0x10] sm:$0xff] %vm695, %v5107
  %5297 = vst.msk [vmem:[#allocation3 + $0x18] sm:$0xff] %vm695, %v5109
  %5298 = vst.msk [vmem:[#allocation3 + $0x20] sm:$0xff] %vm695, %v5111
  %5299 = vst.msk [vmem:[#allocation3 + $0x28] sm:$0xff] %vm695, %v5113
  %5300 = vst.msk [vmem:[#allocation3 + $0x30] sm:$0xff] %vm695, %v5115
  %5301 = vst.msk [vmem:[#allocation3 + $0x38] sm:$0xff] %vm695, %v5117
  %5302 = vst.msk [vmem:[#allocation3 + $0x40] sm:$0xff] %vm695, %v5119
  %5303 = vst.msk [vmem:[#allocation3 + $0x48] sm:$0xff] %vm695, %v5121
  %5304 = vst.msk [vmem:[#allocation3 + $0x50] sm:$0xff] %vm695, %v5123
  %5305 = vst.msk [vmem:[#allocation3 + $0x58] sm:$0xff] %vm695, %v5125
  %5306 = vst.msk [vmem:[#allocation3 + $0x60] sm:$0xff] %vm695, %v5127
  %5307 = vst.msk [vmem:[#allocation3 + $0x68] sm:$0xff] %vm695, %v5129
  %5308 = vst.msk [vmem:[#allocation3 + $0x70] sm:$0xff] %vm695, %v5131
  %5309 = vst.msk [vmem:[#allocation3 + $0x78] sm:$0xff] %vm695, %v5133
  %5310 = vst.msk [vmem:[#allocation3 + $0x80] sm:$0xff] %vm695, %v5135
  %5311 = vst.msk [vmem:[#allocation3 + $0x88] sm:$0xff] %vm695, %v5137
  %5312 = vst.msk [vmem:[#allocation3 + $0x90] sm:$0xff] %vm695, %v5139
  %5313 = vst.msk [vmem:[#allocation3 + $0x98] sm:$0xff] %vm695, %v5141
  %5314 = vst.msk [vmem:[#allocation3 + $0xa0] sm:$0xff] %vm695, %v5143
  %5315 = vst.msk [vmem:[#allocation3 + $0xa8] sm:$0xff] %vm695, %v5145
  %5316 = vst.msk [vmem:[#allocation3 + $0xb0] sm:$0xff] %vm695, %v5147
  %5317 = vst.msk [vmem:[#allocation3 + $0xb8] sm:$0xff] %vm695, %v5149
  %5318 = vst.msk [vmem:[#allocation3 + $0xc0] sm:$0xff] %vm695, %v5151
  %5319 = vst.msk [vmem:[#allocation3 + $0xc8] sm:$0xff] %vm695, %v5153
  %5320 = vst.msk [vmem:[#allocation3 + $0xd0] sm:$0xff] %vm695, %v5155
  %5321 = vst.msk [vmem:[#allocation3 + $0xd8] sm:$0xff] %vm695, %v5157
  %5322 = vst.msk [vmem:[#allocation3 + $0xe0] sm:$0xff] %vm695, %v5159
  %5323 = vst.msk [vmem:[#allocation3 + $0xe8] sm:$0xff] %vm695, %v5161
  %5324 = vst.msk [vmem:[#allocation3 + $0xf0] sm:$0xff] %vm695, %v5163
  %5325 = vst.msk [vmem:[#allocation3 + $0xf8] sm:$0xff] %vm695, %v5165
  %5326 = vst.msk [vmem:[#allocation3 + $0x100] sm:$0xff] %vm695, %v5167
  %5327 = vst.msk [vmem:[#allocation3 + $0x108] sm:$0xff] %vm695, %v5169
  %5328 = vst.msk [vmem:[#allocation3 + $0x110] sm:$0xff] %vm695, %v5171
  %5329 = vst.msk [vmem:[#allocation3 + $0x118] sm:$0xff] %vm695, %v5173
  %5330 = vst.msk [vmem:[#allocation3 + $0x120] sm:$0xff] %vm695, %v5175
  %5331 = vst.msk [vmem:[#allocation3 + $0x128] sm:$0xff] %vm695, %v5177
  %5332 = vst.msk [vmem:[#allocation3 + $0x130] sm:$0xff] %vm695, %v5179
  %5333 = vst.msk [vmem:[#allocation3 + $0x138] sm:$0xff] %vm695, %v5181
  %5334 = vst.msk [vmem:[#allocation3 + $0x140] sm:$0xff] %vm695, %v5183
  %5335 = vst.msk [vmem:[#allocation3 + $0x148] sm:$0xff] %vm695, %v5185
  %5336 = vst.msk [vmem:[#allocation3 + $0x150] sm:$0xff] %vm695, %v5187
  %5337 = vst.msk [vmem:[#allocation3 + $0x158] sm:$0xff] %vm695, %v5189
  %5338 = vst.msk [vmem:[#allocation3 + $0x160] sm:$0xff] %vm695, %v5191
  %5339 = vst.msk [vmem:[#allocation3 + $0x168] sm:$0xff] %vm695, %v5193
  %5340 = vst.msk [vmem:[#allocation3 + $0x170] sm:$0xff] %vm695, %v5195
  %5341 = vst.msk [vmem:[#allocation3 + $0x178] sm:$0xff] %vm695, %v5197
  %5342 = vst.msk [vmem:[#allocation3 + $0x180] sm:$0xff] %vm695, %v5199
  %5343 = vst.msk [vmem:[#allocation3 + $0x188] sm:$0xff] %vm695, %v5201
  %5344 = vst.msk [vmem:[#allocation3 + $0x190] sm:$0xff] %vm695, %v5203
  %5345 = vst.msk [vmem:[#allocation3 + $0x198] sm:$0xff] %vm695, %v5205
  %5346 = vst.msk [vmem:[#allocation3 + $0x1a0] sm:$0xff] %vm695, %v5207
  %5347 = vst.msk [vmem:[#allocation3 + $0x1a8] sm:$0xff] %vm695, %v5209
  %5348 = vst.msk [vmem:[#allocation3 + $0x1b0] sm:$0xff] %vm695, %v5211
  %5349 = vst.msk [vmem:[#allocation3 + $0x1b8] sm:$0xff] %vm695, %v5213
  %5350 = vst.msk [vmem:[#allocation3 + $0x1c0] sm:$0xff] %vm695, %v5215
  %5351 = vst.msk [vmem:[#allocation3 + $0x1c8] sm:$0xff] %vm695, %v5217
  %5352 = vst.msk [vmem:[#allocation3 + $0x1d0] sm:$0xff] %vm695, %v5219
  %5353 = vst.msk [vmem:[#allocation3 + $0x1d8] sm:$0xff] %vm695, %v5221
  %5354 = vst.msk [vmem:[#allocation3 + $0x1e0] sm:$0xff] %vm695, %v5223
  %5355 = vst.msk [vmem:[#allocation3 + $0x1e8] sm:$0xff] %vm695, %v5225
  %5356 = vst.msk [vmem:[#allocation3 + $0x1f0] sm:$0xff] %vm695, %v5227
  %5357 = vst.msk [vmem:[#allocation3 + $0x1f8] sm:$0xff] %vm695, %v5229
  %v5358 = vld [vmem:[#allocation2 + $0x2] sm:$0xff]
  %v5359 = vld [vmem:[#allocation2 + $0xa] sm:$0xff]
  %v5360 = vld [vmem:[#allocation2 + $0x1a] sm:$0xff]
  %v5361 = vld [vmem:[#allocation2 + $0x22] sm:$0xff]
  %v5362 = vld [vmem:[#allocation2 + $0x32] sm:$0xff]
  %v5363 = vld [vmem:[#allocation2 + $0x3a] sm:$0xff]
  %v5364 = vld [vmem:[#allocation2 + $0x4a] sm:$0xff]
  %v5365 = vld [vmem:[#allocation2 + $0x52] sm:$0xff]
  %v5366 = vld [vmem:[#allocation2 + $0x62] sm:$0xff]
  %v5367 = vld [vmem:[#allocation2 + $0x6a] sm:$0xff]
  %v5368 = vld [vmem:[#allocation2 + $0x7a] sm:$0xff]
  %v5369 = vld [vmem:[#allocation2 + $0x82] sm:$0xff]
  %v5370 = vld [vmem:[#allocation2 + $0x92] sm:$0xff]
  %v5371 = vld [vmem:[#allocation2 + $0x9a] sm:$0xff]
  %v5372 = vld [vmem:[#allocation2 + $0xaa] sm:$0xff]
  %v5373 = vld [vmem:[#allocation2 + $0xb2] sm:$0xff]
  %v5374 = vld [vmem:[#allocation2 + $0xc2] sm:$0xff]
  %v5375 = vld [vmem:[#allocation2 + $0xca] sm:$0xff]
  %v5376 = vld [vmem:[#allocation2 + $0xda] sm:$0xff]
  %v5377 = vld [vmem:[#allocation2 + $0xe2] sm:$0xff]
  %v5378 = vld [vmem:[#allocation2 + $0xf2] sm:$0xff]
  %v5379 = vld [vmem:[#allocation2 + $0xfa] sm:$0xff]
  %v5380 = vld [vmem:[#allocation2 + $0x10a] sm:$0xff]
  %v5381 = vld [vmem:[#allocation2 + $0x112] sm:$0xff]
  %v5382 = vld [vmem:[#allocation2 + $0x122] sm:$0xff]
  %v5383 = vld [vmem:[#allocation2 + $0x12a] sm:$0xff]
  %v5384 = vld [vmem:[#allocation2 + $0x13a] sm:$0xff]
  %v5385 = vld [vmem:[#allocation2 + $0x142] sm:$0xff]
  %v5386 = vld [vmem:[#allocation2 + $0x152] sm:$0xff]
  %v5387 = vld [vmem:[#allocation2 + $0x15a] sm:$0xff]
  %v5388 = vld [vmem:[#allocation2 + $0x16a] sm:$0xff]
  %v5389 = vld [vmem:[#allocation2 + $0x172] sm:$0xff]
  %v5390 = vld [vmem:[#allocation2 + $0x1b2] sm:$0xff]
  %v5391 = vld [vmem:[#allocation2 + $0x1ba] sm:$0xff]
  %v5392 = vld [vmem:[#allocation2 + $0x1ca] sm:$0xff]
  %v5393 = vld [vmem:[#allocation2 + $0x1d2] sm:$0xff]
  %v5394 = vld [vmem:[#allocation2 + $0x1e2] sm:$0xff]
  %v5395 = vld [vmem:[#allocation2 + $0x1ea] sm:$0xff]
  %v5396 = vld [vmem:[#allocation2 + $0x1fa] sm:$0xff]
  %v5397 = vld [vmem:[#allocation2 + $0x202] sm:$0xff]
  %v5398 = vld [vmem:[#allocation2 + $0x212] sm:$0xff]
  %v5399 = vld [vmem:[#allocation2 + $0x21a] sm:$0xff]
  %v5400 = vld [vmem:[#allocation2 + $0x22a] sm:$0xff]
  %v5401 = vld [vmem:[#allocation2 + $0x232] sm:$0xff]
  %v5402 = vld [vmem:[#allocation2 + $0x242] sm:$0xff]
  %v5403 = vld [vmem:[#allocation2 + $0x24a] sm:$0xff]
  %v5404 = vld [vmem:[#allocation2 + $0x25a] sm:$0xff]
  %v5405 = vld [vmem:[#allocation2 + $0x262] sm:$0xff]
  %v5406 = vld [vmem:[#allocation2 + $0x272] sm:$0xff]
  %v5407 = vld [vmem:[#allocation2 + $0x27a] sm:$0xff]
  %v5408 = vld [vmem:[#allocation2 + $0x28a] sm:$0xff]
  %v5409 = vld [vmem:[#allocation2 + $0x292] sm:$0xff]
  %v5410 = vld [vmem:[#allocation2 + $0x2a2] sm:$0xff]
  %v5411 = vld [vmem:[#allocation2 + $0x2aa] sm:$0xff]
  %v5412 = vld [vmem:[#allocation2 + $0x2ba] sm:$0xff]
  %v5413 = vld [vmem:[#allocation2 + $0x2c2] sm:$0xff]
  %v5414 = vld [vmem:[#allocation2 + $0x2d2] sm:$0xff]
  %v5415 = vld [vmem:[#allocation2 + $0x2da] sm:$0xff]
  %v5416 = vld [vmem:[#allocation2 + $0x2ea] sm:$0xff]
  %v5417 = vld [vmem:[#allocation2 + $0x2f2] sm:$0xff]
  %v5418 = vld [vmem:[#allocation2 + $0x302] sm:$0xff]
  %v5419 = vld [vmem:[#allocation2 + $0x30a] sm:$0xff]
  %v5420 = vld [vmem:[#allocation2 + $0x31a] sm:$0xff]
  %v5421 = vld [vmem:[#allocation2 + $0x322] sm:$0xff]
  %5486 = vrot.lane.b32.xlu0 %v5358, 8
  %v5487 = vpop.permute.xlu0 %5486
  %5488 = vrot.lane.b32.xlu0 %v5359, 8
  %v5489 = vpop.permute.xlu0 %5488
  %5490 = vrot.lane.b32.xlu0 %v5360, 8
  %v5491 = vpop.permute.xlu0 %5490
  %5492 = vrot.lane.b32.xlu0 %v5361, 8
  %v5493 = vpop.permute.xlu0 %5492
  %5494 = vrot.lane.b32.xlu0 %v5362, 8
  %v5495 = vpop.permute.xlu0 %5494
  %5496 = vrot.lane.b32.xlu0 %v5363, 8
  %v5497 = vpop.permute.xlu0 %5496
  %5498 = vrot.lane.b32.xlu0 %v5364, 8
  %v5499 = vpop.permute.xlu0 %5498
  %5500 = vrot.lane.b32.xlu0 %v5365, 8
  %v5501 = vpop.permute.xlu0 %5500
  %5502 = vrot.lane.b32.xlu0 %v5366, 8
  %v5503 = vpop.permute.xlu0 %5502
  %5504 = vrot.lane.b32.xlu0 %v5367, 8
  %v5505 = vpop.permute.xlu0 %5504
  %5506 = vrot.lane.b32.xlu0 %v5368, 8
  %v5507 = vpop.permute.xlu0 %5506
  %5508 = vrot.lane.b32.xlu0 %v5369, 8
  %v5509 = vpop.permute.xlu0 %5508
  %5510 = vrot.lane.b32.xlu0 %v5370, 8
  %v5511 = vpop.permute.xlu0 %5510
  %5512 = vrot.lane.b32.xlu0 %v5371, 8
  %v5513 = vpop.permute.xlu0 %5512
  %5514 = vrot.lane.b32.xlu0 %v5372, 8
  %v5515 = vpop.permute.xlu0 %5514
  %5516 = vrot.lane.b32.xlu0 %v5373, 8
  %v5517 = vpop.permute.xlu0 %5516
  %5518 = vrot.lane.b32.xlu0 %v5374, 8
  %v5519 = vpop.permute.xlu0 %5518
  %5520 = vrot.lane.b32.xlu0 %v5375, 8
  %v5521 = vpop.permute.xlu0 %5520
  %5522 = vrot.lane.b32.xlu0 %v5376, 8
  %v5523 = vpop.permute.xlu0 %5522
  %5524 = vrot.lane.b32.xlu0 %v5377, 8
  %v5525 = vpop.permute.xlu0 %5524
  %5526 = vrot.lane.b32.xlu0 %v5378, 8
  %v5527 = vpop.permute.xlu0 %5526
  %5528 = vrot.lane.b32.xlu0 %v5379, 8
  %v5529 = vpop.permute.xlu0 %5528
  %5530 = vrot.lane.b32.xlu0 %v5380, 8
  %v5531 = vpop.permute.xlu0 %5530
  %5532 = vrot.lane.b32.xlu0 %v5381, 8
  %v5533 = vpop.permute.xlu0 %5532
  %5534 = vrot.lane.b32.xlu0 %v5382, 8
  %v5535 = vpop.permute.xlu0 %5534
  %5536 = vrot.lane.b32.xlu0 %v5383, 8
  %v5537 = vpop.permute.xlu0 %5536
  %5538 = vrot.lane.b32.xlu0 %v5384, 8
  %v5539 = vpop.permute.xlu0 %5538
  %5540 = vrot.lane.b32.xlu0 %v5385, 8
  %v5541 = vpop.permute.xlu0 %5540
  %5542 = vrot.lane.b32.xlu0 %v5386, 8
  %v5543 = vpop.permute.xlu0 %5542
  %5544 = vrot.lane.b32.xlu0 %v5387, 8
  %v5545 = vpop.permute.xlu0 %5544
  %5546 = vrot.lane.b32.xlu0 %v5388, 8
  %v5547 = vpop.permute.xlu0 %5546
  %5548 = vrot.lane.b32.xlu0 %v5389, 8
  %v5549 = vpop.permute.xlu0 %5548
  %5550 = vrot.lane.b32.xlu0 %v5390, 8
  %v5551 = vpop.permute.xlu0 %5550
  %5552 = vrot.lane.b32.xlu0 %v5391, 8
  %v5553 = vpop.permute.xlu0 %5552
  %5554 = vrot.lane.b32.xlu0 %v5392, 8
  %v5555 = vpop.permute.xlu0 %5554
  %5556 = vrot.lane.b32.xlu0 %v5393, 8
  %v5557 = vpop.permute.xlu0 %5556
  %5558 = vrot.lane.b32.xlu0 %v5394, 8
  %v5559 = vpop.permute.xlu0 %5558
  %5560 = vrot.lane.b32.xlu0 %v5395, 8
  %v5561 = vpop.permute.xlu0 %5560
  %5562 = vrot.lane.b32.xlu0 %v5396, 8
  %v5563 = vpop.permute.xlu0 %5562
  %5564 = vrot.lane.b32.xlu0 %v5397, 8
  %v5565 = vpop.permute.xlu0 %5564
  %5566 = vrot.lane.b32.xlu0 %v5398, 8
  %v5567 = vpop.permute.xlu0 %5566
  %5568 = vrot.lane.b32.xlu0 %v5399, 8
  %v5569 = vpop.permute.xlu0 %5568
  %5570 = vrot.lane.b32.xlu0 %v5400, 8
  %v5571 = vpop.permute.xlu0 %5570
  %5572 = vrot.lane.b32.xlu0 %v5401, 8
  %v5573 = vpop.permute.xlu0 %5572
  %5574 = vrot.lane.b32.xlu0 %v5402, 8
  %v5575 = vpop.permute.xlu0 %5574
  %5576 = vrot.lane.b32.xlu0 %v5403, 8
  %v5577 = vpop.permute.xlu0 %5576
  %5578 = vrot.lane.b32.xlu0 %v5404, 8
  %v5579 = vpop.permute.xlu0 %5578
  %5580 = vrot.lane.b32.xlu0 %v5405, 8
  %v5581 = vpop.permute.xlu0 %5580
  %5582 = vrot.lane.b32.xlu0 %v5406, 8
  %v5583 = vpop.permute.xlu0 %5582
  %5584 = vrot.lane.b32.xlu0 %v5407, 8
  %v5585 = vpop.permute.xlu0 %5584
  %5586 = vrot.lane.b32.xlu0 %v5408, 8
  %v5587 = vpop.permute.xlu0 %5586
  %5588 = vrot.lane.b32.xlu0 %v5409, 8
  %v5589 = vpop.permute.xlu0 %5588
  %5590 = vrot.lane.b32.xlu0 %v5410, 8
  %v5591 = vpop.permute.xlu0 %5590
  %5592 = vrot.lane.b32.xlu0 %v5411, 8
  %v5593 = vpop.permute.xlu0 %5592
  %5594 = vrot.lane.b32.xlu0 %v5412, 8
  %v5595 = vpop.permute.xlu0 %5594
  %5596 = vrot.lane.b32.xlu0 %v5413, 8
  %v5597 = vpop.permute.xlu0 %5596
  %5598 = vrot.lane.b32.xlu0 %v5414, 8
  %v5599 = vpop.permute.xlu0 %5598
  %5600 = vrot.lane.b32.xlu0 %v5415, 8
  %v5601 = vpop.permute.xlu0 %5600
  %5602 = vrot.lane.b32.xlu0 %v5416, 8
  %v5603 = vpop.permute.xlu0 %5602
  %5604 = vrot.lane.b32.xlu0 %v5417, 8
  %v5605 = vpop.permute.xlu0 %5604
  %5606 = vrot.lane.b32.xlu0 %v5418, 8
  %v5607 = vpop.permute.xlu0 %5606
  %5608 = vrot.lane.b32.xlu0 %v5419, 8
  %v5609 = vpop.permute.xlu0 %5608
  %5610 = vrot.lane.b32.xlu0 %v5420, 8
  %v5611 = vpop.permute.xlu0 %5610
  %5612 = vrot.lane.b32.xlu0 %v5421, 8
  %v5613 = vpop.permute.xlu0 %5612
  %5678 = vst.msk [vmem:[#allocation3] sm:$0xff] %vm1080, %v5487
  %5679 = vst.msk [vmem:[#allocation3 + $0x8] sm:$0xff] %vm1080, %v5489
  %5680 = vst.msk [vmem:[#allocation3 + $0x10] sm:$0xff] %vm1080, %v5491
  %5681 = vst.msk [vmem:[#allocation3 + $0x18] sm:$0xff] %vm1080, %v5493
  %5682 = vst.msk [vmem:[#allocation3 + $0x20] sm:$0xff] %vm1080, %v5495
  %5683 = vst.msk [vmem:[#allocation3 + $0x28] sm:$0xff] %vm1080, %v5497
  %5684 = vst.msk [vmem:[#allocation3 + $0x30] sm:$0xff] %vm1080, %v5499
  %5685 = vst.msk [vmem:[#allocation3 + $0x38] sm:$0xff] %vm1080, %v5501
  %5686 = vst.msk [vmem:[#allocation3 + $0x40] sm:$0xff] %vm1080, %v5503
  %5687 = vst.msk [vmem:[#allocation3 + $0x48] sm:$0xff] %vm1080, %v5505
  %5688 = vst.msk [vmem:[#allocation3 + $0x50] sm:$0xff] %vm1080, %v5507
  %5689 = vst.msk [vmem:[#allocation3 + $0x58] sm:$0xff] %vm1080, %v5509
  %5690 = vst.msk [vmem:[#allocation3 + $0x60] sm:$0xff] %vm1080, %v5511
  %5691 = vst.msk [vmem:[#allocation3 + $0x68] sm:$0xff] %vm1080, %v5513
  %5692 = vst.msk [vmem:[#allocation3 + $0x70] sm:$0xff] %vm1080, %v5515
  %5693 = vst.msk [vmem:[#allocation3 + $0x78] sm:$0xff] %vm1080, %v5517
  %5694 = vst.msk [vmem:[#allocation3 + $0x80] sm:$0xff] %vm1080, %v5519
  %5695 = vst.msk [vmem:[#allocation3 + $0x88] sm:$0xff] %vm1080, %v5521
  %5696 = vst.msk [vmem:[#allocation3 + $0x90] sm:$0xff] %vm1080, %v5523
  %5697 = vst.msk [vmem:[#allocation3 + $0x98] sm:$0xff] %vm1080, %v5525
  %5698 = vst.msk [vmem:[#allocation3 + $0xa0] sm:$0xff] %vm1080, %v5527
  %5699 = vst.msk [vmem:[#allocation3 + $0xa8] sm:$0xff] %vm1080, %v5529
  %5700 = vst.msk [vmem:[#allocation3 + $0xb0] sm:$0xff] %vm1080, %v5531
  %5701 = vst.msk [vmem:[#allocation3 + $0xb8] sm:$0xff] %vm1080, %v5533
  %5702 = vst.msk [vmem:[#allocation3 + $0xc0] sm:$0xff] %vm1080, %v5535
  %5703 = vst.msk [vmem:[#allocation3 + $0xc8] sm:$0xff] %vm1080, %v5537
  %5704 = vst.msk [vmem:[#allocation3 + $0xd0] sm:$0xff] %vm1080, %v5539
  %5705 = vst.msk [vmem:[#allocation3 + $0xd8] sm:$0xff] %vm1080, %v5541
  %5706 = vst.msk [vmem:[#allocation3 + $0xe0] sm:$0xff] %vm1080, %v5543
  %5707 = vst.msk [vmem:[#allocation3 + $0xe8] sm:$0xff] %vm1080, %v5545
  %5708 = vst.msk [vmem:[#allocation3 + $0xf0] sm:$0xff] %vm1080, %v5547
  %5709 = vst.msk [vmem:[#allocation3 + $0xf8] sm:$0xff] %vm1080, %v5549
  %5710 = vst.msk [vmem:[#allocation3 + $0x100] sm:$0xff] %vm1080, %v5551
  %5711 = vst.msk [vmem:[#allocation3 + $0x108] sm:$0xff] %vm1080, %v5553
  %5712 = vst.msk [vmem:[#allocation3 + $0x110] sm:$0xff] %vm1080, %v5555
  %5713 = vst.msk [vmem:[#allocation3 + $0x118] sm:$0xff] %vm1080, %v5557
  %5714 = vst.msk [vmem:[#allocation3 + $0x120] sm:$0xff] %vm1080, %v5559
  %5715 = vst.msk [vmem:[#allocation3 + $0x128] sm:$0xff] %vm1080, %v5561
  %5716 = vst.msk [vmem:[#allocation3 + $0x130] sm:$0xff] %vm1080, %v5563
  %5717 = vst.msk [vmem:[#allocation3 + $0x138] sm:$0xff] %vm1080, %v5565
  %5718 = vst.msk [vmem:[#allocation3 + $0x140] sm:$0xff] %vm1080, %v5567
  %5719 = vst.msk [vmem:[#allocation3 + $0x148] sm:$0xff] %vm1080, %v5569
  %5720 = vst.msk [vmem:[#allocation3 + $0x150] sm:$0xff] %vm1080, %v5571
  %5721 = vst.msk [vmem:[#allocation3 + $0x158] sm:$0xff] %vm1080, %v5573
  %5722 = vst.msk [vmem:[#allocation3 + $0x160] sm:$0xff] %vm1080, %v5575
  %5723 = vst.msk [vmem:[#allocation3 + $0x168] sm:$0xff] %vm1080, %v5577
  %5724 = vst.msk [vmem:[#allocation3 + $0x170] sm:$0xff] %vm1080, %v5579
  %5725 = vst.msk [vmem:[#allocation3 + $0x178] sm:$0xff] %vm1080, %v5581
  %5726 = vst.msk [vmem:[#allocation3 + $0x180] sm:$0xff] %vm1080, %v5583
  %5727 = vst.msk [vmem:[#allocation3 + $0x188] sm:$0xff] %vm1080, %v5585
  %5728 = vst.msk [vmem:[#allocation3 + $0x190] sm:$0xff] %vm1080, %v5587
  %5729 = vst.msk [vmem:[#allocation3 + $0x198] sm:$0xff] %vm1080, %v5589
  %5730 = vst.msk [vmem:[#allocation3 + $0x1a0] sm:$0xff] %vm1080, %v5591
  %5731 = vst.msk [vmem:[#allocation3 + $0x1a8] sm:$0xff] %vm1080, %v5593
  %5732 = vst.msk [vmem:[#allocation3 + $0x1b0] sm:$0xff] %vm1080, %v5595
  %5733 = vst.msk [vmem:[#allocation3 + $0x1b8] sm:$0xff] %vm1080, %v5597
  %5734 = vst.msk [vmem:[#allocation3 + $0x1c0] sm:$0xff] %vm1080, %v5599
  %5735 = vst.msk [vmem:[#allocation3 + $0x1c8] sm:$0xff] %vm1080, %v5601
  %5736 = vst.msk [vmem:[#allocation3 + $0x1d0] sm:$0xff] %vm1080, %v5603
  %5737 = vst.msk [vmem:[#allocation3 + $0x1d8] sm:$0xff] %vm1080, %v5605
  %5738 = vst.msk [vmem:[#allocation3 + $0x1e0] sm:$0xff] %vm1080, %v5607
  %5739 = vst.msk [vmem:[#allocation3 + $0x1e8] sm:$0xff] %vm1080, %v5609
  %5740 = vst.msk [vmem:[#allocation3 + $0x1f0] sm:$0xff] %vm1080, %v5611
  %5741 = vst.msk [vmem:[#allocation3 + $0x1f8] sm:$0xff] %vm1080, %v5613
  %v5742 = vld [vmem:[%s182] sm:$0xff]
  %v5743 = vld [vmem:[%s182 + $0x8] sm:$0xff]
  %v5744 = vld [vmem:[%s182 + $0x18] sm:$0xff]
  %v5745 = vld [vmem:[%s182 + $0x20] sm:$0xff]
  %v5746 = vld [vmem:[%s182 + $0x30] sm:$0xff]
  %v5747 = vld [vmem:[%s182 + $0x38] sm:$0xff]
  %v5748 = vld [vmem:[%s182 + $0x48] sm:$0xff]
  %v5749 = vld [vmem:[%s182 + $0x50] sm:$0xff]
  %v5750 = vld [vmem:[%s182 + $0x60] sm:$0xff]
  %v5751 = vld [vmem:[%s182 + $0x68] sm:$0xff]
  %v5752 = vld [vmem:[%s182 + $0x78] sm:$0xff]
  %v5753 = vld [vmem:[%s182 + $0x80] sm:$0xff]
  %v5754 = vld [vmem:[%s182 + $0x90] sm:$0xff]
  %v5755 = vld [vmem:[%s182 + $0x98] sm:$0xff]
  %v5756 = vld [vmem:[%s182 + $0xa8] sm:$0xff]
  %v5757 = vld [vmem:[%s182 + $0xb0] sm:$0xff]
  %v5758 = vld [vmem:[%s182 + $0xc0] sm:$0xff]
  %v5759 = vld [vmem:[%s182 + $0xc8] sm:$0xff]
  %v5760 = vld [vmem:[%s182 + $0xd8] sm:$0xff]
  %v5761 = vld [vmem:[%s182 + $0xe0] sm:$0xff]
  %v5762 = vld [vmem:[%s182 + $0xf0] sm:$0xff]
  %v5763 = vld [vmem:[%s182 + $0xf8] sm:$0xff]
  %v5764 = vld [vmem:[%s182 + $0x108] sm:$0xff]
  %v5765 = vld [vmem:[%s182 + $0x110] sm:$0xff]
  %v5766 = vld [vmem:[%s182 + $0x120] sm:$0xff]
  %v5767 = vld [vmem:[%s182 + $0x128] sm:$0xff]
  %v5768 = vld [vmem:[%s182 + $0x138] sm:$0xff]
  %v5769 = vld [vmem:[%s182 + $0x140] sm:$0xff]
  %v5770 = vld [vmem:[%s182 + $0x150] sm:$0xff]
  %v5771 = vld [vmem:[%s182 + $0x158] sm:$0xff]
  %v5772 = vld [vmem:[%s182 + $0x168] sm:$0xff]
  %v5773 = vld [vmem:[%s182 + $0x170] sm:$0xff]
  %v5774 = vld [vmem:[%s182 + $0x1b0] sm:$0xff]
  %v5775 = vld [vmem:[%s182 + $0x1b8] sm:$0xff]
  %v5776 = vld [vmem:[%s182 + $0x1c8] sm:$0xff]
  %v5777 = vld [vmem:[%s182 + $0x1d0] sm:$0xff]
  %v5778 = vld [vmem:[%s182 + $0x1e0] sm:$0xff]
  %v5779 = vld [vmem:[%s182 + $0x1e8] sm:$0xff]
  %v5780 = vld [vmem:[%s182 + $0x1f8] sm:$0xff]
  %v5781 = vld [vmem:[%s182 + $0x200] sm:$0xff]
  %v5782 = vld [vmem:[%s182 + $0x210] sm:$0xff]
  %v5783 = vld [vmem:[%s182 + $0x218] sm:$0xff]
  %v5784 = vld [vmem:[%s182 + $0x228] sm:$0xff]
  %v5785 = vld [vmem:[%s182 + $0x230] sm:$0xff]
  %v5786 = vld [vmem:[%s182 + $0x240] sm:$0xff]
  %v5787 = vld [vmem:[%s182 + $0x248] sm:$0xff]
  %v5788 = vld [vmem:[%s182 + $0x258] sm:$0xff]
  %v5789 = vld [vmem:[%s182 + $0x260] sm:$0xff]
  %v5790 = vld [vmem:[%s182 + $0x270] sm:$0xff]
  %v5791 = vld [vmem:[%s182 + $0x278] sm:$0xff]
  %v5792 = vld [vmem:[%s182 + $0x288] sm:$0xff]
  %v5793 = vld [vmem:[%s182 + $0x290] sm:$0xff]
  %v5794 = vld [vmem:[%s182 + $0x2a0] sm:$0xff]
  %v5795 = vld [vmem:[%s182 + $0x2a8] sm:$0xff]
  %v5796 = vld [vmem:[%s182 + $0x2b8] sm:$0xff]
  %v5797 = vld [vmem:[%s182 + $0x2c0] sm:$0xff]
  %v5798 = vld [vmem:[%s182 + $0x2d0] sm:$0xff]
  %v5799 = vld [vmem:[%s182 + $0x2d8] sm:$0xff]
  %v5800 = vld [vmem:[%s182 + $0x2e8] sm:$0xff]
  %v5801 = vld [vmem:[%s182 + $0x2f0] sm:$0xff]
  %v5802 = vld [vmem:[%s182 + $0x300] sm:$0xff]
  %v5803 = vld [vmem:[%s182 + $0x308] sm:$0xff]
  %v5804 = vld [vmem:[%s182 + $0x318] sm:$0xff]
  %v5805 = vld [vmem:[%s182 + $0x320] sm:$0xff]
  %5870 = vrot.lane.b32.xlu0 %v5742, 12
  %v5871 = vpop.permute.xlu0 %5870
  %5872 = vrot.lane.b32.xlu0 %v5743, 12
  %v5873 = vpop.permute.xlu0 %5872
  %5874 = vrot.lane.b32.xlu0 %v5744, 12
  %v5875 = vpop.permute.xlu0 %5874
  %5876 = vrot.lane.b32.xlu0 %v5745, 12
  %v5877 = vpop.permute.xlu0 %5876
  %5878 = vrot.lane.b32.xlu0 %v5746, 12
  %v5879 = vpop.permute.xlu0 %5878
  %5880 = vrot.lane.b32.xlu0 %v5747, 12
  %v5881 = vpop.permute.xlu0 %5880
  %5882 = vrot.lane.b32.xlu0 %v5748, 12
  %v5883 = vpop.permute.xlu0 %5882
  %5884 = vrot.lane.b32.xlu0 %v5749, 12
  %v5885 = vpop.permute.xlu0 %5884
  %5886 = vrot.lane.b32.xlu0 %v5750, 12
  %v5887 = vpop.permute.xlu0 %5886
  %5888 = vrot.lane.b32.xlu0 %v5751, 12
  %v5889 = vpop.permute.xlu0 %5888
  %5890 = vrot.lane.b32.xlu0 %v5752, 12
  %v5891 = vpop.permute.xlu0 %5890
  %5892 = vrot.lane.b32.xlu0 %v5753, 12
  %v5893 = vpop.permute.xlu0 %5892
  %5894 = vrot.lane.b32.xlu0 %v5754, 12
  %v5895 = vpop.permute.xlu0 %5894
  %5896 = vrot.lane.b32.xlu0 %v5755, 12
  %v5897 = vpop.permute.xlu0 %5896
  %5898 = vrot.lane.b32.xlu0 %v5756, 12
  %v5899 = vpop.permute.xlu0 %5898
  %5900 = vrot.lane.b32.xlu0 %v5757, 12
  %v5901 = vpop.permute.xlu0 %5900
  %5902 = vrot.lane.b32.xlu0 %v5758, 12
  %v5903 = vpop.permute.xlu0 %5902
  %5904 = vrot.lane.b32.xlu0 %v5759, 12
  %v5905 = vpop.permute.xlu0 %5904
  %5906 = vrot.lane.b32.xlu0 %v5760, 12
  %v5907 = vpop.permute.xlu0 %5906
  %5908 = vrot.lane.b32.xlu0 %v5761, 12
  %v5909 = vpop.permute.xlu0 %5908
  %5910 = vrot.lane.b32.xlu0 %v5762, 12
  %v5911 = vpop.permute.xlu0 %5910
  %5912 = vrot.lane.b32.xlu0 %v5763, 12
  %v5913 = vpop.permute.xlu0 %5912
  %5914 = vrot.lane.b32.xlu0 %v5764, 12
  %v5915 = vpop.permute.xlu0 %5914
  %5916 = vrot.lane.b32.xlu0 %v5765, 12
  %v5917 = vpop.permute.xlu0 %5916
  %5918 = vrot.lane.b32.xlu0 %v5766, 12
  %v5919 = vpop.permute.xlu0 %5918
  %5920 = vrot.lane.b32.xlu0 %v5767, 12
  %v5921 = vpop.permute.xlu0 %5920
  %5922 = vrot.lane.b32.xlu0 %v5768, 12
  %v5923 = vpop.permute.xlu0 %5922
  %5924 = vrot.lane.b32.xlu0 %v5769, 12
  %v5925 = vpop.permute.xlu0 %5924
  %5926 = vrot.lane.b32.xlu0 %v5770, 12
  %v5927 = vpop.permute.xlu0 %5926
  %5928 = vrot.lane.b32.xlu0 %v5771, 12
  %v5929 = vpop.permute.xlu0 %5928
  %5930 = vrot.lane.b32.xlu0 %v5772, 12
  %v5931 = vpop.permute.xlu0 %5930
  %5932 = vrot.lane.b32.xlu0 %v5773, 12
  %v5933 = vpop.permute.xlu0 %5932
  %5934 = vrot.lane.b32.xlu0 %v5774, 12
  %v5935 = vpop.permute.xlu0 %5934
  %5936 = vrot.lane.b32.xlu0 %v5775, 12
  %v5937 = vpop.permute.xlu0 %5936
  %5938 = vrot.lane.b32.xlu0 %v5776, 12
  %v5939 = vpop.permute.xlu0 %5938
  %5940 = vrot.lane.b32.xlu0 %v5777, 12
  %v5941 = vpop.permute.xlu0 %5940
  %5942 = vrot.lane.b32.xlu0 %v5778, 12
  %v5943 = vpop.permute.xlu0 %5942
  %5944 = vrot.lane.b32.xlu0 %v5779, 12
  %v5945 = vpop.permute.xlu0 %5944
  %5946 = vrot.lane.b32.xlu0 %v5780, 12
  %v5947 = vpop.permute.xlu0 %5946
  %5948 = vrot.lane.b32.xlu0 %v5781, 12
  %v5949 = vpop.permute.xlu0 %5948
  %5950 = vrot.lane.b32.xlu0 %v5782, 12
  %v5951 = vpop.permute.xlu0 %5950
  %5952 = vrot.lane.b32.xlu0 %v5783, 12
  %v5953 = vpop.permute.xlu0 %5952
  %5954 = vrot.lane.b32.xlu0 %v5784, 12
  %v5955 = vpop.permute.xlu0 %5954
  %5956 = vrot.lane.b32.xlu0 %v5785, 12
  %v5957 = vpop.permute.xlu0 %5956
  %5958 = vrot.lane.b32.xlu0 %v5786, 12
  %v5959 = vpop.permute.xlu0 %5958
  %5960 = vrot.lane.b32.xlu0 %v5787, 12
  %v5961 = vpop.permute.xlu0 %5960
  %5962 = vrot.lane.b32.xlu0 %v5788, 12
  %v5963 = vpop.permute.xlu0 %5962
  %5964 = vrot.lane.b32.xlu0 %v5789, 12
  %v5965 = vpop.permute.xlu0 %5964
  %5966 = vrot.lane.b32.xlu0 %v5790, 12
  %v5967 = vpop.permute.xlu0 %5966
  %5968 = vrot.lane.b32.xlu0 %v5791, 12
  %v5969 = vpop.permute.xlu0 %5968
  %5970 = vrot.lane.b32.xlu0 %v5792, 12
  %v5971 = vpop.permute.xlu0 %5970
  %5972 = vrot.lane.b32.xlu0 %v5793, 12
  %v5973 = vpop.permute.xlu0 %5972
  %5974 = vrot.lane.b32.xlu0 %v5794, 12
  %v5975 = vpop.permute.xlu0 %5974
  %5976 = vrot.lane.b32.xlu0 %v5795, 12
  %v5977 = vpop.permute.xlu0 %5976
  %5978 = vrot.lane.b32.xlu0 %v5796, 12
  %v5979 = vpop.permute.xlu0 %5978
  %5980 = vrot.lane.b32.xlu0 %v5797, 12
  %v5981 = vpop.permute.xlu0 %5980
  %5982 = vrot.lane.b32.xlu0 %v5798, 12
  %v5983 = vpop.permute.xlu0 %5982
  %5984 = vrot.lane.b32.xlu0 %v5799, 12
  %v5985 = vpop.permute.xlu0 %5984
  %5986 = vrot.lane.b32.xlu0 %v5800, 12
  %v5987 = vpop.permute.xlu0 %5986
  %5988 = vrot.lane.b32.xlu0 %v5801, 12
  %v5989 = vpop.permute.xlu0 %5988
  %5990 = vrot.lane.b32.xlu0 %v5802, 12
  %v5991 = vpop.permute.xlu0 %5990
  %5992 = vrot.lane.b32.xlu0 %v5803, 12
  %v5993 = vpop.permute.xlu0 %5992
  %5994 = vrot.lane.b32.xlu0 %v5804, 12
  %v5995 = vpop.permute.xlu0 %5994
  %5996 = vrot.lane.b32.xlu0 %v5805, 12
  %v5997 = vpop.permute.xlu0 %5996
  %6062 = vst.msk [vmem:[#allocation3] sm:$0xff] %vm1465, %v5871
  %6063 = vst.msk [vmem:[#allocation3 + $0x8] sm:$0xff] %vm1465, %v5873
  %6064 = vst.msk [vmem:[#allocation3 + $0x10] sm:$0xff] %vm1465, %v5875
  %6065 = vst.msk [vmem:[#allocation3 + $0x18] sm:$0xff] %vm1465, %v5877
  %6066 = vst.msk [vmem:[#allocation3 + $0x20] sm:$0xff] %vm1465, %v5879
  %6067 = vst.msk [vmem:[#allocation3 + $0x28] sm:$0xff] %vm1465, %v5881
  %6068 = vst.msk [vmem:[#allocation3 + $0x30] sm:$0xff] %vm1465, %v5883
  %6069 = vst.msk [vmem:[#allocation3 + $0x38] sm:$0xff] %vm1465, %v5885
  %6070 = vst.msk [vmem:[#allocation3 + $0x40] sm:$0xff] %vm1465, %v5887
  %6071 = vst.msk [vmem:[#allocation3 + $0x48] sm:$0xff] %vm1465, %v5889
  %6072 = vst.msk [vmem:[#allocation3 + $0x50] sm:$0xff] %vm1465, %v5891
  %6073 = vst.msk [vmem:[#allocation3 + $0x58] sm:$0xff] %vm1465, %v5893
  %6074 = vst.msk [vmem:[#allocation3 + $0x60] sm:$0xff] %vm1465, %v5895
  %6075 = vst.msk [vmem:[#allocation3 + $0x68] sm:$0xff] %vm1465, %v5897
  %6076 = vst.msk [vmem:[#allocation3 + $0x70] sm:$0xff] %vm1465, %v5899
  %6077 = vst.msk [vmem:[#allocation3 + $0x78] sm:$0xff] %vm1465, %v5901
  %6078 = vst.msk [vmem:[#allocation3 + $0x80] sm:$0xff] %vm1465, %v5903
  %6079 = vst.msk [vmem:[#allocation3 + $0x88] sm:$0xff] %vm1465, %v5905
  %6080 = vst.msk [vmem:[#allocation3 + $0x90] sm:$0xff] %vm1465, %v5907
  %6081 = vst.msk [vmem:[#allocation3 + $0x98] sm:$0xff] %vm1465, %v5909
  %6082 = vst.msk [vmem:[#allocation3 + $0xa0] sm:$0xff] %vm1465, %v5911
  %6083 = vst.msk [vmem:[#allocation3 + $0xa8] sm:$0xff] %vm1465, %v5913
  %6084 = vst.msk [vmem:[#allocation3 + $0xb0] sm:$0xff] %vm1465, %v5915
  %6085 = vst.msk [vmem:[#allocation3 + $0xb8] sm:$0xff] %vm1465, %v5917
  %6086 = vst.msk [vmem:[#allocation3 + $0xc0] sm:$0xff] %vm1465, %v5919
  %6087 = vst.msk [vmem:[#allocation3 + $0xc8] sm:$0xff] %vm1465, %v5921
  %6088 = vst.msk [vmem:[#allocation3 + $0xd0] sm:$0xff] %vm1465, %v5923
  %6089 = vst.msk [vmem:[#allocation3 + $0xd8] sm:$0xff] %vm1465, %v5925
  %6090 = vst.msk [vmem:[#allocation3 + $0xe0] sm:$0xff] %vm1465, %v5927
  %6091 = vst.msk [vmem:[#allocation3 + $0xe8] sm:$0xff] %vm1465, %v5929
  %6092 = vst.msk [vmem:[#allocation3 + $0xf0] sm:$0xff] %vm1465, %v5931
  %6093 = vst.msk [vmem:[#allocation3 + $0xf8] sm:$0xff] %vm1465, %v5933
  %6094 = vst.msk [vmem:[#allocation3 + $0x100] sm:$0xff] %vm1465, %v5935
  %6095 = vst.msk [vmem:[#allocation3 + $0x108] sm:$0xff] %vm1465, %v5937
  %6096 = vst.msk [vmem:[#allocation3 + $0x110] sm:$0xff] %vm1465, %v5939
  %6097 = vst.msk [vmem:[#allocation3 + $0x118] sm:$0xff] %vm1465, %v5941
  %6098 = vst.msk [vmem:[#allocation3 + $0x120] sm:$0xff] %vm1465, %v5943
  %6099 = vst.msk [vmem:[#allocation3 + $0x128] sm:$0xff] %vm1465, %v5945
  %6100 = vst.msk [vmem:[#allocation3 + $0x130] sm:$0xff] %vm1465, %v5947
  %6101 = vst.msk [vmem:[#allocation3 + $0x138] sm:$0xff] %vm1465, %v5949
  %6102 = vst.msk [vmem:[#allocation3 + $0x140] sm:$0xff] %vm1465, %v5951
  %6103 = vst.msk [vmem:[#allocation3 + $0x148] sm:$0xff] %vm1465, %v5953
  %6104 = vst.msk [vmem:[#allocation3 + $0x150] sm:$0xff] %vm1465, %v5955
  %6105 = vst.msk [vmem:[#allocation3 + $0x158] sm:$0xff] %vm1465, %v5957
  %6106 = vst.msk [vmem:[#allocation3 + $0x160] sm:$0xff] %vm1465, %v5959
  %6107 = vst.msk [vmem:[#allocation3 + $0x168] sm:$0xff] %vm1465, %v5961
  %6108 = vst.msk [vmem:[#allocation3 + $0x170] sm:$0xff] %vm1465, %v5963
  %6109 = vst.msk [vmem:[#allocation3 + $0x178] sm:$0xff] %vm1465, %v5965
  %6110 = vst.msk [vmem:[#allocation3 + $0x180] sm:$0xff] %vm1465, %v5967
  %6111 = vst.msk [vmem:[#allocation3 + $0x188] sm:$0xff] %vm1465, %v5969
  %6112 = vst.msk [vmem:[#allocation3 + $0x190] sm:$0xff] %vm1465, %v5971
  %6113 = vst.msk [vmem:[#allocation3 + $0x198] sm:$0xff] %vm1465, %v5973
  %6114 = vst.msk [vmem:[#allocation3 + $0x1a0] sm:$0xff] %vm1465, %v5975
  %6115 = vst.msk [vmem:[#allocation3 + $0x1a8] sm:$0xff] %vm1465, %v5977
  %6116 = vst.msk [vmem:[#allocation3 + $0x1b0] sm:$0xff] %vm1465, %v5979
  %6117 = vst.msk [vmem:[#allocation3 + $0x1b8] sm:$0xff] %vm1465, %v5981
  %6118 = vst.msk [vmem:[#allocation3 + $0x1c0] sm:$0xff] %vm1465, %v5983
  %6119 = vst.msk [vmem:[#allocation3 + $0x1c8] sm:$0xff] %vm1465, %v5985
  %6120 = vst.msk [vmem:[#allocation3 + $0x1d0] sm:$0xff] %vm1465, %v5987
  %6121 = vst.msk [vmem:[#allocation3 + $0x1d8] sm:$0xff] %vm1465, %v5989
  %6122 = vst.msk [vmem:[#allocation3 + $0x1e0] sm:$0xff] %vm1465, %v5991
  %6123 = vst.msk [vmem:[#allocation3 + $0x1e8] sm:$0xff] %vm1465, %v5993
  %6124 = vst.msk [vmem:[#allocation3 + $0x1f0] sm:$0xff] %vm1465, %v5995
  %6125 = vst.msk [vmem:[#allocation3 + $0x1f8] sm:$0xff] %vm1465, %v5997
  %v6126 = vld [vmem:[%s182 + $0x1] sm:$0xff]
  %v6127 = vld [vmem:[%s182 + $0x9] sm:$0xff]
  %v6128 = vld [vmem:[%s182 + $0x19] sm:$0xff]
  %v6129 = vld [vmem:[%s182 + $0x21] sm:$0xff]
  %v6130 = vld [vmem:[%s182 + $0x31] sm:$0xff]
  %v6131 = vld [vmem:[%s182 + $0x39] sm:$0xff]
  %v6132 = vld [vmem:[%s182 + $0x49] sm:$0xff]
  %v6133 = vld [vmem:[%s182 + $0x51] sm:$0xff]
  %v6134 = vld [vmem:[%s182 + $0x61] sm:$0xff]
  %v6135 = vld [vmem:[%s182 + $0x69] sm:$0xff]
  %v6136 = vld [vmem:[%s182 + $0x79] sm:$0xff]
  %v6137 = vld [vmem:[%s182 + $0x81] sm:$0xff]
  %v6138 = vld [vmem:[%s182 + $0x91] sm:$0xff]
  %v6139 = vld [vmem:[%s182 + $0x99] sm:$0xff]
  %v6140 = vld [vmem:[%s182 + $0xa9] sm:$0xff]
  %v6141 = vld [vmem:[%s182 + $0xb1] sm:$0xff]
  %v6142 = vld [vmem:[%s182 + $0xc1] sm:$0xff]
  %v6143 = vld [vmem:[%s182 + $0xc9] sm:$0xff]
  %v6144 = vld [vmem:[%s182 + $0xd9] sm:$0xff]
  %v6145 = vld [vmem:[%s182 + $0xe1] sm:$0xff]
  %v6146 = vld [vmem:[%s182 + $0xf1] sm:$0xff]
  %v6147 = vld [vmem:[%s182 + $0xf9] sm:$0xff]
  %v6148 = vld [vmem:[%s182 + $0x109] sm:$0xff]
  %v6149 = vld [vmem:[%s182 + $0x111] sm:$0xff]
  %v6150 = vld [vmem:[%s182 + $0x121] sm:$0xff]
  %v6151 = vld [vmem:[%s182 + $0x129] sm:$0xff]
  %v6152 = vld [vmem:[%s182 + $0x139] sm:$0xff]
  %v6153 = vld [vmem:[%s182 + $0x141] sm:$0xff]
  %v6154 = vld [vmem:[%s182 + $0x151] sm:$0xff]
  %v6155 = vld [vmem:[%s182 + $0x159] sm:$0xff]
  %v6156 = vld [vmem:[%s182 + $0x169] sm:$0xff]
  %v6157 = vld [vmem:[%s182 + $0x171] sm:$0xff]
  %v6158 = vld [vmem:[%s182 + $0x1b1] sm:$0xff]
  %v6159 = vld [vmem:[%s182 + $0x1b9] sm:$0xff]
  %v6160 = vld [vmem:[%s182 + $0x1c9] sm:$0xff]
  %v6161 = vld [vmem:[%s182 + $0x1d1] sm:$0xff]
  %v6162 = vld [vmem:[%s182 + $0x1e1] sm:$0xff]
  %v6163 = vld [vmem:[%s182 + $0x1e9] sm:$0xff]
  %v6164 = vld [vmem:[%s182 + $0x1f9] sm:$0xff]
  %v6165 = vld [vmem:[%s182 + $0x201] sm:$0xff]
  %v6166 = vld [vmem:[%s182 + $0x211] sm:$0xff]
  %v6167 = vld [vmem:[%s182 + $0x219] sm:$0xff]
  %v6168 = vld [vmem:[%s182 + $0x229] sm:$0xff]
  %v6169 = vld [vmem:[%s182 + $0x231] sm:$0xff]
  %v6170 = vld [vmem:[%s182 + $0x241] sm:$0xff]
  %v6171 = vld [vmem:[%s182 + $0x249] sm:$0xff]
  %v6172 = vld [vmem:[%s182 + $0x259] sm:$0xff]
  %v6173 = vld [vmem:[%s182 + $0x261] sm:$0xff]
  %v6174 = vld [vmem:[%s182 + $0x271] sm:$0xff]
  %v6175 = vld [vmem:[%s182 + $0x279] sm:$0xff]
  %v6176 = vld [vmem:[%s182 + $0x289] sm:$0xff]
  %v6177 = vld [vmem:[%s182 + $0x291] sm:$0xff]
  %v6178 = vld [vmem:[%s182 + $0x2a1] sm:$0xff]
  %v6179 = vld [vmem:[%s182 + $0x2a9] sm:$0xff]
  %v6180 = vld [vmem:[%s182 + $0x2b9] sm:$0xff]
  %v6181 = vld [vmem:[%s182 + $0x2c1] sm:$0xff]
  %v6182 = vld [vmem:[%s182 + $0x2d1] sm:$0xff]
  %v6183 = vld [vmem:[%s182 + $0x2d9] sm:$0xff]
  %v6184 = vld [vmem:[%s182 + $0x2e9] sm:$0xff]
  %v6185 = vld [vmem:[%s182 + $0x2f1] sm:$0xff]
  %v6186 = vld [vmem:[%s182 + $0x301] sm:$0xff]
  %v6187 = vld [vmem:[%s182 + $0x309] sm:$0xff]
  %v6188 = vld [vmem:[%s182 + $0x319] sm:$0xff]
  %v6189 = vld [vmem:[%s182 + $0x321] sm:$0xff]
  %6254 = vrot.lane.b32.xlu0 %v6126, 16
  %v6255 = vpop.permute.xlu0 %6254
  %6256 = vrot.lane.b32.xlu0 %v6127, 16
  %v6257 = vpop.permute.xlu0 %6256
  %6258 = vrot.lane.b32.xlu0 %v6128, 16
  %v6259 = vpop.permute.xlu0 %6258
  %6260 = vrot.lane.b32.xlu0 %v6129, 16
  %v6261 = vpop.permute.xlu0 %6260
  %6262 = vrot.lane.b32.xlu0 %v6130, 16
  %v6263 = vpop.permute.xlu0 %6262
  %6264 = vrot.lane.b32.xlu0 %v6131, 16
  %v6265 = vpop.permute.xlu0 %6264
  %6266 = vrot.lane.b32.xlu0 %v6132, 16
  %v6267 = vpop.permute.xlu0 %6266
  %6268 = vrot.lane.b32.xlu0 %v6133, 16
  %v6269 = vpop.permute.xlu0 %6268
  %6270 = vrot.lane.b32.xlu0 %v6134, 16
  %v6271 = vpop.permute.xlu0 %6270
  %6272 = vrot.lane.b32.xlu0 %v6135, 16
  %v6273 = vpop.permute.xlu0 %6272
  %6274 = vrot.lane.b32.xlu0 %v6136, 16
  %v6275 = vpop.permute.xlu0 %6274
  %6276 = vrot.lane.b32.xlu0 %v6137, 16
  %v6277 = vpop.permute.xlu0 %6276
  %6278 = vrot.lane.b32.xlu0 %v6138, 16
  %v6279 = vpop.permute.xlu0 %6278
  %6280 = vrot.lane.b32.xlu0 %v6139, 16
  %v6281 = vpop.permute.xlu0 %6280
  %6282 = vrot.lane.b32.xlu0 %v6140, 16
  %v6283 = vpop.permute.xlu0 %6282
  %6284 = vrot.lane.b32.xlu0 %v6141, 16
  %v6285 = vpop.permute.xlu0 %6284
  %6286 = vrot.lane.b32.xlu0 %v6142, 16
  %v6287 = vpop.permute.xlu0 %6286
  %6288 = vrot.lane.b32.xlu0 %v6143, 16
  %v6289 = vpop.permute.xlu0 %6288
  %6290 = vrot.lane.b32.xlu0 %v6144, 16
  %v6291 = vpop.permute.xlu0 %6290
  %6292 = vrot.lane.b32.xlu0 %v6145, 16
  %v6293 = vpop.permute.xlu0 %6292
  %6294 = vrot.lane.b32.xlu0 %v6146, 16
  %v6295 = vpop.permute.xlu0 %6294
  %6296 = vrot.lane.b32.xlu0 %v6147, 16
  %v6297 = vpop.permute.xlu0 %6296
  %6298 = vrot.lane.b32.xlu0 %v6148, 16
  %v6299 = vpop.permute.xlu0 %6298
  %6300 = vrot.lane.b32.xlu0 %v6149, 16
  %v6301 = vpop.permute.xlu0 %6300
  %6302 = vrot.lane.b32.xlu0 %v6150, 16
  %v6303 = vpop.permute.xlu0 %6302
  %6304 = vrot.lane.b32.xlu0 %v6151, 16
  %v6305 = vpop.permute.xlu0 %6304
  %6306 = vrot.lane.b32.xlu0 %v6152, 16
  %v6307 = vpop.permute.xlu0 %6306
  %6308 = vrot.lane.b32.xlu0 %v6153, 16
  %v6309 = vpop.permute.xlu0 %6308
  %6310 = vrot.lane.b32.xlu0 %v6154, 16
  %v6311 = vpop.permute.xlu0 %6310
  %6312 = vrot.lane.b32.xlu0 %v6155, 16
  %v6313 = vpop.permute.xlu0 %6312
  %6314 = vrot.lane.b32.xlu0 %v6156, 16
  %v6315 = vpop.permute.xlu0 %6314
  %6316 = vrot.lane.b32.xlu0 %v6157, 16
  %v6317 = vpop.permute.xlu0 %6316
  %6318 = vrot.lane.b32.xlu0 %v6158, 16
  %v6319 = vpop.permute.xlu0 %6318
  %6320 = vrot.lane.b32.xlu0 %v6159, 16
  %v6321 = vpop.permute.xlu0 %6320
  %6322 = vrot.lane.b32.xlu0 %v6160, 16
  %v6323 = vpop.permute.xlu0 %6322
  %6324 = vrot.lane.b32.xlu0 %v6161, 16
  %v6325 = vpop.permute.xlu0 %6324
  %6326 = vrot.lane.b32.xlu0 %v6162, 16
  %v6327 = vpop.permute.xlu0 %6326
  %6328 = vrot.lane.b32.xlu0 %v6163, 16
  %v6329 = vpop.permute.xlu0 %6328
  %6330 = vrot.lane.b32.xlu0 %v6164, 16
  %v6331 = vpop.permute.xlu0 %6330
  %6332 = vrot.lane.b32.xlu0 %v6165, 16
  %v6333 = vpop.permute.xlu0 %6332
  %6334 = vrot.lane.b32.xlu0 %v6166, 16
  %v6335 = vpop.permute.xlu0 %6334
  %6336 = vrot.lane.b32.xlu0 %v6167, 16
  %v6337 = vpop.permute.xlu0 %6336
  %6338 = vrot.lane.b32.xlu0 %v6168, 16
  %v6339 = vpop.permute.xlu0 %6338
  %6340 = vrot.lane.b32.xlu0 %v6169, 16
  %v6341 = vpop.permute.xlu0 %6340
  %6342 = vrot.lane.b32.xlu0 %v6170, 16
  %v6343 = vpop.permute.xlu0 %6342
  %6344 = vrot.lane.b32.xlu0 %v6171, 16
  %v6345 = vpop.permute.xlu0 %6344
  %6346 = vrot.lane.b32.xlu0 %v6172, 16
  %v6347 = vpop.permute.xlu0 %6346
  %6348 = vrot.lane.b32.xlu0 %v6173, 16
  %v6349 = vpop.permute.xlu0 %6348
  %6350 = vrot.lane.b32.xlu0 %v6174, 16
  %v6351 = vpop.permute.xlu0 %6350
  %6352 = vrot.lane.b32.xlu0 %v6175, 16
  %v6353 = vpop.permute.xlu0 %6352
  %6354 = vrot.lane.b32.xlu0 %v6176, 16
  %v6355 = vpop.permute.xlu0 %6354
  %6356 = vrot.lane.b32.xlu0 %v6177, 16
  %v6357 = vpop.permute.xlu0 %6356
  %6358 = vrot.lane.b32.xlu0 %v6178, 16
  %v6359 = vpop.permute.xlu0 %6358
  %6360 = vrot.lane.b32.xlu0 %v6179, 16
  %v6361 = vpop.permute.xlu0 %6360
  %6362 = vrot.lane.b32.xlu0 %v6180, 16
  %v6363 = vpop.permute.xlu0 %6362
  %6364 = vrot.lane.b32.xlu0 %v6181, 16
  %v6365 = vpop.permute.xlu0 %6364
  %6366 = vrot.lane.b32.xlu0 %v6182, 16
  %v6367 = vpop.permute.xlu0 %6366
  %6368 = vrot.lane.b32.xlu0 %v6183, 16
  %v6369 = vpop.permute.xlu0 %6368
  %6370 = vrot.lane.b32.xlu0 %v6184, 16
  %v6371 = vpop.permute.xlu0 %6370
  %6372 = vrot.lane.b32.xlu0 %v6185, 16
  %v6373 = vpop.permute.xlu0 %6372
  %6374 = vrot.lane.b32.xlu0 %v6186, 16
  %v6375 = vpop.permute.xlu0 %6374
  %6376 = vrot.lane.b32.xlu0 %v6187, 16
  %v6377 = vpop.permute.xlu0 %6376
  %6378 = vrot.lane.b32.xlu0 %v6188, 16
  %v6379 = vpop.permute.xlu0 %6378
  %6380 = vrot.lane.b32.xlu0 %v6189, 16
  %v6381 = vpop.permute.xlu0 %6380
  %6446 = vst.msk [vmem:[#allocation3] sm:$0xff] %vm1850, %v6255
  %6447 = vst.msk [vmem:[#allocation3 + $0x8] sm:$0xff] %vm1850, %v6257
  %6448 = vst.msk [vmem:[#allocation3 + $0x10] sm:$0xff] %vm1850, %v6259
  %6449 = vst.msk [vmem:[#allocation3 + $0x18] sm:$0xff] %vm1850, %v6261
  %6450 = vst.msk [vmem:[#allocation3 + $0x20] sm:$0xff] %vm1850, %v6263
  %6451 = vst.msk [vmem:[#allocation3 + $0x28] sm:$0xff] %vm1850, %v6265
  %6452 = vst.msk [vmem:[#allocation3 + $0x30] sm:$0xff] %vm1850, %v6267
  %6453 = vst.msk [vmem:[#allocation3 + $0x38] sm:$0xff] %vm1850, %v6269
  %6454 = vst.msk [vmem:[#allocation3 + $0x40] sm:$0xff] %vm1850, %v6271
  %6455 = vst.msk [vmem:[#allocation3 + $0x48] sm:$0xff] %vm1850, %v6273
  %6456 = vst.msk [vmem:[#allocation3 + $0x50] sm:$0xff] %vm1850, %v6275
  %6457 = vst.msk [vmem:[#allocation3 + $0x58] sm:$0xff] %vm1850, %v6277
  %6458 = vst.msk [vmem:[#allocation3 + $0x60] sm:$0xff] %vm1850, %v6279
  %6459 = vst.msk [vmem:[#allocation3 + $0x68] sm:$0xff] %vm1850, %v6281
  %6460 = vst.msk [vmem:[#allocation3 + $0x70] sm:$0xff] %vm1850, %v6283
  %6461 = vst.msk [vmem:[#allocation3 + $0x78] sm:$0xff] %vm1850, %v6285
  %6462 = vst.msk [vmem:[#allocation3 + $0x80] sm:$0xff] %vm1850, %v6287
  %6463 = vst.msk [vmem:[#allocation3 + $0x88] sm:$0xff] %vm1850, %v6289
  %6464 = vst.msk [vmem:[#allocation3 + $0x90] sm:$0xff] %vm1850, %v6291
  %6465 = vst.msk [vmem:[#allocation3 + $0x98] sm:$0xff] %vm1850, %v6293
  %6466 = vst.msk [vmem:[#allocation3 + $0xa0] sm:$0xff] %vm1850, %v6295
  %6467 = vst.msk [vmem:[#allocation3 + $0xa8] sm:$0xff] %vm1850, %v6297
  %6468 = vst.msk [vmem:[#allocation3 + $0xb0] sm:$0xff] %vm1850, %v6299
  %6469 = vst.msk [vmem:[#allocation3 + $0xb8] sm:$0xff] %vm1850, %v6301
  %6470 = vst.msk [vmem:[#allocation3 + $0xc0] sm:$0xff] %vm1850, %v6303
  %6471 = vst.msk [vmem:[#allocation3 + $0xc8] sm:$0xff] %vm1850, %v6305
  %6472 = vst.msk [vmem:[#allocation3 + $0xd0] sm:$0xff] %vm1850, %v6307
  %6473 = vst.msk [vmem:[#allocation3 + $0xd8] sm:$0xff] %vm1850, %v6309
  %6474 = vst.msk [vmem:[#allocation3 + $0xe0] sm:$0xff] %vm1850, %v6311
  %6475 = vst.msk [vmem:[#allocation3 + $0xe8] sm:$0xff] %vm1850, %v6313
  %6476 = vst.msk [vmem:[#allocation3 + $0xf0] sm:$0xff] %vm1850, %v6315
  %6477 = vst.msk [vmem:[#allocation3 + $0xf8] sm:$0xff] %vm1850, %v6317
  %6478 = vst.msk [vmem:[#allocation3 + $0x100] sm:$0xff] %vm1850, %v6319
  %6479 = vst.msk [vmem:[#allocation3 + $0x108] sm:$0xff] %vm1850, %v6321
  %6480 = vst.msk [vmem:[#allocation3 + $0x110] sm:$0xff] %vm1850, %v6323
  %6481 = vst.msk [vmem:[#allocation3 + $0x118] sm:$0xff] %vm1850, %v6325
  %6482 = vst.msk [vmem:[#allocation3 + $0x120] sm:$0xff] %vm1850, %v6327
  %6483 = vst.msk [vmem:[#allocation3 + $0x128] sm:$0xff] %vm1850, %v6329
  %6484 = vst.msk [vmem:[#allocation3 + $0x130] sm:$0xff] %vm1850, %v6331
  %6485 = vst.msk [vmem:[#allocation3 + $0x138] sm:$0xff] %vm1850, %v6333
  %6486 = vst.msk [vmem:[#allocation3 + $0x140] sm:$0xff] %vm1850, %v6335
  %6487 = vst.msk [vmem:[#allocation3 + $0x148] sm:$0xff] %vm1850, %v6337
  %6488 = vst.msk [vmem:[#allocation3 + $0x150] sm:$0xff] %vm1850, %v6339
  %6489 = vst.msk [vmem:[#allocation3 + $0x158] sm:$0xff] %vm1850, %v6341
  %6490 = vst.msk [vmem:[#allocation3 + $0x160] sm:$0xff] %vm1850, %v6343
  %6491 = vst.msk [vmem:[#allocation3 + $0x168] sm:$0xff] %vm1850, %v6345
  %6492 = vst.msk [vmem:[#allocation3 + $0x170] sm:$0xff] %vm1850, %v6347
  %6493 = vst.msk [vmem:[#allocation3 + $0x178] sm:$0xff] %vm1850, %v6349
  %6494 = vst.msk [vmem:[#allocation3 + $0x180] sm:$0xff] %vm1850, %v6351
  %6495 = vst.msk [vmem:[#allocation3 + $0x188] sm:$0xff] %vm1850, %v6353
  %6496 = vst.msk [vmem:[#allocation3 + $0x190] sm:$0xff] %vm1850, %v6355
  %6497 = vst.msk [vmem:[#allocation3 + $0x198] sm:$0xff] %vm1850, %v6357
  %6498 = vst.msk [vmem:[#allocation3 + $0x1a0] sm:$0xff] %vm1850, %v6359
  %6499 = vst.msk [vmem:[#allocation3 + $0x1a8] sm:$0xff] %vm1850, %v6361
  %6500 = vst.msk [vmem:[#allocation3 + $0x1b0] sm:$0xff] %vm1850, %v6363
  %6501 = vst.msk [vmem:[#allocation3 + $0x1b8] sm:$0xff] %vm1850, %v6365
  %6502 = vst.msk [vmem:[#allocation3 + $0x1c0] sm:$0xff] %vm1850, %v6367
  %6503 = vst.msk [vmem:[#allocation3 + $0x1c8] sm:$0xff] %vm1850, %v6369
  %6504 = vst.msk [vmem:[#allocation3 + $0x1d0] sm:$0xff] %vm1850, %v6371
  %6505 = vst.msk [vmem:[#allocation3 + $0x1d8] sm:$0xff] %vm1850, %v6373
  %6506 = vst.msk [vmem:[#allocation3 + $0x1e0] sm:$0xff] %vm1850, %v6375
  %6507 = vst.msk [vmem:[#allocation3 + $0x1e8] sm:$0xff] %vm1850, %v6377
  %6508 = vst.msk [vmem:[#allocation3 + $0x1f0] sm:$0xff] %vm1850, %v6379
  %6509 = vst.msk [vmem:[#allocation3 + $0x1f8] sm:$0xff] %vm1850, %v6381
  %v6510 = vld [vmem:[%s182 + $0x2] sm:$0xff]
  %v6511 = vld [vmem:[%s182 + $0xa] sm:$0xff]
  %v6512 = vld [vmem:[%s182 + $0x1a] sm:$0xff]
  %v6513 = vld [vmem:[%s182 + $0x22] sm:$0xff]
  %v6514 = vld [vmem:[%s182 + $0x32] sm:$0xff]
  %v6515 = vld [vmem:[%s182 + $0x3a] sm:$0xff]
  %v6516 = vld [vmem:[%s182 + $0x4a] sm:$0xff]
  %v6517 = vld [vmem:[%s182 + $0x52] sm:$0xff]
  %v6518 = vld [vmem:[%s182 + $0x62] sm:$0xff]
  %v6519 = vld [vmem:[%s182 + $0x6a] sm:$0xff]
  %v6520 = vld [vmem:[%s182 + $0x7a] sm:$0xff]
  %v6521 = vld [vmem:[%s182 + $0x82] sm:$0xff]
  %v6522 = vld [vmem:[%s182 + $0x92] sm:$0xff]
  %v6523 = vld [vmem:[%s182 + $0x9a] sm:$0xff]
  %v6524 = vld [vmem:[%s182 + $0xaa] sm:$0xff]
  %v6525 = vld [vmem:[%s182 + $0xb2] sm:$0xff]
  %v6526 = vld [vmem:[%s182 + $0xc2] sm:$0xff]
  %v6527 = vld [vmem:[%s182 + $0xca] sm:$0xff]
  %v6528 = vld [vmem:[%s182 + $0xda] sm:$0xff]
  %v6529 = vld [vmem:[%s182 + $0xe2] sm:$0xff]
  %v6530 = vld [vmem:[%s182 + $0xf2] sm:$0xff]
  %v6531 = vld [vmem:[%s182 + $0xfa] sm:$0xff]
  %v6532 = vld [vmem:[%s182 + $0x10a] sm:$0xff]
  %v6533 = vld [vmem:[%s182 + $0x112] sm:$0xff]
  %v6534 = vld [vmem:[%s182 + $0x122] sm:$0xff]
  %v6535 = vld [vmem:[%s182 + $0x12a] sm:$0xff]
  %v6536 = vld [vmem:[%s182 + $0x13a] sm:$0xff]
  %v6537 = vld [vmem:[%s182 + $0x142] sm:$0xff]
  %v6538 = vld [vmem:[%s182 + $0x152] sm:$0xff]
  %v6539 = vld [vmem:[%s182 + $0x15a] sm:$0xff]
  %v6540 = vld [vmem:[%s182 + $0x16a] sm:$0xff]
  %v6541 = vld [vmem:[%s182 + $0x172] sm:$0xff]
  %v6542 = vld [vmem:[%s182 + $0x1b2] sm:$0xff]
  %v6543 = vld [vmem:[%s182 + $0x1ba] sm:$0xff]
  %v6544 = vld [vmem:[%s182 + $0x1ca] sm:$0xff]
  %v6545 = vld [vmem:[%s182 + $0x1d2] sm:$0xff]
  %v6546 = vld [vmem:[%s182 + $0x1e2] sm:$0xff]
  %v6547 = vld [vmem:[%s182 + $0x1ea] sm:$0xff]
  %v6548 = vld [vmem:[%s182 + $0x1fa] sm:$0xff]
  %v6549 = vld [vmem:[%s182 + $0x202] sm:$0xff]
  %v6550 = vld [vmem:[%s182 + $0x212] sm:$0xff]
  %v6551 = vld [vmem:[%s182 + $0x21a] sm:$0xff]
  %v6552 = vld [vmem:[%s182 + $0x22a] sm:$0xff]
  %v6553 = vld [vmem:[%s182 + $0x232] sm:$0xff]
  %v6554 = vld [vmem:[%s182 + $0x242] sm:$0xff]
  %v6555 = vld [vmem:[%s182 + $0x24a] sm:$0xff]
  %v6556 = vld [vmem:[%s182 + $0x25a] sm:$0xff]
  %v6557 = vld [vmem:[%s182 + $0x262] sm:$0xff]
  %v6558 = vld [vmem:[%s182 + $0x272] sm:$0xff]
  %v6559 = vld [vmem:[%s182 + $0x27a] sm:$0xff]
  %v6560 = vld [vmem:[%s182 + $0x28a] sm:$0xff]
  %v6561 = vld [vmem:[%s182 + $0x292] sm:$0xff]
  %v6562 = vld [vmem:[%s182 + $0x2a2] sm:$0xff]
  %v6563 = vld [vmem:[%s182 + $0x2aa] sm:$0xff]
  %v6564 = vld [vmem:[%s182 + $0x2ba] sm:$0xff]
  %v6565 = vld [vmem:[%s182 + $0x2c2] sm:$0xff]
  %v6566 = vld [vmem:[%s182 + $0x2d2] sm:$0xff]
  %v6567 = vld [vmem:[%s182 + $0x2da] sm:$0xff]
  %v6568 = vld [vmem:[%s182 + $0x2ea] sm:$0xff]
  %v6569 = vld [vmem:[%s182 + $0x2f2] sm:$0xff]
  %v6570 = vld [vmem:[%s182 + $0x302] sm:$0xff]
  %v6571 = vld [vmem:[%s182 + $0x30a] sm:$0xff]
  %v6572 = vld [vmem:[%s182 + $0x31a] sm:$0xff]
  %v6573 = vld [vmem:[%s182 + $0x322] sm:$0xff]
  %6638 = vrot.lane.b32.xlu0 %v6510, 20
  %v6639 = vpop.permute.xlu0 %6638
  %6640 = vrot.lane.b32.xlu0 %v6511, 20
  %v6641 = vpop.permute.xlu0 %6640
  %6642 = vrot.lane.b32.xlu0 %v6512, 20
  %v6643 = vpop.permute.xlu0 %6642
  %6644 = vrot.lane.b32.xlu0 %v6513, 20
  %v6645 = vpop.permute.xlu0 %6644
  %6646 = vrot.lane.b32.xlu0 %v6514, 20
  %v6647 = vpop.permute.xlu0 %6646
  %6648 = vrot.lane.b32.xlu0 %v6515, 20
  %v6649 = vpop.permute.xlu0 %6648
  %6650 = vrot.lane.b32.xlu0 %v6516, 20
  %v6651 = vpop.permute.xlu0 %6650
  %6652 = vrot.lane.b32.xlu0 %v6517, 20
  %v6653 = vpop.permute.xlu0 %6652
  %6654 = vrot.lane.b32.xlu0 %v6518, 20
  %v6655 = vpop.permute.xlu0 %6654
  %6656 = vrot.lane.b32.xlu0 %v6519, 20
  %v6657 = vpop.permute.xlu0 %6656
  %6658 = vrot.lane.b32.xlu0 %v6520, 20
  %v6659 = vpop.permute.xlu0 %6658
  %6660 = vrot.lane.b32.xlu0 %v6521, 20
  %v6661 = vpop.permute.xlu0 %6660
  %6662 = vrot.lane.b32.xlu0 %v6522, 20
  %v6663 = vpop.permute.xlu0 %6662
  %6664 = vrot.lane.b32.xlu0 %v6523, 20
  %v6665 = vpop.permute.xlu0 %6664
  %6666 = vrot.lane.b32.xlu0 %v6524, 20
  %v6667 = vpop.permute.xlu0 %6666
  %6668 = vrot.lane.b32.xlu0 %v6525, 20
  %v6669 = vpop.permute.xlu0 %6668
  %6670 = vrot.lane.b32.xlu0 %v6526, 20
  %v6671 = vpop.permute.xlu0 %6670
  %6672 = vrot.lane.b32.xlu0 %v6527, 20
  %v6673 = vpop.permute.xlu0 %6672
  %6674 = vrot.lane.b32.xlu0 %v6528, 20
  %v6675 = vpop.permute.xlu0 %6674
  %6676 = vrot.lane.b32.xlu0 %v6529, 20
  %v6677 = vpop.permute.xlu0 %6676
  %6678 = vrot.lane.b32.xlu0 %v6530, 20
  %v6679 = vpop.permute.xlu0 %6678
  %6680 = vrot.lane.b32.xlu0 %v6531, 20
  %v6681 = vpop.permute.xlu0 %6680
  %6682 = vrot.lane.b32.xlu0 %v6532, 20
  %v6683 = vpop.permute.xlu0 %6682
  %6684 = vrot.lane.b32.xlu0 %v6533, 20
  %v6685 = vpop.permute.xlu0 %6684
  %6686 = vrot.lane.b32.xlu0 %v6534, 20
  %v6687 = vpop.permute.xlu0 %6686
  %6688 = vrot.lane.b32.xlu0 %v6535, 20
  %v6689 = vpop.permute.xlu0 %6688
  %6690 = vrot.lane.b32.xlu0 %v6536, 20
  %v6691 = vpop.permute.xlu0 %6690
  %6692 = vrot.lane.b32.xlu0 %v6537, 20
  %v6693 = vpop.permute.xlu0 %6692
  %6694 = vrot.lane.b32.xlu0 %v6538, 20
  %v6695 = vpop.permute.xlu0 %6694
  %6696 = vrot.lane.b32.xlu0 %v6539, 20
  %v6697 = vpop.permute.xlu0 %6696
  %6698 = vrot.lane.b32.xlu0 %v6540, 20
  %v6699 = vpop.permute.xlu0 %6698
  %6700 = vrot.lane.b32.xlu0 %v6541, 20
  %v6701 = vpop.permute.xlu0 %6700
  %6702 = vrot.lane.b32.xlu0 %v6542, 20
  %v6703 = vpop.permute.xlu0 %6702
  %6704 = vrot.lane.b32.xlu0 %v6543, 20
  %v6705 = vpop.permute.xlu0 %6704
  %6706 = vrot.lane.b32.xlu0 %v6544, 20
  %v6707 = vpop.permute.xlu0 %6706
  %6708 = vrot.lane.b32.xlu0 %v6545, 20
  %v6709 = vpop.permute.xlu0 %6708
  %6710 = vrot.lane.b32.xlu0 %v6546, 20
  %v6711 = vpop.permute.xlu0 %6710
  %6712 = vrot.lane.b32.xlu0 %v6547, 20
  %v6713 = vpop.permute.xlu0 %6712
  %6714 = vrot.lane.b32.xlu0 %v6548, 20
  %v6715 = vpop.permute.xlu0 %6714
  %6716 = vrot.lane.b32.xlu0 %v6549, 20
  %v6717 = vpop.permute.xlu0 %6716
  %6718 = vrot.lane.b32.xlu0 %v6550, 20
  %v6719 = vpop.permute.xlu0 %6718
  %6720 = vrot.lane.b32.xlu0 %v6551, 20
  %v6721 = vpop.permute.xlu0 %6720
  %6722 = vrot.lane.b32.xlu0 %v6552, 20
  %v6723 = vpop.permute.xlu0 %6722
  %6724 = vrot.lane.b32.xlu0 %v6553, 20
  %v6725 = vpop.permute.xlu0 %6724
  %6726 = vrot.lane.b32.xlu0 %v6554, 20
  %v6727 = vpop.permute.xlu0 %6726
  %6728 = vrot.lane.b32.xlu0 %v6555, 20
  %v6729 = vpop.permute.xlu0 %6728
  %6730 = vrot.lane.b32.xlu0 %v6556, 20
  %v6731 = vpop.permute.xlu0 %6730
  %6732 = vrot.lane.b32.xlu0 %v6557, 20
  %v6733 = vpop.permute.xlu0 %6732
  %6734 = vrot.lane.b32.xlu0 %v6558, 20
  %v6735 = vpop.permute.xlu0 %6734
  %6736 = vrot.lane.b32.xlu0 %v6559, 20
  %v6737 = vpop.permute.xlu0 %6736
  %6738 = vrot.lane.b32.xlu0 %v6560, 20
  %v6739 = vpop.permute.xlu0 %6738
  %6740 = vrot.lane.b32.xlu0 %v6561, 20
  %v6741 = vpop.permute.xlu0 %6740
  %6742 = vrot.lane.b32.xlu0 %v6562, 20
  %v6743 = vpop.permute.xlu0 %6742
  %6744 = vrot.lane.b32.xlu0 %v6563, 20
  %v6745 = vpop.permute.xlu0 %6744
  %6746 = vrot.lane.b32.xlu0 %v6564, 20
  %v6747 = vpop.permute.xlu0 %6746
  %6748 = vrot.lane.b32.xlu0 %v6565, 20
  %v6749 = vpop.permute.xlu0 %6748
  %6750 = vrot.lane.b32.xlu0 %v6566, 20
  %v6751 = vpop.permute.xlu0 %6750
  %6752 = vrot.lane.b32.xlu0 %v6567, 20
  %v6753 = vpop.permute.xlu0 %6752
  %6754 = vrot.lane.b32.xlu0 %v6568, 20
  %v6755 = vpop.permute.xlu0 %6754
  %6756 = vrot.lane.b32.xlu0 %v6569, 20
  %v6757 = vpop.permute.xlu0 %6756
  %6758 = vrot.lane.b32.xlu0 %v6570, 20
  %v6759 = vpop.permute.xlu0 %6758
  %6760 = vrot.lane.b32.xlu0 %v6571, 20
  %v6761 = vpop.permute.xlu0 %6760
  %6762 = vrot.lane.b32.xlu0 %v6572, 20
  %v6763 = vpop.permute.xlu0 %6762
  %6764 = vrot.lane.b32.xlu0 %v6573, 20
  %v6765 = vpop.permute.xlu0 %6764
  %6830 = vst.msk [vmem:[#allocation3] sm:$0xff] %vm2235, %v6639
  %6831 = vst.msk [vmem:[#allocation3 + $0x8] sm:$0xff] %vm2235, %v6641
  %6832 = vst.msk [vmem:[#allocation3 + $0x10] sm:$0xff] %vm2235, %v6643
  %6833 = vst.msk [vmem:[#allocation3 + $0x18] sm:$0xff] %vm2235, %v6645
  %6834 = vst.msk [vmem:[#allocation3 + $0x20] sm:$0xff] %vm2235, %v6647
  %6835 = vst.msk [vmem:[#allocation3 + $0x28] sm:$0xff] %vm2235, %v6649
  %6836 = vst.msk [vmem:[#allocation3 + $0x30] sm:$0xff] %vm2235, %v6651
  %6837 = vst.msk [vmem:[#allocation3 + $0x38] sm:$0xff] %vm2235, %v6653
  %6838 = vst.msk [vmem:[#allocation3 + $0x40] sm:$0xff] %vm2235, %v6655
  %6839 = vst.msk [vmem:[#allocation3 + $0x48] sm:$0xff] %vm2235, %v6657
  %6840 = vst.msk [vmem:[#allocation3 + $0x50] sm:$0xff] %vm2235, %v6659
  %6841 = vst.msk [vmem:[#allocation3 + $0x58] sm:$0xff] %vm2235, %v6661
  %6842 = vst.msk [vmem:[#allocation3 + $0x60] sm:$0xff] %vm2235, %v6663
  %6843 = vst.msk [vmem:[#allocation3 + $0x68] sm:$0xff] %vm2235, %v6665
  %6844 = vst.msk [vmem:[#allocation3 + $0x70] sm:$0xff] %vm2235, %v6667
  %6845 = vst.msk [vmem:[#allocation3 + $0x78] sm:$0xff] %vm2235, %v6669
  %6846 = vst.msk [vmem:[#allocation3 + $0x80] sm:$0xff] %vm2235, %v6671
  %6847 = vst.msk [vmem:[#allocation3 + $0x88] sm:$0xff] %vm2235, %v6673
  %6848 = vst.msk [vmem:[#allocation3 + $0x90] sm:$0xff] %vm2235, %v6675
  %6849 = vst.msk [vmem:[#allocation3 + $0x98] sm:$0xff] %vm2235, %v6677
  %6850 = vst.msk [vmem:[#allocation3 + $0xa0] sm:$0xff] %vm2235, %v6679
  %6851 = vst.msk [vmem:[#allocation3 + $0xa8] sm:$0xff] %vm2235, %v6681
  %6852 = vst.msk [vmem:[#allocation3 + $0xb0] sm:$0xff] %vm2235, %v6683
  %6853 = vst.msk [vmem:[#allocation3 + $0xb8] sm:$0xff] %vm2235, %v6685
  %6854 = vst.msk [vmem:[#allocation3 + $0xc0] sm:$0xff] %vm2235, %v6687
  %6855 = vst.msk [vmem:[#allocation3 + $0xc8] sm:$0xff] %vm2235, %v6689
  %6856 = vst.msk [vmem:[#allocation3 + $0xd0] sm:$0xff] %vm2235, %v6691
  %6857 = vst.msk [vmem:[#allocation3 + $0xd8] sm:$0xff] %vm2235, %v6693
  %6858 = vst.msk [vmem:[#allocation3 + $0xe0] sm:$0xff] %vm2235, %v6695
  %6859 = vst.msk [vmem:[#allocation3 + $0xe8] sm:$0xff] %vm2235, %v6697
  %6860 = vst.msk [vmem:[#allocation3 + $0xf0] sm:$0xff] %vm2235, %v6699
  %6861 = vst.msk [vmem:[#allocation3 + $0xf8] sm:$0xff] %vm2235, %v6701
  %6862 = vst.msk [vmem:[#allocation3 + $0x100] sm:$0xff] %vm2235, %v6703
  %6863 = vst.msk [vmem:[#allocation3 + $0x108] sm:$0xff] %vm2235, %v6705
  %6864 = vst.msk [vmem:[#allocation3 + $0x110] sm:$0xff] %vm2235, %v6707
  %6865 = vst.msk [vmem:[#allocation3 + $0x118] sm:$0xff] %vm2235, %v6709
  %6866 = vst.msk [vmem:[#allocation3 + $0x120] sm:$0xff] %vm2235, %v6711
  %6867 = vst.msk [vmem:[#allocation3 + $0x128] sm:$0xff] %vm2235, %v6713
  %6868 = vst.msk [vmem:[#allocation3 + $0x130] sm:$0xff] %vm2235, %v6715
  %6869 = vst.msk [vmem:[#allocation3 + $0x138] sm:$0xff] %vm2235, %v6717
  %6870 = vst.msk [vmem:[#allocation3 + $0x140] sm:$0xff] %vm2235, %v6719
  %6871 = vst.msk [vmem:[#allocation3 + $0x148] sm:$0xff] %vm2235, %v6721
  %6872 = vst.msk [vmem:[#allocation3 + $0x150] sm:$0xff] %vm2235, %v6723
  %6873 = vst.msk [vmem:[#allocation3 + $0x158] sm:$0xff] %vm2235, %v6725
  %6874 = vst.msk [vmem:[#allocation3 + $0x160] sm:$0xff] %vm2235, %v6727
  %6875 = vst.msk [vmem:[#allocation3 + $0x168] sm:$0xff] %vm2235, %v6729
  %6876 = vst.msk [vmem:[#allocation3 + $0x170] sm:$0xff] %vm2235, %v6731
  %6877 = vst.msk [vmem:[#allocation3 + $0x178] sm:$0xff] %vm2235, %v6733
  %6878 = vst.msk [vmem:[#allocation3 + $0x180] sm:$0xff] %vm2235, %v6735
  %6879 = vst.msk [vmem:[#allocation3 + $0x188] sm:$0xff] %vm2235, %v6737
  %6880 = vst.msk [vmem:[#allocation3 + $0x190] sm:$0xff] %vm2235, %v6739
  %6881 = vst.msk [vmem:[#allocation3 + $0x198] sm:$0xff] %vm2235, %v6741
  %6882 = vst.msk [vmem:[#allocation3 + $0x1a0] sm:$0xff] %vm2235, %v6743
  %6883 = vst.msk [vmem:[#allocation3 + $0x1a8] sm:$0xff] %vm2235, %v6745
  %6884 = vst.msk [vmem:[#allocation3 + $0x1b0] sm:$0xff] %vm2235, %v6747
  %6885 = vst.msk [vmem:[#allocation3 + $0x1b8] sm:$0xff] %vm2235, %v6749
  %6886 = vst.msk [vmem:[#allocation3 + $0x1c0] sm:$0xff] %vm2235, %v6751
  %6887 = vst.msk [vmem:[#allocation3 + $0x1c8] sm:$0xff] %vm2235, %v6753
  %6888 = vst.msk [vmem:[#allocation3 + $0x1d0] sm:$0xff] %vm2235, %v6755
  %6889 = vst.msk [vmem:[#allocation3 + $0x1d8] sm:$0xff] %vm2235, %v6757
  %6890 = vst.msk [vmem:[#allocation3 + $0x1e0] sm:$0xff] %vm2235, %v6759
  %6891 = vst.msk [vmem:[#allocation3 + $0x1e8] sm:$0xff] %vm2235, %v6761
  %6892 = vst.msk [vmem:[#allocation3 + $0x1f0] sm:$0xff] %vm2235, %v6763
  %6893 = vst.msk [vmem:[#allocation3 + $0x1f8] sm:$0xff] %vm2235, %v6765
  %v6894 = vld [vmem:[%s2300] sm:$0xff]
  %v6895 = vld [vmem:[%s2300 + $0x8] sm:$0xff]
  %v6896 = vld [vmem:[%s2300 + $0x18] sm:$0xff]
  %v6897 = vld [vmem:[%s2300 + $0x20] sm:$0xff]
  %v6898 = vld [vmem:[%s2300 + $0x30] sm:$0xff]
  %v6899 = vld [vmem:[%s2300 + $0x38] sm:$0xff]
  %v6900 = vld [vmem:[%s2300 + $0x48] sm:$0xff]
  %v6901 = vld [vmem:[%s2300 + $0x50] sm:$0xff]
  %v6902 = vld [vmem:[%s2300 + $0x60] sm:$0xff]
  %v6903 = vld [vmem:[%s2300 + $0x68] sm:$0xff]
  %v6904 = vld [vmem:[%s2300 + $0x78] sm:$0xff]
  %v6905 = vld [vmem:[%s2300 + $0x80] sm:$0xff]
  %v6906 = vld [vmem:[%s2300 + $0x90] sm:$0xff]
  %v6907 = vld [vmem:[%s2300 + $0x98] sm:$0xff]
  %v6908 = vld [vmem:[%s2300 + $0xa8] sm:$0xff]
  %v6909 = vld [vmem:[%s2300 + $0xb0] sm:$0xff]
  %v6910 = vld [vmem:[%s2300 + $0xc0] sm:$0xff]
  %v6911 = vld [vmem:[%s2300 + $0xc8] sm:$0xff]
  %v6912 = vld [vmem:[%s2300 + $0xd8] sm:$0xff]
  %v6913 = vld [vmem:[%s2300 + $0xe0] sm:$0xff]
  %v6914 = vld [vmem:[%s2300 + $0xf0] sm:$0xff]
  %v6915 = vld [vmem:[%s2300 + $0xf8] sm:$0xff]
  %v6916 = vld [vmem:[%s2300 + $0x108] sm:$0xff]
  %v6917 = vld [vmem:[%s2300 + $0x110] sm:$0xff]
  %v6918 = vld [vmem:[%s2300 + $0x120] sm:$0xff]
  %v6919 = vld [vmem:[%s2300 + $0x128] sm:$0xff]
  %v6920 = vld [vmem:[%s2300 + $0x138] sm:$0xff]
  %v6921 = vld [vmem:[%s2300 + $0x140] sm:$0xff]
  %v6922 = vld [vmem:[%s2300 + $0x150] sm:$0xff]
  %v6923 = vld [vmem:[%s2300 + $0x158] sm:$0xff]
  %v6924 = vld [vmem:[%s2300 + $0x168] sm:$0xff]
  %v6925 = vld [vmem:[%s2300 + $0x170] sm:$0xff]
  %v6926 = vld [vmem:[%s2300 + $0x1b0] sm:$0xff]
  %v6927 = vld [vmem:[%s2300 + $0x1b8] sm:$0xff]
  %v6928 = vld [vmem:[%s2300 + $0x1c8] sm:$0xff]
  %v6929 = vld [vmem:[%s2300 + $0x1d0] sm:$0xff]
  %v6930 = vld [vmem:[%s2300 + $0x1e0] sm:$0xff]
  %v6931 = vld [vmem:[%s2300 + $0x1e8] sm:$0xff]
  %v6932 = vld [vmem:[%s2300 + $0x1f8] sm:$0xff]
  %v6933 = vld [vmem:[%s2300 + $0x200] sm:$0xff]
  %v6934 = vld [vmem:[%s2300 + $0x210] sm:$0xff]
  %v6935 = vld [vmem:[%s2300 + $0x218] sm:$0xff]
  %v6936 = vld [vmem:[%s2300 + $0x228] sm:$0xff]
  %v6937 = vld [vmem:[%s2300 + $0x230] sm:$0xff]
  %v6938 = vld [vmem:[%s2300 + $0x240] sm:$0xff]
  %v6939 = vld [vmem:[%s2300 + $0x248] sm:$0xff]
  %v6940 = vld [vmem:[%s2300 + $0x258] sm:$0xff]
  %v6941 = vld [vmem:[%s2300 + $0x260] sm:$0xff]
  %v6942 = vld [vmem:[%s2300 + $0x270] sm:$0xff]
  %v6943 = vld [vmem:[%s2300 + $0x278] sm:$0xff]
  %v6944 = vld [vmem:[%s2300 + $0x288] sm:$0xff]
  %v6945 = vld [vmem:[%s2300 + $0x290] sm:$0xff]
  %v6946 = vld [vmem:[%s2300 + $0x2a0] sm:$0xff]
  %v6947 = vld [vmem:[%s2300 + $0x2a8] sm:$0xff]
  %v6948 = vld [vmem:[%s2300 + $0x2b8] sm:$0xff]
  %v6949 = vld [vmem:[%s2300 + $0x2c0] sm:$0xff]
  %v6950 = vld [vmem:[%s2300 + $0x2d0] sm:$0xff]
  %v6951 = vld [vmem:[%s2300 + $0x2d8] sm:$0xff]
  %v6952 = vld [vmem:[%s2300 + $0x2e8] sm:$0xff]
  %v6953 = vld [vmem:[%s2300 + $0x2f0] sm:$0xff]
  %v6954 = vld [vmem:[%s2300 + $0x300] sm:$0xff]
  %v6955 = vld [vmem:[%s2300 + $0x308] sm:$0xff]
  %v6956 = vld [vmem:[%s2300 + $0x318] sm:$0xff]
  %v6957 = vld [vmem:[%s2300 + $0x320] sm:$0xff]
  %7022 = vrot.lane.b32.xlu0 %v6894, 24
  %v7023 = vpop.permute.xlu0 %7022
  %7024 = vrot.lane.b32.xlu0 %v6895, 24
  %v7025 = vpop.permute.xlu0 %7024
  %7026 = vrot.lane.b32.xlu0 %v6896, 24
  %v7027 = vpop.permute.xlu0 %7026
  %7028 = vrot.lane.b32.xlu0 %v6897, 24
  %v7029 = vpop.permute.xlu0 %7028
  %7030 = vrot.lane.b32.xlu0 %v6898, 24
  %v7031 = vpop.permute.xlu0 %7030
  %7032 = vrot.lane.b32.xlu0 %v6899, 24
  %v7033 = vpop.permute.xlu0 %7032
  %7034 = vrot.lane.b32.xlu0 %v6900, 24
  %v7035 = vpop.permute.xlu0 %7034
  %7036 = vrot.lane.b32.xlu0 %v6901, 24
  %v7037 = vpop.permute.xlu0 %7036
  %7038 = vrot.lane.b32.xlu0 %v6902, 24
  %v7039 = vpop.permute.xlu0 %7038
  %7040 = vrot.lane.b32.xlu0 %v6903, 24
  %v7041 = vpop.permute.xlu0 %7040
  %7042 = vrot.lane.b32.xlu0 %v6904, 24
  %v7043 = vpop.permute.xlu0 %7042
  %7044 = vrot.lane.b32.xlu0 %v6905, 24
  %v7045 = vpop.permute.xlu0 %7044
  %7046 = vrot.lane.b32.xlu0 %v6906, 24
  %v7047 = vpop.permute.xlu0 %7046
  %7048 = vrot.lane.b32.xlu0 %v6907, 24
  %v7049 = vpop.permute.xlu0 %7048
  %7050 = vrot.lane.b32.xlu0 %v6908, 24
  %v7051 = vpop.permute.xlu0 %7050
  %7052 = vrot.lane.b32.xlu0 %v6909, 24
  %v7053 = vpop.permute.xlu0 %7052
  %7054 = vrot.lane.b32.xlu0 %v6910, 24
  %v7055 = vpop.permute.xlu0 %7054
  %7056 = vrot.lane.b32.xlu0 %v6911, 24
  %v7057 = vpop.permute.xlu0 %7056
  %7058 = vrot.lane.b32.xlu0 %v6912, 24
  %v7059 = vpop.permute.xlu0 %7058
  %7060 = vrot.lane.b32.xlu0 %v6913, 24
  %v7061 = vpop.permute.xlu0 %7060
  %7062 = vrot.lane.b32.xlu0 %v6914, 24
  %v7063 = vpop.permute.xlu0 %7062
  %7064 = vrot.lane.b32.xlu0 %v6915, 24
  %v7065 = vpop.permute.xlu0 %7064
  %7066 = vrot.lane.b32.xlu0 %v6916, 24
  %v7067 = vpop.permute.xlu0 %7066
  %7068 = vrot.lane.b32.xlu0 %v6917, 24
  %v7069 = vpop.permute.xlu0 %7068
  %7070 = vrot.lane.b32.xlu0 %v6918, 24
  %v7071 = vpop.permute.xlu0 %7070
  %7072 = vrot.lane.b32.xlu0 %v6919, 24
  %v7073 = vpop.permute.xlu0 %7072
  %7074 = vrot.lane.b32.xlu0 %v6920, 24
  %v7075 = vpop.permute.xlu0 %7074
  %7076 = vrot.lane.b32.xlu0 %v6921, 24
  %v7077 = vpop.permute.xlu0 %7076
  %7078 = vrot.lane.b32.xlu0 %v6922, 24
  %v7079 = vpop.permute.xlu0 %7078
  %7080 = vrot.lane.b32.xlu0 %v6923, 24
  %v7081 = vpop.permute.xlu0 %7080
  %7082 = vrot.lane.b32.xlu0 %v6924, 24
  %v7083 = vpop.permute.xlu0 %7082
  %7084 = vrot.lane.b32.xlu0 %v6925, 24
  %v7085 = vpop.permute.xlu0 %7084
  %7086 = vrot.lane.b32.xlu0 %v6926, 24
  %v7087 = vpop.permute.xlu0 %7086
  %7088 = vrot.lane.b32.xlu0 %v6927, 24
  %v7089 = vpop.permute.xlu0 %7088
  %7090 = vrot.lane.b32.xlu0 %v6928, 24
  %v7091 = vpop.permute.xlu0 %7090
  %7092 = vrot.lane.b32.xlu0 %v6929, 24
  %v7093 = vpop.permute.xlu0 %7092
  %7094 = vrot.lane.b32.xlu0 %v6930, 24
  %v7095 = vpop.permute.xlu0 %7094
  %7096 = vrot.lane.b32.xlu0 %v6931, 24
  %v7097 = vpop.permute.xlu0 %7096
  %7098 = vrot.lane.b32.xlu0 %v6932, 24
  %v7099 = vpop.permute.xlu0 %7098
  %7100 = vrot.lane.b32.xlu0 %v6933, 24
  %v7101 = vpop.permute.xlu0 %7100
  %7102 = vrot.lane.b32.xlu0 %v6934, 24
  %v7103 = vpop.permute.xlu0 %7102
  %7104 = vrot.lane.b32.xlu0 %v6935, 24
  %v7105 = vpop.permute.xlu0 %7104
  %7106 = vrot.lane.b32.xlu0 %v6936, 24
  %v7107 = vpop.permute.xlu0 %7106
  %7108 = vrot.lane.b32.xlu0 %v6937, 24
  %v7109 = vpop.permute.xlu0 %7108
  %7110 = vrot.lane.b32.xlu0 %v6938, 24
  %v7111 = vpop.permute.xlu0 %7110
  %7112 = vrot.lane.b32.xlu0 %v6939, 24
  %v7113 = vpop.permute.xlu0 %7112
  %7114 = vrot.lane.b32.xlu0 %v6940, 24
  %v7115 = vpop.permute.xlu0 %7114
  %7116 = vrot.lane.b32.xlu0 %v6941, 24
  %v7117 = vpop.permute.xlu0 %7116
  %7118 = vrot.lane.b32.xlu0 %v6942, 24
  %v7119 = vpop.permute.xlu0 %7118
  %7120 = vrot.lane.b32.xlu0 %v6943, 24
  %v7121 = vpop.permute.xlu0 %7120
  %7122 = vrot.lane.b32.xlu0 %v6944, 24
  %v7123 = vpop.permute.xlu0 %7122
  %7124 = vrot.lane.b32.xlu0 %v6945, 24
  %v7125 = vpop.permute.xlu0 %7124
  %7126 = vrot.lane.b32.xlu0 %v6946, 24
  %v7127 = vpop.permute.xlu0 %7126
  %7128 = vrot.lane.b32.xlu0 %v6947, 24
  %v7129 = vpop.permute.xlu0 %7128
  %7130 = vrot.lane.b32.xlu0 %v6948, 24
  %v7131 = vpop.permute.xlu0 %7130
  %7132 = vrot.lane.b32.xlu0 %v6949, 24
  %v7133 = vpop.permute.xlu0 %7132
  %7134 = vrot.lane.b32.xlu0 %v6950, 24
  %v7135 = vpop.permute.xlu0 %7134
  %7136 = vrot.lane.b32.xlu0 %v6951, 24
  %v7137 = vpop.permute.xlu0 %7136
  %7138 = vrot.lane.b32.xlu0 %v6952, 24
  %v7139 = vpop.permute.xlu0 %7138
  %7140 = vrot.lane.b32.xlu0 %v6953, 24
  %v7141 = vpop.permute.xlu0 %7140
  %7142 = vrot.lane.b32.xlu0 %v6954, 24
  %v7143 = vpop.permute.xlu0 %7142
  %7144 = vrot.lane.b32.xlu0 %v6955, 24
  %v7145 = vpop.permute.xlu0 %7144
  %7146 = vrot.lane.b32.xlu0 %v6956, 24
  %v7147 = vpop.permute.xlu0 %7146
  %7148 = vrot.lane.b32.xlu0 %v6957, 24
  %v7149 = vpop.permute.xlu0 %7148
  %7214 = vst.msk [vmem:[#allocation3] sm:$0xff] %vm2621, %v7023
  %7215 = vst.msk [vmem:[#allocation3 + $0x8] sm:$0xff] %vm2621, %v7025
  %7216 = vst.msk [vmem:[#allocation3 + $0x10] sm:$0xff] %vm2621, %v7027
  %7217 = vst.msk [vmem:[#allocation3 + $0x18] sm:$0xff] %vm2621, %v7029
  %7218 = vst.msk [vmem:[#allocation3 + $0x20] sm:$0xff] %vm2621, %v7031
  %7219 = vst.msk [vmem:[#allocation3 + $0x28] sm:$0xff] %vm2621, %v7033
  %7220 = vst.msk [vmem:[#allocation3 + $0x30] sm:$0xff] %vm2621, %v7035
  %7221 = vst.msk [vmem:[#allocation3 + $0x38] sm:$0xff] %vm2621, %v7037
  %7222 = vst.msk [vmem:[#allocation3 + $0x40] sm:$0xff] %vm2621, %v7039
  %7223 = vst.msk [vmem:[#allocation3 + $0x48] sm:$0xff] %vm2621, %v7041
  %7224 = vst.msk [vmem:[#allocation3 + $0x50] sm:$0xff] %vm2621, %v7043
  %7225 = vst.msk [vmem:[#allocation3 + $0x58] sm:$0xff] %vm2621, %v7045
  %7226 = vst.msk [vmem:[#allocation3 + $0x60] sm:$0xff] %vm2621, %v7047
  %7227 = vst.msk [vmem:[#allocation3 + $0x68] sm:$0xff] %vm2621, %v7049
  %7228 = vst.msk [vmem:[#allocation3 + $0x70] sm:$0xff] %vm2621, %v7051
  %7229 = vst.msk [vmem:[#allocation3 + $0x78] sm:$0xff] %vm2621, %v7053
  %7230 = vst.msk [vmem:[#allocation3 + $0x80] sm:$0xff] %vm2621, %v7055
  %7231 = vst.msk [vmem:[#allocation3 + $0x88] sm:$0xff] %vm2621, %v7057
  %7232 = vst.msk [vmem:[#allocation3 + $0x90] sm:$0xff] %vm2621, %v7059
  %7233 = vst.msk [vmem:[#allocation3 + $0x98] sm:$0xff] %vm2621, %v7061
  %7234 = vst.msk [vmem:[#allocation3 + $0xa0] sm:$0xff] %vm2621, %v7063
  %7235 = vst.msk [vmem:[#allocation3 + $0xa8] sm:$0xff] %vm2621, %v7065
  %7236 = vst.msk [vmem:[#allocation3 + $0xb0] sm:$0xff] %vm2621, %v7067
  %7237 = vst.msk [vmem:[#allocation3 + $0xb8] sm:$0xff] %vm2621, %v7069
  %7238 = vst.msk [vmem:[#allocation3 + $0xc0] sm:$0xff] %vm2621, %v7071
  %7239 = vst.msk [vmem:[#allocation3 + $0xc8] sm:$0xff] %vm2621, %v7073
  %7240 = vst.msk [vmem:[#allocation3 + $0xd0] sm:$0xff] %vm2621, %v7075
  %7241 = vst.msk [vmem:[#allocation3 + $0xd8] sm:$0xff] %vm2621, %v7077
  %7242 = vst.msk [vmem:[#allocation3 + $0xe0] sm:$0xff] %vm2621, %v7079
  %7243 = vst.msk [vmem:[#allocation3 + $0xe8] sm:$0xff] %vm2621, %v7081
  %7244 = vst.msk [vmem:[#allocation3 + $0xf0] sm:$0xff] %vm2621, %v7083
  %7245 = vst.msk [vmem:[#allocation3 + $0xf8] sm:$0xff] %vm2621, %v7085
  %7246 = vst.msk [vmem:[#allocation3 + $0x100] sm:$0xff] %vm2621, %v7087
  %7247 = vst.msk [vmem:[#allocation3 + $0x108] sm:$0xff] %vm2621, %v7089
  %7248 = vst.msk [vmem:[#allocation3 + $0x110] sm:$0xff] %vm2621, %v7091
  %7249 = vst.msk [vmem:[#allocation3 + $0x118] sm:$0xff] %vm2621, %v7093
  %7250 = vst.msk [vmem:[#allocation3 + $0x120] sm:$0xff] %vm2621, %v7095
  %7251 = vst.msk [vmem:[#allocation3 + $0x128] sm:$0xff] %vm2621, %v7097
  %7252 = vst.msk [vmem:[#allocation3 + $0x130] sm:$0xff] %vm2621, %v7099
  %7253 = vst.msk [vmem:[#allocation3 + $0x138] sm:$0xff] %vm2621, %v7101
  %7254 = vst.msk [vmem:[#allocation3 + $0x140] sm:$0xff] %vm2621, %v7103
  %7255 = vst.msk [vmem:[#allocation3 + $0x148] sm:$0xff] %vm2621, %v7105
  %7256 = vst.msk [vmem:[#allocation3 + $0x150] sm:$0xff] %vm2621, %v7107
  %7257 = vst.msk [vmem:[#allocation3 + $0x158] sm:$0xff] %vm2621, %v7109
  %7258 = vst.msk [vmem:[#allocation3 + $0x160] sm:$0xff] %vm2621, %v7111
  %7259 = vst.msk [vmem:[#allocation3 + $0x168] sm:$0xff] %vm2621, %v7113
  %7260 = vst.msk [vmem:[#allocation3 + $0x170] sm:$0xff] %vm2621, %v7115
  %7261 = vst.msk [vmem:[#allocation3 + $0x178] sm:$0xff] %vm2621, %v7117
  %7262 = vst.msk [vmem:[#allocation3 + $0x180] sm:$0xff] %vm2621, %v7119
  %7263 = vst.msk [vmem:[#allocation3 + $0x188] sm:$0xff] %vm2621, %v7121
  %7264 = vst.msk [vmem:[#allocation3 + $0x190] sm:$0xff] %vm2621, %v7123
  %7265 = vst.msk [vmem:[#allocation3 + $0x198] sm:$0xff] %vm2621, %v7125
  %7266 = vst.msk [vmem:[#allocation3 + $0x1a0] sm:$0xff] %vm2621, %v7127
  %7267 = vst.msk [vmem:[#allocation3 + $0x1a8] sm:$0xff] %vm2621, %v7129
  %7268 = vst.msk [vmem:[#allocation3 + $0x1b0] sm:$0xff] %vm2621, %v7131
  %7269 = vst.msk [vmem:[#allocation3 + $0x1b8] sm:$0xff] %vm2621, %v7133
  %7270 = vst.msk [vmem:[#allocation3 + $0x1c0] sm:$0xff] %vm2621, %v7135
  %7271 = vst.msk [vmem:[#allocation3 + $0x1c8] sm:$0xff] %vm2621, %v7137
  %7272 = vst.msk [vmem:[#allocation3 + $0x1d0] sm:$0xff] %vm2621, %v7139
  %7273 = vst.msk [vmem:[#allocation3 + $0x1d8] sm:$0xff] %vm2621, %v7141
  %7274 = vst.msk [vmem:[#allocation3 + $0x1e0] sm:$0xff] %vm2621, %v7143
  %7275 = vst.msk [vmem:[#allocation3 + $0x1e8] sm:$0xff] %vm2621, %v7145
  %7276 = vst.msk [vmem:[#allocation3 + $0x1f0] sm:$0xff] %vm2621, %v7147
  %7277 = vst.msk [vmem:[#allocation3 + $0x1f8] sm:$0xff] %vm2621, %v7149
  %v7278 = vld [vmem:[%s2300 + $0x1] sm:$0xff]
  %v7279 = vld [vmem:[%s2300 + $0x9] sm:$0xff]
  %v7280 = vld [vmem:[%s2300 + $0x19] sm:$0xff]
  %v7281 = vld [vmem:[%s2300 + $0x21] sm:$0xff]
  %v7282 = vld [vmem:[%s2300 + $0x31] sm:$0xff]
  %v7283 = vld [vmem:[%s2300 + $0x39] sm:$0xff]
  %v7284 = vld [vmem:[%s2300 + $0x49] sm:$0xff]
  %v7285 = vld [vmem:[%s2300 + $0x51] sm:$0xff]
  %v7286 = vld [vmem:[%s2300 + $0x61] sm:$0xff]
  %v7287 = vld [vmem:[%s2300 + $0x69] sm:$0xff]
  %v7288 = vld [vmem:[%s2300 + $0x79] sm:$0xff]
  %v7289 = vld [vmem:[%s2300 + $0x81] sm:$0xff]
  %v7290 = vld [vmem:[%s2300 + $0x91] sm:$0xff]
  %v7291 = vld [vmem:[%s2300 + $0x99] sm:$0xff]
  %v7292 = vld [vmem:[%s2300 + $0xa9] sm:$0xff]
  %v7293 = vld [vmem:[%s2300 + $0xb1] sm:$0xff]
  %v7294 = vld [vmem:[%s2300 + $0xc1] sm:$0xff]
  %v7295 = vld [vmem:[%s2300 + $0xc9] sm:$0xff]
  %v7296 = vld [vmem:[%s2300 + $0xd9] sm:$0xff]
  %v7297 = vld [vmem:[%s2300 + $0xe1] sm:$0xff]
  %v7298 = vld [vmem:[%s2300 + $0xf1] sm:$0xff]
  %v7299 = vld [vmem:[%s2300 + $0xf9] sm:$0xff]
  %v7300 = vld [vmem:[%s2300 + $0x109] sm:$0xff]
  %v7301 = vld [vmem:[%s2300 + $0x111] sm:$0xff]
  %v7302 = vld [vmem:[%s2300 + $0x121] sm:$0xff]
  %v7303 = vld [vmem:[%s2300 + $0x129] sm:$0xff]
  %v7304 = vld [vmem:[%s2300 + $0x139] sm:$0xff]
  %v7305 = vld [vmem:[%s2300 + $0x141] sm:$0xff]
  %v7306 = vld [vmem:[%s2300 + $0x151] sm:$0xff]
  %v7307 = vld [vmem:[%s2300 + $0x159] sm:$0xff]
  %v7308 = vld [vmem:[%s2300 + $0x169] sm:$0xff]
  %v7309 = vld [vmem:[%s2300 + $0x171] sm:$0xff]
  %v7310 = vld [vmem:[%s2300 + $0x1b1] sm:$0xff]
  %v7311 = vld [vmem:[%s2300 + $0x1b9] sm:$0xff]
  %v7312 = vld [vmem:[%s2300 + $0x1c9] sm:$0xff]
  %v7313 = vld [vmem:[%s2300 + $0x1d1] sm:$0xff]
  %v7314 = vld [vmem:[%s2300 + $0x1e1] sm:$0xff]
  %v7315 = vld [vmem:[%s2300 + $0x1e9] sm:$0xff]
  %v7316 = vld [vmem:[%s2300 + $0x1f9] sm:$0xff]
  %v7317 = vld [vmem:[%s2300 + $0x201] sm:$0xff]
  %v7318 = vld [vmem:[%s2300 + $0x211] sm:$0xff]
  %v7319 = vld [vmem:[%s2300 + $0x219] sm:$0xff]
  %v7320 = vld [vmem:[%s2300 + $0x229] sm:$0xff]
  %v7321 = vld [vmem:[%s2300 + $0x231] sm:$0xff]
  %v7322 = vld [vmem:[%s2300 + $0x241] sm:$0xff]
  %v7323 = vld [vmem:[%s2300 + $0x249] sm:$0xff]
  %v7324 = vld [vmem:[%s2300 + $0x259] sm:$0xff]
  %v7325 = vld [vmem:[%s2300 + $0x261] sm:$0xff]
  %v7326 = vld [vmem:[%s2300 + $0x271] sm:$0xff]
  %v7327 = vld [vmem:[%s2300 + $0x279] sm:$0xff]
  %v7328 = vld [vmem:[%s2300 + $0x289] sm:$0xff]
  %v7329 = vld [vmem:[%s2300 + $0x291] sm:$0xff]
  %v7330 = vld [vmem:[%s2300 + $0x2a1] sm:$0xff]
  %v7331 = vld [vmem:[%s2300 + $0x2a9] sm:$0xff]
  %v7332 = vld [vmem:[%s2300 + $0x2b9] sm:$0xff]
  %v7333 = vld [vmem:[%s2300 + $0x2c1] sm:$0xff]
  %v7334 = vld [vmem:[%s2300 + $0x2d1] sm:$0xff]
  %v7335 = vld [vmem:[%s2300 + $0x2d9] sm:$0xff]
  %v7336 = vld [vmem:[%s2300 + $0x2e9] sm:$0xff]
  %v7337 = vld [vmem:[%s2300 + $0x2f1] sm:$0xff]
  %v7338 = vld [vmem:[%s2300 + $0x301] sm:$0xff]
  %v7339 = vld [vmem:[%s2300 + $0x309] sm:$0xff]
  %v7340 = vld [vmem:[%s2300 + $0x319] sm:$0xff]
  %v7341 = vld [vmem:[%s2300 + $0x321] sm:$0xff]
  %7406 = vrot.lane.b32.xlu0 %v7278, 28
  %v7407 = vpop.permute.xlu0 %7406
  %7408 = vrot.lane.b32.xlu0 %v7279, 28
  %v7409 = vpop.permute.xlu0 %7408
  %7410 = vrot.lane.b32.xlu0 %v7280, 28
  %v7411 = vpop.permute.xlu0 %7410
  %7412 = vrot.lane.b32.xlu0 %v7281, 28
  %v7413 = vpop.permute.xlu0 %7412
  %7414 = vrot.lane.b32.xlu0 %v7282, 28
  %v7415 = vpop.permute.xlu0 %7414
  %7416 = vrot.lane.b32.xlu0 %v7283, 28
  %v7417 = vpop.permute.xlu0 %7416
  %7418 = vrot.lane.b32.xlu0 %v7284, 28
  %v7419 = vpop.permute.xlu0 %7418
  %7420 = vrot.lane.b32.xlu0 %v7285, 28
  %v7421 = vpop.permute.xlu0 %7420
  %7422 = vrot.lane.b32.xlu0 %v7286, 28
  %v7423 = vpop.permute.xlu0 %7422
  %7424 = vrot.lane.b32.xlu0 %v7287, 28
  %v7425 = vpop.permute.xlu0 %7424
  %7426 = vrot.lane.b32.xlu0 %v7288, 28
  %v7427 = vpop.permute.xlu0 %7426
  %7428 = vrot.lane.b32.xlu0 %v7289, 28
  %v7429 = vpop.permute.xlu0 %7428
  %7430 = vrot.lane.b32.xlu0 %v7290, 28
  %v7431 = vpop.permute.xlu0 %7430
  %7432 = vrot.lane.b32.xlu0 %v7291, 28
  %v7433 = vpop.permute.xlu0 %7432
  %7434 = vrot.lane.b32.xlu0 %v7292, 28
  %v7435 = vpop.permute.xlu0 %7434
  %7436 = vrot.lane.b32.xlu0 %v7293, 28
  %v7437 = vpop.permute.xlu0 %7436
  %7438 = vrot.lane.b32.xlu0 %v7294, 28
  %v7439 = vpop.permute.xlu0 %7438
  %7440 = vrot.lane.b32.xlu0 %v7295, 28
  %v7441 = vpop.permute.xlu0 %7440
  %7442 = vrot.lane.b32.xlu0 %v7296, 28
  %v7443 = vpop.permute.xlu0 %7442
  %7444 = vrot.lane.b32.xlu0 %v7297, 28
  %v7445 = vpop.permute.xlu0 %7444
  %7446 = vrot.lane.b32.xlu0 %v7298, 28
  %v7447 = vpop.permute.xlu0 %7446
  %7448 = vrot.lane.b32.xlu0 %v7299, 28
  %v7449 = vpop.permute.xlu0 %7448
  %7450 = vrot.lane.b32.xlu0 %v7300, 28
  %v7451 = vpop.permute.xlu0 %7450
  %7452 = vrot.lane.b32.xlu0 %v7301, 28
  %v7453 = vpop.permute.xlu0 %7452
  %7454 = vrot.lane.b32.xlu0 %v7302, 28
  %v7455 = vpop.permute.xlu0 %7454
  %7456 = vrot.lane.b32.xlu0 %v7303, 28
  %v7457 = vpop.permute.xlu0 %7456
  %7458 = vrot.lane.b32.xlu0 %v7304, 28
  %v7459 = vpop.permute.xlu0 %7458
  %7460 = vrot.lane.b32.xlu0 %v7305, 28
  %v7461 = vpop.permute.xlu0 %7460
  %7462 = vrot.lane.b32.xlu0 %v7306, 28
  %v7463 = vpop.permute.xlu0 %7462
  %7464 = vrot.lane.b32.xlu0 %v7307, 28
  %v7465 = vpop.permute.xlu0 %7464
  %7466 = vrot.lane.b32.xlu0 %v7308, 28
  %v7467 = vpop.permute.xlu0 %7466
  %7468 = vrot.lane.b32.xlu0 %v7309, 28
  %v7469 = vpop.permute.xlu0 %7468
  %7470 = vrot.lane.b32.xlu0 %v7310, 28
  %v7471 = vpop.permute.xlu0 %7470
  %7472 = vrot.lane.b32.xlu0 %v7311, 28
  %v7473 = vpop.permute.xlu0 %7472
  %7474 = vrot.lane.b32.xlu0 %v7312, 28
  %v7475 = vpop.permute.xlu0 %7474
  %7476 = vrot.lane.b32.xlu0 %v7313, 28
  %v7477 = vpop.permute.xlu0 %7476
  %7478 = vrot.lane.b32.xlu0 %v7314, 28
  %v7479 = vpop.permute.xlu0 %7478
  %7480 = vrot.lane.b32.xlu0 %v7315, 28
  %v7481 = vpop.permute.xlu0 %7480
  %7482 = vrot.lane.b32.xlu0 %v7316, 28
  %v7483 = vpop.permute.xlu0 %7482
  %7484 = vrot.lane.b32.xlu0 %v7317, 28
  %v7485 = vpop.permute.xlu0 %7484
  %7486 = vrot.lane.b32.xlu0 %v7318, 28
  %v7487 = vpop.permute.xlu0 %7486
  %7488 = vrot.lane.b32.xlu0 %v7319, 28
  %v7489 = vpop.permute.xlu0 %7488
  %7490 = vrot.lane.b32.xlu0 %v7320, 28
  %v7491 = vpop.permute.xlu0 %7490
  %7492 = vrot.lane.b32.xlu0 %v7321, 28
  %v7493 = vpop.permute.xlu0 %7492
  %7494 = vrot.lane.b32.xlu0 %v7322, 28
  %v7495 = vpop.permute.xlu0 %7494
  %7496 = vrot.lane.b32.xlu0 %v7323, 28
  %v7497 = vpop.permute.xlu0 %7496
  %7498 = vrot.lane.b32.xlu0 %v7324, 28
  %v7499 = vpop.permute.xlu0 %7498
  %7500 = vrot.lane.b32.xlu0 %v7325, 28
  %v7501 = vpop.permute.xlu0 %7500
  %7502 = vrot.lane.b32.xlu0 %v7326, 28
  %v7503 = vpop.permute.xlu0 %7502
  %7504 = vrot.lane.b32.xlu0 %v7327, 28
  %v7505 = vpop.permute.xlu0 %7504
  %7506 = vrot.lane.b32.xlu0 %v7328, 28
  %v7507 = vpop.permute.xlu0 %7506
  %7508 = vrot.lane.b32.xlu0 %v7329, 28
  %v7509 = vpop.permute.xlu0 %7508
  %7510 = vrot.lane.b32.xlu0 %v7330, 28
  %v7511 = vpop.permute.xlu0 %7510
  %7512 = vrot.lane.b32.xlu0 %v7331, 28
  %v7513 = vpop.permute.xlu0 %7512
  %7514 = vrot.lane.b32.xlu0 %v7332, 28
  %v7515 = vpop.permute.xlu0 %7514
  %7516 = vrot.lane.b32.xlu0 %v7333, 28
  %v7517 = vpop.permute.xlu0 %7516
  %7518 = vrot.lane.b32.xlu0 %v7334, 28
  %v7519 = vpop.permute.xlu0 %7518
  %7520 = vrot.lane.b32.xlu0 %v7335, 28
  %v7521 = vpop.permute.xlu0 %7520
  %7522 = vrot.lane.b32.xlu0 %v7336, 28
  %v7523 = vpop.permute.xlu0 %7522
  %7524 = vrot.lane.b32.xlu0 %v7337, 28
  %v7525 = vpop.permute.xlu0 %7524
  %7526 = vrot.lane.b32.xlu0 %v7338, 28
  %v7527 = vpop.permute.xlu0 %7526
  %7528 = vrot.lane.b32.xlu0 %v7339, 28
  %v7529 = vpop.permute.xlu0 %7528
  %7530 = vrot.lane.b32.xlu0 %v7340, 28
  %v7531 = vpop.permute.xlu0 %7530
  %7532 = vrot.lane.b32.xlu0 %v7341, 28
  %v7533 = vpop.permute.xlu0 %7532
  %7598 = vst.msk [vmem:[#allocation3] sm:$0xff] %vm3006, %v7407
  %7599 = vst.msk [vmem:[#allocation3 + $0x8] sm:$0xff] %vm3006, %v7409
  %7600 = vst.msk [vmem:[#allocation3 + $0x10] sm:$0xff] %vm3006, %v7411
  %7601 = vst.msk [vmem:[#allocation3 + $0x18] sm:$0xff] %vm3006, %v7413
  %7602 = vst.msk [vmem:[#allocation3 + $0x20] sm:$0xff] %vm3006, %v7415
  %7603 = vst.msk [vmem:[#allocation3 + $0x28] sm:$0xff] %vm3006, %v7417
  %7604 = vst.msk [vmem:[#allocation3 + $0x30] sm:$0xff] %vm3006, %v7419
  %7605 = vst.msk [vmem:[#allocation3 + $0x38] sm:$0xff] %vm3006, %v7421
  %7606 = vst.msk [vmem:[#allocation3 + $0x40] sm:$0xff] %vm3006, %v7423
  %7607 = vst.msk [vmem:[#allocation3 + $0x48] sm:$0xff] %vm3006, %v7425
  %7608 = vst.msk [vmem:[#allocation3 + $0x50] sm:$0xff] %vm3006, %v7427
  %7609 = vst.msk [vmem:[#allocation3 + $0x58] sm:$0xff] %vm3006, %v7429
  %7610 = vst.msk [vmem:[#allocation3 + $0x60] sm:$0xff] %vm3006, %v7431
  %7611 = vst.msk [vmem:[#allocation3 + $0x68] sm:$0xff] %vm3006, %v7433
  %7612 = vst.msk [vmem:[#allocation3 + $0x70] sm:$0xff] %vm3006, %v7435
  %7613 = vst.msk [vmem:[#allocation3 + $0x78] sm:$0xff] %vm3006, %v7437
  %7614 = vst.msk [vmem:[#allocation3 + $0x80] sm:$0xff] %vm3006, %v7439
  %7615 = vst.msk [vmem:[#allocation3 + $0x88] sm:$0xff] %vm3006, %v7441
  %7616 = vst.msk [vmem:[#allocation3 + $0x90] sm:$0xff] %vm3006, %v7443
  %7617 = vst.msk [vmem:[#allocation3 + $0x98] sm:$0xff] %vm3006, %v7445
  %7618 = vst.msk [vmem:[#allocation3 + $0xa0] sm:$0xff] %vm3006, %v7447
  %7619 = vst.msk [vmem:[#allocation3 + $0xa8] sm:$0xff] %vm3006, %v7449
  %7620 = vst.msk [vmem:[#allocation3 + $0xb0] sm:$0xff] %vm3006, %v7451
  %7621 = vst.msk [vmem:[#allocation3 + $0xb8] sm:$0xff] %vm3006, %v7453
  %7622 = vst.msk [vmem:[#allocation3 + $0xc0] sm:$0xff] %vm3006, %v7455
  %7623 = vst.msk [vmem:[#allocation3 + $0xc8] sm:$0xff] %vm3006, %v7457
  %7624 = vst.msk [vmem:[#allocation3 + $0xd0] sm:$0xff] %vm3006, %v7459
  %7625 = vst.msk [vmem:[#allocation3 + $0xd8] sm:$0xff] %vm3006, %v7461
  %7626 = vst.msk [vmem:[#allocation3 + $0xe0] sm:$0xff] %vm3006, %v7463
  %7627 = vst.msk [vmem:[#allocation3 + $0xe8] sm:$0xff] %vm3006, %v7465
  %7628 = vst.msk [vmem:[#allocation3 + $0xf0] sm:$0xff] %vm3006, %v7467
  %7629 = vst.msk [vmem:[#allocation3 + $0xf8] sm:$0xff] %vm3006, %v7469
  %7630 = vst.msk [vmem:[#allocation3 + $0x100] sm:$0xff] %vm3006, %v7471
  %7631 = vst.msk [vmem:[#allocation3 + $0x108] sm:$0xff] %vm3006, %v7473
  %7632 = vst.msk [vmem:[#allocation3 + $0x110] sm:$0xff] %vm3006, %v7475
  %7633 = vst.msk [vmem:[#allocation3 + $0x118] sm:$0xff] %vm3006, %v7477
  %7634 = vst.msk [vmem:[#allocation3 + $0x120] sm:$0xff] %vm3006, %v7479
  %7635 = vst.msk [vmem:[#allocation3 + $0x128] sm:$0xff] %vm3006, %v7481
  %7636 = vst.msk [vmem:[#allocation3 + $0x130] sm:$0xff] %vm3006, %v7483
  %7637 = vst.msk [vmem:[#allocation3 + $0x138] sm:$0xff] %vm3006, %v7485
  %7638 = vst.msk [vmem:[#allocation3 + $0x140] sm:$0xff] %vm3006, %v7487
  %7639 = vst.msk [vmem:[#allocation3 + $0x148] sm:$0xff] %vm3006, %v7489
  %7640 = vst.msk [vmem:[#allocation3 + $0x150] sm:$0xff] %vm3006, %v7491
  %7641 = vst.msk [vmem:[#allocation3 + $0x158] sm:$0xff] %vm3006, %v7493
  %7642 = vst.msk [vmem:[#allocation3 + $0x160] sm:$0xff] %vm3006, %v7495
  %7643 = vst.msk [vmem:[#allocation3 + $0x168] sm:$0xff] %vm3006, %v7497
  %7644 = vst.msk [vmem:[#allocation3 + $0x170] sm:$0xff] %vm3006, %v7499
  %7645 = vst.msk [vmem:[#allocation3 + $0x178] sm:$0xff] %vm3006, %v7501
  %7646 = vst.msk [vmem:[#allocation3 + $0x180] sm:$0xff] %vm3006, %v7503
  %7647 = vst.msk [vmem:[#allocation3 + $0x188] sm:$0xff] %vm3006, %v7505
  %7648 = vst.msk [vmem:[#allocation3 + $0x190] sm:$0xff] %vm3006, %v7507
  %7649 = vst.msk [vmem:[#allocation3 + $0x198] sm:$0xff] %vm3006, %v7509
  %7650 = vst.msk [vmem:[#allocation3 + $0x1a0] sm:$0xff] %vm3006, %v7511
  %7651 = vst.msk [vmem:[#allocation3 + $0x1a8] sm:$0xff] %vm3006, %v7513
  %7652 = vst.msk [vmem:[#allocation3 + $0x1b0] sm:$0xff] %vm3006, %v7515
  %7653 = vst.msk [vmem:[#allocation3 + $0x1b8] sm:$0xff] %vm3006, %v7517
  %7654 = vst.msk [vmem:[#allocation3 + $0x1c0] sm:$0xff] %vm3006, %v7519
  %7655 = vst.msk [vmem:[#allocation3 + $0x1c8] sm:$0xff] %vm3006, %v7521
  %7656 = vst.msk [vmem:[#allocation3 + $0x1d0] sm:$0xff] %vm3006, %v7523
  %7657 = vst.msk [vmem:[#allocation3 + $0x1d8] sm:$0xff] %vm3006, %v7525
  %7658 = vst.msk [vmem:[#allocation3 + $0x1e0] sm:$0xff] %vm3006, %v7527
  %7659 = vst.msk [vmem:[#allocation3 + $0x1e8] sm:$0xff] %vm3006, %v7529
  %7660 = vst.msk [vmem:[#allocation3 + $0x1f0] sm:$0xff] %vm3006, %v7531
  %7661 = vst.msk [vmem:[#allocation3 + $0x1f8] sm:$0xff] %vm3006, %v7533
  %v7662 = vld [vmem:[%s2300 + $0x2] sm:$0xff]
  %v7663 = vld [vmem:[%s2300 + $0xa] sm:$0xff]
  %v7664 = vld [vmem:[%s2300 + $0x1a] sm:$0xff]
  %v7665 = vld [vmem:[%s2300 + $0x22] sm:$0xff]
  %v7666 = vld [vmem:[%s2300 + $0x32] sm:$0xff]
  %v7667 = vld [vmem:[%s2300 + $0x3a] sm:$0xff]
  %v7668 = vld [vmem:[%s2300 + $0x4a] sm:$0xff]
  %v7669 = vld [vmem:[%s2300 + $0x52] sm:$0xff]
  %v7670 = vld [vmem:[%s2300 + $0x62] sm:$0xff]
  %v7671 = vld [vmem:[%s2300 + $0x6a] sm:$0xff]
  %v7672 = vld [vmem:[%s2300 + $0x7a] sm:$0xff]
  %v7673 = vld [vmem:[%s2300 + $0x82] sm:$0xff]
  %v7674 = vld [vmem:[%s2300 + $0x92] sm:$0xff]
  %v7675 = vld [vmem:[%s2300 + $0x9a] sm:$0xff]
  %v7676 = vld [vmem:[%s2300 + $0xaa] sm:$0xff]
  %v7677 = vld [vmem:[%s2300 + $0xb2] sm:$0xff]
  %v7678 = vld [vmem:[%s2300 + $0xc2] sm:$0xff]
  %v7679 = vld [vmem:[%s2300 + $0xca] sm:$0xff]
  %v7680 = vld [vmem:[%s2300 + $0xda] sm:$0xff]
  %v7681 = vld [vmem:[%s2300 + $0xe2] sm:$0xff]
  %v7682 = vld [vmem:[%s2300 + $0xf2] sm:$0xff]
  %v7683 = vld [vmem:[%s2300 + $0xfa] sm:$0xff]
  %v7684 = vld [vmem:[%s2300 + $0x10a] sm:$0xff]
  %v7685 = vld [vmem:[%s2300 + $0x112] sm:$0xff]
  %v7686 = vld [vmem:[%s2300 + $0x122] sm:$0xff]
  %v7687 = vld [vmem:[%s2300 + $0x12a] sm:$0xff]
  %v7688 = vld [vmem:[%s2300 + $0x13a] sm:$0xff]
  %v7689 = vld [vmem:[%s2300 + $0x142] sm:$0xff]
  %v7690 = vld [vmem:[%s2300 + $0x152] sm:$0xff]
  %v7691 = vld [vmem:[%s2300 + $0x15a] sm:$0xff]
  %v7692 = vld [vmem:[%s2300 + $0x16a] sm:$0xff]
  %v7693 = vld [vmem:[%s2300 + $0x172] sm:$0xff]
  %v7694 = vld [vmem:[%s2300 + $0x1b2] sm:$0xff]
  %v7695 = vld [vmem:[%s2300 + $0x1ba] sm:$0xff]
  %v7696 = vld [vmem:[%s2300 + $0x1ca] sm:$0xff]
  %v7697 = vld [vmem:[%s2300 + $0x1d2] sm:$0xff]
  %v7698 = vld [vmem:[%s2300 + $0x1e2] sm:$0xff]
  %v7699 = vld [vmem:[%s2300 + $0x1ea] sm:$0xff]
  %v7700 = vld [vmem:[%s2300 + $0x1fa] sm:$0xff]
  %v7701 = vld [vmem:[%s2300 + $0x202] sm:$0xff]
  %v7702 = vld [vmem:[%s2300 + $0x212] sm:$0xff]
  %v7703 = vld [vmem:[%s2300 + $0x21a] sm:$0xff]
  %v7704 = vld [vmem:[%s2300 + $0x22a] sm:$0xff]
  %v7705 = vld [vmem:[%s2300 + $0x232] sm:$0xff]
  %v7706 = vld [vmem:[%s2300 + $0x242] sm:$0xff]
  %v7707 = vld [vmem:[%s2300 + $0x24a] sm:$0xff]
  %v7708 = vld [vmem:[%s2300 + $0x25a] sm:$0xff]
  %v7709 = vld [vmem:[%s2300 + $0x262] sm:$0xff]
  %v7710 = vld [vmem:[%s2300 + $0x272] sm:$0xff]
  %v7711 = vld [vmem:[%s2300 + $0x27a] sm:$0xff]
  %v7712 = vld [vmem:[%s2300 + $0x28a] sm:$0xff]
  %v7713 = vld [vmem:[%s2300 + $0x292] sm:$0xff]
  %v7714 = vld [vmem:[%s2300 + $0x2a2] sm:$0xff]
  %v7715 = vld [vmem:[%s2300 + $0x2aa] sm:$0xff]
  %v7716 = vld [vmem:[%s2300 + $0x2ba] sm:$0xff]
  %v7717 = vld [vmem:[%s2300 + $0x2c2] sm:$0xff]
  %v7718 = vld [vmem:[%s2300 + $0x2d2] sm:$0xff]
  %v7719 = vld [vmem:[%s2300 + $0x2da] sm:$0xff]
  %v7720 = vld [vmem:[%s2300 + $0x2ea] sm:$0xff]
  %v7721 = vld [vmem:[%s2300 + $0x2f2] sm:$0xff]
  %v7722 = vld [vmem:[%s2300 + $0x302] sm:$0xff]
  %v7723 = vld [vmem:[%s2300 + $0x30a] sm:$0xff]
  %v7724 = vld [vmem:[%s2300 + $0x31a] sm:$0xff]
  %v7725 = vld [vmem:[%s2300 + $0x322] sm:$0xff]
  %7790 = vrot.lane.b32.xlu0 %v7662, 32
  %v7791 = vpop.permute.xlu0 %7790
  %7792 = vrot.lane.b32.xlu0 %v7663, 32
  %v7793 = vpop.permute.xlu0 %7792
  %7794 = vrot.lane.b32.xlu0 %v7664, 32
  %v7795 = vpop.permute.xlu0 %7794
  %7796 = vrot.lane.b32.xlu0 %v7665, 32
  %v7797 = vpop.permute.xlu0 %7796
  %7798 = vrot.lane.b32.xlu0 %v7666, 32
  %v7799 = vpop.permute.xlu0 %7798
  %7800 = vrot.lane.b32.xlu0 %v7667, 32
  %v7801 = vpop.permute.xlu0 %7800
  %7802 = vrot.lane.b32.xlu0 %v7668, 32
  %v7803 = vpop.permute.xlu0 %7802
  %7804 = vrot.lane.b32.xlu0 %v7669, 32
  %v7805 = vpop.permute.xlu0 %7804
  %7806 = vrot.lane.b32.xlu0 %v7670, 32
  %v7807 = vpop.permute.xlu0 %7806
  %7808 = vrot.lane.b32.xlu0 %v7671, 32
  %v7809 = vpop.permute.xlu0 %7808
  %7810 = vrot.lane.b32.xlu0 %v7672, 32
  %v7811 = vpop.permute.xlu0 %7810
  %7812 = vrot.lane.b32.xlu0 %v7673, 32
  %v7813 = vpop.permute.xlu0 %7812
  %7814 = vrot.lane.b32.xlu0 %v7674, 32
  %v7815 = vpop.permute.xlu0 %7814
  %7816 = vrot.lane.b32.xlu0 %v7675, 32
  %v7817 = vpop.permute.xlu0 %7816
  %7818 = vrot.lane.b32.xlu0 %v7676, 32
  %v7819 = vpop.permute.xlu0 %7818
  %7820 = vrot.lane.b32.xlu0 %v7677, 32
  %v7821 = vpop.permute.xlu0 %7820
  %7822 = vrot.lane.b32.xlu0 %v7678, 32
  %v7823 = vpop.permute.xlu0 %7822
  %7824 = vrot.lane.b32.xlu0 %v7679, 32
  %v7825 = vpop.permute.xlu0 %7824
  %7826 = vrot.lane.b32.xlu0 %v7680, 32
  %v7827 = vpop.permute.xlu0 %7826
  %7828 = vrot.lane.b32.xlu0 %v7681, 32
  %v7829 = vpop.permute.xlu0 %7828
  %7830 = vrot.lane.b32.xlu0 %v7682, 32
  %v7831 = vpop.permute.xlu0 %7830
  %7832 = vrot.lane.b32.xlu0 %v7683, 32
  %v7833 = vpop.permute.xlu0 %7832
  %7834 = vrot.lane.b32.xlu0 %v7684, 32
  %v7835 = vpop.permute.xlu0 %7834
  %7836 = vrot.lane.b32.xlu0 %v7685, 32
  %v7837 = vpop.permute.xlu0 %7836
  %7838 = vrot.lane.b32.xlu0 %v7686, 32
  %v7839 = vpop.permute.xlu0 %7838
  %7840 = vrot.lane.b32.xlu0 %v7687, 32
  %v7841 = vpop.permute.xlu0 %7840
  %7842 = vrot.lane.b32.xlu0 %v7688, 32
  %v7843 = vpop.permute.xlu0 %7842
  %7844 = vrot.lane.b32.xlu0 %v7689, 32
  %v7845 = vpop.permute.xlu0 %7844
  %7846 = vrot.lane.b32.xlu0 %v7690, 32
  %v7847 = vpop.permute.xlu0 %7846
  %7848 = vrot.lane.b32.xlu0 %v7691, 32
  %v7849 = vpop.permute.xlu0 %7848
  %7850 = vrot.lane.b32.xlu0 %v7692, 32
  %v7851 = vpop.permute.xlu0 %7850
  %7852 = vrot.lane.b32.xlu0 %v7693, 32
  %v7853 = vpop.permute.xlu0 %7852
  %7854 = vrot.lane.b32.xlu0 %v7694, 32
  %v7855 = vpop.permute.xlu0 %7854
  %7856 = vrot.lane.b32.xlu0 %v7695, 32
  %v7857 = vpop.permute.xlu0 %7856
  %7858 = vrot.lane.b32.xlu0 %v7696, 32
  %v7859 = vpop.permute.xlu0 %7858
  %7860 = vrot.lane.b32.xlu0 %v7697, 32
  %v7861 = vpop.permute.xlu0 %7860
  %7862 = vrot.lane.b32.xlu0 %v7698, 32
  %v7863 = vpop.permute.xlu0 %7862
  %7864 = vrot.lane.b32.xlu0 %v7699, 32
  %v7865 = vpop.permute.xlu0 %7864
  %7866 = vrot.lane.b32.xlu0 %v7700, 32
  %v7867 = vpop.permute.xlu0 %7866
  %7868 = vrot.lane.b32.xlu0 %v7701, 32
  %v7869 = vpop.permute.xlu0 %7868
  %7870 = vrot.lane.b32.xlu0 %v7702, 32
  %v7871 = vpop.permute.xlu0 %7870
  %7872 = vrot.lane.b32.xlu0 %v7703, 32
  %v7873 = vpop.permute.xlu0 %7872
  %7874 = vrot.lane.b32.xlu0 %v7704, 32
  %v7875 = vpop.permute.xlu0 %7874
  %7876 = vrot.lane.b32.xlu0 %v7705, 32
  %v7877 = vpop.permute.xlu0 %7876
  %7878 = vrot.lane.b32.xlu0 %v7706, 32
  %v7879 = vpop.permute.xlu0 %7878
  %7880 = vrot.lane.b32.xlu0 %v7707, 32
  %v7881 = vpop.permute.xlu0 %7880
  %7882 = vrot.lane.b32.xlu0 %v7708, 32
  %v7883 = vpop.permute.xlu0 %7882
  %7884 = vrot.lane.b32.xlu0 %v7709, 32
  %v7885 = vpop.permute.xlu0 %7884
  %7886 = vrot.lane.b32.xlu0 %v7710, 32
  %v7887 = vpop.permute.xlu0 %7886
  %7888 = vrot.lane.b32.xlu0 %v7711, 32
  %v7889 = vpop.permute.xlu0 %7888
  %7890 = vrot.lane.b32.xlu0 %v7712, 32
  %v7891 = vpop.permute.xlu0 %7890
  %7892 = vrot.lane.b32.xlu0 %v7713, 32
  %v7893 = vpop.permute.xlu0 %7892
  %7894 = vrot.lane.b32.xlu0 %v7714, 32
  %v7895 = vpop.permute.xlu0 %7894
  %7896 = vrot.lane.b32.xlu0 %v7715, 32
  %v7897 = vpop.permute.xlu0 %7896
  %7898 = vrot.lane.b32.xlu0 %v7716, 32
  %v7899 = vpop.permute.xlu0 %7898
  %7900 = vrot.lane.b32.xlu0 %v7717, 32
  %v7901 = vpop.permute.xlu0 %7900
  %7902 = vrot.lane.b32.xlu0 %v7718, 32
  %v7903 = vpop.permute.xlu0 %7902
  %7904 = vrot.lane.b32.xlu0 %v7719, 32
  %v7905 = vpop.permute.xlu0 %7904
  %7906 = vrot.lane.b32.xlu0 %v7720, 32
  %v7907 = vpop.permute.xlu0 %7906
  %7908 = vrot.lane.b32.xlu0 %v7721, 32
  %v7909 = vpop.permute.xlu0 %7908
  %7910 = vrot.lane.b32.xlu0 %v7722, 32
  %v7911 = vpop.permute.xlu0 %7910
  %7912 = vrot.lane.b32.xlu0 %v7723, 32
  %v7913 = vpop.permute.xlu0 %7912
  %7914 = vrot.lane.b32.xlu0 %v7724, 32
  %v7915 = vpop.permute.xlu0 %7914
  %7916 = vrot.lane.b32.xlu0 %v7725, 32
  %v7917 = vpop.permute.xlu0 %7916
  %7982 = vst.msk [vmem:[#allocation3] sm:$0xff] %vm3391, %v7791
  %7983 = vst.msk [vmem:[#allocation3 + $0x8] sm:$0xff] %vm3391, %v7793
  %7984 = vst.msk [vmem:[#allocation3 + $0x10] sm:$0xff] %vm3391, %v7795
  %7985 = vst.msk [vmem:[#allocation3 + $0x18] sm:$0xff] %vm3391, %v7797
  %7986 = vst.msk [vmem:[#allocation3 + $0x20] sm:$0xff] %vm3391, %v7799
  %7987 = vst.msk [vmem:[#allocation3 + $0x28] sm:$0xff] %vm3391, %v7801
  %7988 = vst.msk [vmem:[#allocation3 + $0x30] sm:$0xff] %vm3391, %v7803
  %7989 = vst.msk [vmem:[#allocation3 + $0x38] sm:$0xff] %vm3391, %v7805
  %7990 = vst.msk [vmem:[#allocation3 + $0x40] sm:$0xff] %vm3391, %v7807
  %7991 = vst.msk [vmem:[#allocation3 + $0x48] sm:$0xff] %vm3391, %v7809
  %7992 = vst.msk [vmem:[#allocation3 + $0x50] sm:$0xff] %vm3391, %v7811
  %7993 = vst.msk [vmem:[#allocation3 + $0x58] sm:$0xff] %vm3391, %v7813
  %7994 = vst.msk [vmem:[#allocation3 + $0x60] sm:$0xff] %vm3391, %v7815
  %7995 = vst.msk [vmem:[#allocation3 + $0x68] sm:$0xff] %vm3391, %v7817
  %7996 = vst.msk [vmem:[#allocation3 + $0x70] sm:$0xff] %vm3391, %v7819
  %7997 = vst.msk [vmem:[#allocation3 + $0x78] sm:$0xff] %vm3391, %v7821
  %7998 = vst.msk [vmem:[#allocation3 + $0x80] sm:$0xff] %vm3391, %v7823
  %7999 = vst.msk [vmem:[#allocation3 + $0x88] sm:$0xff] %vm3391, %v7825
  %8000 = vst.msk [vmem:[#allocation3 + $0x90] sm:$0xff] %vm3391, %v7827
  %8001 = vst.msk [vmem:[#allocation3 + $0x98] sm:$0xff] %vm3391, %v7829
  %8002 = vst.msk [vmem:[#allocation3 + $0xa0] sm:$0xff] %vm3391, %v7831
  %8003 = vst.msk [vmem:[#allocation3 + $0xa8] sm:$0xff] %vm3391, %v7833
  %8004 = vst.msk [vmem:[#allocation3 + $0xb0] sm:$0xff] %vm3391, %v7835
  %8005 = vst.msk [vmem:[#allocation3 + $0xb8] sm:$0xff] %vm3391, %v7837
  %8006 = vst.msk [vmem:[#allocation3 + $0xc0] sm:$0xff] %vm3391, %v7839
  %8007 = vst.msk [vmem:[#allocation3 + $0xc8] sm:$0xff] %vm3391, %v7841
  %8008 = vst.msk [vmem:[#allocation3 + $0xd0] sm:$0xff] %vm3391, %v7843
  %8009 = vst.msk [vmem:[#allocation3 + $0xd8] sm:$0xff] %vm3391, %v7845
  %8010 = vst.msk [vmem:[#allocation3 + $0xe0] sm:$0xff] %vm3391, %v7847
  %8011 = vst.msk [vmem:[#allocation3 + $0xe8] sm:$0xff] %vm3391, %v7849
  %8012 = vst.msk [vmem:[#allocation3 + $0xf0] sm:$0xff] %vm3391, %v7851
  %8013 = vst.msk [vmem:[#allocation3 + $0xf8] sm:$0xff] %vm3391, %v7853
  %8014 = vst.msk [vmem:[#allocation3 + $0x100] sm:$0xff] %vm3391, %v7855
  %8015 = vst.msk [vmem:[#allocation3 + $0x108] sm:$0xff] %vm3391, %v7857
  %8016 = vst.msk [vmem:[#allocation3 + $0x110] sm:$0xff] %vm3391, %v7859
  %8017 = vst.msk [vmem:[#allocation3 + $0x118] sm:$0xff] %vm3391, %v7861
  %8018 = vst.msk [vmem:[#allocation3 + $0x120] sm:$0xff] %vm3391, %v7863
  %8019 = vst.msk [vmem:[#allocation3 + $0x128] sm:$0xff] %vm3391, %v7865
  %8020 = vst.msk [vmem:[#allocation3 + $0x130] sm:$0xff] %vm3391, %v7867
  %8021 = vst.msk [vmem:[#allocation3 + $0x138] sm:$0xff] %vm3391, %v7869
  %8022 = vst.msk [vmem:[#allocation3 + $0x140] sm:$0xff] %vm3391, %v7871
  %8023 = vst.msk [vmem:[#allocation3 + $0x148] sm:$0xff] %vm3391, %v7873
  %8024 = vst.msk [vmem:[#allocation3 + $0x150] sm:$0xff] %vm3391, %v7875
  %8025 = vst.msk [vmem:[#allocation3 + $0x158] sm:$0xff] %vm3391, %v7877
  %8026 = vst.msk [vmem:[#allocation3 + $0x160] sm:$0xff] %vm3391, %v7879
  %8027 = vst.msk [vmem:[#allocation3 + $0x168] sm:$0xff] %vm3391, %v7881
  %8028 = vst.msk [vmem:[#allocation3 + $0x170] sm:$0xff] %vm3391, %v7883
  %8029 = vst.msk [vmem:[#allocation3 + $0x178] sm:$0xff] %vm3391, %v7885
  %8030 = vst.msk [vmem:[#allocation3 + $0x180] sm:$0xff] %vm3391, %v7887
  %8031 = vst.msk [vmem:[#allocation3 + $0x188] sm:$0xff] %vm3391, %v7889
  %8032 = vst.msk [vmem:[#allocation3 + $0x190] sm:$0xff] %vm3391, %v7891
  %8033 = vst.msk [vmem:[#allocation3 + $0x198] sm:$0xff] %vm3391, %v7893
  %8034 = vst.msk [vmem:[#allocation3 + $0x1a0] sm:$0xff] %vm3391, %v7895
  %8035 = vst.msk [vmem:[#allocation3 + $0x1a8] sm:$0xff] %vm3391, %v7897
  %8036 = vst.msk [vmem:[#allocation3 + $0x1b0] sm:$0xff] %vm3391, %v7899
  %8037 = vst.msk [vmem:[#allocation3 + $0x1b8] sm:$0xff] %vm3391, %v7901
  %8038 = vst.msk [vmem:[#allocation3 + $0x1c0] sm:$0xff] %vm3391, %v7903
  %8039 = vst.msk [vmem:[#allocation3 + $0x1c8] sm:$0xff] %vm3391, %v7905
  %8040 = vst.msk [vmem:[#allocation3 + $0x1d0] sm:$0xff] %vm3391, %v7907
  %8041 = vst.msk [vmem:[#allocation3 + $0x1d8] sm:$0xff] %vm3391, %v7909
  %8042 = vst.msk [vmem:[#allocation3 + $0x1e0] sm:$0xff] %vm3391, %v7911
  %8043 = vst.msk [vmem:[#allocation3 + $0x1e8] sm:$0xff] %vm3391, %v7913
  %8044 = vst.msk [vmem:[#allocation3 + $0x1f0] sm:$0xff] %vm3391, %v7915
  %8045 = vst.msk [vmem:[#allocation3 + $0x1f8] sm:$0xff] %vm3391, %v7917
  %v8046 = vld [vmem:[#allocation3] sm:$0xff]
  %v8047 = vld [vmem:[#allocation3 + $0x8] sm:$0xff]
  %v8048 = vld [vmem:[#allocation3 + $0x10] sm:$0xff]
  %v8049 = vld [vmem:[#allocation3 + $0x18] sm:$0xff]
  %v8050 = vld [vmem:[#allocation3 + $0x20] sm:$0xff]
  %v8051 = vld [vmem:[#allocation3 + $0x28] sm:$0xff]
  %v8052 = vld [vmem:[#allocation3 + $0x30] sm:$0xff]
  %v8053 = vld [vmem:[#allocation3 + $0x38] sm:$0xff]
  %v8054 = vld [vmem:[#allocation3 + $0x40] sm:$0xff]
  %v8055 = vld [vmem:[#allocation3 + $0x48] sm:$0xff]
  %v8056 = vld [vmem:[#allocation3 + $0x50] sm:$0xff]
  %v8057 = vld [vmem:[#allocation3 + $0x58] sm:$0xff]
  %v8058 = vld [vmem:[#allocation3 + $0x60] sm:$0xff]
  %v8059 = vld [vmem:[#allocation3 + $0x68] sm:$0xff]
  %v8060 = vld [vmem:[#allocation3 + $0x70] sm:$0xff]
  %v8061 = vld [vmem:[#allocation3 + $0x78] sm:$0xff]
  %v8062 = vld [vmem:[#allocation3 + $0x80] sm:$0xff]
  %v8063 = vld [vmem:[#allocation3 + $0x88] sm:$0xff]
  %v8064 = vld [vmem:[#allocation3 + $0x90] sm:$0xff]
  %v8065 = vld [vmem:[#allocation3 + $0x98] sm:$0xff]
  %v8066 = vld [vmem:[#allocation3 + $0xa0] sm:$0xff]
  %v8067 = vld [vmem:[#allocation3 + $0xa8] sm:$0xff]
  %v8068 = vld [vmem:[#allocation3 + $0xb0] sm:$0xff]
  %v8069 = vld [vmem:[#allocation3 + $0xb8] sm:$0xff]
  %v8070 = vld [vmem:[#allocation3 + $0xc0] sm:$0xff]
  %v8071 = vld [vmem:[#allocation3 + $0xc8] sm:$0xff]
  %v8072 = vld [vmem:[#allocation3 + $0xd0] sm:$0xff]
  %v8073 = vld [vmem:[#allocation3 + $0xd8] sm:$0xff]
  %v8074 = vld [vmem:[#allocation3 + $0xe0] sm:$0xff]
  %v8075 = vld [vmem:[#allocation3 + $0xe8] sm:$0xff]
  %v8076 = vld [vmem:[#allocation3 + $0xf0] sm:$0xff]
  %v8077 = vld [vmem:[#allocation3 + $0xf8] sm:$0xff]
  %v8078 = vld [vmem:[#allocation3 + $0x100] sm:$0xff]
  %v8079 = vld [vmem:[#allocation3 + $0x108] sm:$0xff]
  %v8080 = vld [vmem:[#allocation3 + $0x110] sm:$0xff]
  %v8081 = vld [vmem:[#allocation3 + $0x118] sm:$0xff]
  %v8082 = vld [vmem:[#allocation3 + $0x120] sm:$0xff]
  %v8083 = vld [vmem:[#allocation3 + $0x128] sm:$0xff]
  %v8084 = vld [vmem:[#allocation3 + $0x130] sm:$0xff]
  %v8085 = vld [vmem:[#allocation3 + $0x138] sm:$0xff]
  %v8086 = vld [vmem:[#allocation3 + $0x140] sm:$0xff]
  %v8087 = vld [vmem:[#allocation3 + $0x148] sm:$0xff]
  %v8088 = vld [vmem:[#allocation3 + $0x150] sm:$0xff]
  %v8089 = vld [vmem:[#allocation3 + $0x158] sm:$0xff]
  %v8090 = vld [vmem:[#allocation3 + $0x160] sm:$0xff]
  %v8091 = vld [vmem:[#allocation3 + $0x168] sm:$0xff]
  %v8092 = vld [vmem:[#allocation3 + $0x170] sm:$0xff]
  %v8093 = vld [vmem:[#allocation3 + $0x178] sm:$0xff]
  %v8094 = vld [vmem:[#allocation3 + $0x180] sm:$0xff]
  %v8095 = vld [vmem:[#allocation3 + $0x188] sm:$0xff]
  %v8096 = vld [vmem:[#allocation3 + $0x190] sm:$0xff]
  %v8097 = vld [vmem:[#allocation3 + $0x198] sm:$0xff]
  %v8098 = vld [vmem:[#allocation3 + $0x1a0] sm:$0xff]
  %v8099 = vld [vmem:[#allocation3 + $0x1a8] sm:$0xff]
  %v8100 = vld [vmem:[#allocation3 + $0x1b0] sm:$0xff]
  %v8101 = vld [vmem:[#allocation3 + $0x1b8] sm:$0xff]
  %v8102 = vld [vmem:[#allocation3 + $0x1c0] sm:$0xff]
  %v8103 = vld [vmem:[#allocation3 + $0x1c8] sm:$0xff]
  %v8104 = vld [vmem:[#allocation3 + $0x1d0] sm:$0xff]
  %v8105 = vld [vmem:[#allocation3 + $0x1d8] sm:$0xff]
  %v8106 = vld [vmem:[#allocation3 + $0x1e0] sm:$0xff]
  %v8107 = vld [vmem:[#allocation3 + $0x1e8] sm:$0xff]
  %v8108 = vld [vmem:[#allocation3 + $0x1f0] sm:$0xff]
  %v8109 = vld [vmem:[#allocation3 + $0x1f8] sm:$0xff]
  %v8110 = vld [vmem:[%s5] sm:$0xff]
  %v8111 = vld [vmem:[%s5 + $0x8] sm:$0xff]
  %v8112 = vld [vmem:[%s5 + $0x10] sm:$0xff]
  %v8113 = vld [vmem:[%s5 + $0x18] sm:$0xff]
  %v8114 = vld [vmem:[%s5 + $0x20] sm:$0xf]
  %v8116 = vsel %vm3525, %v8046, 0
  %v8119 = vsel %vm3525, %v8047, 0
  %v8122 = vsel %vm3525, %v8048, 0
  %v8125 = vsel %vm3525, %v8049, 0
  %v8128 = vsel %vm3525, %v8050, 0
  %v8131 = vsel %vm3525, %v8051, 0
  %v8134 = vsel %vm3525, %v8052, 0
  %v8137 = vsel %vm3525, %v8053, 0
  %v8140 = vsel %vm3525, %v8054, 0
  %v8143 = vsel %vm3525, %v8055, 0
  %v8146 = vsel %vm3525, %v8056, 0
  %v8149 = vsel %vm3525, %v8057, 0
  %v8152 = vsel %vm3525, %v8058, 0
  %v8155 = vsel %vm3525, %v8059, 0
  %v8158 = vsel %vm3525, %v8060, 0
  %v8161 = vsel %vm3525, %v8061, 0
  %v8164 = vsel %vm3525, %v8062, 0
  %v8167 = vsel %vm3525, %v8063, 0
  %v8170 = vsel %vm3525, %v8064, 0
  %v8173 = vsel %vm3525, %v8065, 0
  %v8176 = vsel %vm3525, %v8066, 0
  %v8179 = vsel %vm3525, %v8067, 0
  %v8182 = vsel %vm3525, %v8068, 0
  %v8185 = vsel %vm3525, %v8069, 0
  %v8188 = vsel %vm3525, %v8070, 0
  %v8191 = vsel %vm3525, %v8071, 0
  %v8194 = vsel %vm3525, %v8072, 0
  %v8197 = vsel %vm3525, %v8073, 0
  %v8200 = vsel %vm3525, %v8074, 0
  %v8203 = vsel %vm3525, %v8075, 0
  %v8206 = vsel %vm3525, %v8076, 0
  %v8209 = vsel %vm3525, %v8077, 0
  %v8212 = vsel %vm3525, %v8078, 0
  %v8215 = vsel %vm3525, %v8079, 0
  %v8218 = vsel %vm3525, %v8080, 0
  %v8221 = vsel %vm3525, %v8081, 0
  %v8224 = vsel %vm3525, %v8082, 0
  %v8227 = vsel %vm3525, %v8083, 0
  %v8230 = vsel %vm3525, %v8084, 0
  %v8233 = vsel %vm3525, %v8085, 0
  %v8236 = vsel %vm3525, %v8086, 0
  %v8239 = vsel %vm3525, %v8087, 0
  %v8242 = vsel %vm3525, %v8088, 0
  %v8245 = vsel %vm3525, %v8089, 0
  %v8248 = vsel %vm3525, %v8090, 0
  %v8251 = vsel %vm3525, %v8091, 0
  %v8254 = vsel %vm3525, %v8092, 0
  %v8257 = vsel %vm3525, %v8093, 0
  %v8260 = vsel %vm3525, %v8094, 0
  %v8263 = vsel %vm3525, %v8095, 0
  %v8266 = vsel %vm3525, %v8096, 0
  %v8269 = vsel %vm3525, %v8097, 0
  %v8272 = vsel %vm3525, %v8098, 0
  %v8275 = vsel %vm3525, %v8099, 0
  %v8278 = vsel %vm3525, %v8100, 0
  %v8281 = vsel %vm3525, %v8101, 0
  %v8284 = vsel %vm3525, %v8102, 0
  %v8287 = vsel %vm3525, %v8103, 0
  %v8290 = vsel %vm3525, %v8104, 0
  %v8293 = vsel %vm3525, %v8105, 0
  %v8296 = vsel %vm3525, %v8106, 0
  %v8299 = vsel %vm3525, %v8107, 0
  %v8302 = vsel %vm3525, %v8108, 0
  %v8305 = vsel %vm3525, %v8109, 0
  %v8308 = vsel %vm3718, %v8114, 0
  %8310 = vmatprep.subr.mxu0 0.0
  %8311 = vmatpush1.msra.mxu0 0.0
  %8312 = vmatprep.subr.mxu0 0.0
  %8313 = vmatpush1.msra.mxu0 0.0
  %8314 = vmatprep.subr.mxu0 0.0
  %8315 = vmatpush1.msra.mxu0 0.0
  %8316 = vmatprep.subr.mxu0 0.0
  %8317 = vmatpush1.msra.mxu0 0.0
  %8318 = vmatprep.subr.mxu0 0.0
  %8319 = vmatpush1.msra.mxu0 0.0
  %8320 = vmatprep.subr.mxu0 0.0
  %8321 = vmatpush1.msra.mxu0 0.0
  %8322 = vmatprep.subr.mxu0 0.0
  %8323 = vmatpush1.msra.mxu0 0.0
  %8324 = vmatprep.subr.mxu0 0.0
  %8325 = vmatpush1.msra.mxu0 0.0
  %8326 = vmatprep.subr.mxu0 0.0
  %8327 = vmatpush1.msra.mxu0 0.0
  %8328 = vmatprep.subr.mxu0 0.0
  %8329 = vmatpush1.msra.mxu0 0.0
  %8330 = vmatprep.subr.mxu0 0.0
  %8331 = vmatpush1.msra.mxu0 0.0
  %8332 = vmatprep.subr.mxu0 0.0
  %8333 = vmatpush1.msra.mxu0 %v8308
  %8334 = vmatprep.subr.mxu0 0.0
  %8335 = vmatpush1.msra.mxu0 %v8113
  %8336 = vmatprep.subr.mxu0 0.0
  %8337 = vmatpush1.msra.mxu0 %v8112
  %8338 = vmatprep.subr.mxu0 0.0
  %8339 = vmatpush1.msra.mxu0 %v8111
  %8340 = vmatprep.subr.mxu0 0.0
  %8341 = vmatpush1.msra.mxu0 %v8110
  %8342 = vmatprep.subr.mxu0 0.0
  %8343 = vmatpush2.msra.mxu0 0.0
  %8344 = vmatprep.subr.mxu0 0.0
  %8345 = vmatpush2.msra.mxu0 0.0
  %8346 = vmatprep.subr.mxu0 0.0
  %8347 = vmatpush2.msra.mxu0 0.0
  %8348 = vmatprep.subr.mxu0 0.0
  %8349 = vmatpush2.msra.mxu0 0.0
  %8350 = vmatprep.subr.mxu0 0.0
  %8351 = vmatpush2.msra.mxu0 0.0
  %8352 = vmatprep.subr.mxu0 0.0
  %8353 = vmatpush2.msra.mxu0 0.0
  %8354 = vmatprep.subr.mxu0 0.0
  %8355 = vmatpush2.msra.mxu0 0.0
  %8356 = vmatprep.subr.mxu0 0.0
  %8357 = vmatpush2.msra.mxu0 0.0
  %8358 = vmatprep.subr.mxu0 0.0
  %8359 = vmatpush2.msra.mxu0 0.0
  %8360 = vmatprep.subr.mxu0 0.0
  %8361 = vmatpush2.msra.mxu0 0.0
  %8362 = vmatprep.subr.mxu0 0.0
  %8363 = vmatpush2.msra.mxu0 0.0
  %8364 = vmatprep.subr.mxu0 0.0
  %8365 = vmatpush2.msra.mxu0 0.0
  %8366 = vmatprep.subr.mxu0 0.0
  %8367 = vmatpush2.msra.mxu0 0.0
  %8368 = vmatprep.subr.mxu0 0.0
  %8369 = vmatpush2.msra.mxu0 0.0
  %8370 = vmatprep.subr.mxu0 0.0
  %8371 = vmatpush2.msra.mxu0 0.0
  %8372 = vmatprep.subr.mxu0 0.0
  %8373 = vmatpush2.msra.mxu0 0.0
  %8374 = vmatprep.mubr.f32.mxu0 0.0
  %8375 = vmatmul.mubr.f32.gmra.mxu0 %v8116
  %v8376 = vpop.f32.mrf.mxu0
  %v8377 = vadd.f32 0.0, %v8376
  %v8378 = vpop.f32.mrf.mxu0
  %8379 = vmatprep.mubr.f32.mxu0 0.0
  %8380 = vmatmul.mubr.f32.gmra.mxu0 %v8119
  %v8381 = vpop.f32.mrf.mxu0
  %v8382 = vadd.f32 0.0, %v8381
  %v8383 = vpop.f32.mrf.mxu0
  %8384 = vmatprep.mubr.f32.mxu0 0.0
  %8385 = vmatmul.mubr.f32.gmra.mxu0 %v8122
  %v8386 = vpop.f32.mrf.mxu0
  %v8387 = vadd.f32 0.0, %v8386
  %v8388 = vpop.f32.mrf.mxu0
  %8389 = vmatprep.mubr.f32.mxu0 0.0
  %8390 = vmatmul.mubr.f32.gmra.mxu0 %v8125
  %v8391 = vpop.f32.mrf.mxu0
  %v8392 = vadd.f32 0.0, %v8391
  %v8393 = vpop.f32.mrf.mxu0
  %8394 = vmatprep.mubr.f32.mxu0 0.0
  %8395 = vmatmul.mubr.f32.gmra.mxu0 %v8128
  %v8396 = vpop.f32.mrf.mxu0
  %v8397 = vadd.f32 0.0, %v8396
  %v8398 = vpop.f32.mrf.mxu0
  %8399 = vmatprep.mubr.f32.mxu0 0.0
  %8400 = vmatmul.mubr.f32.gmra.mxu0 %v8131
  %v8401 = vpop.f32.mrf.mxu0
  %v8402 = vadd.f32 0.0, %v8401
  %v8403 = vpop.f32.mrf.mxu0
  %8404 = vmatprep.mubr.f32.mxu0 0.0
  %8405 = vmatmul.mubr.f32.gmra.mxu0 %v8134
  %v8406 = vpop.f32.mrf.mxu0
  %v8407 = vadd.f32 0.0, %v8406
  %v8408 = vpop.f32.mrf.mxu0
  %8409 = vmatprep.mubr.f32.mxu0 0.0
  %8410 = vmatmul.mubr.f32.gmra.mxu0 %v8137
  %v8411 = vpop.f32.mrf.mxu0
  %v8412 = vadd.f32 0.0, %v8411
  %v8413 = vpop.f32.mrf.mxu0
  %8414 = vmatprep.mubr.f32.mxu0 0.0
  %8415 = vmatmul.mubr.f32.gmra.mxu0 %v8140
  %v8416 = vpop.f32.mrf.mxu0
  %v8417 = vadd.f32 0.0, %v8416
  %v8418 = vpop.f32.mrf.mxu0
  %8419 = vmatprep.mubr.f32.mxu0 0.0
  %8420 = vmatmul.mubr.f32.gmra.mxu0 %v8143
  %v8421 = vpop.f32.mrf.mxu0
  %v8422 = vadd.f32 0.0, %v8421
  %v8423 = vpop.f32.mrf.mxu0
  %8424 = vmatprep.mubr.f32.mxu0 0.0
  %8425 = vmatmul.mubr.f32.gmra.mxu0 %v8146
  %v8426 = vpop.f32.mrf.mxu0
  %v8427 = vadd.f32 0.0, %v8426
  %v8428 = vpop.f32.mrf.mxu0
  %8429 = vmatprep.mubr.f32.mxu0 0.0
  %8430 = vmatmul.mubr.f32.gmra.mxu0 %v8149
  %v8431 = vpop.f32.mrf.mxu0
  %v8432 = vadd.f32 0.0, %v8431
  %v8433 = vpop.f32.mrf.mxu0
  %8434 = vmatprep.mubr.f32.mxu0 0.0
  %8435 = vmatmul.mubr.f32.gmra.mxu0 %v8152
  %v8436 = vpop.f32.mrf.mxu0
  %v8437 = vadd.f32 0.0, %v8436
  %v8438 = vpop.f32.mrf.mxu0
  %8439 = vmatprep.mubr.f32.mxu0 0.0
  %8440 = vmatmul.mubr.f32.gmra.mxu0 %v8155
  %v8441 = vpop.f32.mrf.mxu0
  %v8442 = vadd.f32 0.0, %v8441
  %v8443 = vpop.f32.mrf.mxu0
  %8444 = vmatprep.mubr.f32.mxu0 0.0
  %8445 = vmatmul.mubr.f32.gmra.mxu0 %v8158
  %v8446 = vpop.f32.mrf.mxu0
  %v8447 = vadd.f32 0.0, %v8446
  %v8448 = vpop.f32.mrf.mxu0
  %8449 = vmatprep.mubr.f32.mxu0 0.0
  %8450 = vmatmul.mubr.f32.gmra.mxu0 %v8161
  %v8451 = vpop.f32.mrf.mxu0
  %v8452 = vadd.f32 0.0, %v8451
  %v8453 = vpop.f32.mrf.mxu0
  %8454 = vmatprep.mubr.f32.mxu0 0.0
  %8455 = vmatmul.mubr.f32.gmra.mxu0 %v8164
  %v8456 = vpop.f32.mrf.mxu0
  %v8457 = vadd.f32 0.0, %v8456
  %v8458 = vpop.f32.mrf.mxu0
  %8459 = vmatprep.mubr.f32.mxu0 0.0
  %8460 = vmatmul.mubr.f32.gmra.mxu0 %v8167
  %v8461 = vpop.f32.mrf.mxu0
  %v8462 = vadd.f32 0.0, %v8461
  %v8463 = vpop.f32.mrf.mxu0
  %8464 = vmatprep.mubr.f32.mxu0 0.0
  %8465 = vmatmul.mubr.f32.gmra.mxu0 %v8170
  %v8466 = vpop.f32.mrf.mxu0
  %v8467 = vadd.f32 0.0, %v8466
  %v8468 = vpop.f32.mrf.mxu0
  %8469 = vmatprep.mubr.f32.mxu0 0.0
  %8470 = vmatmul.mubr.f32.gmra.mxu0 %v8173
  %v8471 = vpop.f32.mrf.mxu0
  %v8472 = vadd.f32 0.0, %v8471
  %v8473 = vpop.f32.mrf.mxu0
  %8474 = vmatprep.mubr.f32.mxu0 0.0
  %8475 = vmatmul.mubr.f32.gmra.mxu0 %v8176
  %v8476 = vpop.f32.mrf.mxu0
  %v8477 = vadd.f32 0.0, %v8476
  %v8478 = vpop.f32.mrf.mxu0
  %8479 = vmatprep.mubr.f32.mxu0 0.0
  %8480 = vmatmul.mubr.f32.gmra.mxu0 %v8179
  %v8481 = vpop.f32.mrf.mxu0
  %v8482 = vadd.f32 0.0, %v8481
  %v8483 = vpop.f32.mrf.mxu0
  %8484 = vmatprep.mubr.f32.mxu0 0.0
  %8485 = vmatmul.mubr.f32.gmra.mxu0 %v8182
  %v8486 = vpop.f32.mrf.mxu0
  %v8487 = vadd.f32 0.0, %v8486
  %v8488 = vpop.f32.mrf.mxu0
  %8489 = vmatprep.mubr.f32.mxu0 0.0
  %8490 = vmatmul.mubr.f32.gmra.mxu0 %v8185
  %v8491 = vpop.f32.mrf.mxu0
  %v8492 = vadd.f32 0.0, %v8491
  %v8493 = vpop.f32.mrf.mxu0
  %8494 = vmatprep.mubr.f32.mxu0 0.0
  %8495 = vmatmul.mubr.f32.gmra.mxu0 %v8188
  %v8496 = vpop.f32.mrf.mxu0
  %v8497 = vadd.f32 0.0, %v8496
  %v8498 = vpop.f32.mrf.mxu0
  %8499 = vmatprep.mubr.f32.mxu0 0.0
  %8500 = vmatmul.mubr.f32.gmra.mxu0 %v8191
  %v8501 = vpop.f32.mrf.mxu0
  %v8502 = vadd.f32 0.0, %v8501
  %v8503 = vpop.f32.mrf.mxu0
  %8504 = vmatprep.mubr.f32.mxu0 0.0
  %8505 = vmatmul.mubr.f32.gmra.mxu0 %v8194
  %v8506 = vpop.f32.mrf.mxu0
  %v8507 = vadd.f32 0.0, %v8506
  %v8508 = vpop.f32.mrf.mxu0
  %8509 = vmatprep.mubr.f32.mxu0 0.0
  %8510 = vmatmul.mubr.f32.gmra.mxu0 %v8197
  %v8511 = vpop.f32.mrf.mxu0
  %v8512 = vadd.f32 0.0, %v8511
  %v8513 = vpop.f32.mrf.mxu0
  %8514 = vmatprep.mubr.f32.mxu0 0.0
  %8515 = vmatmul.mubr.f32.gmra.mxu0 %v8200
  %v8516 = vpop.f32.mrf.mxu0
  %v8517 = vadd.f32 0.0, %v8516
  %v8518 = vpop.f32.mrf.mxu0
  %8519 = vmatprep.mubr.f32.mxu0 0.0
  %8520 = vmatmul.mubr.f32.gmra.mxu0 %v8203
  %v8521 = vpop.f32.mrf.mxu0
  %v8522 = vadd.f32 0.0, %v8521
  %v8523 = vpop.f32.mrf.mxu0
  %8524 = vmatprep.mubr.f32.mxu0 0.0
  %8525 = vmatmul.mubr.f32.gmra.mxu0 %v8206
  %v8526 = vpop.f32.mrf.mxu0
  %v8527 = vadd.f32 0.0, %v8526
  %v8528 = vpop.f32.mrf.mxu0
  %8529 = vmatprep.mubr.f32.mxu0 0.0
  %8530 = vmatmul.mubr.f32.gmra.mxu0 %v8209
  %v8531 = vpop.f32.mrf.mxu0
  %v8532 = vadd.f32 0.0, %v8531
  %v8533 = vpop.f32.mrf.mxu0
  %8534 = vmatprep.mubr.f32.mxu0 0.0
  %8535 = vmatmul.mubr.f32.gmra.mxu0 %v8212
  %v8536 = vpop.f32.mrf.mxu0
  %v8537 = vadd.f32 0.0, %v8536
  %v8538 = vpop.f32.mrf.mxu0
  %8539 = vmatprep.mubr.f32.mxu0 0.0
  %8540 = vmatmul.mubr.f32.gmra.mxu0 %v8215
  %v8541 = vpop.f32.mrf.mxu0
  %v8542 = vadd.f32 0.0, %v8541
  %v8543 = vpop.f32.mrf.mxu0
  %8544 = vmatprep.mubr.f32.mxu0 0.0
  %8545 = vmatmul.mubr.f32.gmra.mxu0 %v8218
  %v8546 = vpop.f32.mrf.mxu0
  %v8547 = vadd.f32 0.0, %v8546
  %v8548 = vpop.f32.mrf.mxu0
  %8549 = vmatprep.mubr.f32.mxu0 0.0
  %8550 = vmatmul.mubr.f32.gmra.mxu0 %v8221
  %v8551 = vpop.f32.mrf.mxu0
  %v8552 = vadd.f32 0.0, %v8551
  %v8553 = vpop.f32.mrf.mxu0
  %8554 = vmatprep.mubr.f32.mxu0 0.0
  %8555 = vmatmul.mubr.f32.gmra.mxu0 %v8224
  %v8556 = vpop.f32.mrf.mxu0
  %v8557 = vadd.f32 0.0, %v8556
  %v8558 = vpop.f32.mrf.mxu0
  %8559 = vmatprep.mubr.f32.mxu0 0.0
  %8560 = vmatmul.mubr.f32.gmra.mxu0 %v8227
  %v8561 = vpop.f32.mrf.mxu0
  %v8562 = vadd.f32 0.0, %v8561
  %v8563 = vpop.f32.mrf.mxu0
  %8564 = vmatprep.mubr.f32.mxu0 0.0
  %8565 = vmatmul.mubr.f32.gmra.mxu0 %v8230
  %v8566 = vpop.f32.mrf.mxu0
  %v8567 = vadd.f32 0.0, %v8566
  %v8568 = vpop.f32.mrf.mxu0
  %8569 = vmatprep.mubr.f32.mxu0 0.0
  %8570 = vmatmul.mubr.f32.gmra.mxu0 %v8233
  %v8571 = vpop.f32.mrf.mxu0
  %v8572 = vadd.f32 0.0, %v8571
  %v8573 = vpop.f32.mrf.mxu0
  %8574 = vmatprep.mubr.f32.mxu0 0.0
  %8575 = vmatmul.mubr.f32.gmra.mxu0 %v8236
  %v8576 = vpop.f32.mrf.mxu0
  %v8577 = vadd.f32 0.0, %v8576
  %v8578 = vpop.f32.mrf.mxu0
  %8579 = vmatprep.mubr.f32.mxu0 0.0
  %8580 = vmatmul.mubr.f32.gmra.mxu0 %v8239
  %v8581 = vpop.f32.mrf.mxu0
  %v8582 = vadd.f32 0.0, %v8581
  %v8583 = vpop.f32.mrf.mxu0
  %8584 = vmatprep.mubr.f32.mxu0 0.0
  %8585 = vmatmul.mubr.f32.gmra.mxu0 %v8242
  %v8586 = vpop.f32.mrf.mxu0
  %v8587 = vadd.f32 0.0, %v8586
  %v8588 = vpop.f32.mrf.mxu0
  %8589 = vmatprep.mubr.f32.mxu0 0.0
  %8590 = vmatmul.mubr.f32.gmra.mxu0 %v8245
  %v8591 = vpop.f32.mrf.mxu0
  %v8592 = vadd.f32 0.0, %v8591
  %v8593 = vpop.f32.mrf.mxu0
  %8594 = vmatprep.mubr.f32.mxu0 0.0
  %8595 = vmatmul.mubr.f32.gmra.mxu0 %v8248
  %v8596 = vpop.f32.mrf.mxu0
  %v8597 = vadd.f32 0.0, %v8596
  %v8598 = vpop.f32.mrf.mxu0
  %8599 = vmatprep.mubr.f32.mxu0 0.0
  %8600 = vmatmul.mubr.f32.gmra.mxu0 %v8251
  %v8601 = vpop.f32.mrf.mxu0
  %v8602 = vadd.f32 0.0, %v8601
  %v8603 = vpop.f32.mrf.mxu0
  %8604 = vmatprep.mubr.f32.mxu0 0.0
  %8605 = vmatmul.mubr.f32.gmra.mxu0 %v8254
  %v8606 = vpop.f32.mrf.mxu0
  %v8607 = vadd.f32 0.0, %v8606
  %v8608 = vpop.f32.mrf.mxu0
  %8609 = vmatprep.mubr.f32.mxu0 0.0
  %8610 = vmatmul.mubr.f32.gmra.mxu0 %v8257
  %v8611 = vpop.f32.mrf.mxu0
  %v8612 = vadd.f32 0.0, %v8611
  %v8613 = vpop.f32.mrf.mxu0
  %8614 = vmatprep.mubr.f32.mxu0 0.0
  %8615 = vmatmul.mubr.f32.gmra.mxu0 %v8260
  %v8616 = vpop.f32.mrf.mxu0
  %v8617 = vadd.f32 0.0, %v8616
  %v8618 = vpop.f32.mrf.mxu0
  %8619 = vmatprep.mubr.f32.mxu0 0.0
  %8620 = vmatmul.mubr.f32.gmra.mxu0 %v8263
  %v8621 = vpop.f32.mrf.mxu0
  %v8622 = vadd.f32 0.0, %v8621
  %v8623 = vpop.f32.mrf.mxu0
  %8624 = vmatprep.mubr.f32.mxu0 0.0
  %8625 = vmatmul.mubr.f32.gmra.mxu0 %v8266
  %v8626 = vpop.f32.mrf.mxu0
  %v8627 = vadd.f32 0.0, %v8626
  %v8628 = vpop.f32.mrf.mxu0
  %8629 = vmatprep.mubr.f32.mxu0 0.0
  %8630 = vmatmul.mubr.f32.gmra.mxu0 %v8269
  %v8631 = vpop.f32.mrf.mxu0
  %v8632 = vadd.f32 0.0, %v8631
  %v8633 = vpop.f32.mrf.mxu0
  %8634 = vmatprep.mubr.f32.mxu0 0.0
  %8635 = vmatmul.mubr.f32.gmra.mxu0 %v8272
  %v8636 = vpop.f32.mrf.mxu0
  %v8637 = vadd.f32 0.0, %v8636
  %v8638 = vpop.f32.mrf.mxu0
  %8639 = vmatprep.mubr.f32.mxu0 0.0
  %8640 = vmatmul.mubr.f32.gmra.mxu0 %v8275
  %v8641 = vpop.f32.mrf.mxu0
  %v8642 = vadd.f32 0.0, %v8641
  %v8643 = vpop.f32.mrf.mxu0
  %8644 = vmatprep.mubr.f32.mxu0 0.0
  %8645 = vmatmul.mubr.f32.gmra.mxu0 %v8278
  %v8646 = vpop.f32.mrf.mxu0
  %v8647 = vadd.f32 0.0, %v8646
  %v8648 = vpop.f32.mrf.mxu0
  %8649 = vmatprep.mubr.f32.mxu0 0.0
  %8650 = vmatmul.mubr.f32.gmra.mxu0 %v8281
  %v8651 = vpop.f32.mrf.mxu0
  %v8652 = vadd.f32 0.0, %v8651
  %v8653 = vpop.f32.mrf.mxu0
  %8654 = vmatprep.mubr.f32.mxu0 0.0
  %8655 = vmatmul.mubr.f32.gmra.mxu0 %v8284
  %v8656 = vpop.f32.mrf.mxu0
  %v8657 = vadd.f32 0.0, %v8656
  %v8658 = vpop.f32.mrf.mxu0
  %8659 = vmatprep.mubr.f32.mxu0 0.0
  %8660 = vmatmul.mubr.f32.gmra.mxu0 %v8287
  %v8661 = vpop.f32.mrf.mxu0
  %v8662 = vadd.f32 0.0, %v8661
  %v8663 = vpop.f32.mrf.mxu0
  %8664 = vmatprep.mubr.f32.mxu0 0.0
  %8665 = vmatmul.mubr.f32.gmra.mxu0 %v8290
  %v8666 = vpop.f32.mrf.mxu0
  %v8667 = vadd.f32 0.0, %v8666
  %v8668 = vpop.f32.mrf.mxu0
  %8669 = vmatprep.mubr.f32.mxu0 0.0
  %8670 = vmatmul.mubr.f32.gmra.mxu0 %v8293
  %v8671 = vpop.f32.mrf.mxu0
  %v8672 = vadd.f32 0.0, %v8671
  %v8673 = vpop.f32.mrf.mxu0
  %8674 = vmatprep.mubr.f32.mxu0 0.0
  %8675 = vmatmul.mubr.f32.gmra.mxu0 %v8296
  %v8676 = vpop.f32.mrf.mxu0
  %v8677 = vadd.f32 0.0, %v8676
  %v8678 = vpop.f32.mrf.mxu0
  %8679 = vmatprep.mubr.f32.mxu0 0.0
  %8680 = vmatmul.mubr.f32.gmra.mxu0 %v8299
  %v8681 = vpop.f32.mrf.mxu0
  %v8682 = vadd.f32 0.0, %v8681
  %v8683 = vpop.f32.mrf.mxu0
  %8684 = vmatprep.mubr.f32.mxu0 0.0
  %8685 = vmatmul.mubr.f32.gmra.mxu0 %v8302
  %v8686 = vpop.f32.mrf.mxu0
  %v8687 = vadd.f32 0.0, %v8686
  %v8688 = vpop.f32.mrf.mxu0
  %8689 = vmatprep.mubr.f32.mxu0 0.0
  %8690 = vmatmul.mubr.f32.gmra.mxu0 %v8305
  %v8691 = vpop.f32.mrf.mxu0
  %v8692 = vadd.f32 0.0, %v8691
  %v8693 = vpop.f32.mrf.mxu0
  %8694 = vdwg.mxu0
  %v8695 = vsel %vm30, %v8377, 0.0
  %v8696 = vsel %vm30, %v8382, 0.0
  %v8697 = vadd.f32 %v8695, %v8696
  %v8698 = vsel %vm30, %v8387, 0.0
  %v8699 = vadd.f32 %v8697, %v8698
  %v8700 = vsel %vm30, %v8392, 0.0
  %v8701 = vadd.f32 %v8699, %v8700
  %v8702 = vsel %vm30, %v8397, 0.0
  %v8703 = vadd.f32 %v8701, %v8702
  %v8704 = vsel %vm30, %v8402, 0.0
  %v8705 = vadd.f32 %v8703, %v8704
  %v8706 = vsel %vm30, %v8407, 0.0
  %v8707 = vadd.f32 %v8705, %v8706
  %v8708 = vsel %vm30, %v8412, 0.0
  %v8709 = vadd.f32 %v8707, %v8708
  %v8710 = vsel %vm30, %v8417, 0.0
  %v8711 = vadd.f32 %v8709, %v8710
  %v8712 = vsel %vm30, %v8422, 0.0
  %v8713 = vadd.f32 %v8711, %v8712
  %v8714 = vsel %vm30, %v8427, 0.0
  %v8715 = vadd.f32 %v8713, %v8714
  %v8716 = vsel %vm30, %v8432, 0.0
  %v8717 = vadd.f32 %v8715, %v8716
  %v8718 = vsel %vm30, %v8437, 0.0
  %v8719 = vadd.f32 %v8717, %v8718
  %v8720 = vsel %vm30, %v8442, 0.0
  %v8721 = vadd.f32 %v8719, %v8720
  %v8722 = vsel %vm30, %v8447, 0.0
  %v8723 = vadd.f32 %v8721, %v8722
  %v8724 = vsel %vm30, %v8452, 0.0
  %v8725 = vadd.f32 %v8723, %v8724
  %v8726 = vsel %vm30, %v8457, 0.0
  %v8727 = vadd.f32 %v8725, %v8726
  %v8728 = vsel %vm30, %v8462, 0.0
  %v8729 = vadd.f32 %v8727, %v8728
  %v8730 = vsel %vm30, %v8467, 0.0
  %v8731 = vadd.f32 %v8729, %v8730
  %v8732 = vsel %vm30, %v8472, 0.0
  %v8733 = vadd.f32 %v8731, %v8732
  %v8734 = vsel %vm30, %v8477, 0.0
  %v8735 = vadd.f32 %v8733, %v8734
  %v8736 = vsel %vm30, %v8482, 0.0
  %v8737 = vadd.f32 %v8735, %v8736
  %v8738 = vsel %vm30, %v8487, 0.0
  %v8739 = vadd.f32 %v8737, %v8738
  %v8740 = vsel %vm30, %v8492, 0.0
  %v8741 = vadd.f32 %v8739, %v8740
  %v8742 = vsel %vm30, %v8497, 0.0
  %v8743 = vadd.f32 %v8741, %v8742
  %v8744 = vsel %vm30, %v8502, 0.0
  %v8745 = vadd.f32 %v8743, %v8744
  %v8746 = vsel %vm30, %v8507, 0.0
  %v8747 = vadd.f32 %v8745, %v8746
  %v8748 = vsel %vm30, %v8512, 0.0
  %v8749 = vadd.f32 %v8747, %v8748
  %v8750 = vsel %vm30, %v8517, 0.0
  %v8751 = vadd.f32 %v8749, %v8750
  %v8752 = vsel %vm30, %v8522, 0.0
  %v8753 = vadd.f32 %v8751, %v8752
  %v8754 = vsel %vm30, %v8527, 0.0
  %v8755 = vadd.f32 %v8753, %v8754
  %v8756 = vsel %vm30, %v8532, 0.0
  %v8757 = vadd.f32 %v8755, %v8756
  %v8758 = vsel %vm30, %v8537, 0.0
  %v8759 = vadd.f32 %v8757, %v8758
  %v8760 = vsel %vm30, %v8542, 0.0
  %v8761 = vadd.f32 %v8759, %v8760
  %v8762 = vsel %vm30, %v8547, 0.0
  %v8763 = vadd.f32 %v8761, %v8762
  %v8764 = vsel %vm30, %v8552, 0.0
  %v8765 = vadd.f32 %v8763, %v8764
  %v8766 = vsel %vm30, %v8557, 0.0
  %v8767 = vadd.f32 %v8765, %v8766
  %v8768 = vsel %vm30, %v8562, 0.0
  %v8769 = vadd.f32 %v8767, %v8768
  %v8770 = vsel %vm30, %v8567, 0.0
  %v8771 = vadd.f32 %v8769, %v8770
  %v8772 = vsel %vm30, %v8572, 0.0
  %v8773 = vadd.f32 %v8771, %v8772
  %v8774 = vsel %vm30, %v8577, 0.0
  %v8775 = vadd.f32 %v8773, %v8774
  %v8776 = vsel %vm30, %v8582, 0.0
  %v8777 = vadd.f32 %v8775, %v8776
  %v8778 = vsel %vm30, %v8587, 0.0
  %v8779 = vadd.f32 %v8777, %v8778
  %v8780 = vsel %vm30, %v8592, 0.0
  %v8781 = vadd.f32 %v8779, %v8780
  %v8782 = vsel %vm30, %v8597, 0.0
  %v8783 = vadd.f32 %v8781, %v8782
  %v8784 = vsel %vm30, %v8602, 0.0
  %v8785 = vadd.f32 %v8783, %v8784
  %v8786 = vsel %vm30, %v8607, 0.0
  %v8787 = vadd.f32 %v8785, %v8786
  %v8788 = vsel %vm30, %v8612, 0.0
  %v8789 = vadd.f32 %v8787, %v8788
  %v8790 = vsel %vm30, %v8617, 0.0
  %v8791 = vadd.f32 %v8789, %v8790
  %v8792 = vsel %vm30, %v8622, 0.0
  %v8793 = vadd.f32 %v8791, %v8792
  %v8794 = vsel %vm30, %v8627, 0.0
  %v8795 = vadd.f32 %v8793, %v8794
  %v8796 = vsel %vm30, %v8632, 0.0
  %v8797 = vadd.f32 %v8795, %v8796
  %v8798 = vsel %vm30, %v8637, 0.0
  %v8799 = vadd.f32 %v8797, %v8798
  %v8800 = vsel %vm30, %v8642, 0.0
  %v8801 = vadd.f32 %v8799, %v8800
  %v8802 = vsel %vm30, %v8647, 0.0
  %v8803 = vadd.f32 %v8801, %v8802
  %v8804 = vsel %vm30, %v8652, 0.0
  %v8805 = vadd.f32 %v8803, %v8804
  %v8806 = vsel %vm30, %v8657, 0.0
  %v8807 = vadd.f32 %v8805, %v8806
  %v8808 = vsel %vm30, %v8662, 0.0
  %v8809 = vadd.f32 %v8807, %v8808
  %v8810 = vsel %vm30, %v8667, 0.0
  %v8811 = vadd.f32 %v8809, %v8810
  %v8812 = vsel %vm30, %v8672, 0.0
  %v8813 = vadd.f32 %v8811, %v8812
  %v8814 = vsel %vm30, %v8677, 0.0
  %v8815 = vadd.f32 %v8813, %v8814
  %v8816 = vsel %vm30, %v8682, 0.0
  %v8817 = vadd.f32 %v8815, %v8816
  %v8818 = vsel %vm30, %v8687, 0.0
  %v8819 = vadd.f32 %v8817, %v8818
  %v8820 = vsel %vm30, %v8692, 0.0
  %v8821 = vadd.f32 %v8819, %v8820
  %v8822 = vrot.slane %v8821, 4
  %v8823 = vadd.f32 %v8821, %v8822
  %v8824 = vrot.slane %v8823, 2
  %v8825 = vadd.f32 %v8823, %v8824
  %v8826 = vrot.slane %v8825, 1
  %v8827 = vadd.f32 %v8825, %v8826
  %v8828 = vmul.f32 %v8377, %v8377
  %v8829 = vmul.f32 %v8382, %v8382
  %v8830 = vmul.f32 %v8387, %v8387
  %v8831 = vmul.f32 %v8392, %v8392
  %v8832 = vmul.f32 %v8397, %v8397
  %v8833 = vmul.f32 %v8402, %v8402
  %v8834 = vmul.f32 %v8407, %v8407
  %v8835 = vmul.f32 %v8412, %v8412
  %v8836 = vmul.f32 %v8417, %v8417
  %v8837 = vmul.f32 %v8422, %v8422
  %v8838 = vmul.f32 %v8427, %v8427
  %v8839 = vmul.f32 %v8432, %v8432
  %v8840 = vmul.f32 %v8437, %v8437
  %v8841 = vmul.f32 %v8442, %v8442
  %v8842 = vmul.f32 %v8447, %v8447
  %v8843 = vmul.f32 %v8452, %v8452
  %v8844 = vmul.f32 %v8457, %v8457
  %v8845 = vmul.f32 %v8462, %v8462
  %v8846 = vmul.f32 %v8467, %v8467
  %v8847 = vmul.f32 %v8472, %v8472
  %v8848 = vmul.f32 %v8477, %v8477
  %v8849 = vmul.f32 %v8482, %v8482
  %v8850 = vmul.f32 %v8487, %v8487
  %v8851 = vmul.f32 %v8492, %v8492
  %v8852 = vmul.f32 %v8497, %v8497
  %v8853 = vmul.f32 %v8502, %v8502
  %v8854 = vmul.f32 %v8507, %v8507
  %v8855 = vmul.f32 %v8512, %v8512
  %v8856 = vmul.f32 %v8517, %v8517
  %v8857 = vmul.f32 %v8522, %v8522
  %v8858 = vmul.f32 %v8527, %v8527
  %v8859 = vmul.f32 %v8532, %v8532
  %v8860 = vmul.f32 %v8537, %v8537
  %v8861 = vmul.f32 %v8542, %v8542
  %v8862 = vmul.f32 %v8547, %v8547
  %v8863 = vmul.f32 %v8552, %v8552
  %v8864 = vmul.f32 %v8557, %v8557
  %v8865 = vmul.f32 %v8562, %v8562
  %v8866 = vmul.f32 %v8567, %v8567
  %v8867 = vmul.f32 %v8572, %v8572
  %v8868 = vmul.f32 %v8577, %v8577
  %v8869 = vmul.f32 %v8582, %v8582
  %v8870 = vmul.f32 %v8587, %v8587
  %v8871 = vmul.f32 %v8592, %v8592
  %v8872 = vmul.f32 %v8597, %v8597
  %v8873 = vmul.f32 %v8602, %v8602
  %v8874 = vmul.f32 %v8607, %v8607
  %v8875 = vmul.f32 %v8612, %v8612
  %v8876 = vmul.f32 %v8617, %v8617
  %v8877 = vmul.f32 %v8622, %v8622
  %v8878 = vmul.f32 %v8627, %v8627
  %v8879 = vmul.f32 %v8632, %v8632
  %v8880 = vmul.f32 %v8637, %v8637
  %v8881 = vmul.f32 %v8642, %v8642
  %v8882 = vmul.f32 %v8647, %v8647
  %v8883 = vmul.f32 %v8652, %v8652
  %v8884 = vmul.f32 %v8657, %v8657
  %v8885 = vmul.f32 %v8662, %v8662
  %v8886 = vmul.f32 %v8667, %v8667
  %v8887 = vmul.f32 %v8672, %v8672
  %v8888 = vmul.f32 %v8677, %v8677
  %v8889 = vmul.f32 %v8682, %v8682
  %v8890 = vmul.f32 %v8687, %v8687
  %v8891 = vmul.f32 %v8692, %v8692
  %v8892 = vsel %vm30, %v8828, 0.0
  %v8893 = vsel %vm30, %v8829, 0.0
  %v8894 = vadd.f32 %v8892, %v8893
  %v8895 = vsel %vm30, %v8830, 0.0
  %v8896 = vadd.f32 %v8894, %v8895
  %v8897 = vsel %vm30, %v8831, 0.0
  %v8898 = vadd.f32 %v8896, %v8897
  %v8899 = vsel %vm30, %v8832, 0.0
  %v8900 = vadd.f32 %v8898, %v8899
  %v8901 = vsel %vm30, %v8833, 0.0
  %v8902 = vadd.f32 %v8900, %v8901
  %v8903 = vsel %vm30, %v8834, 0.0
  %v8904 = vadd.f32 %v8902, %v8903
  %v8905 = vsel %vm30, %v8835, 0.0
  %v8906 = vadd.f32 %v8904, %v8905
  %v8907 = vsel %vm30, %v8836, 0.0
  %v8908 = vadd.f32 %v8906, %v8907
  %v8909 = vsel %vm30, %v8837, 0.0
  %v8910 = vadd.f32 %v8908, %v8909
  %v8911 = vsel %vm30, %v8838, 0.0
  %v8912 = vadd.f32 %v8910, %v8911
  %v8913 = vsel %vm30, %v8839, 0.0
  %v8914 = vadd.f32 %v8912, %v8913
  %v8915 = vsel %vm30, %v8840, 0.0
  %v8916 = vadd.f32 %v8914, %v8915
  %v8917 = vsel %vm30, %v8841, 0.0
  %v8918 = vadd.f32 %v8916, %v8917
  %v8919 = vsel %vm30, %v8842, 0.0
  %v8920 = vadd.f32 %v8918, %v8919
  %v8921 = vsel %vm30, %v8843, 0.0
  %v8922 = vadd.f32 %v8920, %v8921
  %v8923 = vsel %vm30, %v8844, 0.0
  %v8924 = vadd.f32 %v8922, %v8923
  %v8925 = vsel %vm30, %v8845, 0.0
  %v8926 = vadd.f32 %v8924, %v8925
  %v8927 = vsel %vm30, %v8846, 0.0
  %v8928 = vadd.f32 %v8926, %v8927
  %v8929 = vsel %vm30, %v8847, 0.0
  %v8930 = vadd.f32 %v8928, %v8929
  %v8931 = vsel %vm30, %v8848, 0.0
  %v8932 = vadd.f32 %v8930, %v8931
  %v8933 = vsel %vm30, %v8849, 0.0
  %v8934 = vadd.f32 %v8932, %v8933
  %v8935 = vsel %vm30, %v8850, 0.0
  %v8936 = vadd.f32 %v8934, %v8935
  %v8937 = vsel %vm30, %v8851, 0.0
  %v8938 = vadd.f32 %v8936, %v8937
  %v8939 = vsel %vm30, %v8852, 0.0
  %v8940 = vadd.f32 %v8938, %v8939
  %v8941 = vsel %vm30, %v8853, 0.0
  %v8942 = vadd.f32 %v8940, %v8941
  %v8943 = vsel %vm30, %v8854, 0.0
  %v8944 = vadd.f32 %v8942, %v8943
  %v8945 = vsel %vm30, %v8855, 0.0
  %v8946 = vadd.f32 %v8944, %v8945
  %v8947 = vsel %vm30, %v8856, 0.0
  %v8948 = vadd.f32 %v8946, %v8947
  %v8949 = vsel %vm30, %v8857, 0.0
  %v8950 = vadd.f32 %v8948, %v8949
  %v8951 = vsel %vm30, %v8858, 0.0
  %v8952 = vadd.f32 %v8950, %v8951
  %v8953 = vsel %vm30, %v8859, 0.0
  %v8954 = vadd.f32 %v8952, %v8953
  %v8955 = vsel %vm30, %v8860, 0.0
  %v8956 = vadd.f32 %v8954, %v8955
  %v8957 = vsel %vm30, %v8861, 0.0
  %v8958 = vadd.f32 %v8956, %v8957
  %v8959 = vsel %vm30, %v8862, 0.0
  %v8960 = vadd.f32 %v8958, %v8959
  %v8961 = vsel %vm30, %v8863, 0.0
  %v8962 = vadd.f32 %v8960, %v8961
  %v8963 = vsel %vm30, %v8864, 0.0
  %v8964 = vadd.f32 %v8962, %v8963
  %v8965 = vsel %vm30, %v8865, 0.0
  %v8966 = vadd.f32 %v8964, %v8965
  %v8967 = vsel %vm30, %v8866, 0.0
  %v8968 = vadd.f32 %v8966, %v8967
  %v8969 = vsel %vm30, %v8867, 0.0
  %v8970 = vadd.f32 %v8968, %v8969
  %v8971 = vsel %vm30, %v8868, 0.0
  %v8972 = vadd.f32 %v8970, %v8971
  %v8973 = vsel %vm30, %v8869, 0.0
  %v8974 = vadd.f32 %v8972, %v8973
  %v8975 = vsel %vm30, %v8870, 0.0
  %v8976 = vadd.f32 %v8974, %v8975
  %v8977 = vsel %vm30, %v8871, 0.0
  %v8978 = vadd.f32 %v8976, %v8977
  %v8979 = vsel %vm30, %v8872, 0.0
  %v8980 = vadd.f32 %v8978, %v8979
  %v8981 = vsel %vm30, %v8873, 0.0
  %v8982 = vadd.f32 %v8980, %v8981
  %v8983 = vsel %vm30, %v8874, 0.0
  %v8984 = vadd.f32 %v8982, %v8983
  %v8985 = vsel %vm30, %v8875, 0.0
  %v8986 = vadd.f32 %v8984, %v8985
  %v8987 = vsel %vm30, %v8876, 0.0
  %v8988 = vadd.f32 %v8986, %v8987
  %v8989 = vsel %vm30, %v8877, 0.0
  %v8990 = vadd.f32 %v8988, %v8989
  %v8991 = vsel %vm30, %v8878, 0.0
  %v8992 = vadd.f32 %v8990, %v8991
  %v8993 = vsel %vm30, %v8879, 0.0
  %v8994 = vadd.f32 %v8992, %v8993
  %v8995 = vsel %vm30, %v8880, 0.0
  %v8996 = vadd.f32 %v8994, %v8995
  %v8997 = vsel %vm30, %v8881, 0.0
  %v8998 = vadd.f32 %v8996, %v8997
  %v8999 = vsel %vm30, %v8882, 0.0
  %v9000 = vadd.f32 %v8998, %v8999
  %v9001 = vsel %vm30, %v8883, 0.0
  %v9002 = vadd.f32 %v9000, %v9001
  %v9003 = vsel %vm30, %v8884, 0.0
  %v9004 = vadd.f32 %v9002, %v9003
  %v9005 = vsel %vm30, %v8885, 0.0
  %v9006 = vadd.f32 %v9004, %v9005
  %v9007 = vsel %vm30, %v8886, 0.0
  %v9008 = vadd.f32 %v9006, %v9007
  %v9009 = vsel %vm30, %v8887, 0.0
  %v9010 = vadd.f32 %v9008, %v9009
  %v9011 = vsel %vm30, %v8888, 0.0
  %v9012 = vadd.f32 %v9010, %v9011
  %v9013 = vsel %vm30, %v8889, 0.0
  %v9014 = vadd.f32 %v9012, %v9013
  %v9015 = vsel %vm30, %v8890, 0.0
  %v9016 = vadd.f32 %v9014, %v9015
  %v9017 = vsel %vm30, %v8891, 0.0
  %v9018 = vadd.f32 %v9016, %v9017
  %v9019 = vrot.slane %v9018, 4
  %v9020 = vadd.f32 %v9018, %v9019
  %v9021 = vrot.slane %v9020, 2
  %v9022 = vadd.f32 %v9020, %v9021
  %v9023 = vrot.slane %v9022, 1
  %v9024 = vadd.f32 %v9022, %v9023
  %v9025 = vmul.f32 %v8827, 0.001953125
  %v9026 = vmul.f32 %v9024, 0.001953125
  %v9027 = vmul.f32 %v9025, %v9025
  %v9028 = vsub.f32 %v9026, %v9027
  %v9029 = vld [vmem:[%s6] sm:$0x1]
  %v9030 = vadd.f32 %v9028, 1e-05
  %v9031 = vrsqrt.pop %v9030
  %v9032 = vmul.f32 %v9029, %v9031
  %v9033 = vld [vmem:[%s7] sm:$0x1]
  %v9034 = vmul.f32 %v9025, %v9032
  %v9035 = vsub.f32 %v9033, %v9034
  %v9037 = vlaneseq
  %v9038 = vshrl.u32 %v9037, 7
  %v9039 = vsub.s32 0, %v9038
  %v9040 = vrot.slane %v9032, %v9039
  %v9042 = vmul.f32 %v8377, %v9040
  %v9043 = vmul.f32 %v8382, %v9040
  %v9044 = vmul.f32 %v8387, %v9040
  %v9045 = vmul.f32 %v8392, %v9040
  %v9046 = vmul.f32 %v8397, %v9040
  %v9047 = vmul.f32 %v8402, %v9040
  %v9048 = vmul.f32 %v8407, %v9040
  %v9049 = vmul.f32 %v8412, %v9040
  %v9050 = vmul.f32 %v8417, %v9040
  %v9051 = vmul.f32 %v8422, %v9040
  %v9052 = vmul.f32 %v8427, %v9040
  %v9053 = vmul.f32 %v8432, %v9040
  %v9054 = vmul.f32 %v8437, %v9040
  %v9055 = vmul.f32 %v8442, %v9040
  %v9056 = vmul.f32 %v8447, %v9040
  %v9057 = vmul.f32 %v8452, %v9040
  %v9058 = vmul.f32 %v8457, %v9040
  %v9059 = vmul.f32 %v8462, %v9040
  %v9060 = vmul.f32 %v8467, %v9040
  %v9061 = vmul.f32 %v8472, %v9040
  %v9062 = vmul.f32 %v8477, %v9040
  %v9063 = vmul.f32 %v8482, %v9040
  %v9064 = vmul.f32 %v8487, %v9040
  %v9065 = vmul.f32 %v8492, %v9040
  %v9066 = vmul.f32 %v8497, %v9040
  %v9067 = vmul.f32 %v8502, %v9040
  %v9068 = vmul.f32 %v8507, %v9040
  %v9069 = vmul.f32 %v8512, %v9040
  %v9070 = vmul.f32 %v8517, %v9040
  %v9071 = vmul.f32 %v8522, %v9040
  %v9072 = vmul.f32 %v8527, %v9040
  %v9073 = vmul.f32 %v8532, %v9040
  %v9074 = vmul.f32 %v8537, %v9040
  %v9075 = vmul.f32 %v8542, %v9040
  %v9076 = vmul.f32 %v8547, %v9040
  %v9077 = vmul.f32 %v8552, %v9040
  %v9078 = vmul.f32 %v8557, %v9040
  %v9079 = vmul.f32 %v8562, %v9040
  %v9080 = vmul.f32 %v8567, %v9040
  %v9081 = vmul.f32 %v8572, %v9040
  %v9082 = vmul.f32 %v8577, %v9040
  %v9083 = vmul.f32 %v8582, %v9040
  %v9084 = vmul.f32 %v8587, %v9040
  %v9085 = vmul.f32 %v8592, %v9040
  %v9086 = vmul.f32 %v8597, %v9040
  %v9087 = vmul.f32 %v8602, %v9040
  %v9088 = vmul.f32 %v8607, %v9040
  %v9089 = vmul.f32 %v8612, %v9040
  %v9090 = vmul.f32 %v8617, %v9040
  %v9091 = vmul.f32 %v8622, %v9040
  %v9092 = vmul.f32 %v8627, %v9040
  %v9093 = vmul.f32 %v8632, %v9040
  %v9094 = vmul.f32 %v8637, %v9040
  %v9095 = vmul.f32 %v8642, %v9040
  %v9096 = vmul.f32 %v8647, %v9040
  %v9097 = vmul.f32 %v8652, %v9040
  %v9098 = vmul.f32 %v8657, %v9040
  %v9099 = vmul.f32 %v8662, %v9040
  %v9100 = vmul.f32 %v8667, %v9040
  %v9101 = vmul.f32 %v8672, %v9040
  %v9102 = vmul.f32 %v8677, %v9040
  %v9103 = vmul.f32 %v8682, %v9040
  %v9104 = vmul.f32 %v8687, %v9040
  %v9105 = vmul.f32 %v8692, %v9040
  %v9107 = vlaneseq
  %v9108 = vshrl.u32 %v9107, 7
  %v9109 = vsub.s32 0, %v9108
  %v9110 = vrot.slane %v9035, %v9109
  %v9112 = vadd.f32 %v9042, %v9110
  %v9113 = vadd.f32 %v9043, %v9110
  %v9114 = vadd.f32 %v9044, %v9110
  %v9115 = vadd.f32 %v9045, %v9110
  %v9116 = vadd.f32 %v9046, %v9110
  %v9117 = vadd.f32 %v9047, %v9110
  %v9118 = vadd.f32 %v9048, %v9110
  %v9119 = vadd.f32 %v9049, %v9110
  %v9120 = vadd.f32 %v9050, %v9110
  %v9121 = vadd.f32 %v9051, %v9110
  %v9122 = vadd.f32 %v9052, %v9110
  %v9123 = vadd.f32 %v9053, %v9110
  %v9124 = vadd.f32 %v9054, %v9110
  %v9125 = vadd.f32 %v9055, %v9110
  %v9126 = vadd.f32 %v9056, %v9110
  %v9127 = vadd.f32 %v9057, %v9110
  %v9128 = vadd.f32 %v9058, %v9110
  %v9129 = vadd.f32 %v9059, %v9110
  %v9130 = vadd.f32 %v9060, %v9110
  %v9131 = vadd.f32 %v9061, %v9110
  %v9132 = vadd.f32 %v9062, %v9110
  %v9133 = vadd.f32 %v9063, %v9110
  %v9134 = vadd.f32 %v9064, %v9110
  %v9135 = vadd.f32 %v9065, %v9110
  %v9136 = vadd.f32 %v9066, %v9110
  %v9137 = vadd.f32 %v9067, %v9110
  %v9138 = vadd.f32 %v9068, %v9110
  %v9139 = vadd.f32 %v9069, %v9110
  %v9140 = vadd.f32 %v9070, %v9110
  %v9141 = vadd.f32 %v9071, %v9110
  %v9142 = vadd.f32 %v9072, %v9110
  %v9143 = vadd.f32 %v9073, %v9110
  %v9144 = vadd.f32 %v9074, %v9110
  %v9145 = vadd.f32 %v9075, %v9110
  %v9146 = vadd.f32 %v9076, %v9110
  %v9147 = vadd.f32 %v9077, %v9110
  %v9148 = vadd.f32 %v9078, %v9110
  %v9149 = vadd.f32 %v9079, %v9110
  %v9150 = vadd.f32 %v9080, %v9110
  %v9151 = vadd.f32 %v9081, %v9110
  %v9152 = vadd.f32 %v9082, %v9110
  %v9153 = vadd.f32 %v9083, %v9110
  %v9154 = vadd.f32 %v9084, %v9110
  %v9155 = vadd.f32 %v9085, %v9110
  %v9156 = vadd.f32 %v9086, %v9110
  %v9157 = vadd.f32 %v9087, %v9110
  %v9158 = vadd.f32 %v9088, %v9110
  %v9159 = vadd.f32 %v9089, %v9110
  %v9160 = vadd.f32 %v9090, %v9110
  %v9161 = vadd.f32 %v9091, %v9110
  %v9162 = vadd.f32 %v9092, %v9110
  %v9163 = vadd.f32 %v9093, %v9110
  %v9164 = vadd.f32 %v9094, %v9110
  %v9165 = vadd.f32 %v9095, %v9110
  %v9166 = vadd.f32 %v9096, %v9110
  %v9167 = vadd.f32 %v9097, %v9110
  %v9168 = vadd.f32 %v9098, %v9110
  %v9169 = vadd.f32 %v9099, %v9110
  %v9170 = vadd.f32 %v9100, %v9110
  %v9171 = vadd.f32 %v9101, %v9110
  %v9172 = vadd.f32 %v9102, %v9110
  %v9173 = vadd.f32 %v9103, %v9110
  %v9174 = vadd.f32 %v9104, %v9110
  %v9175 = vadd.f32 %v9105, %v9110
  %v9176 = vld [vmem:[%s0] sm:$0xff]
  %v9177 = vld [vmem:[%s0 + $0x8] sm:$0xff]
  %v9178 = vld [vmem:[%s0 + $0x10] sm:$0xff]
  %v9179 = vld [vmem:[%s0 + $0x18] sm:$0xff]
  %v9180 = vld [vmem:[%s0 + $0x20] sm:$0xff]
  %v9181 = vld [vmem:[%s0 + $0x28] sm:$0xff]
  %v9182 = vld [vmem:[%s0 + $0x30] sm:$0xff]
  %v9183 = vld [vmem:[%s0 + $0x38] sm:$0xff]
  %v9184 = vld [vmem:[%s0 + $0x40] sm:$0xff]
  %v9185 = vld [vmem:[%s0 + $0x48] sm:$0xff]
  %v9186 = vld [vmem:[%s0 + $0x50] sm:$0xff]
  %v9187 = vld [vmem:[%s0 + $0x58] sm:$0xff]
  %v9188 = vld [vmem:[%s0 + $0x60] sm:$0xff]
  %v9189 = vld [vmem:[%s0 + $0x68] sm:$0xff]
  %v9190 = vld [vmem:[%s0 + $0x70] sm:$0xff]
  %v9191 = vld [vmem:[%s0 + $0x78] sm:$0xff]
  %v9192 = vld [vmem:[%s0 + $0x80] sm:$0xff]
  %v9193 = vld [vmem:[%s0 + $0x88] sm:$0xff]
  %v9194 = vld [vmem:[%s0 + $0x90] sm:$0xff]
  %v9195 = vld [vmem:[%s0 + $0x98] sm:$0xff]
  %v9196 = vld [vmem:[%s0 + $0xa0] sm:$0xff]
  %v9197 = vld [vmem:[%s0 + $0xa8] sm:$0xff]
  %v9198 = vld [vmem:[%s0 + $0xb0] sm:$0xff]
  %v9199 = vld [vmem:[%s0 + $0xb8] sm:$0xff]
  %v9200 = vld [vmem:[%s0 + $0xc0] sm:$0xff]
  %v9201 = vld [vmem:[%s0 + $0xc8] sm:$0xff]
  %v9202 = vld [vmem:[%s0 + $0xd0] sm:$0xff]
  %v9203 = vld [vmem:[%s0 + $0xd8] sm:$0xff]
  %v9204 = vld [vmem:[%s0 + $0xe0] sm:$0xff]
  %v9205 = vld [vmem:[%s0 + $0xe8] sm:$0xff]
  %v9206 = vld [vmem:[%s0 + $0xf0] sm:$0xff]
  %v9207 = vld [vmem:[%s0 + $0xf8] sm:$0xff]
  %v9208 = vld [vmem:[%s0 + $0x100] sm:$0xff]
  %v9209 = vld [vmem:[%s0 + $0x108] sm:$0xff]
  %v9210 = vld [vmem:[%s0 + $0x110] sm:$0xff]
  %v9211 = vld [vmem:[%s0 + $0x118] sm:$0xff]
  %v9212 = vld [vmem:[%s0 + $0x120] sm:$0xff]
  %v9213 = vld [vmem:[%s0 + $0x128] sm:$0xff]
  %v9214 = vld [vmem:[%s0 + $0x130] sm:$0xff]
  %v9215 = vld [vmem:[%s0 + $0x138] sm:$0xff]
  %v9216 = vld [vmem:[%s0 + $0x140] sm:$0xff]
  %v9217 = vld [vmem:[%s0 + $0x148] sm:$0xff]
  %v9218 = vld [vmem:[%s0 + $0x150] sm:$0xff]
  %v9219 = vld [vmem:[%s0 + $0x158] sm:$0xff]
  %v9220 = vld [vmem:[%s0 + $0x160] sm:$0xff]
  %v9221 = vld [vmem:[%s0 + $0x168] sm:$0xff]
  %v9222 = vld [vmem:[%s0 + $0x170] sm:$0xff]
  %v9223 = vld [vmem:[%s0 + $0x178] sm:$0xff]
  %v9224 = vld [vmem:[%s0 + $0x180] sm:$0xff]
  %v9225 = vld [vmem:[%s0 + $0x188] sm:$0xff]
  %v9226 = vld [vmem:[%s0 + $0x190] sm:$0xff]
  %v9227 = vld [vmem:[%s0 + $0x198] sm:$0xff]
  %v9228 = vld [vmem:[%s0 + $0x1a0] sm:$0xff]
  %v9229 = vld [vmem:[%s0 + $0x1a8] sm:$0xff]
  %v9230 = vld [vmem:[%s0 + $0x1b0] sm:$0xff]
  %v9231 = vld [vmem:[%s0 + $0x1b8] sm:$0xff]
  %v9232 = vld [vmem:[%s0 + $0x1c0] sm:$0xff]
  %v9233 = vld [vmem:[%s0 + $0x1c8] sm:$0xff]
  %v9234 = vld [vmem:[%s0 + $0x1d0] sm:$0xff]
  %v9235 = vld [vmem:[%s0 + $0x1d8] sm:$0xff]
  %v9236 = vld [vmem:[%s0 + $0x1e0] sm:$0xff]
  %v9237 = vld [vmem:[%s0 + $0x1e8] sm:$0xff]
  %v9238 = vld [vmem:[%s0 + $0x1f0] sm:$0xff]
  %v9239 = vld [vmem:[%s0 + $0x1f8] sm:$0xff]
  %v9240 = vadd.f32 %v9176, %v9112
  %v9241 = vadd.f32 %v9177, %v9113
  %v9242 = vadd.f32 %v9178, %v9114
  %v9243 = vadd.f32 %v9179, %v9115
  %v9244 = vadd.f32 %v9180, %v9116
  %v9245 = vadd.f32 %v9181, %v9117
  %v9246 = vadd.f32 %v9182, %v9118
  %v9247 = vadd.f32 %v9183, %v9119
  %v9248 = vadd.f32 %v9184, %v9120
  %v9249 = vadd.f32 %v9185, %v9121
  %v9250 = vadd.f32 %v9186, %v9122
  %v9251 = vadd.f32 %v9187, %v9123
  %v9252 = vadd.f32 %v9188, %v9124
  %v9253 = vadd.f32 %v9189, %v9125
  %v9254 = vadd.f32 %v9190, %v9126
  %v9255 = vadd.f32 %v9191, %v9127
  %v9256 = vadd.f32 %v9192, %v9128
  %v9257 = vadd.f32 %v9193, %v9129
  %v9258 = vadd.f32 %v9194, %v9130
  %v9259 = vadd.f32 %v9195, %v9131
  %v9260 = vadd.f32 %v9196, %v9132
  %v9261 = vadd.f32 %v9197, %v9133
  %v9262 = vadd.f32 %v9198, %v9134
  %v9263 = vadd.f32 %v9199, %v9135
  %v9264 = vadd.f32 %v9200, %v9136
  %v9265 = vadd.f32 %v9201, %v9137
  %v9266 = vadd.f32 %v9202, %v9138
  %v9267 = vadd.f32 %v9203, %v9139
  %v9268 = vadd.f32 %v9204, %v9140
  %v9269 = vadd.f32 %v9205, %v9141
  %v9270 = vadd.f32 %v9206, %v9142
  %v9271 = vadd.f32 %v9207, %v9143
  %v9272 = vadd.f32 %v9208, %v9144
  %v9273 = vadd.f32 %v9209, %v9145
  %v9274 = vadd.f32 %v9210, %v9146
  %v9275 = vadd.f32 %v9211, %v9147
  %v9276 = vadd.f32 %v9212, %v9148
  %v9277 = vadd.f32 %v9213, %v9149
  %v9278 = vadd.f32 %v9214, %v9150
  %v9279 = vadd.f32 %v9215, %v9151
  %v9280 = vadd.f32 %v9216, %v9152
  %v9281 = vadd.f32 %v9217, %v9153
  %v9282 = vadd.f32 %v9218, %v9154
  %v9283 = vadd.f32 %v9219, %v9155
  %v9284 = vadd.f32 %v9220, %v9156
  %v9285 = vadd.f32 %v9221, %v9157
  %v9286 = vadd.f32 %v9222, %v9158
  %v9287 = vadd.f32 %v9223, %v9159
  %v9288 = vadd.f32 %v9224, %v9160
  %v9289 = vadd.f32 %v9225, %v9161
  %v9290 = vadd.f32 %v9226, %v9162
  %v9291 = vadd.f32 %v9227, %v9163
  %v9292 = vadd.f32 %v9228, %v9164
  %v9293 = vadd.f32 %v9229, %v9165
  %v9294 = vadd.f32 %v9230, %v9166
  %v9295 = vadd.f32 %v9231, %v9167
  %v9296 = vadd.f32 %v9232, %v9168
  %v9297 = vadd.f32 %v9233, %v9169
  %v9298 = vadd.f32 %v9234, %v9170
  %v9299 = vadd.f32 %v9235, %v9171
  %v9300 = vadd.f32 %v9236, %v9172
  %v9301 = vadd.f32 %v9237, %v9173
  %v9302 = vadd.f32 %v9238, %v9174
  %v9303 = vadd.f32 %v9239, %v9175
  %9304 = vst.msk [vmem:[%s8] sm:$0xff] %vm30, %v9240
  %9305 = vst.msk [vmem:[%s8 + $0x8] sm:$0xff] %vm30, %v9241
  %9306 = vst.msk [vmem:[%s8 + $0x10] sm:$0xff] %vm30, %v9242
  %9307 = vst.msk [vmem:[%s8 + $0x18] sm:$0xff] %vm30, %v9243
  %9308 = vst.msk [vmem:[%s8 + $0x20] sm:$0xff] %vm30, %v9244
  %9309 = vst.msk [vmem:[%s8 + $0x28] sm:$0xff] %vm30, %v9245
  %9310 = vst.msk [vmem:[%s8 + $0x30] sm:$0xff] %vm30, %v9246
  %9311 = vst.msk [vmem:[%s8 + $0x38] sm:$0xff] %vm30, %v9247
  %9312 = vst.msk [vmem:[%s8 + $0x40] sm:$0xff] %vm30, %v9248
  %9313 = vst.msk [vmem:[%s8 + $0x48] sm:$0xff] %vm30, %v9249
  %9314 = vst.msk [vmem:[%s8 + $0x50] sm:$0xff] %vm30, %v9250
  %9315 = vst.msk [vmem:[%s8 + $0x58] sm:$0xff] %vm30, %v9251
  %9316 = vst.msk [vmem:[%s8 + $0x60] sm:$0xff] %vm30, %v9252
  %9317 = vst.msk [vmem:[%s8 + $0x68] sm:$0xff] %vm30, %v9253
  %9318 = vst.msk [vmem:[%s8 + $0x70] sm:$0xff] %vm30, %v9254
  %9319 = vst.msk [vmem:[%s8 + $0x78] sm:$0xff] %vm30, %v9255
  %9320 = vst.msk [vmem:[%s8 + $0x80] sm:$0xff] %vm30, %v9256
  %9321 = vst.msk [vmem:[%s8 + $0x88] sm:$0xff] %vm30, %v9257
  %9322 = vst.msk [vmem:[%s8 + $0x90] sm:$0xff] %vm30, %v9258
  %9323 = vst.msk [vmem:[%s8 + $0x98] sm:$0xff] %vm30, %v9259
  %9324 = vst.msk [vmem:[%s8 + $0xa0] sm:$0xff] %vm30, %v9260
  %9325 = vst.msk [vmem:[%s8 + $0xa8] sm:$0xff] %vm30, %v9261
  %9326 = vst.msk [vmem:[%s8 + $0xb0] sm:$0xff] %vm30, %v9262
  %9327 = vst.msk [vmem:[%s8 + $0xb8] sm:$0xff] %vm30, %v9263
  %9328 = vst.msk [vmem:[%s8 + $0xc0] sm:$0xff] %vm30, %v9264
  %9329 = vst.msk [vmem:[%s8 + $0xc8] sm:$0xff] %vm30, %v9265
  %9330 = vst.msk [vmem:[%s8 + $0xd0] sm:$0xff] %vm30, %v9266
  %9331 = vst.msk [vmem:[%s8 + $0xd8] sm:$0xff] %vm30, %v9267
  %9332 = vst.msk [vmem:[%s8 + $0xe0] sm:$0xff] %vm30, %v9268
  %9333 = vst.msk [vmem:[%s8 + $0xe8] sm:$0xff] %vm30, %v9269
  %9334 = vst.msk [vmem:[%s8 + $0xf0] sm:$0xff] %vm30, %v9270
  %9335 = vst.msk [vmem:[%s8 + $0xf8] sm:$0xff] %vm30, %v9271
  %9336 = vst.msk [vmem:[%s8 + $0x100] sm:$0xff] %vm30, %v9272
  %9337 = vst.msk [vmem:[%s8 + $0x108] sm:$0xff] %vm30, %v9273
  %9338 = vst.msk [vmem:[%s8 + $0x110] sm:$0xff] %vm30, %v9274
  %9339 = vst.msk [vmem:[%s8 + $0x118] sm:$0xff] %vm30, %v9275
  %9340 = vst.msk [vmem:[%s8 + $0x120] sm:$0xff] %vm30, %v9276
  %9341 = vst.msk [vmem:[%s8 + $0x128] sm:$0xff] %vm30, %v9277
  %9342 = vst.msk [vmem:[%s8 + $0x130] sm:$0xff] %vm30, %v9278
  %9343 = vst.msk [vmem:[%s8 + $0x138] sm:$0xff] %vm30, %v9279
  %9344 = vst.msk [vmem:[%s8 + $0x140] sm:$0xff] %vm30, %v9280
  %9345 = vst.msk [vmem:[%s8 + $0x148] sm:$0xff] %vm30, %v9281
  %9346 = vst.msk [vmem:[%s8 + $0x150] sm:$0xff] %vm30, %v9282
  %9347 = vst.msk [vmem:[%s8 + $0x158] sm:$0xff] %vm30, %v9283
  %9348 = vst.msk [vmem:[%s8 + $0x160] sm:$0xff] %vm30, %v9284
  %9349 = vst.msk [vmem:[%s8 + $0x168] sm:$0xff] %vm30, %v9285
  %9350 = vst.msk [vmem:[%s8 + $0x170] sm:$0xff] %vm30, %v9286
  %9351 = vst.msk [vmem:[%s8 + $0x178] sm:$0xff] %vm30, %v9287
  %9352 = vst.msk [vmem:[%s8 + $0x180] sm:$0xff] %vm30, %v9288
  %9353 = vst.msk [vmem:[%s8 + $0x188] sm:$0xff] %vm30, %v9289
  %9354 = vst.msk [vmem:[%s8 + $0x190] sm:$0xff] %vm30, %v9290
  %9355 = vst.msk [vmem:[%s8 + $0x198] sm:$0xff] %vm30, %v9291
  %9356 = vst.msk [vmem:[%s8 + $0x1a0] sm:$0xff] %vm30, %v9292
  %9357 = vst.msk [vmem:[%s8 + $0x1a8] sm:$0xff] %vm30, %v9293
  %9358 = vst.msk [vmem:[%s8 + $0x1b0] sm:$0xff] %vm30, %v9294
  %9359 = vst.msk [vmem:[%s8 + $0x1b8] sm:$0xff] %vm30, %v9295
  %9360 = vst.msk [vmem:[%s8 + $0x1c0] sm:$0xff] %vm30, %v9296
  %9361 = vst.msk [vmem:[%s8 + $0x1c8] sm:$0xff] %vm30, %v9297
  %9362 = vst.msk [vmem:[%s8 + $0x1d0] sm:$0xff] %vm30, %v9298
  %9363 = vst.msk [vmem:[%s8 + $0x1d8] sm:$0xff] %vm30, %v9299
  %9364 = vst.msk [vmem:[%s8 + $0x1e0] sm:$0xff] %vm30, %v9300
  %9365 = vst.msk [vmem:[%s8 + $0x1e8] sm:$0xff] %vm30, %v9301
  %9366 = vst.msk [vmem:[%s8 + $0x1f0] sm:$0xff] %vm30, %v9302
  %9367 = vst.msk [vmem:[%s8 + $0x1f8] sm:$0xff] %vm30, %v9303
  // Predicated region
  $region34: #{residual_block.1} parent=0 // pred_check
    _
  $region35: #{residual_block.1} parent=0 // pred_check_branch
    %9369 = sbr.rel (0) target = $region37
  $region36: #{residual_block.1} parent=0 // pred_region
    _
  $region37: #{residual_block.1} parent=0 // pred_fallthru
    _
  // Predicated region
  $region38: #{residual_block.1} parent=0 // pred_check
    _
  $region39: #{residual_block.1} parent=0 // pred_check_branch
    %9371 = sbr.rel (0) target = $region41
  $region40: #{residual_block.1} parent=0 // pred_region
    _
  $region41: #{residual_block.1} parent=0 // pred_fallthru
    _

</llo_original>
